<compile_context>
chip_gen: v5e
topology: v5e:2x2
jax: 0.10.0
libtpu: 0.0.40
codegen_flags: <defaults>
</compile_context>

<pallas_src>
import jax
import jax.numpy as jnp
from jax import lax
from jax.experimental import pallas as pl
from jax.experimental.pallas import tpu as pltpu  # noqa: F401  (TPU backend)

# --- small, module-consistent shapes -----------------------------------------
B = 2          # batch
R = 8          # number of image regions (sequence length)
IMG_DIM = 64   # precomputed image feature dim (2048 in the original module)
EMBED = 32     # embed_size (2048 in the original); must be divisible by HEAD
HEAD = 2
HALF = EMBED // HEAD
ASPACE = 500
APAD = 512     # 128-lane aligned padded action space (per head)
TEMP = 0.8
BN_EPS = 1e-5
L2_EPS = 1e-12
NEG_BIG = -1e30
DATA_NAME = "coco_precomp"   # != 'f30k_precomp'  -> first l2norm is applied


# =============================== fused Pallas kernel ==========================

def _fused_encoder_kernel(
        img_ref, fcw_ref, gtpw_ref, ww_ref, gruw_ref, muw_ref,
        vece_ref, vec3e_ref, mub_ref,
        feat_ref, gcn_ref, logp_ref, act_ref):
    f32 = jnp.float32
    E = EMBED

    def mm(a, b):
        return jnp.dot(a, b, preferred_element_type=f32)

    vece = vece_ref[...]      # (15, E)  packed small E-wide vectors
    vec3e = vec3e_ref[...]    # (8, 3E)  packed small 3E-wide vectors
    fc_b = vece[0:1, :]

    # ---- fc: (B*R, IMG_DIM) @ (IMG_DIM, E) -----------------------------------
    x = mm(img_ref[...], fcw_ref[...]) + fc_b                  # (B*R, E)

    # ---- torch l2norm over dim=1 (the regions axis), per batch ---------------
    def l2norm_regions(flat):                                  # (B*R, E)
        v3 = flat.reshape(B, R, E)
        ss = jnp.sum(v3 * v3, axis=1, keepdims=True)           # (B, 1, E)
        return (v3 * lax.rsqrt(ss + L2_EPS)).reshape(B * R, E)

    if DATA_NAME != "f30k_precomp":
        x = l2norm_regions(x)

    # ---- 4 Rs_GCN blocks; g/theta/phi fused into one (E, 3E) matmul ----------
    inv_r = 1.0 / R
    for k in range(4):
        gtp = mm(x, gtpw_ref[k]) + vec3e[k:k + 1, :]           # (B*R, 3E)
        gtp3 = gtp.reshape(B, R, 3 * E)
        g = gtp3[..., 0:E]
        th = gtp3[..., E:2 * E]
        ph = gtp3[..., 2 * E:]
        rel = jnp.einsum("bre,bse->brs", th, ph,
                         preferred_element_type=f32) * inv_r   # (B, R, R)
        y = jnp.einsum("brs,bse->bre", rel, g,
                       preferred_element_type=f32)             # (B, R, E)
        wy = mm(y.reshape(B * R, E), ww_ref[k]) + vece[1 + k:2 + k, :]
        wy = wy * vece[5 + k:6 + k, :] + vece[9 + k:10 + k, :]  # folded eval BN
        x = wy + x                                              # residual

    gcn = l2norm_regions(x)                                     # (B*R, E)
    gcn_ref[...] = gcn.reshape(B, R, E)                         # GCN_img_emd

    # ---- step-major relayout + hoisted x-side projections ---------------------
    gcn_sb = jnp.transpose(gcn.reshape(B, R, E), (1, 0, 2)).reshape(R * B, E)

    rl_wih = gruw_ref[0]
    rl_whh = gruw_ref[1]
    g_wih = gruw_ref[2]
    g_whh = gruw_ref[3]
    rl_bih = vec3e[4:5, :]
    rl_bhh = vec3e[5:6, :]
    g_bih = vec3e[6:7, :]
    g_bhh = vec3e[7:8, :]

    # all-steps rl-GRU x-side pre-activations and mu img-half (+bias folded)
    xh_rl_all = mm(gcn_sb, rl_wih) + rl_bih                     # (R*B, 3E)
    mu_img_all = mm(jnp.maximum(gcn_sb, 0.0), muw_ref[0]) + mub_ref[...]
    mu_whx = muw_ref[1]                                         # (E, HEAD*APAD)

    # pre-broadcast loop-invariant biases once
    rl_bhh_b = jnp.broadcast_to(rl_bhh, (B, 3 * E))
    g_bih_b = jnp.broadcast_to(g_bih, (B, 3 * E))
    g_bhh_b = jnp.broadcast_to(g_bhh, (B, 3 * E))

    lane_e = lax.broadcasted_iota(jnp.int32, (B, E), 1)
    iota_a = lax.broadcasted_iota(jnp.int32, (B, HEAD, APAD), 2)
    inv_temp = 1.0 / TEMP

    hx_rl = jnp.zeros((B, E), f32)
    hx_rnn = jnp.zeros((B, E), f32)
    img_sum = jnp.zeros((B, E), f32)
    logp_cols, act_cols = [], []

    for i in range(R):
        lo = i * B
        img = gcn_sb[lo:lo + B, :]                              # (B, E) static slice

        # rl_rnn GRUCell: x-side hoisted; one fused (E,3E) h-side matmul
        hh = mm(hx_rl, rl_whh) + rl_bhh_b                       # (B, 3E)
        xh = xh_rl_all[lo:lo + B, :]
        r = jax.nn.sigmoid(xh[:, 0:E] + hh[:, 0:E])
        z = jax.nn.sigmoid(xh[:, E:2 * E] + hh[:, E:2 * E])
        n = jnp.tanh(xh[:, 2 * E:] + r * hh[:, 2 * E:])
        hx_rl = (1.0 - z) * n + z * hx_rl

        # mu = relu(img)@Wi (hoisted, bias folded) + relu(hx)@Wh
        mu = mu_img_all[lo:lo + B, :] + mm(jnp.maximum(hx_rl, 0.0), mu_whx)
        mu3 = mu.reshape(B, HEAD, APAD) * inv_temp              # (B, HEAD, APAD)

        m = jnp.max(mu3, axis=-1, keepdims=True)                # (B, HEAD, 1)
        denom = jnp.sum(jnp.exp(mu3 - m), axis=-1, keepdims=True)
        logp = -jnp.log(denom)                                  # log(max softmax prob)
        ind = jnp.min(jnp.where(mu3 == m, iota_a, APAD),
                      axis=-1, keepdims=True)                   # argmax (first hit)
        action = ind.astype(f32) * (1.0 / ASPACE)               # (B, HEAD, 1)
        att = 20.0 * jax.nn.sigmoid(action)                     # 20*sigmoid(action)

        logp_cols.append(logp.reshape(B, HEAD))                 # column order i*HEAD+h
        act_cols.append(action.reshape(B, HEAD))

        # per-head scaling as a lane-iota select (no sub-vreg reshape)
        gain = jnp.broadcast_to(att[:, 0, :], (B, E))
        for h in range(1, HEAD):
            gain = jnp.where(lane_e >= h * HALF, att[:, h, :], gain)
        img_scaled = img * gain
        img_sum = img_sum + img_scaled

        # img_rnn GRU cell: fused 3-gate weights, 2 matmuls
        xh2 = mm(img_scaled, g_wih) + g_bih_b
        hh2 = mm(hx_rnn, g_whh) + g_bhh_b
        r2 = jax.nn.sigmoid(xh2[:, 0:E] + hh2[:, 0:E])
        z2 = jax.nn.sigmoid(xh2[:, E:2 * E] + hh2[:, E:2 * E])
        n2 = jnp.tanh(xh2[:, 2 * E:] + r2 * hh2[:, 2 * E:])
        hx_rnn = (1.0 - z2) * n2 + z2 * hx_rnn

    # ---- single writes of the per-step outputs --------------------------------
    logp_ref[...] = jnp.concatenate(logp_cols, axis=1)          # (B, R*HEAD)
    act_ref[...] = jnp.concatenate(act_cols, axis=1)            # (B, R*HEAD)

    # ---- features = img_emb.mean(2) + hidden_state; self.bn in train mode -----
    feats = img_sum * (1.0 / R) + hx_rnn                        # (B, E)
    mean = jnp.mean(feats, axis=0, keepdims=True)
    var = jnp.mean((feats - mean) ** 2, axis=0, keepdims=True)
    feat_ref[...] = ((feats - mean) * lax.rsqrt(var + BN_EPS)
                     * vece[13:14, :] + vece[14:15, :])


# ============================ forward wrapper =================================

def encoder_forward(images, params):
    b, r, d = images.shape
    feats, gcn_img_emd, logp_flat, act_flat = pl.pallas_call(
        _fused_encoder_kernel,
        out_shape=(
            jax.ShapeDtypeStruct((b, EMBED), jnp.float32),        # features
            jax.ShapeDtypeStruct((b, r, EMBED), jnp.float32),     # GCN_img_emd
            jax.ShapeDtypeStruct((b, r * HEAD), jnp.float32),     # log probs (flat)
            jax.ShapeDtypeStruct((b, r * HEAD), jnp.float32),     # actions (flat)
        ),
    )(images.reshape(b * r, d),
      params["fc_wt"], params["gcn_gtp_w"], params["gcn_w_w"],
      params["gru_w"], params["mu_w"],
      params["vec_e"], params["vec_3e"], params["mu_b"])

    # torch: stack(list, 1) -> (B, R, HEAD) contiguous -> .view(B, HEAD, -1)
    sampled_log_img_all = logp_flat.reshape(b, HEAD, r)
    action_imgs_all = act_flat.reshape(b, HEAD, r)
    log_all = 1.0                                                 # train == False branch
    return feats, gcn_img_emd, sampled_log_img_all, action_imgs_all, log_all


# ============================ deterministic params ============================

def init_params(key):
    counter = [0]

    def nkey():
        counter[0] += 1
        return jax.random.fold_in(key, counter[0])

    def nrm(shape, scale=0.1):
        return scale * jax.random.normal(nkey(), shape, dtype=jnp.float32)

    params = {}
    E = EMBED

    # fc: xavier-uniform as in init_weights(), bias = 0
    rr = (6.0 ** 0.5) / ((IMG_DIM + E) ** 0.5)
    fc_w = jax.random.uniform(nkey(), (E, IMG_DIM), jnp.float32, -rr, rr)
    params["fc_wt"] = fc_w.T                                     # (IMG_DIM, E)
    fc_b = jnp.zeros((1, E), jnp.float32)

    # 4 Rs_GCN blocks: g/theta/phi fused to one (E, 3E) weight (+bias),
    # W conv separate, BatchNorm folded to eval (running-stats) scale/shift.
    gtp_w, gtp_b, w_w, w_b, bn_s, bn_sh = [], [], [], [], [], []
    for _ in range(4):
        gtp_w.append(nrm((E, 3 * E)))
        gtp_b.append(nrm((1, 3 * E)))
        w_w.append(nrm((E, E)))
        w_b.append(nrm((1, E)))
        bn_s.append(1.0 + nrm((1, E)))
        bn_sh.append(nrm((1, E)))
    params["gcn_gtp_w"] = jnp.stack(gtp_w)                       # (4, E, 3E)
    params["gcn_w_w"] = jnp.stack(w_w)                           # (4, E, E)

    # GRU weights fused per cell along the gate axis (gate order r, z, n):
    # stacked as [rl_wih, rl_whh, img_wih, img_whh]  -> (4, E, 3E)
    rl_wih, rl_whh = nrm((E, 3 * E)), nrm((E, 3 * E))
    rl_bih, rl_bhh = nrm((1, 3 * E)), nrm((1, 3 * E))
    g_wih, g_whh = nrm((E, 3 * E)), nrm((E, 3 * E))
    g_bih, g_bhh = nrm((1, 3 * E)), nrm((1, 3 * E))
    params["gru_w"] = jnp.stack([rl_wih, rl_whh, g_wih, g_whh])

    # linear_rl_image_mus: Linear(2E, HEAD*ASPACE), split into img/hx halves and
    # padded to 512 lanes per head (weight pad 0, bias pad -1e30 so the padded
    # columns never win softmax/argmax and contribute ~0 to the denominator).
    mu_wt = nrm((2 * E, HEAD * ASPACE))
    mu_b = nrm((HEAD * ASPACE,))
    wt_pad = jnp.zeros((2 * E, HEAD * APAD), jnp.float32)
    b_pad = jnp.full((HEAD * APAD,), NEG_BIG, jnp.float32)
    for h in range(HEAD):
        wt_pad = wt_pad.at[:, h * APAD:h * APAD + ASPACE].set(
            mu_wt[:, h * ASPACE:(h + 1) * ASPACE])
        b_pad = b_pad.at[h * APAD:h * APAD + ASPACE].set(
            mu_b[h * ASPACE:(h + 1) * ASPACE])
    params["mu_w"] = jnp.stack([wt_pad[:E], wt_pad[E:]])         # (2, E, HEAD*APAD)
    params["mu_b"] = b_pad.reshape(1, -1)                        # (1, HEAD*APAD)

    # final BatchNorm1d(EMBED): default gamma=1, beta=0
    bn_gamma = jnp.ones((1, E), jnp.float32)
    bn_beta = jnp.zeros((1, E), jnp.float32)

    # ---- packed small vectors (fewer kernel inputs / prologue DMAs) ----------
    # vec_e rows: [fc_b, w_b x4, bn_scale x4, bn_shift x4, gamma, beta] -> (15, E)
    params["vec_e"] = jnp.concatenate(
        [fc_b] + w_b + bn_s + bn_sh + [bn_gamma, bn_beta], axis=0)
    # vec_3e rows: [gtp_b x4, rl_bih, rl_bhh, img_bih, img_bhh] -> (8, 3E)
    params["vec_3e"] = jnp.concatenate(
        gtp_b + [rl_bih, rl_bhh, g_bih, g_bhh], axis=0)
    return params


if __name__ == "__main__":
    key = jax.random.PRNGKey(0)
    k_in, k_par = jax.random.split(key)
    images = jax.random.normal(k_in, (B, R, IMG_DIM), dtype=jnp.float32)
    params = init_params(k_par)

    features, gcn_emd, slog, aimg, log_all = encoder_forward(images, params)
    features, gcn_emd, slog, aimg = jax.block_until_ready(
        (features, gcn_emd, slog, aimg))

    assert features.shape == (B, EMBED)
    assert gcn_emd.shape == (B, R, EMBED)
    assert slog.shape == (B, HEAD, R)
    assert aimg.shape == (B, HEAD, R)
    assert log_all == 1.0
    assert bool(jnp.all(jnp.isfinite(features)))
    assert bool(jnp.all(jnp.isfinite(gcn_emd)))
    assert bool(jnp.all(jnp.isfinite(slog)))
    assert bool(jnp.all(jnp.isfinite(aimg)))
    print("KERNEL_OK")
</pallas_src>

<mosaic_0001>
module attributes {stable_mosaic.version = 11 : i64} {
  func.func @_fused_encoder_kernel(%arg0: memref<16x64xf32, #tpu.memory_space<vmem>>, %arg1: memref<64x32xf32, #tpu.memory_space<vmem>>, %arg2: memref<4x32x96xf32, #tpu.memory_space<vmem>>, %arg3: memref<4x32x32xf32, #tpu.memory_space<vmem>>, %arg4: memref<4x32x96xf32, #tpu.memory_space<vmem>>, %arg5: memref<2x32x1024xf32, #tpu.memory_space<vmem>>, %arg6: memref<15x32xf32, #tpu.memory_space<vmem>>, %arg7: memref<8x96xf32, #tpu.memory_space<vmem>>, %arg8: memref<1x1024xf32, #tpu.memory_space<vmem>>, %arg9: memref<2x32xf32, #tpu.memory_space<vmem>>, %arg10: memref<2x8x32xf32, #tpu.memory_space<vmem>>, %arg11: memref<2x16xf32, #tpu.memory_space<vmem>>, %arg12: memref<2x16xf32, #tpu.memory_space<vmem>>) attributes {dimension_semantics = [], scalar_prefetch = 0 : i64, scratch_operands = 0 : i64, tpu.core_type = #tpu.core_type<tc>} {
    %c0 = arith.constant 0 : index
    %c0_0 = arith.constant 0 : index
    %0 = vector.load %arg6[%c0, %c0_0] : memref<15x32xf32, #tpu.memory_space<vmem>>, vector<15x32xf32>
    %c0_1 = arith.constant 0 : index
    %c0_2 = arith.constant 0 : index
    %1 = vector.load %arg7[%c0_1, %c0_2] : memref<8x96xf32, #tpu.memory_space<vmem>>, vector<8x96xf32>
    %2 = vector.extract_strided_slice %0 {offsets = [0, 0], sizes = [1, 32], strides = [1, 1]} : vector<15x32xf32> to vector<1x32xf32>
    %c0_3 = arith.constant 0 : index
    %c0_4 = arith.constant 0 : index
    %3 = vector.load %arg0[%c0_3, %c0_4] : memref<16x64xf32, #tpu.memory_space<vmem>>, vector<16x64xf32>
    %c0_5 = arith.constant 0 : index
    %c0_6 = arith.constant 0 : index
    %4 = vector.load %arg1[%c0_5, %c0_6] : memref<64x32xf32, #tpu.memory_space<vmem>>, vector<64x32xf32>
    %cst = arith.constant dense<0.000000e+00> : vector<16x32xf32>
    %5 = tpu.matmul %3, %4, %cst {dimension_numbers = #tpu.dot_dimension_numbers<[1], [0], [0], [1], [0, 0, 1, 1], [], []>} : vector<16x64xf32>, vector<64x32xf32>, vector<16x32xf32> -> vector<16x32xf32>
    %6 = vector.broadcast %2 : vector<1x32xf32> to vector<16x32xf32>
    %7 = arith.addf %5, %6 : vector<16x32xf32>
    %8 = vector.shape_cast %7 : vector<16x32xf32> to vector<2x8x32xf32>
    %9 = arith.mulf %8, %8 : vector<2x8x32xf32>
    %cst_7 = arith.constant dense<0.000000e+00> : vector<2x32xf32>
    %10 = vector.multi_reduction <add>, %9, %cst_7 [1] : vector<2x8x32xf32> to vector<2x32xf32>
    %11 = vector.shape_cast %10 : vector<2x32xf32> to vector<2x1x32xf32>
    %cst_8 = arith.constant 9.99999996E-13 : f32
    %12 = vector.broadcast %cst_8 : f32 to vector<2x1x32xf32>
    %13 = arith.addf %11, %12 : vector<2x1x32xf32>
    %14 = math.rsqrt %13 : vector<2x1x32xf32>
    %15 = vector.broadcast %14 : vector<2x1x32xf32> to vector<2x8x32xf32>
    %16 = arith.mulf %8, %15 : vector<2x8x32xf32>
    %17 = vector.shape_cast %16 : vector<2x8x32xf32> to vector<16x32xf32>
    %c0_9 = arith.constant 0 : index
    %c0_10 = arith.constant 0 : index
    %c0_11 = arith.constant 0 : index
    %18 = vector.load %arg2[%c0_9, %c0_10, %c0_11] : memref<4x32x96xf32, #tpu.memory_space<vmem>>, vector<1x32x96xf32>
    %19 = vector.shape_cast %18 : vector<1x32x96xf32> to vector<32x96xf32>
    %cst_12 = arith.constant dense<0.000000e+00> : vector<16x96xf32>
    %20 = tpu.matmul %17, %19, %cst_12 {dimension_numbers = #tpu.dot_dimension_numbers<[1], [0], [0], [1], [0, 0, 1, 1], [], []>} : vector<16x32xf32>, vector<32x96xf32>, vector<16x96xf32> -> vector<16x96xf32>
    %21 = vector.extract_strided_slice %1 {offsets = [0, 0], sizes = [1, 96], strides = [1, 1]} : vector<8x96xf32> to vector<1x96xf32>
    %22 = vector.broadcast %21 : vector<1x96xf32> to vector<16x96xf32>
    %23 = arith.addf %20, %22 : vector<16x96xf32>
    %24 = vector.shape_cast %23 : vector<16x96xf32> to vector<2x8x96xf32>
    %25 = vector.extract_strided_slice %24 {offsets = [0, 0, 0], sizes = [2, 8, 32], strides = [1, 1, 1]} : vector<2x8x96xf32> to vector<2x8x32xf32>
    %26 = vector.extract_strided_slice %24 {offsets = [0, 0, 32], sizes = [2, 8, 32], strides = [1, 1, 1]} : vector<2x8x96xf32> to vector<2x8x32xf32>
    %27 = vector.extract_strided_slice %24 {offsets = [0, 0, 64], sizes = [2, 8, 32], strides = [1, 1, 1]} : vector<2x8x96xf32> to vector<2x8x32xf32>
    "tpu.trace_start"() <{level = 10 : i32, message = "bre,bse->brs"}> : () -> ()
    %cst_13 = arith.constant dense<0.000000e+00> : vector<2x8x8xf32>
    %28 = tpu.matmul %26, %27, %cst_13 {dimension_numbers = #tpu.dot_dimension_numbers<[2], [2], [1], [1], [0, 0, 0, 1, 1, 1], [0], [0]>} : vector<2x8x32xf32>, vector<2x8x32xf32>, vector<2x8x8xf32> -> vector<2x8x8xf32>
    "tpu.trace_stop"() : () -> ()
    %cst_14 = arith.constant 1.250000e-01 : f32
    %29 = vector.broadcast %cst_14 : f32 to vector<2x8x8xf32>
    %30 = arith.mulf %28, %29 : vector<2x8x8xf32>
    "tpu.trace_start"() <{level = 10 : i32, message = "brs,bse->bre"}> : () -> ()
    %cst_15 = arith.constant dense<0.000000e+00> : vector<2x8x32xf32>
    %31 = tpu.matmul %30, %25, %cst_15 {dimension_numbers = #tpu.dot_dimension_numbers<[2], [1], [1], [2], [0, 0, 0, 1, 1, 2], [0], [0]>} : vector<2x8x8xf32>, vector<2x8x32xf32>, vector<2x8x32xf32> -> vector<2x8x32xf32>
    "tpu.trace_stop"() : () -> ()
    %32 = vector.shape_cast %31 : vector<2x8x32xf32> to vector<16x32xf32>
    %c0_16 = arith.constant 0 : index
    %c0_17 = arith.constant 0 : index
    %c0_18 = arith.constant 0 : index
    %33 = vector.load %arg3[%c0_16, %c0_17, %c0_18] : memref<4x32x32xf32, #tpu.memory_space<vmem>>, vector<1x32x32xf32>
    %34 = vector.shape_cast %33 : vector<1x32x32xf32> to vector<32x32xf32>
    %cst_19 = arith.constant dense<0.000000e+00> : vector<16x32xf32>
    %35 = tpu.matmul %32, %34, %cst_19 {dimension_numbers = #tpu.dot_dimension_numbers<[1], [0], [0], [1], [0, 0, 1, 1], [], []>} : vector<16x32xf32>, vector<32x32xf32>, vector<16x32xf32> -> vector<16x32xf32>
    %36 = vector.extract_strided_slice %0 {offsets = [1, 0], sizes = [1, 32], strides = [1, 1]} : vector<15x32xf32> to vector<1x32xf32>
    %37 = vector.broadcast %36 : vector<1x32xf32> to vector<16x32xf32>
    %38 = arith.addf %35, %37 : vector<16x32xf32>
    %39 = vector.extract_strided_slice %0 {offsets = [5, 0], sizes = [1, 32], strides = [1, 1]} : vector<15x32xf32> to vector<1x32xf32>
    %40 = vector.broadcast %39 : vector<1x32xf32> to vector<16x32xf32>
    %41 = arith.mulf %38, %40 : vector<16x32xf32>
    %42 = vector.extract_strided_slice %0 {offsets = [9, 0], sizes = [1, 32], strides = [1, 1]} : vector<15x32xf32> to vector<1x32xf32>
    %43 = vector.broadcast %42 : vector<1x32xf32> to vector<16x32xf32>
    %44 = arith.addf %41, %43 : vector<16x32xf32>
    %45 = arith.addf %44, %17 : vector<16x32xf32>
    %c1 = arith.constant 1 : index
    %c0_20 = arith.constant 0 : index
    %c0_21 = arith.constant 0 : index
    %46 = vector.load %arg2[%c1, %c0_20, %c0_21] : memref<4x32x96xf32, #tpu.memory_space<vmem>>, vector<1x32x96xf32>
    %47 = vector.shape_cast %46 : vector<1x32x96xf32> to vector<32x96xf32>
    %cst_22 = arith.constant dense<0.000000e+00> : vector<16x96xf32>
    %48 = tpu.matmul %45, %47, %cst_22 {dimension_numbers = #tpu.dot_dimension_numbers<[1], [0], [0], [1], [0, 0, 1, 1], [], []>} : vector<16x32xf32>, vector<32x96xf32>, vector<16x96xf32> -> vector<16x96xf32>
    %49 = vector.extract_strided_slice %1 {offsets = [1, 0], sizes = [1, 96], strides = [1, 1]} : vector<8x96xf32> to vector<1x96xf32>
    %50 = vector.broadcast %49 : vector<1x96xf32> to vector<16x96xf32>
    %51 = arith.addf %48, %50 : vector<16x96xf32>
    %52 = vector.shape_cast %51 : vector<16x96xf32> to vector<2x8x96xf32>
    %53 = vector.extract_strided_slice %52 {offsets = [0, 0, 0], sizes = [2, 8, 32], strides = [1, 1, 1]} : vector<2x8x96xf32> to vector<2x8x32xf32>
    %54 = vector.extract_strided_slice %52 {offsets = [0, 0, 32], sizes = [2, 8, 32], strides = [1, 1, 1]} : vector<2x8x96xf32> to vector<2x8x32xf32>
    %55 = vector.extract_strided_slice %52 {offsets = [0, 0, 64], sizes = [2, 8, 32], strides = [1, 1, 1]} : vector<2x8x96xf32> to vector<2x8x32xf32>
    "tpu.trace_start"() <{level = 10 : i32, message = "bre,bse->brs"}> : () -> ()
    %cst_23 = arith.constant dense<0.000000e+00> : vector<2x8x8xf32>
    %56 = tpu.matmul %54, %55, %cst_23 {dimension_numbers = #tpu.dot_dimension_numbers<[2], [2], [1], [1], [0, 0, 0, 1, 1, 1], [0], [0]>} : vector<2x8x32xf32>, vector<2x8x32xf32>, vector<2x8x8xf32> -> vector<2x8x8xf32>
    "tpu.trace_stop"() : () -> ()
    %cst_24 = arith.constant 1.250000e-01 : f32
    %57 = vector.broadcast %cst_24 : f32 to vector<2x8x8xf32>
    %58 = arith.mulf %56, %57 : vector<2x8x8xf32>
    "tpu.trace_start"() <{level = 10 : i32, message = "brs,bse->bre"}> : () -> ()
    %cst_25 = arith.constant dense<0.000000e+00> : vector<2x8x32xf32>
    %59 = tpu.matmul %58, %53, %cst_25 {dimension_numbers = #tpu.dot_dimension_numbers<[2], [1], [1], [2], [0, 0, 0, 1, 1, 2], [0], [0]>} : vector<2x8x8xf32>, vector<2x8x32xf32>, vector<2x8x32xf32> -> vector<2x8x32xf32>
    "tpu.trace_stop"() : () -> ()
    %60 = vector.shape_cast %59 : vector<2x8x32xf32> to vector<16x32xf32>
    %c1_26 = arith.constant 1 : index
    %c0_27 = arith.constant 0 : index
    %c0_28 = arith.constant 0 : index
    %61 = vector.load %arg3[%c1_26, %c0_27, %c0_28] : memref<4x32x32xf32, #tpu.memory_space<vmem>>, vector<1x32x32xf32>
    %62 = vector.shape_cast %61 : vector<1x32x32xf32> to vector<32x32xf32>
    %cst_29 = arith.constant dense<0.000000e+00> : vector<16x32xf32>
    %63 = tpu.matmul %60, %62, %cst_29 {dimension_numbers = #tpu.dot_dimension_numbers<[1], [0], [0], [1], [0, 0, 1, 1], [], []>} : vector<16x32xf32>, vector<32x32xf32>, vector<16x32xf32> -> vector<16x32xf32>
    %64 = vector.extract_strided_slice %0 {offsets = [2, 0], sizes = [1, 32], strides = [1, 1]} : vector<15x32xf32> to vector<1x32xf32>
    %65 = vector.broadcast %64 : vector<1x32xf32> to vector<16x32xf32>
    %66 = arith.addf %63, %65 : vector<16x32xf32>
    %67 = vector.extract_strided_slice %0 {offsets = [6, 0], sizes = [1, 32], strides = [1, 1]} : vector<15x32xf32> to vector<1x32xf32>
    %68 = vector.broadcast %67 : vector<1x32xf32> to vector<16x32xf32>
    %69 = arith.mulf %66, %68 : vector<16x32xf32>
    %70 = vector.extract_strided_slice %0 {offsets = [10, 0], sizes = [1, 32], strides = [1, 1]} : vector<15x32xf32> to vector<1x32xf32>
    %71 = vector.broadcast %70 : vector<1x32xf32> to vector<16x32xf32>
    %72 = arith.addf %69, %71 : vector<16x32xf32>
    %73 = arith.addf %72, %45 : vector<16x32xf32>
    %c2 = arith.constant 2 : index
    %c0_30 = arith.constant 0 : index
    %c0_31 = arith.constant 0 : index
    %74 = vector.load %arg2[%c2, %c0_30, %c0_31] : memref<4x32x96xf32, #tpu.memory_space<vmem>>, vector<1x32x96xf32>
    %75 = vector.shape_cast %74 : vector<1x32x96xf32> to vector<32x96xf32>
    %cst_32 = arith.constant dense<0.000000e+00> : vector<16x96xf32>
    %76 = tpu.matmul %73, %75, %cst_32 {dimension_numbers = #tpu.dot_dimension_numbers<[1], [0], [0], [1], [0, 0, 1, 1], [], []>} : vector<16x32xf32>, vector<32x96xf32>, vector<16x96xf32> -> vector<16x96xf32>
    %77 = vector.extract_strided_slice %1 {offsets = [2, 0], sizes = [1, 96], strides = [1, 1]} : vector<8x96xf32> to vector<1x96xf32>
    %78 = vector.broadcast %77 : vector<1x96xf32> to vector<16x96xf32>
    %79 = arith.addf %76, %78 : vector<16x96xf32>
    %80 = vector.shape_cast %79 : vector<16x96xf32> to vector<2x8x96xf32>
    %81 = vector.extract_strided_slice %80 {offsets = [0, 0, 0], sizes = [2, 8, 32], strides = [1, 1, 1]} : vector<2x8x96xf32> to vector<2x8x32xf32>
    %82 = vector.extract_strided_slice %80 {offsets = [0, 0, 32], sizes = [2, 8, 32], strides = [1, 1, 1]} : vector<2x8x96xf32> to vector<2x8x32xf32>
    %83 = vector.extract_strided_slice %80 {offsets = [0, 0, 64], sizes = [2, 8, 32], strides = [1, 1, 1]} : vector<2x8x96xf32> to vector<2x8x32xf32>
    "tpu.trace_start"() <{level = 10 : i32, message = "bre,bse->brs"}> : () -> ()
    %cst_33 = arith.constant dense<0.000000e+00> : vector<2x8x8xf32>
    %84 = tpu.matmul %82, %83, %cst_33 {dimension_numbers = #tpu.dot_dimension_numbers<[2], [2], [1], [1], [0, 0, 0, 1, 1, 1], [0], [0]>} : vector<2x8x32xf32>, vector<2x8x32xf32>, vector<2x8x8xf32> -> vector<2x8x8xf32>
    "tpu.trace_stop"() : () -> ()
    %cst_34 = arith.constant 1.250000e-01 : f32
    %85 = vector.broadcast %cst_34 : f32 to vector<2x8x8xf32>
    %86 = arith.mulf %84, %85 : vector<2x8x8xf32>
    "tpu.trace_start"() <{level = 10 : i32, message = "brs,bse->bre"}> : () -> ()
    %cst_35 = arith.constant dense<0.000000e+00> : vector<2x8x32xf32>
    %87 = tpu.matmul %86, %81, %cst_35 {dimension_numbers = #tpu.dot_dimension_numbers<[2], [1], [1], [2], [0, 0, 0, 1, 1, 2], [0], [0]>} : vector<2x8x8xf32>, vector<2x8x32xf32>, vector<2x8x32xf32> -> vector<2x8x32xf32>
    "tpu.trace_stop"() : () -> ()
    %88 = vector.shape_cast %87 : vector<2x8x32xf32> to vector<16x32xf32>
    %c2_36 = arith.constant 2 : index
    %c0_37 = arith.constant 0 : index
    %c0_38 = arith.constant 0 : index
    %89 = vector.load %arg3[%c2_36, %c0_37, %c0_38] : memref<4x32x32xf32, #tpu.memory_space<vmem>>, vector<1x32x32xf32>
    %90 = vector.shape_cast %89 : vector<1x32x32xf32> to vector<32x32xf32>
    %cst_39 = arith.constant dense<0.000000e+00> : vector<16x32xf32>
    %91 = tpu.matmul %88, %90, %cst_39 {dimension_numbers = #tpu.dot_dimension_numbers<[1], [0], [0], [1], [0, 0, 1, 1], [], []>} : vector<16x32xf32>, vector<32x32xf32>, vector<16x32xf32> -> vector<16x32xf32>
    %92 = vector.extract_strided_slice %0 {offsets = [3, 0], sizes = [1, 32], strides = [1, 1]} : vector<15x32xf32> to vector<1x32xf32>
    %93 = vector.broadcast %92 : vector<1x32xf32> to vector<16x32xf32>
    %94 = arith.addf %91, %93 : vector<16x32xf32>
    %95 = vector.extract_strided_slice %0 {offsets = [7, 0], sizes = [1, 32], strides = [1, 1]} : vector<15x32xf32> to vector<1x32xf32>
    %96 = vector.broadcast %95 : vector<1x32xf32> to vector<16x32xf32>
    %97 = arith.mulf %94, %96 : vector<16x32xf32>
    %98 = vector.extract_strided_slice %0 {offsets = [11, 0], sizes = [1, 32], strides = [1, 1]} : vector<15x32xf32> to vector<1x32xf32>
    %99 = vector.broadcast %98 : vector<1x32xf32> to vector<16x32xf32>
    %100 = arith.addf %97, %99 : vector<16x32xf32>
    %101 = arith.addf %100, %73 : vector<16x32xf32>
    %c3 = arith.constant 3 : index
    %c0_40 = arith.constant 0 : index
    %c0_41 = arith.constant 0 : index
    %102 = vector.load %arg2[%c3, %c0_40, %c0_41] : memref<4x32x96xf32, #tpu.memory_space<vmem>>, vector<1x32x96xf32>
    %103 = vector.shape_cast %102 : vector<1x32x96xf32> to vector<32x96xf32>
    %cst_42 = arith.constant dense<0.000000e+00> : vector<16x96xf32>
    %104 = tpu.matmul %101, %103, %cst_42 {dimension_numbers = #tpu.dot_dimension_numbers<[1], [0], [0], [1], [0, 0, 1, 1], [], []>} : vector<16x32xf32>, vector<32x96xf32>, vector<16x96xf32> -> vector<16x96xf32>
    %105 = vector.extract_strided_slice %1 {offsets = [3, 0], sizes = [1, 96], strides = [1, 1]} : vector<8x96xf32> to vector<1x96xf32>
    %106 = vector.broadcast %105 : vector<1x96xf32> to vector<16x96xf32>
    %107 = arith.addf %104, %106 : vector<16x96xf32>
    %108 = vector.shape_cast %107 : vector<16x96xf32> to vector<2x8x96xf32>
    %109 = vector.extract_strided_slice %108 {offsets = [0, 0, 0], sizes = [2, 8, 32], strides = [1, 1, 1]} : vector<2x8x96xf32> to vector<2x8x32xf32>
    %110 = vector.extract_strided_slice %108 {offsets = [0, 0, 32], sizes = [2, 8, 32], strides = [1, 1, 1]} : vector<2x8x96xf32> to vector<2x8x32xf32>
    %111 = vector.extract_strided_slice %108 {offsets = [0, 0, 64], sizes = [2, 8, 32], strides = [1, 1, 1]} : vector<2x8x96xf32> to vector<2x8x32xf32>
    "tpu.trace_start"() <{level = 10 : i32, message = "bre,bse->brs"}> : () -> ()
    %cst_43 = arith.constant dense<0.000000e+00> : vector<2x8x8xf32>
    %112 = tpu.matmul %110, %111, %cst_43 {dimension_numbers = #tpu.dot_dimension_numbers<[2], [2], [1], [1], [0, 0, 0, 1, 1, 1], [0], [0]>} : vector<2x8x32xf32>, vector<2x8x32xf32>, vector<2x8x8xf32> -> vector<2x8x8xf32>
    "tpu.trace_stop"() : () -> ()
    %cst_44 = arith.constant 1.250000e-01 : f32
    %113 = vector.broadcast %cst_44 : f32 to vector<2x8x8xf32>
    %114 = arith.mulf %112, %113 : vector<2x8x8xf32>
    "tpu.trace_start"() <{level = 10 : i32, message = "brs,bse->bre"}> : () -> ()
    %cst_45 = arith.constant dense<0.000000e+00> : vector<2x8x32xf32>
    %115 = tpu.matmul %114, %109, %cst_45 {dimension_numbers = #tpu.dot_dimension_numbers<[2], [1], [1], [2], [0, 0, 0, 1, 1, 2], [0], [0]>} : vector<2x8x8xf32>, vector<2x8x32xf32>, vector<2x8x32xf32> -> vector<2x8x32xf32>
    "tpu.trace_stop"() : () -> ()
    %116 = vector.shape_cast %115 : vector<2x8x32xf32> to vector<16x32xf32>
    %c3_46 = arith.constant 3 : index
    %c0_47 = arith.constant 0 : index
    %c0_48 = arith.constant 0 : index
    %117 = vector.load %arg3[%c3_46, %c0_47, %c0_48] : memref<4x32x32xf32, #tpu.memory_space<vmem>>, vector<1x32x32xf32>
    %118 = vector.shape_cast %117 : vector<1x32x32xf32> to vector<32x32xf32>
    %cst_49 = arith.constant dense<0.000000e+00> : vector<16x32xf32>
    %119 = tpu.matmul %116, %118, %cst_49 {dimension_numbers = #tpu.dot_dimension_numbers<[1], [0], [0], [1], [0, 0, 1, 1], [], []>} : vector<16x32xf32>, vector<32x32xf32>, vector<16x32xf32> -> vector<16x32xf32>
    %120 = vector.extract_strided_slice %0 {offsets = [4, 0], sizes = [1, 32], strides = [1, 1]} : vector<15x32xf32> to vector<1x32xf32>
    %121 = vector.broadcast %120 : vector<1x32xf32> to vector<16x32xf32>
    %122 = arith.addf %119, %121 : vector<16x32xf32>
    %123 = vector.extract_strided_slice %0 {offsets = [8, 0], sizes = [1, 32], strides = [1, 1]} : vector<15x32xf32> to vector<1x32xf32>
    %124 = vector.broadcast %123 : vector<1x32xf32> to vector<16x32xf32>
    %125 = arith.mulf %122, %124 : vector<16x32xf32>
    %126 = vector.extract_strided_slice %0 {offsets = [12, 0], sizes = [1, 32], strides = [1, 1]} : vector<15x32xf32> to vector<1x32xf32>
    %127 = vector.broadcast %126 : vector<1x32xf32> to vector<16x32xf32>
    %128 = arith.addf %125, %127 : vector<16x32xf32>
    %129 = arith.addf %128, %101 : vector<16x32xf32>
    %130 = vector.shape_cast %129 : vector<16x32xf32> to vector<2x8x32xf32>
    %131 = arith.mulf %130, %130 : vector<2x8x32xf32>
    %cst_50 = arith.constant dense<0.000000e+00> : vector<2x32xf32>
    %132 = vector.multi_reduction <add>, %131, %cst_50 [1] : vector<2x8x32xf32> to vector<2x32xf32>
    %133 = vector.shape_cast %132 : vector<2x32xf32> to vector<2x1x32xf32>
    %cst_51 = arith.constant 9.99999996E-13 : f32
    %134 = vector.broadcast %cst_51 : f32 to vector<2x1x32xf32>
    %135 = arith.addf %133, %134 : vector<2x1x32xf32>
    %136 = math.rsqrt %135 : vector<2x1x32xf32>
    %137 = vector.broadcast %136 : vector<2x1x32xf32> to vector<2x8x32xf32>
    %138 = arith.mulf %130, %137 : vector<2x8x32xf32>
    %139 = vector.shape_cast %138 : vector<2x8x32xf32> to vector<16x32xf32>
    %140 = vector.shape_cast %139 : vector<16x32xf32> to vector<2x8x32xf32>
    %c0_52 = arith.constant 0 : index
    %c0_53 = arith.constant 0 : index
    %c0_54 = arith.constant 0 : index
    %141 = vector.load %arg10[%c0_52, %c0_53, %c0_54] : memref<2x8x32xf32, #tpu.memory_space<vmem>>, vector<2x8x32xf32>
    tpu.vector_store %arg10[%c0_52, %c0_53, %c0_54], %140 {strides = array<i32>} : memref<2x8x32xf32, #tpu.memory_space<vmem>>, vector<2x8x32xf32>,
    %142 = vector.shape_cast %139 : vector<16x32xf32> to vector<2x8x32xf32>
    %143 = tpu.transpose %142, [1, 0, 2] : vector<2x8x32xf32> -> vector<8x2x32xf32>
    %144 = vector.shape_cast %143 : vector<8x2x32xf32> to vector<16x32xf32>
    %c0_55 = arith.constant 0 : index
    %c0_56 = arith.constant 0 : index
    %c0_57 = arith.constant 0 : index
    %145 = vector.load %arg4[%c0_55, %c0_56, %c0_57] : memref<4x32x96xf32, #tpu.memory_space<vmem>>, vector<1x32x96xf32>
    %146 = vector.shape_cast %145 : vector<1x32x96xf32> to vector<32x96xf32>
    %c1_58 = arith.constant 1 : index
    %c0_59 = arith.constant 0 : index
    %c0_60 = arith.constant 0 : index
    %147 = vector.load %arg4[%c1_58, %c0_59, %c0_60] : memref<4x32x96xf32, #tpu.memory_space<vmem>>, vector<1x32x96xf32>
    %148 = vector.shape_cast %147 : vector<1x32x96xf32> to vector<32x96xf32>
    %c2_61 = arith.constant 2 : index
    %c0_62 = arith.constant 0 : index
    %c0_63 = arith.constant 0 : index
    %149 = vector.load %arg4[%c2_61, %c0_62, %c0_63] : memref<4x32x96xf32, #tpu.memory_space<vmem>>, vector<1x32x96xf32>
    %150 = vector.shape_cast %149 : vector<1x32x96xf32> to vector<32x96xf32>
    %c3_64 = arith.constant 3 : index
    %c0_65 = arith.constant 0 : index
    %c0_66 = arith.constant 0 : index
    %151 = vector.load %arg4[%c3_64, %c0_65, %c0_66] : memref<4x32x96xf32, #tpu.memory_space<vmem>>, vector<1x32x96xf32>
    %152 = vector.shape_cast %151 : vector<1x32x96xf32> to vector<32x96xf32>
    %153 = vector.extract_strided_slice %1 {offsets = [4, 0], sizes = [1, 96], strides = [1, 1]} : vector<8x96xf32> to vector<1x96xf32>
    %154 = vector.extract_strided_slice %1 {offsets = [5, 0], sizes = [1, 96], strides = [1, 1]} : vector<8x96xf32> to vector<1x96xf32>
    %155 = vector.extract_strided_slice %1 {offsets = [6, 0], sizes = [1, 96], strides = [1, 1]} : vector<8x96xf32> to vector<1x96xf32>
    %156 = vector.extract_strided_slice %1 {offsets = [7, 0], sizes = [1, 96], strides = [1, 1]} : vector<8x96xf32> to vector<1x96xf32>
    %cst_67 = arith.constant dense<0.000000e+00> : vector<16x96xf32>
    %157 = tpu.matmul %144, %146, %cst_67 {dimension_numbers = #tpu.dot_dimension_numbers<[1], [0], [0], [1], [0, 0, 1, 1], [], []>} : vector<16x32xf32>, vector<32x96xf32>, vector<16x96xf32> -> vector<16x96xf32>
    %158 = vector.broadcast %153 : vector<1x96xf32> to vector<16x96xf32>
    %159 = arith.addf %157, %158 : vector<16x96xf32>
    %cst_68 = arith.constant 0.000000e+00 : f32
    %160 = vector.broadcast %cst_68 : f32 to vector<16x32xf32>
    %161 = arith.maximumf %144, %160 : vector<16x32xf32>
    %c0_69 = arith.constant 0 : index
    %c0_70 = arith.constant 0 : index
    %c0_71 = arith.constant 0 : index
    %162 = vector.load %arg5[%c0_69, %c0_70, %c0_71] : memref<2x32x1024xf32, #tpu.memory_space<vmem>>, vector<1x32x1024xf32>
    %163 = vector.shape_cast %162 : vector<1x32x1024xf32> to vector<32x1024xf32>
    %cst_72 = arith.constant dense<0.000000e+00> : vector<16x1024xf32>
    %164 = tpu.matmul %161, %163, %cst_72 {dimension_numbers = #tpu.dot_dimension_numbers<[1], [0], [0], [1], [0, 0, 1, 1], [], []>} : vector<16x32xf32>, vector<32x1024xf32>, vector<16x1024xf32> -> vector<16x1024xf32>
    %c0_73 = arith.constant 0 : index
    %c0_74 = arith.constant 0 : index
    %165 = vector.load %arg8[%c0_73, %c0_74] : memref<1x1024xf32, #tpu.memory_space<vmem>>, vector<1x1024xf32>
    %166 = vector.broadcast %165 : vector<1x1024xf32> to vector<16x1024xf32>
    %167 = arith.addf %164, %166 : vector<16x1024xf32>
    %c1_75 = arith.constant 1 : index
    %c0_76 = arith.constant 0 : index
    %c0_77 = arith.constant 0 : index
    %168 = vector.load %arg5[%c1_75, %c0_76, %c0_77] : memref<2x32x1024xf32, #tpu.memory_space<vmem>>, vector<1x32x1024xf32>
    %169 = vector.shape_cast %168 : vector<1x32x1024xf32> to vector<32x1024xf32>
    %170 = vector.shape_cast %154 : vector<1x96xf32> to vector<1x96xf32>
    %171 = vector.broadcast %170 : vector<1x96xf32> to vector<2x96xf32>
    %172 = vector.shape_cast %155 : vector<1x96xf32> to vector<1x96xf32>
    %173 = vector.broadcast %172 : vector<1x96xf32> to vector<2x96xf32>
    %174 = vector.shape_cast %156 : vector<1x96xf32> to vector<1x96xf32>
    %175 = vector.broadcast %174 : vector<1x96xf32> to vector<2x96xf32>
    %176 = tpu.iota {dimensions = array<i32: 1>} : vector<2x32xi32>
    %177 = tpu.iota {dimensions = array<i32: 2>} : vector<2x2x512xi32>
    %cst_78 = arith.constant 0.000000e+00 : f32
    %178 = vector.broadcast %cst_78 : f32 to vector<2x32xf32>
    %cst_79 = arith.constant 0.000000e+00 : f32
    %179 = vector.broadcast %cst_79 : f32 to vector<2x32xf32>
    %cst_80 = arith.constant 0.000000e+00 : f32
    %180 = vector.broadcast %cst_80 : f32 to vector<2x32xf32>
    %181 = vector.extract_strided_slice %144 {offsets = [0, 0], sizes = [2, 32], strides = [1, 1]} : vector<16x32xf32> to vector<2x32xf32>
    %cst_81 = arith.constant dense<0.000000e+00> : vector<2x96xf32>
    %182 = tpu.matmul %178, %148, %cst_81 {dimension_numbers = #tpu.dot_dimension_numbers<[1], [0], [0], [1], [0, 0, 1, 1], [], []>} : vector<2x32xf32>, vector<32x96xf32>, vector<2x96xf32> -> vector<2x96xf32>
    %183 = arith.addf %182, %171 : vector<2x96xf32>
    %184 = vector.extract_strided_slice %159 {offsets = [0, 0], sizes = [2, 96], strides = [1, 1]} : vector<16x96xf32> to vector<2x96xf32>
    %185 = vector.extract_strided_slice %184 {offsets = [0, 0], sizes = [2, 32], strides = [1, 1]} : vector<2x96xf32> to vector<2x32xf32>
    %186 = vector.extract_strided_slice %183 {offsets = [0, 0], sizes = [2, 32], strides = [1, 1]} : vector<2x96xf32> to vector<2x32xf32>
    %187 = arith.addf %185, %186 : vector<2x32xf32>
    %188 = arith.negf %187 : vector<2x32xf32>
    %189 = math.exp %188 : vector<2x32xf32>
    %cst_82 = arith.constant 1.000000e+00 : f32
    %190 = vector.broadcast %cst_82 : f32 to vector<2x32xf32>
    %191 = arith.addf %190, %189 : vector<2x32xf32>
    %192 = arith.divf %190, %191 : vector<2x32xf32>
    %193 = vector.extract_strided_slice %184 {offsets = [0, 32], sizes = [2, 32], strides = [1, 1]} : vector<2x96xf32> to vector<2x32xf32>
    %194 = vector.extract_strided_slice %183 {offsets = [0, 32], sizes = [2, 32], strides = [1, 1]} : vector<2x96xf32> to vector<2x32xf32>
    %195 = arith.addf %193, %194 : vector<2x32xf32>
    %196 = arith.negf %195 : vector<2x32xf32>
    %197 = math.exp %196 : vector<2x32xf32>
    %cst_83 = arith.constant 1.000000e+00 : f32
    %198 = vector.broadcast %cst_83 : f32 to vector<2x32xf32>
    %199 = arith.addf %198, %197 : vector<2x32xf32>
    %200 = arith.divf %198, %199 : vector<2x32xf32>
    %201 = vector.extract_strided_slice %184 {offsets = [0, 64], sizes = [2, 32], strides = [1, 1]} : vector<2x96xf32> to vector<2x32xf32>
    %202 = vector.extract_strided_slice %183 {offsets = [0, 64], sizes = [2, 32], strides = [1, 1]} : vector<2x96xf32> to vector<2x32xf32>
    %203 = arith.mulf %192, %202 : vector<2x32xf32>
    %204 = arith.addf %201, %203 : vector<2x32xf32>
    %205 = math.tanh %204 : vector<2x32xf32>
    %cst_84 = arith.constant 1.000000e+00 : f32
    %206 = vector.broadcast %cst_84 : f32 to vector<2x32xf32>
    %207 = arith.subf %206, %200 : vector<2x32xf32>
    %208 = arith.mulf %207, %205 : vector<2x32xf32>
    %209 = arith.mulf %200, %178 : vector<2x32xf32>
    %210 = arith.addf %208, %209 : vector<2x32xf32>
    %211 = vector.extract_strided_slice %167 {offsets = [0, 0], sizes = [2, 1024], strides = [1, 1]} : vector<16x1024xf32> to vector<2x1024xf32>
    %cst_85 = arith.constant 0.000000e+00 : f32
    %212 = vector.broadcast %cst_85 : f32 to vector<2x32xf32>
    %213 = arith.maximumf %210, %212 : vector<2x32xf32>
    %cst_86 = arith.constant dense<0.000000e+00> : vector<2x1024xf32>
    %214 = tpu.matmul %213, %169, %cst_86 {dimension_numbers = #tpu.dot_dimension_numbers<[1], [0], [0], [1], [0, 0, 1, 1], [], []>} : vector<2x32xf32>, vector<32x1024xf32>, vector<2x1024xf32> -> vector<2x1024xf32>
    %215 = arith.addf %211, %214 : vector<2x1024xf32>
    %216 = vector.shape_cast %215 : vector<2x1024xf32> to vector<2x2x512xf32>
    %cst_87 = arith.constant 1.250000e+00 : f32
    %217 = vector.broadcast %cst_87 : f32 to vector<2x2x512xf32>
    %218 = arith.mulf %216, %217 : vector<2x2x512xf32>
    %cst_88 = arith.constant dense<0xFF800000> : vector<2x2xf32>
    %219 = vector.multi_reduction <maximumf>, %218, %cst_88 [2] : vector<2x2x512xf32> to vector<2x2xf32>
    %220 = vector.shape_cast %219 : vector<2x2xf32> to vector<2x2x1xf32>
    %221 = vector.broadcast %220 : vector<2x2x1xf32> to vector<2x2x512xf32>
    %222 = arith.subf %218, %221 : vector<2x2x512xf32>
    %223 = math.exp %222 : vector<2x2x512xf32>
    %cst_89 = arith.constant dense<0.000000e+00> : vector<2x2xf32>
    %224 = vector.multi_reduction <add>, %223, %cst_89 [2] : vector<2x2x512xf32> to vector<2x2xf32>
    %225 = vector.shape_cast %224 : vector<2x2xf32> to vector<2x2x1xf32>
    %226 = math.log %225 : vector<2x2x1xf32>
    %cst_90 = arith.constant 0.000000e+00 : f32
    %227 = vector.broadcast %cst_90 : f32 to vector<2x2x1xf32>
    %228 = arith.subf %227, %226 : vector<2x2x1xf32>
    %229 = vector.broadcast %220 : vector<2x2x1xf32> to vector<2x2x512xf32>
    %230 = arith.cmpf oeq, %218, %229 : vector<2x2x512xf32>
    %c512_i32 = arith.constant 512 : i32
    %231 = vector.broadcast %c512_i32 : i32 to vector<2x2x512xi32>
    %232 = arith.select %230, %177, %231 : vector<2x2x512xi1>, vector<2x2x512xi32>
    %cst_91 = arith.constant dense<2147483647> : vector<2x2xi32>
    %233 = vector.multi_reduction <minsi>, %232, %cst_91 [2] : vector<2x2x512xi32> to vector<2x2xi32>
    %234 = vector.shape_cast %233 : vector<2x2xi32> to vector<2x2x1xi32>
    %235 = arith.sitofp %234 : vector<2x2x1xi32> to vector<2x2x1xf32>
    %cst_92 = arith.constant 2.000000e-03 : f32
    %236 = vector.broadcast %cst_92 : f32 to vector<2x2x1xf32>
    %237 = arith.mulf %235, %236 : vector<2x2x1xf32>
    %238 = arith.negf %237 : vector<2x2x1xf32>
    %239 = math.exp %238 : vector<2x2x1xf32>
    %cst_93 = arith.constant 1.000000e+00 : f32
    %240 = vector.broadcast %cst_93 : f32 to vector<2x2x1xf32>
    %241 = arith.addf %240, %239 : vector<2x2x1xf32>
    %242 = arith.divf %240, %241 : vector<2x2x1xf32>
    %cst_94 = arith.constant 2.000000e+01 : f32
    %243 = vector.broadcast %cst_94 : f32 to vector<2x2x1xf32>
    %244 = arith.mulf %243, %242 : vector<2x2x1xf32>
    %245 = vector.shape_cast %228 : vector<2x2x1xf32> to vector<2x2xf32>
    %246 = vector.shape_cast %237 : vector<2x2x1xf32> to vector<2x2xf32>
    %247 = vector.extract_strided_slice %244 {offsets = [0, 0, 0], sizes = [2, 1, 1], strides = [1, 1, 1]} : vector<2x2x1xf32> to vector<2x1x1xf32>
    %248 = vector.shape_cast %247 : vector<2x1x1xf32> to vector<2x1xf32>
    %249 = vector.shape_cast %248 : vector<2x1xf32> to vector<2x1xf32>
    %250 = vector.broadcast %249 : vector<2x1xf32> to vector<2x32xf32>
    %c16_i32 = arith.constant 16 : i32
    %251 = vector.broadcast %c16_i32 : i32 to vector<2x32xi32>
    %252 = arith.cmpi sge, %176, %251 : vector<2x32xi32>
    %253 = vector.extract_strided_slice %244 {offsets = [0, 1, 0], sizes = [2, 1, 1], strides = [1, 1, 1]} : vector<2x2x1xf32> to vector<2x1x1xf32>
    %254 = vector.shape_cast %253 : vector<2x1x1xf32> to vector<2x1xf32>
    %255 = vector.shape_cast %254 : vector<2x1xf32> to vector<2x1xf32>
    %256 = vector.broadcast %255 : vector<2x1xf32> to vector<2x32xf32>
    %257 = arith.select %252, %256, %250 : vector<2x32xi1>, vector<2x32xf32>
    %258 = arith.mulf %181, %257 : vector<2x32xf32>
    %259 = arith.addf %180, %258 : vector<2x32xf32>
    %cst_95 = arith.constant dense<0.000000e+00> : vector<2x96xf32>
    %260 = tpu.matmul %258, %150, %cst_95 {dimension_numbers = #tpu.dot_dimension_numbers<[1], [0], [0], [1], [0, 0, 1, 1], [], []>} : vector<2x32xf32>, vector<32x96xf32>, vector<2x96xf32> -> vector<2x96xf32>
    %261 = arith.addf %260, %173 : vector<2x96xf32>
    %cst_96 = arith.constant dense<0.000000e+00> : vector<2x96xf32>
    %262 = tpu.matmul %179, %152, %cst_96 {dimension_numbers = #tpu.dot_dimension_numbers<[1], [0], [0], [1], [0, 0, 1, 1], [], []>} : vector<2x32xf32>, vector<32x96xf32>, vector<2x96xf32> -> vector<2x96xf32>
    %263 = arith.addf %262, %175 : vector<2x96xf32>
    %264 = vector.extract_strided_slice %261 {offsets = [0, 0], sizes = [2, 32], strides = [1, 1]} : vector<2x96xf32> to vector<2x32xf32>
    %265 = vector.extract_strided_slice %263 {offsets = [0, 0], sizes = [2, 32], strides = [1, 1]} : vector<2x96xf32> to vector<2x32xf32>
    %266 = arith.addf %264, %265 : vector<2x32xf32>
    %267 = arith.negf %266 : vector<2x32xf32>
    %268 = math.exp %267 : vector<2x32xf32>
    %cst_97 = arith.constant 1.000000e+00 : f32
    %269 = vector.broadcast %cst_97 : f32 to vector<2x32xf32>
    %270 = arith.addf %269, %268 : vector<2x32xf32>
    %271 = arith.divf %269, %270 : vector<2x32xf32>
    %272 = vector.extract_strided_slice %261 {offsets = [0, 32], sizes = [2, 32], strides = [1, 1]} : vector<2x96xf32> to vector<2x32xf32>
    %273 = vector.extract_strided_slice %263 {offsets = [0, 32], sizes = [2, 32], strides = [1, 1]} : vector<2x96xf32> to vector<2x32xf32>
    %274 = arith.addf %272, %273 : vector<2x32xf32>
    %275 = arith.negf %274 : vector<2x32xf32>
    %276 = math.exp %275 : vector<2x32xf32>
    %cst_98 = arith.constant 1.000000e+00 : f32
    %277 = vector.broadcast %cst_98 : f32 to vector<2x32xf32>
    %278 = arith.addf %277, %276 : vector<2x32xf32>
    %279 = arith.divf %277, %278 : vector<2x32xf32>
    %280 = vector.extract_strided_slice %261 {offsets = [0, 64], sizes = [2, 32], strides = [1, 1]} : vector<2x96xf32> to vector<2x32xf32>
    %281 = vector.extract_strided_slice %263 {offsets = [0, 64], sizes = [2, 32], strides = [1, 1]} : vector<2x96xf32> to vector<2x32xf32>
    %282 = arith.mulf %271, %281 : vector<2x32xf32>
    %283 = arith.addf %280, %282 : vector<2x32xf32>
    %284 = math.tanh %283 : vector<2x32xf32>
    %cst_99 = arith.constant 1.000000e+00 : f32
    %285 = vector.broadcast %cst_99 : f32 to vector<2x32xf32>
    %286 = arith.subf %285, %279 : vector<2x32xf32>
    %287 = arith.mulf %286, %284 : vector<2x32xf32>
    %288 = arith.mulf %279, %179 : vector<2x32xf32>
    %289 = arith.addf %287, %288 : vector<2x32xf32>
    %290 = vector.extract_strided_slice %144 {offsets = [2, 0], sizes = [2, 32], strides = [1, 1]} : vector<16x32xf32> to vector<2x32xf32>
    %cst_100 = arith.constant dense<0.000000e+00> : vector<2x96xf32>
    %291 = tpu.matmul %210, %148, %cst_100 {dimension_numbers = #tpu.dot_dimension_numbers<[1], [0], [0], [1], [0, 0, 1, 1], [], []>} : vector<2x32xf32>, vector<32x96xf32>, vector<2x96xf32> -> vector<2x96xf32>
    %292 = arith.addf %291, %171 : vector<2x96xf32>
    %293 = vector.extract_strided_slice %159 {offsets = [2, 0], sizes = [2, 96], strides = [1, 1]} : vector<16x96xf32> to vector<2x96xf32>
    %294 = vector.extract_strided_slice %293 {offsets = [0, 0], sizes = [2, 32], strides = [1, 1]} : vector<2x96xf32> to vector<2x32xf32>
    %295 = vector.extract_strided_slice %292 {offsets = [0, 0], sizes = [2, 32], strides = [1, 1]} : vector<2x96xf32> to vector<2x32xf32>
    %296 = arith.addf %294, %295 : vector<2x32xf32>
    %297 = arith.negf %296 : vector<2x32xf32>
    %298 = math.exp %297 : vector<2x32xf32>
    %cst_101 = arith.constant 1.000000e+00 : f32
    %299 = vector.broadcast %cst_101 : f32 to vector<2x32xf32>
    %300 = arith.addf %299, %298 : vector<2x32xf32>
    %301 = arith.divf %299, %300 : vector<2x32xf32>
    %302 = vector.extract_strided_slice %293 {offsets = [0, 32], sizes = [2, 32], strides = [1, 1]} : vector<2x96xf32> to vector<2x32xf32>
    %303 = vector.extract_strided_slice %292 {offsets = [0, 32], sizes = [2, 32], strides = [1, 1]} : vector<2x96xf32> to vector<2x32xf32>
    %304 = arith.addf %302, %303 : vector<2x32xf32>
    %305 = arith.negf %304 : vector<2x32xf32>
    %306 = math.exp %305 : vector<2x32xf32>
    %cst_102 = arith.constant 1.000000e+00 : f32
    %307 = vector.broadcast %cst_102 : f32 to vector<2x32xf32>
    %308 = arith.addf %307, %306 : vector<2x32xf32>
    %309 = arith.divf %307, %308 : vector<2x32xf32>
    %310 = vector.extract_strided_slice %293 {offsets = [0, 64], sizes = [2, 32], strides = [1, 1]} : vector<2x96xf32> to vector<2x32xf32>
    %311 = vector.extract_strided_slice %292 {offsets = [0, 64], sizes = [2, 32], strides = [1, 1]} : vector<2x96xf32> to vector<2x32xf32>
    %312 = arith.mulf %301, %311 : vector<2x32xf32>
    %313 = arith.addf %310, %312 : vector<2x32xf32>
    %314 = math.tanh %313 : vector<2x32xf32>
    %cst_103 = arith.constant 1.000000e+00 : f32
    %315 = vector.broadcast %cst_103 : f32 to vector<2x32xf32>
    %316 = arith.subf %315, %309 : vector<2x32xf32>
    %317 = arith.mulf %316, %314 : vector<2x32xf32>
    %318 = arith.mulf %309, %210 : vector<2x32xf32>
    %319 = arith.addf %317, %318 : vector<2x32xf32>
    %320 = vector.extract_strided_slice %167 {offsets = [2, 0], sizes = [2, 1024], strides = [1, 1]} : vector<16x1024xf32> to vector<2x1024xf32>
    %cst_104 = arith.constant 0.000000e+00 : f32
    %321 = vector.broadcast %cst_104 : f32 to vector<2x32xf32>
    %322 = arith.maximumf %319, %321 : vector<2x32xf32>
    %cst_105 = arith.constant dense<0.000000e+00> : vector<2x1024xf32>
    %323 = tpu.matmul %322, %169, %cst_105 {dimension_numbers = #tpu.dot_dimension_numbers<[1], [0], [0], [1], [0, 0, 1, 1], [], []>} : vector<2x32xf32>, vector<32x1024xf32>, vector<2x1024xf32> -> vector<2x1024xf32>
    %324 = arith.addf %320, %323 : vector<2x1024xf32>
    %325 = vector.shape_cast %324 : vector<2x1024xf32> to vector<2x2x512xf32>
    %cst_106 = arith.constant 1.250000e+00 : f32
    %326 = vector.broadcast %cst_106 : f32 to vector<2x2x512xf32>
    %327 = arith.mulf %325, %326 : vector<2x2x512xf32>
    %cst_107 = arith.constant dense<0xFF800000> : vector<2x2xf32>
    %328 = vector.multi_reduction <maximumf>, %327, %cst_107 [2] : vector<2x2x512xf32> to vector<2x2xf32>
    %329 = vector.shape_cast %328 : vector<2x2xf32> to vector<2x2x1xf32>
    %330 = vector.broadcast %329 : vector<2x2x1xf32> to vector<2x2x512xf32>
    %331 = arith.subf %327, %330 : vector<2x2x512xf32>
    %332 = math.exp %331 : vector<2x2x512xf32>
    %cst_108 = arith.constant dense<0.000000e+00> : vector<2x2xf32>
    %333 = vector.multi_reduction <add>, %332, %cst_108 [2] : vector<2x2x512xf32> to vector<2x2xf32>
    %334 = vector.shape_cast %333 : vector<2x2xf32> to vector<2x2x1xf32>
    %335 = math.log %334 : vector<2x2x1xf32>
    %cst_109 = arith.constant 0.000000e+00 : f32
    %336 = vector.broadcast %cst_109 : f32 to vector<2x2x1xf32>
    %337 = arith.subf %336, %335 : vector<2x2x1xf32>
    %338 = vector.broadcast %329 : vector<2x2x1xf32> to vector<2x2x512xf32>
    %339 = arith.cmpf oeq, %327, %338 : vector<2x2x512xf32>
    %c512_i32_110 = arith.constant 512 : i32
    %340 = vector.broadcast %c512_i32_110 : i32 to vector<2x2x512xi32>
    %341 = arith.select %339, %177, %340 : vector<2x2x512xi1>, vector<2x2x512xi32>
    %cst_111 = arith.constant dense<2147483647> : vector<2x2xi32>
    %342 = vector.multi_reduction <minsi>, %341, %cst_111 [2] : vector<2x2x512xi32> to vector<2x2xi32>
    %343 = vector.shape_cast %342 : vector<2x2xi32> to vector<2x2x1xi32>
    %344 = arith.sitofp %343 : vector<2x2x1xi32> to vector<2x2x1xf32>
    %cst_112 = arith.constant 2.000000e-03 : f32
    %345 = vector.broadcast %cst_112 : f32 to vector<2x2x1xf32>
    %346 = arith.mulf %344, %345 : vector<2x2x1xf32>
    %347 = arith.negf %346 : vector<2x2x1xf32>
    %348 = math.exp %347 : vector<2x2x1xf32>
    %cst_113 = arith.constant 1.000000e+00 : f32
    %349 = vector.broadcast %cst_113 : f32 to vector<2x2x1xf32>
    %350 = arith.addf %349, %348 : vector<2x2x1xf32>
    %351 = arith.divf %349, %350 : vector<2x2x1xf32>
    %cst_114 = arith.constant 2.000000e+01 : f32
    %352 = vector.broadcast %cst_114 : f32 to vector<2x2x1xf32>
    %353 = arith.mulf %352, %351 : vector<2x2x1xf32>
    %354 = vector.shape_cast %337 : vector<2x2x1xf32> to vector<2x2xf32>
    %355 = vector.shape_cast %346 : vector<2x2x1xf32> to vector<2x2xf32>
    %356 = vector.extract_strided_slice %353 {offsets = [0, 0, 0], sizes = [2, 1, 1], strides = [1, 1, 1]} : vector<2x2x1xf32> to vector<2x1x1xf32>
    %357 = vector.shape_cast %356 : vector<2x1x1xf32> to vector<2x1xf32>
    %358 = vector.shape_cast %357 : vector<2x1xf32> to vector<2x1xf32>
    %359 = vector.broadcast %358 : vector<2x1xf32> to vector<2x32xf32>
    %c16_i32_115 = arith.constant 16 : i32
    %360 = vector.broadcast %c16_i32_115 : i32 to vector<2x32xi32>
    %361 = arith.cmpi sge, %176, %360 : vector<2x32xi32>
    %362 = vector.extract_strided_slice %353 {offsets = [0, 1, 0], sizes = [2, 1, 1], strides = [1, 1, 1]} : vector<2x2x1xf32> to vector<2x1x1xf32>
    %363 = vector.shape_cast %362 : vector<2x1x1xf32> to vector<2x1xf32>
    %364 = vector.shape_cast %363 : vector<2x1xf32> to vector<2x1xf32>
    %365 = vector.broadcast %364 : vector<2x1xf32> to vector<2x32xf32>
    %366 = arith.select %361, %365, %359 : vector<2x32xi1>, vector<2x32xf32>
    %367 = arith.mulf %290, %366 : vector<2x32xf32>
    %368 = arith.addf %259, %367 : vector<2x32xf32>
    %cst_116 = arith.constant dense<0.000000e+00> : vector<2x96xf32>
    %369 = tpu.matmul %367, %150, %cst_116 {dimension_numbers = #tpu.dot_dimension_numbers<[1], [0], [0], [1], [0, 0, 1, 1], [], []>} : vector<2x32xf32>, vector<32x96xf32>, vector<2x96xf32> -> vector<2x96xf32>
    %370 = arith.addf %369, %173 : vector<2x96xf32>
    %cst_117 = arith.constant dense<0.000000e+00> : vector<2x96xf32>
    %371 = tpu.matmul %289, %152, %cst_117 {dimension_numbers = #tpu.dot_dimension_numbers<[1], [0], [0], [1], [0, 0, 1, 1], [], []>} : vector<2x32xf32>, vector<32x96xf32>, vector<2x96xf32> -> vector<2x96xf32>
    %372 = arith.addf %371, %175 : vector<2x96xf32>
    %373 = vector.extract_strided_slice %370 {offsets = [0, 0], sizes = [2, 32], strides = [1, 1]} : vector<2x96xf32> to vector<2x32xf32>
    %374 = vector.extract_strided_slice %372 {offsets = [0, 0], sizes = [2, 32], strides = [1, 1]} : vector<2x96xf32> to vector<2x32xf32>
    %375 = arith.addf %373, %374 : vector<2x32xf32>
    %376 = arith.negf %375 : vector<2x32xf32>
    %377 = math.exp %376 : vector<2x32xf32>
    %cst_118 = arith.constant 1.000000e+00 : f32
    %378 = vector.broadcast %cst_118 : f32 to vector<2x32xf32>
    %379 = arith.addf %378, %377 : vector<2x32xf32>
    %380 = arith.divf %378, %379 : vector<2x32xf32>
    %381 = vector.extract_strided_slice %370 {offsets = [0, 32], sizes = [2, 32], strides = [1, 1]} : vector<2x96xf32> to vector<2x32xf32>
    %382 = vector.extract_strided_slice %372 {offsets = [0, 32], sizes = [2, 32], strides = [1, 1]} : vector<2x96xf32> to vector<2x32xf32>
    %383 = arith.addf %381, %382 : vector<2x32xf32>
    %384 = arith.negf %383 : vector<2x32xf32>
    %385 = math.exp %384 : vector<2x32xf32>
    %cst_119 = arith.constant 1.000000e+00 : f32
    %386 = vector.broadcast %cst_119 : f32 to vector<2x32xf32>
    %387 = arith.addf %386, %385 : vector<2x32xf32>
    %388 = arith.divf %386, %387 : vector<2x32xf32>
    %389 = vector.extract_strided_slice %370 {offsets = [0, 64], sizes = [2, 32], strides = [1, 1]} : vector<2x96xf32> to vector<2x32xf32>
    %390 = vector.extract_strided_slice %372 {offsets = [0, 64], sizes = [2, 32], strides = [1, 1]} : vector<2x96xf32> to vector<2x32xf32>
    %391 = arith.mulf %380, %390 : vector<2x32xf32>
    %392 = arith.addf %389, %391 : vector<2x32xf32>
    %393 = math.tanh %392 : vector<2x32xf32>
    %cst_120 = arith.constant 1.000000e+00 : f32
    %394 = vector.broadcast %cst_120 : f32 to vector<2x32xf32>
    %395 = arith.subf %394, %388 : vector<2x32xf32>
    %396 = arith.mulf %395, %393 : vector<2x32xf32>
    %397 = arith.mulf %388, %289 : vector<2x32xf32>
    %398 = arith.addf %396, %397 : vector<2x32xf32>
    %399 = vector.extract_strided_slice %144 {offsets = [4, 0], sizes = [2, 32], strides = [1, 1]} : vector<16x32xf32> to vector<2x32xf32>
    %cst_121 = arith.constant dense<0.000000e+00> : vector<2x96xf32>
    %400 = tpu.matmul %319, %148, %cst_121 {dimension_numbers = #tpu.dot_dimension_numbers<[1], [0], [0], [1], [0, 0, 1, 1], [], []>} : vector<2x32xf32>, vector<32x96xf32>, vector<2x96xf32> -> vector<2x96xf32>
    %401 = arith.addf %400, %171 : vector<2x96xf32>
    %402 = vector.extract_strided_slice %159 {offsets = [4, 0], sizes = [2, 96], strides = [1, 1]} : vector<16x96xf32> to vector<2x96xf32>
    %403 = vector.extract_strided_slice %402 {offsets = [0, 0], sizes = [2, 32], strides = [1, 1]} : vector<2x96xf32> to vector<2x32xf32>
    %404 = vector.extract_strided_slice %401 {offsets = [0, 0], sizes = [2, 32], strides = [1, 1]} : vector<2x96xf32> to vector<2x32xf32>
    %405 = arith.addf %403, %404 : vector<2x32xf32>
    %406 = arith.negf %405 : vector<2x32xf32>
    %407 = math.exp %406 : vector<2x32xf32>
    %cst_122 = arith.constant 1.000000e+00 : f32
    %408 = vector.broadcast %cst_122 : f32 to vector<2x32xf32>
    %409 = arith.addf %408, %407 : vector<2x32xf32>
    %410 = arith.divf %408, %409 : vector<2x32xf32>
    %411 = vector.extract_strided_slice %402 {offsets = [0, 32], sizes = [2, 32], strides = [1, 1]} : vector<2x96xf32> to vector<2x32xf32>
    %412 = vector.extract_strided_slice %401 {offsets = [0, 32], sizes = [2, 32], strides = [1, 1]} : vector<2x96xf32> to vector<2x32xf32>
    %413 = arith.addf %411, %412 : vector<2x32xf32>
    %414 = arith.negf %413 : vector<2x32xf32>
    %415 = math.exp %414 : vector<2x32xf32>
    %cst_123 = arith.constant 1.000000e+00 : f32
    %416 = vector.broadcast %cst_123 : f32 to vector<2x32xf32>
    %417 = arith.addf %416, %415 : vector<2x32xf32>
    %418 = arith.divf %416, %417 : vector<2x32xf32>
    %419 = vector.extract_strided_slice %402 {offsets = [0, 64], sizes = [2, 32], strides = [1, 1]} : vector<2x96xf32> to vector<2x32xf32>
    %420 = vector.extract_strided_slice %401 {offsets = [0, 64], sizes = [2, 32], strides = [1, 1]} : vector<2x96xf32> to vector<2x32xf32>
    %421 = arith.mulf %410, %420 : vector<2x32xf32>
    %422 = arith.addf %419, %421 : vector<2x32xf32>
    %423 = math.tanh %422 : vector<2x32xf32>
    %cst_124 = arith.constant 1.000000e+00 : f32
    %424 = vector.broadcast %cst_124 : f32 to vector<2x32xf32>
    %425 = arith.subf %424, %418 : vector<2x32xf32>
    %426 = arith.mulf %425, %423 : vector<2x32xf32>
    %427 = arith.mulf %418, %319 : vector<2x32xf32>
    %428 = arith.addf %426, %427 : vector<2x32xf32>
    %429 = vector.extract_strided_slice %167 {offsets = [4, 0], sizes = [2, 1024], strides = [1, 1]} : vector<16x1024xf32> to vector<2x1024xf32>
    %cst_125 = arith.constant 0.000000e+00 : f32
    %430 = vector.broadcast %cst_125 : f32 to vector<2x32xf32>
    %431 = arith.maximumf %428, %430 : vector<2x32xf32>
    %cst_126 = arith.constant dense<0.000000e+00> : vector<2x1024xf32>
    %432 = tpu.matmul %431, %169, %cst_126 {dimension_numbers = #tpu.dot_dimension_numbers<[1], [0], [0], [1], [0, 0, 1, 1], [], []>} : vector<2x32xf32>, vector<32x1024xf32>, vector<2x1024xf32> -> vector<2x1024xf32>
    %433 = arith.addf %429, %432 : vector<2x1024xf32>
    %434 = vector.shape_cast %433 : vector<2x1024xf32> to vector<2x2x512xf32>
    %cst_127 = arith.constant 1.250000e+00 : f32
    %435 = vector.broadcast %cst_127 : f32 to vector<2x2x512xf32>
    %436 = arith.mulf %434, %435 : vector<2x2x512xf32>
    %cst_128 = arith.constant dense<0xFF800000> : vector<2x2xf32>
    %437 = vector.multi_reduction <maximumf>, %436, %cst_128 [2] : vector<2x2x512xf32> to vector<2x2xf32>
    %438 = vector.shape_cast %437 : vector<2x2xf32> to vector<2x2x1xf32>
    %439 = vector.broadcast %438 : vector<2x2x1xf32> to vector<2x2x512xf32>
    %440 = arith.subf %436, %439 : vector<2x2x512xf32>
    %441 = math.exp %440 : vector<2x2x512xf32>
    %cst_129 = arith.constant dense<0.000000e+00> : vector<2x2xf32>
    %442 = vector.multi_reduction <add>, %441, %cst_129 [2] : vector<2x2x512xf32> to vector<2x2xf32>
    %443 = vector.shape_cast %442 : vector<2x2xf32> to vector<2x2x1xf32>
    %444 = math.log %443 : vector<2x2x1xf32>
    %cst_130 = arith.constant 0.000000e+00 : f32
    %445 = vector.broadcast %cst_130 : f32 to vector<2x2x1xf32>
    %446 = arith.subf %445, %444 : vector<2x2x1xf32>
    %447 = vector.broadcast %438 : vector<2x2x1xf32> to vector<2x2x512xf32>
    %448 = arith.cmpf oeq, %436, %447 : vector<2x2x512xf32>
    %c512_i32_131 = arith.constant 512 : i32
    %449 = vector.broadcast %c512_i32_131 : i32 to vector<2x2x512xi32>
    %450 = arith.select %448, %177, %449 : vector<2x2x512xi1>, vector<2x2x512xi32>
    %cst_132 = arith.constant dense<2147483647> : vector<2x2xi32>
    %451 = vector.multi_reduction <minsi>, %450, %cst_132 [2] : vector<2x2x512xi32> to vector<2x2xi32>
    %452 = vector.shape_cast %451 : vector<2x2xi32> to vector<2x2x1xi32>
    %453 = arith.sitofp %452 : vector<2x2x1xi32> to vector<2x2x1xf32>
    %cst_133 = arith.constant 2.000000e-03 : f32
    %454 = vector.broadcast %cst_133 : f32 to vector<2x2x1xf32>
    %455 = arith.mulf %453, %454 : vector<2x2x1xf32>
    %456 = arith.negf %455 : vector<2x2x1xf32>
    %457 = math.exp %456 : vector<2x2x1xf32>
    %cst_134 = arith.constant 1.000000e+00 : f32
    %458 = vector.broadcast %cst_134 : f32 to vector<2x2x1xf32>
    %459 = arith.addf %458, %457 : vector<2x2x1xf32>
    %460 = arith.divf %458, %459 : vector<2x2x1xf32>
    %cst_135 = arith.constant 2.000000e+01 : f32
    %461 = vector.broadcast %cst_135 : f32 to vector<2x2x1xf32>
    %462 = arith.mulf %461, %460 : vector<2x2x1xf32>
    %463 = vector.shape_cast %446 : vector<2x2x1xf32> to vector<2x2xf32>
    %464 = vector.shape_cast %455 : vector<2x2x1xf32> to vector<2x2xf32>
    %465 = vector.extract_strided_slice %462 {offsets = [0, 0, 0], sizes = [2, 1, 1], strides = [1, 1, 1]} : vector<2x2x1xf32> to vector<2x1x1xf32>
    %466 = vector.shape_cast %465 : vector<2x1x1xf32> to vector<2x1xf32>
    %467 = vector.shape_cast %466 : vector<2x1xf32> to vector<2x1xf32>
    %468 = vector.broadcast %467 : vector<2x1xf32> to vector<2x32xf32>
    %c16_i32_136 = arith.constant 16 : i32
    %469 = vector.broadcast %c16_i32_136 : i32 to vector<2x32xi32>
    %470 = arith.cmpi sge, %176, %469 : vector<2x32xi32>
    %471 = vector.extract_strided_slice %462 {offsets = [0, 1, 0], sizes = [2, 1, 1], strides = [1, 1, 1]} : vector<2x2x1xf32> to vector<2x1x1xf32>
    %472 = vector.shape_cast %471 : vector<2x1x1xf32> to vector<2x1xf32>
    %473 = vector.shape_cast %472 : vector<2x1xf32> to vector<2x1xf32>
    %474 = vector.broadcast %473 : vector<2x1xf32> to vector<2x32xf32>
    %475 = arith.select %470, %474, %468 : vector<2x32xi1>, vector<2x32xf32>
    %476 = arith.mulf %399, %475 : vector<2x32xf32>
    %477 = arith.addf %368, %476 : vector<2x32xf32>
    %cst_137 = arith.constant dense<0.000000e+00> : vector<2x96xf32>
    %478 = tpu.matmul %476, %150, %cst_137 {dimension_numbers = #tpu.dot_dimension_numbers<[1], [0], [0], [1], [0, 0, 1, 1], [], []>} : vector<2x32xf32>, vector<32x96xf32>, vector<2x96xf32> -> vector<2x96xf32>
    %479 = arith.addf %478, %173 : vector<2x96xf32>
    %cst_138 = arith.constant dense<0.000000e+00> : vector<2x96xf32>
    %480 = tpu.matmul %398, %152, %cst_138 {dimension_numbers = #tpu.dot_dimension_numbers<[1], [0], [0], [1], [0, 0, 1, 1], [], []>} : vector<2x32xf32>, vector<32x96xf32>, vector<2x96xf32> -> vector<2x96xf32>
    %481 = arith.addf %480, %175 : vector<2x96xf32>
    %482 = vector.extract_strided_slice %479 {offsets = [0, 0], sizes = [2, 32], strides = [1, 1]} : vector<2x96xf32> to vector<2x32xf32>
    %483 = vector.extract_strided_slice %481 {offsets = [0, 0], sizes = [2, 32], strides = [1, 1]} : vector<2x96xf32> to vector<2x32xf32>
    %484 = arith.addf %482, %483 : vector<2x32xf32>
    %485 = arith.negf %484 : vector<2x32xf32>
    %486 = math.exp %485 : vector<2x32xf32>
    %cst_139 = arith.constant 1.000000e+00 : f32
    %487 = vector.broadcast %cst_139 : f32 to vector<2x32xf32>
    %488 = arith.addf %487, %486 : vector<2x32xf32>
    %489 = arith.divf %487, %488 : vector<2x32xf32>
    %490 = vector.extract_strided_slice %479 {offsets = [0, 32], sizes = [2, 32], strides = [1, 1]} : vector<2x96xf32> to vector<2x32xf32>
    %491 = vector.extract_strided_slice %481 {offsets = [0, 32], sizes = [2, 32], strides = [1, 1]} : vector<2x96xf32> to vector<2x32xf32>
    %492 = arith.addf %490, %491 : vector<2x32xf32>
    %493 = arith.negf %492 : vector<2x32xf32>
    %494 = math.exp %493 : vector<2x32xf32>
    %cst_140 = arith.constant 1.000000e+00 : f32
    %495 = vector.broadcast %cst_140 : f32 to vector<2x32xf32>
    %496 = arith.addf %495, %494 : vector<2x32xf32>
    %497 = arith.divf %495, %496 : vector<2x32xf32>
    %498 = vector.extract_strided_slice %479 {offsets = [0, 64], sizes = [2, 32], strides = [1, 1]} : vector<2x96xf32> to vector<2x32xf32>
    %499 = vector.extract_strided_slice %481 {offsets = [0, 64], sizes = [2, 32], strides = [1, 1]} : vector<2x96xf32> to vector<2x32xf32>
    %500 = arith.mulf %489, %499 : vector<2x32xf32>
    %501 = arith.addf %498, %500 : vector<2x32xf32>
    %502 = math.tanh %501 : vector<2x32xf32>
    %cst_141 = arith.constant 1.000000e+00 : f32
    %503 = vector.broadcast %cst_141 : f32 to vector<2x32xf32>
    %504 = arith.subf %503, %497 : vector<2x32xf32>
    %505 = arith.mulf %504, %502 : vector<2x32xf32>
    %506 = arith.mulf %497, %398 : vector<2x32xf32>
    %507 = arith.addf %505, %506 : vector<2x32xf32>
    %508 = vector.extract_strided_slice %144 {offsets = [6, 0], sizes = [2, 32], strides = [1, 1]} : vector<16x32xf32> to vector<2x32xf32>
    %cst_142 = arith.constant dense<0.000000e+00> : vector<2x96xf32>
    %509 = tpu.matmul %428, %148, %cst_142 {dimension_numbers = #tpu.dot_dimension_numbers<[1], [0], [0], [1], [0, 0, 1, 1], [], []>} : vector<2x32xf32>, vector<32x96xf32>, vector<2x96xf32> -> vector<2x96xf32>
    %510 = arith.addf %509, %171 : vector<2x96xf32>
    %511 = vector.extract_strided_slice %159 {offsets = [6, 0], sizes = [2, 96], strides = [1, 1]} : vector<16x96xf32> to vector<2x96xf32>
    %512 = vector.extract_strided_slice %511 {offsets = [0, 0], sizes = [2, 32], strides = [1, 1]} : vector<2x96xf32> to vector<2x32xf32>
    %513 = vector.extract_strided_slice %510 {offsets = [0, 0], sizes = [2, 32], strides = [1, 1]} : vector<2x96xf32> to vector<2x32xf32>
    %514 = arith.addf %512, %513 : vector<2x32xf32>
    %515 = arith.negf %514 : vector<2x32xf32>
    %516 = math.exp %515 : vector<2x32xf32>
    %cst_143 = arith.constant 1.000000e+00 : f32
    %517 = vector.broadcast %cst_143 : f32 to vector<2x32xf32>
    %518 = arith.addf %517, %516 : vector<2x32xf32>
    %519 = arith.divf %517, %518 : vector<2x32xf32>
    %520 = vector.extract_strided_slice %511 {offsets = [0, 32], sizes = [2, 32], strides = [1, 1]} : vector<2x96xf32> to vector<2x32xf32>
    %521 = vector.extract_strided_slice %510 {offsets = [0, 32], sizes = [2, 32], strides = [1, 1]} : vector<2x96xf32> to vector<2x32xf32>
    %522 = arith.addf %520, %521 : vector<2x32xf32>
    %523 = arith.negf %522 : vector<2x32xf32>
    %524 = math.exp %523 : vector<2x32xf32>
    %cst_144 = arith.constant 1.000000e+00 : f32
    %525 = vector.broadcast %cst_144 : f32 to vector<2x32xf32>
    %526 = arith.addf %525, %524 : vector<2x32xf32>
    %527 = arith.divf %525, %526 : vector<2x32xf32>
    %528 = vector.extract_strided_slice %511 {offsets = [0, 64], sizes = [2, 32], strides = [1, 1]} : vector<2x96xf32> to vector<2x32xf32>
    %529 = vector.extract_strided_slice %510 {offsets = [0, 64], sizes = [2, 32], strides = [1, 1]} : vector<2x96xf32> to vector<2x32xf32>
    %530 = arith.mulf %519, %529 : vector<2x32xf32>
    %531 = arith.addf %528, %530 : vector<2x32xf32>
    %532 = math.tanh %531 : vector<2x32xf32>
    %cst_145 = arith.constant 1.000000e+00 : f32
    %533 = vector.broadcast %cst_145 : f32 to vector<2x32xf32>
    %534 = arith.subf %533, %527 : vector<2x32xf32>
    %535 = arith.mulf %534, %532 : vector<2x32xf32>
    %536 = arith.mulf %527, %428 : vector<2x32xf32>
    %537 = arith.addf %535, %536 : vector<2x32xf32>
    %538 = vector.extract_strided_slice %167 {offsets = [6, 0], sizes = [2, 1024], strides = [1, 1]} : vector<16x1024xf32> to vector<2x1024xf32>
    %cst_146 = arith.constant 0.000000e+00 : f32
    %539 = vector.broadcast %cst_146 : f32 to vector<2x32xf32>
    %540 = arith.maximumf %537, %539 : vector<2x32xf32>
    %cst_147 = arith.constant dense<0.000000e+00> : vector<2x1024xf32>
    %541 = tpu.matmul %540, %169, %cst_147 {dimension_numbers = #tpu.dot_dimension_numbers<[1], [0], [0], [1], [0, 0, 1, 1], [], []>} : vector<2x32xf32>, vector<32x1024xf32>, vector<2x1024xf32> -> vector<2x1024xf32>
    %542 = arith.addf %538, %541 : vector<2x1024xf32>
    %543 = vector.shape_cast %542 : vector<2x1024xf32> to vector<2x2x512xf32>
    %cst_148 = arith.constant 1.250000e+00 : f32
    %544 = vector.broadcast %cst_148 : f32 to vector<2x2x512xf32>
    %545 = arith.mulf %543, %544 : vector<2x2x512xf32>
    %cst_149 = arith.constant dense<0xFF800000> : vector<2x2xf32>
    %546 = vector.multi_reduction <maximumf>, %545, %cst_149 [2] : vector<2x2x512xf32> to vector<2x2xf32>
    %547 = vector.shape_cast %546 : vector<2x2xf32> to vector<2x2x1xf32>
    %548 = vector.broadcast %547 : vector<2x2x1xf32> to vector<2x2x512xf32>
    %549 = arith.subf %545, %548 : vector<2x2x512xf32>
    %550 = math.exp %549 : vector<2x2x512xf32>
    %cst_150 = arith.constant dense<0.000000e+00> : vector<2x2xf32>
    %551 = vector.multi_reduction <add>, %550, %cst_150 [2] : vector<2x2x512xf32> to vector<2x2xf32>
    %552 = vector.shape_cast %551 : vector<2x2xf32> to vector<2x2x1xf32>
    %553 = math.log %552 : vector<2x2x1xf32>
    %cst_151 = arith.constant 0.000000e+00 : f32
    %554 = vector.broadcast %cst_151 : f32 to vector<2x2x1xf32>
    %555 = arith.subf %554, %553 : vector<2x2x1xf32>
    %556 = vector.broadcast %547 : vector<2x2x1xf32> to vector<2x2x512xf32>
    %557 = arith.cmpf oeq, %545, %556 : vector<2x2x512xf32>
    %c512_i32_152 = arith.constant 512 : i32
    %558 = vector.broadcast %c512_i32_152 : i32 to vector<2x2x512xi32>
    %559 = arith.select %557, %177, %558 : vector<2x2x512xi1>, vector<2x2x512xi32>
    %cst_153 = arith.constant dense<2147483647> : vector<2x2xi32>
    %560 = vector.multi_reduction <minsi>, %559, %cst_153 [2] : vector<2x2x512xi32> to vector<2x2xi32>
    %561 = vector.shape_cast %560 : vector<2x2xi32> to vector<2x2x1xi32>
    %562 = arith.sitofp %561 : vector<2x2x1xi32> to vector<2x2x1xf32>
    %cst_154 = arith.constant 2.000000e-03 : f32
    %563 = vector.broadcast %cst_154 : f32 to vector<2x2x1xf32>
    %564 = arith.mulf %562, %563 : vector<2x2x1xf32>
    %565 = arith.negf %564 : vector<2x2x1xf32>
    %566 = math.exp %565 : vector<2x2x1xf32>
    %cst_155 = arith.constant 1.000000e+00 : f32
    %567 = vector.broadcast %cst_155 : f32 to vector<2x2x1xf32>
    %568 = arith.addf %567, %566 : vector<2x2x1xf32>
    %569 = arith.divf %567, %568 : vector<2x2x1xf32>
    %cst_156 = arith.constant 2.000000e+01 : f32
    %570 = vector.broadcast %cst_156 : f32 to vector<2x2x1xf32>
    %571 = arith.mulf %570, %569 : vector<2x2x1xf32>
    %572 = vector.shape_cast %555 : vector<2x2x1xf32> to vector<2x2xf32>
    %573 = vector.shape_cast %564 : vector<2x2x1xf32> to vector<2x2xf32>
    %574 = vector.extract_strided_slice %571 {offsets = [0, 0, 0], sizes = [2, 1, 1], strides = [1, 1, 1]} : vector<2x2x1xf32> to vector<2x1x1xf32>
    %575 = vector.shape_cast %574 : vector<2x1x1xf32> to vector<2x1xf32>
    %576 = vector.shape_cast %575 : vector<2x1xf32> to vector<2x1xf32>
    %577 = vector.broadcast %576 : vector<2x1xf32> to vector<2x32xf32>
    %c16_i32_157 = arith.constant 16 : i32
    %578 = vector.broadcast %c16_i32_157 : i32 to vector<2x32xi32>
    %579 = arith.cmpi sge, %176, %578 : vector<2x32xi32>
    %580 = vector.extract_strided_slice %571 {offsets = [0, 1, 0], sizes = [2, 1, 1], strides = [1, 1, 1]} : vector<2x2x1xf32> to vector<2x1x1xf32>
    %581 = vector.shape_cast %580 : vector<2x1x1xf32> to vector<2x1xf32>
    %582 = vector.shape_cast %581 : vector<2x1xf32> to vector<2x1xf32>
    %583 = vector.broadcast %582 : vector<2x1xf32> to vector<2x32xf32>
    %584 = arith.select %579, %583, %577 : vector<2x32xi1>, vector<2x32xf32>
    %585 = arith.mulf %508, %584 : vector<2x32xf32>
    %586 = arith.addf %477, %585 : vector<2x32xf32>
    %cst_158 = arith.constant dense<0.000000e+00> : vector<2x96xf32>
    %587 = tpu.matmul %585, %150, %cst_158 {dimension_numbers = #tpu.dot_dimension_numbers<[1], [0], [0], [1], [0, 0, 1, 1], [], []>} : vector<2x32xf32>, vector<32x96xf32>, vector<2x96xf32> -> vector<2x96xf32>
    %588 = arith.addf %587, %173 : vector<2x96xf32>
    %cst_159 = arith.constant dense<0.000000e+00> : vector<2x96xf32>
    %589 = tpu.matmul %507, %152, %cst_159 {dimension_numbers = #tpu.dot_dimension_numbers<[1], [0], [0], [1], [0, 0, 1, 1], [], []>} : vector<2x32xf32>, vector<32x96xf32>, vector<2x96xf32> -> vector<2x96xf32>
    %590 = arith.addf %589, %175 : vector<2x96xf32>
    %591 = vector.extract_strided_slice %588 {offsets = [0, 0], sizes = [2, 32], strides = [1, 1]} : vector<2x96xf32> to vector<2x32xf32>
    %592 = vector.extract_strided_slice %590 {offsets = [0, 0], sizes = [2, 32], strides = [1, 1]} : vector<2x96xf32> to vector<2x32xf32>
    %593 = arith.addf %591, %592 : vector<2x32xf32>
    %594 = arith.negf %593 : vector<2x32xf32>
    %595 = math.exp %594 : vector<2x32xf32>
    %cst_160 = arith.constant 1.000000e+00 : f32
    %596 = vector.broadcast %cst_160 : f32 to vector<2x32xf32>
    %597 = arith.addf %596, %595 : vector<2x32xf32>
    %598 = arith.divf %596, %597 : vector<2x32xf32>
    %599 = vector.extract_strided_slice %588 {offsets = [0, 32], sizes = [2, 32], strides = [1, 1]} : vector<2x96xf32> to vector<2x32xf32>
    %600 = vector.extract_strided_slice %590 {offsets = [0, 32], sizes = [2, 32], strides = [1, 1]} : vector<2x96xf32> to vector<2x32xf32>
    %601 = arith.addf %599, %600 : vector<2x32xf32>
    %602 = arith.negf %601 : vector<2x32xf32>
    %603 = math.exp %602 : vector<2x32xf32>
    %cst_161 = arith.constant 1.000000e+00 : f32
    %604 = vector.broadcast %cst_161 : f32 to vector<2x32xf32>
    %605 = arith.addf %604, %603 : vector<2x32xf32>
    %606 = arith.divf %604, %605 : vector<2x32xf32>
    %607 = vector.extract_strided_slice %588 {offsets = [0, 64], sizes = [2, 32], strides = [1, 1]} : vector<2x96xf32> to vector<2x32xf32>
    %608 = vector.extract_strided_slice %590 {offsets = [0, 64], sizes = [2, 32], strides = [1, 1]} : vector<2x96xf32> to vector<2x32xf32>
    %609 = arith.mulf %598, %608 : vector<2x32xf32>
    %610 = arith.addf %607, %609 : vector<2x32xf32>
    %611 = math.tanh %610 : vector<2x32xf32>
    %cst_162 = arith.constant 1.000000e+00 : f32
    %612 = vector.broadcast %cst_162 : f32 to vector<2x32xf32>
    %613 = arith.subf %612, %606 : vector<2x32xf32>
    %614 = arith.mulf %613, %611 : vector<2x32xf32>
    %615 = arith.mulf %606, %507 : vector<2x32xf32>
    %616 = arith.addf %614, %615 : vector<2x32xf32>
    %617 = vector.extract_strided_slice %144 {offsets = [8, 0], sizes = [2, 32], strides = [1, 1]} : vector<16x32xf32> to vector<2x32xf32>
    %cst_163 = arith.constant dense<0.000000e+00> : vector<2x96xf32>
    %618 = tpu.matmul %537, %148, %cst_163 {dimension_numbers = #tpu.dot_dimension_numbers<[1], [0], [0], [1], [0, 0, 1, 1], [], []>} : vector<2x32xf32>, vector<32x96xf32>, vector<2x96xf32> -> vector<2x96xf32>
    %619 = arith.addf %618, %171 : vector<2x96xf32>
    %620 = vector.extract_strided_slice %159 {offsets = [8, 0], sizes = [2, 96], strides = [1, 1]} : vector<16x96xf32> to vector<2x96xf32>
    %621 = vector.extract_strided_slice %620 {offsets = [0, 0], sizes = [2, 32], strides = [1, 1]} : vector<2x96xf32> to vector<2x32xf32>
    %622 = vector.extract_strided_slice %619 {offsets = [0, 0], sizes = [2, 32], strides = [1, 1]} : vector<2x96xf32> to vector<2x32xf32>
    %623 = arith.addf %621, %622 : vector<2x32xf32>
    %624 = arith.negf %623 : vector<2x32xf32>
    %625 = math.exp %624 : vector<2x32xf32>
    %cst_164 = arith.constant 1.000000e+00 : f32
    %626 = vector.broadcast %cst_164 : f32 to vector<2x32xf32>
    %627 = arith.addf %626, %625 : vector<2x32xf32>
    %628 = arith.divf %626, %627 : vector<2x32xf32>
    %629 = vector.extract_strided_slice %620 {offsets = [0, 32], sizes = [2, 32], strides = [1, 1]} : vector<2x96xf32> to vector<2x32xf32>
    %630 = vector.extract_strided_slice %619 {offsets = [0, 32], sizes = [2, 32], strides = [1, 1]} : vector<2x96xf32> to vector<2x32xf32>
    %631 = arith.addf %629, %630 : vector<2x32xf32>
    %632 = arith.negf %631 : vector<2x32xf32>
    %633 = math.exp %632 : vector<2x32xf32>
    %cst_165 = arith.constant 1.000000e+00 : f32
    %634 = vector.broadcast %cst_165 : f32 to vector<2x32xf32>
    %635 = arith.addf %634, %633 : vector<2x32xf32>
    %636 = arith.divf %634, %635 : vector<2x32xf32>
    %637 = vector.extract_strided_slice %620 {offsets = [0, 64], sizes = [2, 32], strides = [1, 1]} : vector<2x96xf32> to vector<2x32xf32>
    %638 = vector.extract_strided_slice %619 {offsets = [0, 64], sizes = [2, 32], strides = [1, 1]} : vector<2x96xf32> to vector<2x32xf32>
    %639 = arith.mulf %628, %638 : vector<2x32xf32>
    %640 = arith.addf %637, %639 : vector<2x32xf32>
    %641 = math.tanh %640 : vector<2x32xf32>
    %cst_166 = arith.constant 1.000000e+00 : f32
    %642 = vector.broadcast %cst_166 : f32 to vector<2x32xf32>
    %643 = arith.subf %642, %636 : vector<2x32xf32>
    %644 = arith.mulf %643, %641 : vector<2x32xf32>
    %645 = arith.mulf %636, %537 : vector<2x32xf32>
    %646 = arith.addf %644, %645 : vector<2x32xf32>
    %647 = vector.extract_strided_slice %167 {offsets = [8, 0], sizes = [2, 1024], strides = [1, 1]} : vector<16x1024xf32> to vector<2x1024xf32>
    %cst_167 = arith.constant 0.000000e+00 : f32
    %648 = vector.broadcast %cst_167 : f32 to vector<2x32xf32>
    %649 = arith.maximumf %646, %648 : vector<2x32xf32>
    %cst_168 = arith.constant dense<0.000000e+00> : vector<2x1024xf32>
    %650 = tpu.matmul %649, %169, %cst_168 {dimension_numbers = #tpu.dot_dimension_numbers<[1], [0], [0], [1], [0, 0, 1, 1], [], []>} : vector<2x32xf32>, vector<32x1024xf32>, vector<2x1024xf32> -> vector<2x1024xf32>
    %651 = arith.addf %647, %650 : vector<2x1024xf32>
    %652 = vector.shape_cast %651 : vector<2x1024xf32> to vector<2x2x512xf32>
    %cst_169 = arith.constant 1.250000e+00 : f32
    %653 = vector.broadcast %cst_169 : f32 to vector<2x2x512xf32>
    %654 = arith.mulf %652, %653 : vector<2x2x512xf32>
    %cst_170 = arith.constant dense<0xFF800000> : vector<2x2xf32>
    %655 = vector.multi_reduction <maximumf>, %654, %cst_170 [2] : vector<2x2x512xf32> to vector<2x2xf32>
    %656 = vector.shape_cast %655 : vector<2x2xf32> to vector<2x2x1xf32>
    %657 = vector.broadcast %656 : vector<2x2x1xf32> to vector<2x2x512xf32>
    %658 = arith.subf %654, %657 : vector<2x2x512xf32>
    %659 = math.exp %658 : vector<2x2x512xf32>
    %cst_171 = arith.constant dense<0.000000e+00> : vector<2x2xf32>
    %660 = vector.multi_reduction <add>, %659, %cst_171 [2] : vector<2x2x512xf32> to vector<2x2xf32>
    %661 = vector.shape_cast %660 : vector<2x2xf32> to vector<2x2x1xf32>
    %662 = math.log %661 : vector<2x2x1xf32>
    %cst_172 = arith.constant 0.000000e+00 : f32
    %663 = vector.broadcast %cst_172 : f32 to vector<2x2x1xf32>
    %664 = arith.subf %663, %662 : vector<2x2x1xf32>
    %665 = vector.broadcast %656 : vector<2x2x1xf32> to vector<2x2x512xf32>
    %666 = arith.cmpf oeq, %654, %665 : vector<2x2x512xf32>
    %c512_i32_173 = arith.constant 512 : i32
    %667 = vector.broadcast %c512_i32_173 : i32 to vector<2x2x512xi32>
    %668 = arith.select %666, %177, %667 : vector<2x2x512xi1>, vector<2x2x512xi32>
    %cst_174 = arith.constant dense<2147483647> : vector<2x2xi32>
    %669 = vector.multi_reduction <minsi>, %668, %cst_174 [2] : vector<2x2x512xi32> to vector<2x2xi32>
    %670 = vector.shape_cast %669 : vector<2x2xi32> to vector<2x2x1xi32>
    %671 = arith.sitofp %670 : vector<2x2x1xi32> to vector<2x2x1xf32>
    %cst_175 = arith.constant 2.000000e-03 : f32
    %672 = vector.broadcast %cst_175 : f32 to vector<2x2x1xf32>
    %673 = arith.mulf %671, %672 : vector<2x2x1xf32>
    %674 = arith.negf %673 : vector<2x2x1xf32>
    %675 = math.exp %674 : vector<2x2x1xf32>
    %cst_176 = arith.constant 1.000000e+00 : f32
    %676 = vector.broadcast %cst_176 : f32 to vector<2x2x1xf32>
    %677 = arith.addf %676, %675 : vector<2x2x1xf32>
    %678 = arith.divf %676, %677 : vector<2x2x1xf32>
    %cst_177 = arith.constant 2.000000e+01 : f32
    %679 = vector.broadcast %cst_177 : f32 to vector<2x2x1xf32>
    %680 = arith.mulf %679, %678 : vector<2x2x1xf32>
    %681 = vector.shape_cast %664 : vector<2x2x1xf32> to vector<2x2xf32>
    %682 = vector.shape_cast %673 : vector<2x2x1xf32> to vector<2x2xf32>
    %683 = vector.extract_strided_slice %680 {offsets = [0, 0, 0], sizes = [2, 1, 1], strides = [1, 1, 1]} : vector<2x2x1xf32> to vector<2x1x1xf32>
    %684 = vector.shape_cast %683 : vector<2x1x1xf32> to vector<2x1xf32>
    %685 = vector.shape_cast %684 : vector<2x1xf32> to vector<2x1xf32>
    %686 = vector.broadcast %685 : vector<2x1xf32> to vector<2x32xf32>
    %c16_i32_178 = arith.constant 16 : i32
    %687 = vector.broadcast %c16_i32_178 : i32 to vector<2x32xi32>
    %688 = arith.cmpi sge, %176, %687 : vector<2x32xi32>
    %689 = vector.extract_strided_slice %680 {offsets = [0, 1, 0], sizes = [2, 1, 1], strides = [1, 1, 1]} : vector<2x2x1xf32> to vector<2x1x1xf32>
    %690 = vector.shape_cast %689 : vector<2x1x1xf32> to vector<2x1xf32>
    %691 = vector.shape_cast %690 : vector<2x1xf32> to vector<2x1xf32>
    %692 = vector.broadcast %691 : vector<2x1xf32> to vector<2x32xf32>
    %693 = arith.select %688, %692, %686 : vector<2x32xi1>, vector<2x32xf32>
    %694 = arith.mulf %617, %693 : vector<2x32xf32>
    %695 = arith.addf %586, %694 : vector<2x32xf32>
    %cst_179 = arith.constant dense<0.000000e+00> : vector<2x96xf32>
    %696 = tpu.matmul %694, %150, %cst_179 {dimension_numbers = #tpu.dot_dimension_numbers<[1], [0], [0], [1], [0, 0, 1, 1], [], []>} : vector<2x32xf32>, vector<32x96xf32>, vector<2x96xf32> -> vector<2x96xf32>
    %697 = arith.addf %696, %173 : vector<2x96xf32>
    %cst_180 = arith.constant dense<0.000000e+00> : vector<2x96xf32>
    %698 = tpu.matmul %616, %152, %cst_180 {dimension_numbers = #tpu.dot_dimension_numbers<[1], [0], [0], [1], [0, 0, 1, 1], [], []>} : vector<2x32xf32>, vector<32x96xf32>, vector<2x96xf32> -> vector<2x96xf32>
    %699 = arith.addf %698, %175 : vector<2x96xf32>
    %700 = vector.extract_strided_slice %697 {offsets = [0, 0], sizes = [2, 32], strides = [1, 1]} : vector<2x96xf32> to vector<2x32xf32>
    %701 = vector.extract_strided_slice %699 {offsets = [0, 0], sizes = [2, 32], strides = [1, 1]} : vector<2x96xf32> to vector<2x32xf32>
    %702 = arith.addf %700, %701 : vector<2x32xf32>
    %703 = arith.negf %702 : vector<2x32xf32>
    %704 = math.exp %703 : vector<2x32xf32>
    %cst_181 = arith.constant 1.000000e+00 : f32
    %705 = vector.broadcast %cst_181 : f32 to vector<2x32xf32>
    %706 = arith.addf %705, %704 : vector<2x32xf32>
    %707 = arith.divf %705, %706 : vector<2x32xf32>
    %708 = vector.extract_strided_slice %697 {offsets = [0, 32], sizes = [2, 32], strides = [1, 1]} : vector<2x96xf32> to vector<2x32xf32>
    %709 = vector.extract_strided_slice %699 {offsets = [0, 32], sizes = [2, 32], strides = [1, 1]} : vector<2x96xf32> to vector<2x32xf32>
    %710 = arith.addf %708, %709 : vector<2x32xf32>
    %711 = arith.negf %710 : vector<2x32xf32>
    %712 = math.exp %711 : vector<2x32xf32>
    %cst_182 = arith.constant 1.000000e+00 : f32
    %713 = vector.broadcast %cst_182 : f32 to vector<2x32xf32>
    %714 = arith.addf %713, %712 : vector<2x32xf32>
    %715 = arith.divf %713, %714 : vector<2x32xf32>
    %716 = vector.extract_strided_slice %697 {offsets = [0, 64], sizes = [2, 32], strides = [1, 1]} : vector<2x96xf32> to vector<2x32xf32>
    %717 = vector.extract_strided_slice %699 {offsets = [0, 64], sizes = [2, 32], strides = [1, 1]} : vector<2x96xf32> to vector<2x32xf32>
    %718 = arith.mulf %707, %717 : vector<2x32xf32>
    %719 = arith.addf %716, %718 : vector<2x32xf32>
    %720 = math.tanh %719 : vector<2x32xf32>
    %cst_183 = arith.constant 1.000000e+00 : f32
    %721 = vector.broadcast %cst_183 : f32 to vector<2x32xf32>
    %722 = arith.subf %721, %715 : vector<2x32xf32>
    %723 = arith.mulf %722, %720 : vector<2x32xf32>
    %724 = arith.mulf %715, %616 : vector<2x32xf32>
    %725 = arith.addf %723, %724 : vector<2x32xf32>
    %726 = vector.extract_strided_slice %144 {offsets = [10, 0], sizes = [2, 32], strides = [1, 1]} : vector<16x32xf32> to vector<2x32xf32>
    %cst_184 = arith.constant dense<0.000000e+00> : vector<2x96xf32>
    %727 = tpu.matmul %646, %148, %cst_184 {dimension_numbers = #tpu.dot_dimension_numbers<[1], [0], [0], [1], [0, 0, 1, 1], [], []>} : vector<2x32xf32>, vector<32x96xf32>, vector<2x96xf32> -> vector<2x96xf32>
    %728 = arith.addf %727, %171 : vector<2x96xf32>
    %729 = vector.extract_strided_slice %159 {offsets = [10, 0], sizes = [2, 96], strides = [1, 1]} : vector<16x96xf32> to vector<2x96xf32>
    %730 = vector.extract_strided_slice %729 {offsets = [0, 0], sizes = [2, 32], strides = [1, 1]} : vector<2x96xf32> to vector<2x32xf32>
    %731 = vector.extract_strided_slice %728 {offsets = [0, 0], sizes = [2, 32], strides = [1, 1]} : vector<2x96xf32> to vector<2x32xf32>
    %732 = arith.addf %730, %731 : vector<2x32xf32>
    %733 = arith.negf %732 : vector<2x32xf32>
    %734 = math.exp %733 : vector<2x32xf32>
    %cst_185 = arith.constant 1.000000e+00 : f32
    %735 = vector.broadcast %cst_185 : f32 to vector<2x32xf32>
    %736 = arith.addf %735, %734 : vector<2x32xf32>
    %737 = arith.divf %735, %736 : vector<2x32xf32>
    %738 = vector.extract_strided_slice %729 {offsets = [0, 32], sizes = [2, 32], strides = [1, 1]} : vector<2x96xf32> to vector<2x32xf32>
    %739 = vector.extract_strided_slice %728 {offsets = [0, 32], sizes = [2, 32], strides = [1, 1]} : vector<2x96xf32> to vector<2x32xf32>
    %740 = arith.addf %738, %739 : vector<2x32xf32>
    %741 = arith.negf %740 : vector<2x32xf32>
    %742 = math.exp %741 : vector<2x32xf32>
    %cst_186 = arith.constant 1.000000e+00 : f32
    %743 = vector.broadcast %cst_186 : f32 to vector<2x32xf32>
    %744 = arith.addf %743, %742 : vector<2x32xf32>
    %745 = arith.divf %743, %744 : vector<2x32xf32>
    %746 = vector.extract_strided_slice %729 {offsets = [0, 64], sizes = [2, 32], strides = [1, 1]} : vector<2x96xf32> to vector<2x32xf32>
    %747 = vector.extract_strided_slice %728 {offsets = [0, 64], sizes = [2, 32], strides = [1, 1]} : vector<2x96xf32> to vector<2x32xf32>
    %748 = arith.mulf %737, %747 : vector<2x32xf32>
    %749 = arith.addf %746, %748 : vector<2x32xf32>
    %750 = math.tanh %749 : vector<2x32xf32>
    %cst_187 = arith.constant 1.000000e+00 : f32
    %751 = vector.broadcast %cst_187 : f32 to vector<2x32xf32>
    %752 = arith.subf %751, %745 : vector<2x32xf32>
    %753 = arith.mulf %752, %750 : vector<2x32xf32>
    %754 = arith.mulf %745, %646 : vector<2x32xf32>
    %755 = arith.addf %753, %754 : vector<2x32xf32>
    %756 = vector.extract_strided_slice %167 {offsets = [10, 0], sizes = [2, 1024], strides = [1, 1]} : vector<16x1024xf32> to vector<2x1024xf32>
    %cst_188 = arith.constant 0.000000e+00 : f32
    %757 = vector.broadcast %cst_188 : f32 to vector<2x32xf32>
    %758 = arith.maximumf %755, %757 : vector<2x32xf32>
    %cst_189 = arith.constant dense<0.000000e+00> : vector<2x1024xf32>
    %759 = tpu.matmul %758, %169, %cst_189 {dimension_numbers = #tpu.dot_dimension_numbers<[1], [0], [0], [1], [0, 0, 1, 1], [], []>} : vector<2x32xf32>, vector<32x1024xf32>, vector<2x1024xf32> -> vector<2x1024xf32>
    %760 = arith.addf %756, %759 : vector<2x1024xf32>
    %761 = vector.shape_cast %760 : vector<2x1024xf32> to vector<2x2x512xf32>
    %cst_190 = arith.constant 1.250000e+00 : f32
    %762 = vector.broadcast %cst_190 : f32 to vector<2x2x512xf32>
    %763 = arith.mulf %761, %762 : vector<2x2x512xf32>
    %cst_191 = arith.constant dense<0xFF800000> : vector<2x2xf32>
    %764 = vector.multi_reduction <maximumf>, %763, %cst_191 [2] : vector<2x2x512xf32> to vector<2x2xf32>
    %765 = vector.shape_cast %764 : vector<2x2xf32> to vector<2x2x1xf32>
    %766 = vector.broadcast %765 : vector<2x2x1xf32> to vector<2x2x512xf32>
    %767 = arith.subf %763, %766 : vector<2x2x512xf32>
    %768 = math.exp %767 : vector<2x2x512xf32>
    %cst_192 = arith.constant dense<0.000000e+00> : vector<2x2xf32>
    %769 = vector.multi_reduction <add>, %768, %cst_192 [2] : vector<2x2x512xf32> to vector<2x2xf32>
    %770 = vector.shape_cast %769 : vector<2x2xf32> to vector<2x2x1xf32>
    %771 = math.log %770 : vector<2x2x1xf32>
    %cst_193 = arith.constant 0.000000e+00 : f32
    %772 = vector.broadcast %cst_193 : f32 to vector<2x2x1xf32>
    %773 = arith.subf %772, %771 : vector<2x2x1xf32>
    %774 = vector.broadcast %765 : vector<2x2x1xf32> to vector<2x2x512xf32>
    %775 = arith.cmpf oeq, %763, %774 : vector<2x2x512xf32>
    %c512_i32_194 = arith.constant 512 : i32
    %776 = vector.broadcast %c512_i32_194 : i32 to vector<2x2x512xi32>
    %777 = arith.select %775, %177, %776 : vector<2x2x512xi1>, vector<2x2x512xi32>
    %cst_195 = arith.constant dense<2147483647> : vector<2x2xi32>
    %778 = vector.multi_reduction <minsi>, %777, %cst_195 [2] : vector<2x2x512xi32> to vector<2x2xi32>
    %779 = vector.shape_cast %778 : vector<2x2xi32> to vector<2x2x1xi32>
    %780 = arith.sitofp %779 : vector<2x2x1xi32> to vector<2x2x1xf32>
    %cst_196 = arith.constant 2.000000e-03 : f32
    %781 = vector.broadcast %cst_196 : f32 to vector<2x2x1xf32>
    %782 = arith.mulf %780, %781 : vector<2x2x1xf32>
    %783 = arith.negf %782 : vector<2x2x1xf32>
    %784 = math.exp %783 : vector<2x2x1xf32>
    %cst_197 = arith.constant 1.000000e+00 : f32
    %785 = vector.broadcast %cst_197 : f32 to vector<2x2x1xf32>
    %786 = arith.addf %785, %784 : vector<2x2x1xf32>
    %787 = arith.divf %785, %786 : vector<2x2x1xf32>
    %cst_198 = arith.constant 2.000000e+01 : f32
    %788 = vector.broadcast %cst_198 : f32 to vector<2x2x1xf32>
    %789 = arith.mulf %788, %787 : vector<2x2x1xf32>
    %790 = vector.shape_cast %773 : vector<2x2x1xf32> to vector<2x2xf32>
    %791 = vector.shape_cast %782 : vector<2x2x1xf32> to vector<2x2xf32>
    %792 = vector.extract_strided_slice %789 {offsets = [0, 0, 0], sizes = [2, 1, 1], strides = [1, 1, 1]} : vector<2x2x1xf32> to vector<2x1x1xf32>
    %793 = vector.shape_cast %792 : vector<2x1x1xf32> to vector<2x1xf32>
    %794 = vector.shape_cast %793 : vector<2x1xf32> to vector<2x1xf32>
    %795 = vector.broadcast %794 : vector<2x1xf32> to vector<2x32xf32>
    %c16_i32_199 = arith.constant 16 : i32
    %796 = vector.broadcast %c16_i32_199 : i32 to vector<2x32xi32>
    %797 = arith.cmpi sge, %176, %796 : vector<2x32xi32>
    %798 = vector.extract_strided_slice %789 {offsets = [0, 1, 0], sizes = [2, 1, 1], strides = [1, 1, 1]} : vector<2x2x1xf32> to vector<2x1x1xf32>
    %799 = vector.shape_cast %798 : vector<2x1x1xf32> to vector<2x1xf32>
    %800 = vector.shape_cast %799 : vector<2x1xf32> to vector<2x1xf32>
    %801 = vector.broadcast %800 : vector<2x1xf32> to vector<2x32xf32>
    %802 = arith.select %797, %801, %795 : vector<2x32xi1>, vector<2x32xf32>
    %803 = arith.mulf %726, %802 : vector<2x32xf32>
    %804 = arith.addf %695, %803 : vector<2x32xf32>
    %cst_200 = arith.constant dense<0.000000e+00> : vector<2x96xf32>
    %805 = tpu.matmul %803, %150, %cst_200 {dimension_numbers = #tpu.dot_dimension_numbers<[1], [0], [0], [1], [0, 0, 1, 1], [], []>} : vector<2x32xf32>, vector<32x96xf32>, vector<2x96xf32> -> vector<2x96xf32>
    %806 = arith.addf %805, %173 : vector<2x96xf32>
    %cst_201 = arith.constant dense<0.000000e+00> : vector<2x96xf32>
    %807 = tpu.matmul %725, %152, %cst_201 {dimension_numbers = #tpu.dot_dimension_numbers<[1], [0], [0], [1], [0, 0, 1, 1], [], []>} : vector<2x32xf32>, vector<32x96xf32>, vector<2x96xf32> -> vector<2x96xf32>
    %808 = arith.addf %807, %175 : vector<2x96xf32>
    %809 = vector.extract_strided_slice %806 {offsets = [0, 0], sizes = [2, 32], strides = [1, 1]} : vector<2x96xf32> to vector<2x32xf32>
    %810 = vector.extract_strided_slice %808 {offsets = [0, 0], sizes = [2, 32], strides = [1, 1]} : vector<2x96xf32> to vector<2x32xf32>
    %811 = arith.addf %809, %810 : vector<2x32xf32>
    %812 = arith.negf %811 : vector<2x32xf32>
    %813 = math.exp %812 : vector<2x32xf32>
    %cst_202 = arith.constant 1.000000e+00 : f32
    %814 = vector.broadcast %cst_202 : f32 to vector<2x32xf32>
    %815 = arith.addf %814, %813 : vector<2x32xf32>
    %816 = arith.divf %814, %815 : vector<2x32xf32>
    %817 = vector.extract_strided_slice %806 {offsets = [0, 32], sizes = [2, 32], strides = [1, 1]} : vector<2x96xf32> to vector<2x32xf32>
    %818 = vector.extract_strided_slice %808 {offsets = [0, 32], sizes = [2, 32], strides = [1, 1]} : vector<2x96xf32> to vector<2x32xf32>
    %819 = arith.addf %817, %818 : vector<2x32xf32>
    %820 = arith.negf %819 : vector<2x32xf32>
    %821 = math.exp %820 : vector<2x32xf32>
    %cst_203 = arith.constant 1.000000e+00 : f32
    %822 = vector.broadcast %cst_203 : f32 to vector<2x32xf32>
    %823 = arith.addf %822, %821 : vector<2x32xf32>
    %824 = arith.divf %822, %823 : vector<2x32xf32>
    %825 = vector.extract_strided_slice %806 {offsets = [0, 64], sizes = [2, 32], strides = [1, 1]} : vector<2x96xf32> to vector<2x32xf32>
    %826 = vector.extract_strided_slice %808 {offsets = [0, 64], sizes = [2, 32], strides = [1, 1]} : vector<2x96xf32> to vector<2x32xf32>
    %827 = arith.mulf %816, %826 : vector<2x32xf32>
    %828 = arith.addf %825, %827 : vector<2x32xf32>
    %829 = math.tanh %828 : vector<2x32xf32>
    %cst_204 = arith.constant 1.000000e+00 : f32
    %830 = vector.broadcast %cst_204 : f32 to vector<2x32xf32>
    %831 = arith.subf %830, %824 : vector<2x32xf32>
    %832 = arith.mulf %831, %829 : vector<2x32xf32>
    %833 = arith.mulf %824, %725 : vector<2x32xf32>
    %834 = arith.addf %832, %833 : vector<2x32xf32>
    %835 = vector.extract_strided_slice %144 {offsets = [12, 0], sizes = [2, 32], strides = [1, 1]} : vector<16x32xf32> to vector<2x32xf32>
    %cst_205 = arith.constant dense<0.000000e+00> : vector<2x96xf32>
    %836 = tpu.matmul %755, %148, %cst_205 {dimension_numbers = #tpu.dot_dimension_numbers<[1], [0], [0], [1], [0, 0, 1, 1], [], []>} : vector<2x32xf32>, vector<32x96xf32>, vector<2x96xf32> -> vector<2x96xf32>
    %837 = arith.addf %836, %171 : vector<2x96xf32>
    %838 = vector.extract_strided_slice %159 {offsets = [12, 0], sizes = [2, 96], strides = [1, 1]} : vector<16x96xf32> to vector<2x96xf32>
    %839 = vector.extract_strided_slice %838 {offsets = [0, 0], sizes = [2, 32], strides = [1, 1]} : vector<2x96xf32> to vector<2x32xf32>
    %840 = vector.extract_strided_slice %837 {offsets = [0, 0], sizes = [2, 32], strides = [1, 1]} : vector<2x96xf32> to vector<2x32xf32>
    %841 = arith.addf %839, %840 : vector<2x32xf32>
    %842 = arith.negf %841 : vector<2x32xf32>
    %843 = math.exp %842 : vector<2x32xf32>
    %cst_206 = arith.constant 1.000000e+00 : f32
    %844 = vector.broadcast %cst_206 : f32 to vector<2x32xf32>
    %845 = arith.addf %844, %843 : vector<2x32xf32>
    %846 = arith.divf %844, %845 : vector<2x32xf32>
    %847 = vector.extract_strided_slice %838 {offsets = [0, 32], sizes = [2, 32], strides = [1, 1]} : vector<2x96xf32> to vector<2x32xf32>
    %848 = vector.extract_strided_slice %837 {offsets = [0, 32], sizes = [2, 32], strides = [1, 1]} : vector<2x96xf32> to vector<2x32xf32>
    %849 = arith.addf %847, %848 : vector<2x32xf32>
    %850 = arith.negf %849 : vector<2x32xf32>
    %851 = math.exp %850 : vector<2x32xf32>
    %cst_207 = arith.constant 1.000000e+00 : f32
    %852 = vector.broadcast %cst_207 : f32 to vector<2x32xf32>
    %853 = arith.addf %852, %851 : vector<2x32xf32>
    %854 = arith.divf %852, %853 : vector<2x32xf32>
    %855 = vector.extract_strided_slice %838 {offsets = [0, 64], sizes = [2, 32], strides = [1, 1]} : vector<2x96xf32> to vector<2x32xf32>
    %856 = vector.extract_strided_slice %837 {offsets = [0, 64], sizes = [2, 32], strides = [1, 1]} : vector<2x96xf32> to vector<2x32xf32>
    %857 = arith.mulf %846, %856 : vector<2x32xf32>
    %858 = arith.addf %855, %857 : vector<2x32xf32>
    %859 = math.tanh %858 : vector<2x32xf32>
    %cst_208 = arith.constant 1.000000e+00 : f32
    %860 = vector.broadcast %cst_208 : f32 to vector<2x32xf32>
    %861 = arith.subf %860, %854 : vector<2x32xf32>
    %862 = arith.mulf %861, %859 : vector<2x32xf32>
    %863 = arith.mulf %854, %755 : vector<2x32xf32>
    %864 = arith.addf %862, %863 : vector<2x32xf32>
    %865 = vector.extract_strided_slice %167 {offsets = [12, 0], sizes = [2, 1024], strides = [1, 1]} : vector<16x1024xf32> to vector<2x1024xf32>
    %cst_209 = arith.constant 0.000000e+00 : f32
    %866 = vector.broadcast %cst_209 : f32 to vector<2x32xf32>
    %867 = arith.maximumf %864, %866 : vector<2x32xf32>
    %cst_210 = arith.constant dense<0.000000e+00> : vector<2x1024xf32>
    %868 = tpu.matmul %867, %169, %cst_210 {dimension_numbers = #tpu.dot_dimension_numbers<[1], [0], [0], [1], [0, 0, 1, 1], [], []>} : vector<2x32xf32>, vector<32x1024xf32>, vector<2x1024xf32> -> vector<2x1024xf32>
    %869 = arith.addf %865, %868 : vector<2x1024xf32>
    %870 = vector.shape_cast %869 : vector<2x1024xf32> to vector<2x2x512xf32>
    %cst_211 = arith.constant 1.250000e+00 : f32
    %871 = vector.broadcast %cst_211 : f32 to vector<2x2x512xf32>
    %872 = arith.mulf %870, %871 : vector<2x2x512xf32>
    %cst_212 = arith.constant dense<0xFF800000> : vector<2x2xf32>
    %873 = vector.multi_reduction <maximumf>, %872, %cst_212 [2] : vector<2x2x512xf32> to vector<2x2xf32>
    %874 = vector.shape_cast %873 : vector<2x2xf32> to vector<2x2x1xf32>
    %875 = vector.broadcast %874 : vector<2x2x1xf32> to vector<2x2x512xf32>
    %876 = arith.subf %872, %875 : vector<2x2x512xf32>
    %877 = math.exp %876 : vector<2x2x512xf32>
    %cst_213 = arith.constant dense<0.000000e+00> : vector<2x2xf32>
    %878 = vector.multi_reduction <add>, %877, %cst_213 [2] : vector<2x2x512xf32> to vector<2x2xf32>
    %879 = vector.shape_cast %878 : vector<2x2xf32> to vector<2x2x1xf32>
    %880 = math.log %879 : vector<2x2x1xf32>
    %cst_214 = arith.constant 0.000000e+00 : f32
    %881 = vector.broadcast %cst_214 : f32 to vector<2x2x1xf32>
    %882 = arith.subf %881, %880 : vector<2x2x1xf32>
    %883 = vector.broadcast %874 : vector<2x2x1xf32> to vector<2x2x512xf32>
    %884 = arith.cmpf oeq, %872, %883 : vector<2x2x512xf32>
    %c512_i32_215 = arith.constant 512 : i32
    %885 = vector.broadcast %c512_i32_215 : i32 to vector<2x2x512xi32>
    %886 = arith.select %884, %177, %885 : vector<2x2x512xi1>, vector<2x2x512xi32>
    %cst_216 = arith.constant dense<2147483647> : vector<2x2xi32>
    %887 = vector.multi_reduction <minsi>, %886, %cst_216 [2] : vector<2x2x512xi32> to vector<2x2xi32>
    %888 = vector.shape_cast %887 : vector<2x2xi32> to vector<2x2x1xi32>
    %889 = arith.sitofp %888 : vector<2x2x1xi32> to vector<2x2x1xf32>
    %cst_217 = arith.constant 2.000000e-03 : f32
    %890 = vector.broadcast %cst_217 : f32 to vector<2x2x1xf32>
    %891 = arith.mulf %889, %890 : vector<2x2x1xf32>
    %892 = arith.negf %891 : vector<2x2x1xf32>
    %893 = math.exp %892 : vector<2x2x1xf32>
    %cst_218 = arith.constant 1.000000e+00 : f32
    %894 = vector.broadcast %cst_218 : f32 to vector<2x2x1xf32>
    %895 = arith.addf %894, %893 : vector<2x2x1xf32>
    %896 = arith.divf %894, %895 : vector<2x2x1xf32>
    %cst_219 = arith.constant 2.000000e+01 : f32
    %897 = vector.broadcast %cst_219 : f32 to vector<2x2x1xf32>
    %898 = arith.mulf %897, %896 : vector<2x2x1xf32>
    %899 = vector.shape_cast %882 : vector<2x2x1xf32> to vector<2x2xf32>
    %900 = vector.shape_cast %891 : vector<2x2x1xf32> to vector<2x2xf32>
    %901 = vector.extract_strided_slice %898 {offsets = [0, 0, 0], sizes = [2, 1, 1], strides = [1, 1, 1]} : vector<2x2x1xf32> to vector<2x1x1xf32>
    %902 = vector.shape_cast %901 : vector<2x1x1xf32> to vector<2x1xf32>
    %903 = vector.shape_cast %902 : vector<2x1xf32> to vector<2x1xf32>
    %904 = vector.broadcast %903 : vector<2x1xf32> to vector<2x32xf32>
    %c16_i32_220 = arith.constant 16 : i32
    %905 = vector.broadcast %c16_i32_220 : i32 to vector<2x32xi32>
    %906 = arith.cmpi sge, %176, %905 : vector<2x32xi32>
    %907 = vector.extract_strided_slice %898 {offsets = [0, 1, 0], sizes = [2, 1, 1], strides = [1, 1, 1]} : vector<2x2x1xf32> to vector<2x1x1xf32>
    %908 = vector.shape_cast %907 : vector<2x1x1xf32> to vector<2x1xf32>
    %909 = vector.shape_cast %908 : vector<2x1xf32> to vector<2x1xf32>
    %910 = vector.broadcast %909 : vector<2x1xf32> to vector<2x32xf32>
    %911 = arith.select %906, %910, %904 : vector<2x32xi1>, vector<2x32xf32>
    %912 = arith.mulf %835, %911 : vector<2x32xf32>
    %913 = arith.addf %804, %912 : vector<2x32xf32>
    %cst_221 = arith.constant dense<0.000000e+00> : vector<2x96xf32>
    %914 = tpu.matmul %912, %150, %cst_221 {dimension_numbers = #tpu.dot_dimension_numbers<[1], [0], [0], [1], [0, 0, 1, 1], [], []>} : vector<2x32xf32>, vector<32x96xf32>, vector<2x96xf32> -> vector<2x96xf32>
    %915 = arith.addf %914, %173 : vector<2x96xf32>
    %cst_222 = arith.constant dense<0.000000e+00> : vector<2x96xf32>
    %916 = tpu.matmul %834, %152, %cst_222 {dimension_numbers = #tpu.dot_dimension_numbers<[1], [0], [0], [1], [0, 0, 1, 1], [], []>} : vector<2x32xf32>, vector<32x96xf32>, vector<2x96xf32> -> vector<2x96xf32>
    %917 = arith.addf %916, %175 : vector<2x96xf32>
    %918 = vector.extract_strided_slice %915 {offsets = [0, 0], sizes = [2, 32], strides = [1, 1]} : vector<2x96xf32> to vector<2x32xf32>
    %919 = vector.extract_strided_slice %917 {offsets = [0, 0], sizes = [2, 32], strides = [1, 1]} : vector<2x96xf32> to vector<2x32xf32>
    %920 = arith.addf %918, %919 : vector<2x32xf32>
    %921 = arith.negf %920 : vector<2x32xf32>
    %922 = math.exp %921 : vector<2x32xf32>
    %cst_223 = arith.constant 1.000000e+00 : f32
    %923 = vector.broadcast %cst_223 : f32 to vector<2x32xf32>
    %924 = arith.addf %923, %922 : vector<2x32xf32>
    %925 = arith.divf %923, %924 : vector<2x32xf32>
    %926 = vector.extract_strided_slice %915 {offsets = [0, 32], sizes = [2, 32], strides = [1, 1]} : vector<2x96xf32> to vector<2x32xf32>
    %927 = vector.extract_strided_slice %917 {offsets = [0, 32], sizes = [2, 32], strides = [1, 1]} : vector<2x96xf32> to vector<2x32xf32>
    %928 = arith.addf %926, %927 : vector<2x32xf32>
    %929 = arith.negf %928 : vector<2x32xf32>
    %930 = math.exp %929 : vector<2x32xf32>
    %cst_224 = arith.constant 1.000000e+00 : f32
    %931 = vector.broadcast %cst_224 : f32 to vector<2x32xf32>
    %932 = arith.addf %931, %930 : vector<2x32xf32>
    %933 = arith.divf %931, %932 : vector<2x32xf32>
    %934 = vector.extract_strided_slice %915 {offsets = [0, 64], sizes = [2, 32], strides = [1, 1]} : vector<2x96xf32> to vector<2x32xf32>
    %935 = vector.extract_strided_slice %917 {offsets = [0, 64], sizes = [2, 32], strides = [1, 1]} : vector<2x96xf32> to vector<2x32xf32>
    %936 = arith.mulf %925, %935 : vector<2x32xf32>
    %937 = arith.addf %934, %936 : vector<2x32xf32>
    %938 = math.tanh %937 : vector<2x32xf32>
    %cst_225 = arith.constant 1.000000e+00 : f32
    %939 = vector.broadcast %cst_225 : f32 to vector<2x32xf32>
    %940 = arith.subf %939, %933 : vector<2x32xf32>
    %941 = arith.mulf %940, %938 : vector<2x32xf32>
    %942 = arith.mulf %933, %834 : vector<2x32xf32>
    %943 = arith.addf %941, %942 : vector<2x32xf32>
    %944 = vector.extract_strided_slice %144 {offsets = [14, 0], sizes = [2, 32], strides = [1, 1]} : vector<16x32xf32> to vector<2x32xf32>
    %cst_226 = arith.constant dense<0.000000e+00> : vector<2x96xf32>
    %945 = tpu.matmul %864, %148, %cst_226 {dimension_numbers = #tpu.dot_dimension_numbers<[1], [0], [0], [1], [0, 0, 1, 1], [], []>} : vector<2x32xf32>, vector<32x96xf32>, vector<2x96xf32> -> vector<2x96xf32>
    %946 = arith.addf %945, %171 : vector<2x96xf32>
    %947 = vector.extract_strided_slice %159 {offsets = [14, 0], sizes = [2, 96], strides = [1, 1]} : vector<16x96xf32> to vector<2x96xf32>
    %948 = vector.extract_strided_slice %947 {offsets = [0, 0], sizes = [2, 32], strides = [1, 1]} : vector<2x96xf32> to vector<2x32xf32>
    %949 = vector.extract_strided_slice %946 {offsets = [0, 0], sizes = [2, 32], strides = [1, 1]} : vector<2x96xf32> to vector<2x32xf32>
    %950 = arith.addf %948, %949 : vector<2x32xf32>
    %951 = arith.negf %950 : vector<2x32xf32>
    %952 = math.exp %951 : vector<2x32xf32>
    %cst_227 = arith.constant 1.000000e+00 : f32
    %953 = vector.broadcast %cst_227 : f32 to vector<2x32xf32>
    %954 = arith.addf %953, %952 : vector<2x32xf32>
    %955 = arith.divf %953, %954 : vector<2x32xf32>
    %956 = vector.extract_strided_slice %947 {offsets = [0, 32], sizes = [2, 32], strides = [1, 1]} : vector<2x96xf32> to vector<2x32xf32>
    %957 = vector.extract_strided_slice %946 {offsets = [0, 32], sizes = [2, 32], strides = [1, 1]} : vector<2x96xf32> to vector<2x32xf32>
    %958 = arith.addf %956, %957 : vector<2x32xf32>
    %959 = arith.negf %958 : vector<2x32xf32>
    %960 = math.exp %959 : vector<2x32xf32>
    %cst_228 = arith.constant 1.000000e+00 : f32
    %961 = vector.broadcast %cst_228 : f32 to vector<2x32xf32>
    %962 = arith.addf %961, %960 : vector<2x32xf32>
    %963 = arith.divf %961, %962 : vector<2x32xf32>
    %964 = vector.extract_strided_slice %947 {offsets = [0, 64], sizes = [2, 32], strides = [1, 1]} : vector<2x96xf32> to vector<2x32xf32>
    %965 = vector.extract_strided_slice %946 {offsets = [0, 64], sizes = [2, 32], strides = [1, 1]} : vector<2x96xf32> to vector<2x32xf32>
    %966 = arith.mulf %955, %965 : vector<2x32xf32>
    %967 = arith.addf %964, %966 : vector<2x32xf32>
    %968 = math.tanh %967 : vector<2x32xf32>
    %cst_229 = arith.constant 1.000000e+00 : f32
    %969 = vector.broadcast %cst_229 : f32 to vector<2x32xf32>
    %970 = arith.subf %969, %963 : vector<2x32xf32>
    %971 = arith.mulf %970, %968 : vector<2x32xf32>
    %972 = arith.mulf %963, %864 : vector<2x32xf32>
    %973 = arith.addf %971, %972 : vector<2x32xf32>
    %974 = vector.extract_strided_slice %167 {offsets = [14, 0], sizes = [2, 1024], strides = [1, 1]} : vector<16x1024xf32> to vector<2x1024xf32>
    %cst_230 = arith.constant 0.000000e+00 : f32
    %975 = vector.broadcast %cst_230 : f32 to vector<2x32xf32>
    %976 = arith.maximumf %973, %975 : vector<2x32xf32>
    %cst_231 = arith.constant dense<0.000000e+00> : vector<2x1024xf32>
    %977 = tpu.matmul %976, %169, %cst_231 {dimension_numbers = #tpu.dot_dimension_numbers<[1], [0], [0], [1], [0, 0, 1, 1], [], []>} : vector<2x32xf32>, vector<32x1024xf32>, vector<2x1024xf32> -> vector<2x1024xf32>
    %978 = arith.addf %974, %977 : vector<2x1024xf32>
    %979 = vector.shape_cast %978 : vector<2x1024xf32> to vector<2x2x512xf32>
    %cst_232 = arith.constant 1.250000e+00 : f32
    %980 = vector.broadcast %cst_232 : f32 to vector<2x2x512xf32>
    %981 = arith.mulf %979, %980 : vector<2x2x512xf32>
    %cst_233 = arith.constant dense<0xFF800000> : vector<2x2xf32>
    %982 = vector.multi_reduction <maximumf>, %981, %cst_233 [2] : vector<2x2x512xf32> to vector<2x2xf32>
    %983 = vector.shape_cast %982 : vector<2x2xf32> to vector<2x2x1xf32>
    %984 = vector.broadcast %983 : vector<2x2x1xf32> to vector<2x2x512xf32>
    %985 = arith.subf %981, %984 : vector<2x2x512xf32>
    %986 = math.exp %985 : vector<2x2x512xf32>
    %cst_234 = arith.constant dense<0.000000e+00> : vector<2x2xf32>
    %987 = vector.multi_reduction <add>, %986, %cst_234 [2] : vector<2x2x512xf32> to vector<2x2xf32>
    %988 = vector.shape_cast %987 : vector<2x2xf32> to vector<2x2x1xf32>
    %989 = math.log %988 : vector<2x2x1xf32>
    %cst_235 = arith.constant 0.000000e+00 : f32
    %990 = vector.broadcast %cst_235 : f32 to vector<2x2x1xf32>
    %991 = arith.subf %990, %989 : vector<2x2x1xf32>
    %992 = vector.broadcast %983 : vector<2x2x1xf32> to vector<2x2x512xf32>
    %993 = arith.cmpf oeq, %981, %992 : vector<2x2x512xf32>
    %c512_i32_236 = arith.constant 512 : i32
    %994 = vector.broadcast %c512_i32_236 : i32 to vector<2x2x512xi32>
    %995 = arith.select %993, %177, %994 : vector<2x2x512xi1>, vector<2x2x512xi32>
    %cst_237 = arith.constant dense<2147483647> : vector<2x2xi32>
    %996 = vector.multi_reduction <minsi>, %995, %cst_237 [2] : vector<2x2x512xi32> to vector<2x2xi32>
    %997 = vector.shape_cast %996 : vector<2x2xi32> to vector<2x2x1xi32>
    %998 = arith.sitofp %997 : vector<2x2x1xi32> to vector<2x2x1xf32>
    %cst_238 = arith.constant 2.000000e-03 : f32
    %999 = vector.broadcast %cst_238 : f32 to vector<2x2x1xf32>
    %1000 = arith.mulf %998, %999 : vector<2x2x1xf32>
    %1001 = arith.negf %1000 : vector<2x2x1xf32>
    %1002 = math.exp %1001 : vector<2x2x1xf32>
    %cst_239 = arith.constant 1.000000e+00 : f32
    %1003 = vector.broadcast %cst_239 : f32 to vector<2x2x1xf32>
    %1004 = arith.addf %1003, %1002 : vector<2x2x1xf32>
    %1005 = arith.divf %1003, %1004 : vector<2x2x1xf32>
    %cst_240 = arith.constant 2.000000e+01 : f32
    %1006 = vector.broadcast %cst_240 : f32 to vector<2x2x1xf32>
    %1007 = arith.mulf %1006, %1005 : vector<2x2x1xf32>
    %1008 = vector.shape_cast %991 : vector<2x2x1xf32> to vector<2x2xf32>
    %1009 = vector.shape_cast %1000 : vector<2x2x1xf32> to vector<2x2xf32>
    %1010 = vector.extract_strided_slice %1007 {offsets = [0, 0, 0], sizes = [2, 1, 1], strides = [1, 1, 1]} : vector<2x2x1xf32> to vector<2x1x1xf32>
    %1011 = vector.shape_cast %1010 : vector<2x1x1xf32> to vector<2x1xf32>
    %1012 = vector.shape_cast %1011 : vector<2x1xf32> to vector<2x1xf32>
    %1013 = vector.broadcast %1012 : vector<2x1xf32> to vector<2x32xf32>
    %c16_i32_241 = arith.constant 16 : i32
    %1014 = vector.broadcast %c16_i32_241 : i32 to vector<2x32xi32>
    %1015 = arith.cmpi sge, %176, %1014 : vector<2x32xi32>
    %1016 = vector.extract_strided_slice %1007 {offsets = [0, 1, 0], sizes = [2, 1, 1], strides = [1, 1, 1]} : vector<2x2x1xf32> to vector<2x1x1xf32>
    %1017 = vector.shape_cast %1016 : vector<2x1x1xf32> to vector<2x1xf32>
    %1018 = vector.shape_cast %1017 : vector<2x1xf32> to vector<2x1xf32>
    %1019 = vector.broadcast %1018 : vector<2x1xf32> to vector<2x32xf32>
    %1020 = arith.select %1015, %1019, %1013 : vector<2x32xi1>, vector<2x32xf32>
    %1021 = arith.mulf %944, %1020 : vector<2x32xf32>
    %1022 = arith.addf %913, %1021 : vector<2x32xf32>
    %cst_242 = arith.constant dense<0.000000e+00> : vector<2x96xf32>
    %1023 = tpu.matmul %1021, %150, %cst_242 {dimension_numbers = #tpu.dot_dimension_numbers<[1], [0], [0], [1], [0, 0, 1, 1], [], []>} : vector<2x32xf32>, vector<32x96xf32>, vector<2x96xf32> -> vector<2x96xf32>
    %1024 = arith.addf %1023, %173 : vector<2x96xf32>
    %cst_243 = arith.constant dense<0.000000e+00> : vector<2x96xf32>
    %1025 = tpu.matmul %943, %152, %cst_243 {dimension_numbers = #tpu.dot_dimension_numbers<[1], [0], [0], [1], [0, 0, 1, 1], [], []>} : vector<2x32xf32>, vector<32x96xf32>, vector<2x96xf32> -> vector<2x96xf32>
    %1026 = arith.addf %1025, %175 : vector<2x96xf32>
    %1027 = vector.extract_strided_slice %1024 {offsets = [0, 0], sizes = [2, 32], strides = [1, 1]} : vector<2x96xf32> to vector<2x32xf32>
    %1028 = vector.extract_strided_slice %1026 {offsets = [0, 0], sizes = [2, 32], strides = [1, 1]} : vector<2x96xf32> to vector<2x32xf32>
    %1029 = arith.addf %1027, %1028 : vector<2x32xf32>
    %1030 = arith.negf %1029 : vector<2x32xf32>
    %1031 = math.exp %1030 : vector<2x32xf32>
    %cst_244 = arith.constant 1.000000e+00 : f32
    %1032 = vector.broadcast %cst_244 : f32 to vector<2x32xf32>
    %1033 = arith.addf %1032, %1031 : vector<2x32xf32>
    %1034 = arith.divf %1032, %1033 : vector<2x32xf32>
    %1035 = vector.extract_strided_slice %1024 {offsets = [0, 32], sizes = [2, 32], strides = [1, 1]} : vector<2x96xf32> to vector<2x32xf32>
    %1036 = vector.extract_strided_slice %1026 {offsets = [0, 32], sizes = [2, 32], strides = [1, 1]} : vector<2x96xf32> to vector<2x32xf32>
    %1037 = arith.addf %1035, %1036 : vector<2x32xf32>
    %1038 = arith.negf %1037 : vector<2x32xf32>
    %1039 = math.exp %1038 : vector<2x32xf32>
    %cst_245 = arith.constant 1.000000e+00 : f32
    %1040 = vector.broadcast %cst_245 : f32 to vector<2x32xf32>
    %1041 = arith.addf %1040, %1039 : vector<2x32xf32>
    %1042 = arith.divf %1040, %1041 : vector<2x32xf32>
    %1043 = vector.extract_strided_slice %1024 {offsets = [0, 64], sizes = [2, 32], strides = [1, 1]} : vector<2x96xf32> to vector<2x32xf32>
    %1044 = vector.extract_strided_slice %1026 {offsets = [0, 64], sizes = [2, 32], strides = [1, 1]} : vector<2x96xf32> to vector<2x32xf32>
    %1045 = arith.mulf %1034, %1044 : vector<2x32xf32>
    %1046 = arith.addf %1043, %1045 : vector<2x32xf32>
    %1047 = math.tanh %1046 : vector<2x32xf32>
    %cst_246 = arith.constant 1.000000e+00 : f32
    %1048 = vector.broadcast %cst_246 : f32 to vector<2x32xf32>
    %1049 = arith.subf %1048, %1042 : vector<2x32xf32>
    %1050 = arith.mulf %1049, %1047 : vector<2x32xf32>
    %1051 = arith.mulf %1042, %943 : vector<2x32xf32>
    %1052 = arith.addf %1050, %1051 : vector<2x32xf32>
    %1053 = tpu.concatenate %245, %354, %463, %572, %681, %790, %899, %1008 in 1 : vector<2x2xf32>, vector<2x2xf32>, vector<2x2xf32>, vector<2x2xf32>, vector<2x2xf32>, vector<2x2xf32>, vector<2x2xf32>, vector<2x2xf32> -> vector<2x16xf32>
    %c0_247 = arith.constant 0 : index
    %c0_248 = arith.constant 0 : index
    %1054 = vector.load %arg11[%c0_247, %c0_248] : memref<2x16xf32, #tpu.memory_space<vmem>>, vector<2x16xf32>
    tpu.vector_store %arg11[%c0_247, %c0_248], %1053 {strides = array<i32>} : memref<2x16xf32, #tpu.memory_space<vmem>>, vector<2x16xf32>,
    %1055 = tpu.concatenate %246, %355, %464, %573, %682, %791, %900, %1009 in 1 : vector<2x2xf32>, vector<2x2xf32>, vector<2x2xf32>, vector<2x2xf32>, vector<2x2xf32>, vector<2x2xf32>, vector<2x2xf32>, vector<2x2xf32> -> vector<2x16xf32>
    %c0_249 = arith.constant 0 : index
    %c0_250 = arith.constant 0 : index
    %1056 = vector.load %arg12[%c0_249, %c0_250] : memref<2x16xf32, #tpu.memory_space<vmem>>, vector<2x16xf32>
    tpu.vector_store %arg12[%c0_249, %c0_250], %1055 {strides = array<i32>} : memref<2x16xf32, #tpu.memory_space<vmem>>, vector<2x16xf32>,
    %cst_251 = arith.constant 1.250000e-01 : f32
    %1057 = vector.broadcast %cst_251 : f32 to vector<2x32xf32>
    %1058 = arith.mulf %1022, %1057 : vector<2x32xf32>
    %1059 = arith.addf %1058, %1052 : vector<2x32xf32>
    %cst_252 = arith.constant dense<0.000000e+00> : vector<32xf32>
    %1060 = vector.multi_reduction <add>, %1059, %cst_252 [0] : vector<2x32xf32> to vector<32xf32>
    %1061 = vector.shape_cast %1060 : vector<32xf32> to vector<1x32xf32>
    %cst_253 = arith.constant 2.000000e+00 : f32
    %1062 = vector.broadcast %cst_253 : f32 to vector<1x32xf32>
    %1063 = arith.divf %1061, %1062 : vector<1x32xf32>
    %1064 = vector.broadcast %1063 : vector<1x32xf32> to vector<2x32xf32>
    %1065 = arith.subf %1059, %1064 : vector<2x32xf32>
    %1066 = arith.mulf %1065, %1065 : vector<2x32xf32>
    %cst_254 = arith.constant dense<0.000000e+00> : vector<32xf32>
    %1067 = vector.multi_reduction <add>, %1066, %cst_254 [0] : vector<2x32xf32> to vector<32xf32>
    %1068 = vector.shape_cast %1067 : vector<32xf32> to vector<1x32xf32>
    %cst_255 = arith.constant 2.000000e+00 : f32
    %1069 = vector.broadcast %cst_255 : f32 to vector<1x32xf32>
    %1070 = arith.divf %1068, %1069 : vector<1x32xf32>
    %1071 = vector.broadcast %1063 : vector<1x32xf32> to vector<2x32xf32>
    %1072 = arith.subf %1059, %1071 : vector<2x32xf32>
    %cst_256 = arith.constant 9.99999974E-6 : f32
    %1073 = vector.broadcast %cst_256 : f32 to vector<1x32xf32>
    %1074 = arith.addf %1070, %1073 : vector<1x32xf32>
    %1075 = math.rsqrt %1074 : vector<1x32xf32>
    %1076 = vector.broadcast %1075 : vector<1x32xf32> to vector<2x32xf32>
    %1077 = arith.mulf %1072, %1076 : vector<2x32xf32>
    %1078 = vector.extract_strided_slice %0 {offsets = [13, 0], sizes = [1, 32], strides = [1, 1]} : vector<15x32xf32> to vector<1x32xf32>
    %1079 = vector.broadcast %1078 : vector<1x32xf32> to vector<2x32xf32>
    %1080 = arith.mulf %1077, %1079 : vector<2x32xf32>
    %1081 = vector.extract_strided_slice %0 {offsets = [14, 0], sizes = [1, 32], strides = [1, 1]} : vector<15x32xf32> to vector<1x32xf32>
    %1082 = vector.broadcast %1081 : vector<1x32xf32> to vector<2x32xf32>
    %1083 = arith.addf %1080, %1082 : vector<2x32xf32>
    %c0_257 = arith.constant 0 : index
    %c0_258 = arith.constant 0 : index
    %1084 = vector.load %arg9[%c0_257, %c0_258] : memref<2x32xf32, #tpu.memory_space<vmem>>, vector<2x32xf32>
    tpu.vector_store %arg9[%c0_257, %c0_258], %1083 {strides = array<i32>} : memref<2x32xf32, #tpu.memory_space<vmem>>, vector<2x32xf32>,
    return
  }
}

</mosaic_0001>

<llo_original>
// kernel: tpu_custom_call.1
$region0: #{tpu_custom_call.1}
  #allocation0 [shape = 'u32[]', space=smem, size = 0x4, offset = 0x4, fixed_abs, tag = 'smem constant byte address 0x4 - core index']
  #allocation1 [shape = 'u32[72,128]{1,0:T(1,128)}', space=vmem, size = 0x9000, scoped, tag = 'internal scratch']
  %s0 = inlined_call_operand.vmem [shape: f32[16,64], index: 0, kind: input, shape index: {}]
  %s1 = inlined_call_operand.vmem [shape: f32[64,32], index: 1, kind: input, shape index: {}]
  %s2 = inlined_call_operand.hbm [shape: f32[4,32,96], index: 2, kind: input, shape index: {}]
  %s3 = inlined_call_operand.hbm [shape: f32[4,32,32], index: 3, kind: input, shape index: {}]
  %s4 = inlined_call_operand.hbm [shape: f32[4,32,96], index: 4, kind: input, shape index: {}]
  %s5 = inlined_call_operand.hbm [shape: f32[2,32,1024], index: 5, kind: input, shape index: {}]
  %s6 = inlined_call_operand.vmem [shape: f32[15,32], index: 6, kind: input, shape index: {}]
  %s7 = inlined_call_operand.vmem [shape: f32[8,96], index: 7, kind: input, shape index: {}]
  %s8 = inlined_call_operand.vmem [shape: f32[1,1024], index: 8, kind: input, shape index: {}]
  %s9 = inlined_call_operand.hbm [shape: f32[2,32], index: 9, kind: output, shape index: {0}]
  %s10 = inlined_call_operand.hbm [shape: f32[2,8,32], index: 10, kind: output, shape index: {1}]
  %s11 = inlined_call_operand.hbm [shape: f32[2,16], index: 11, kind: output, shape index: {2}]
  %s12 = inlined_call_operand.hbm [shape: f32[2,16], index: 12, kind: output, shape index: {3}]
  %13 = xla_tuple %s9, %s10, %s11, %s12
  %s14 = sld [smem:[#allocation0]]
  $region86: #{tpu_custom_call.1} parent=0
    _
  %s16 = ssub.s32 1, %s14
  %s17 = scalar_select 0, %s16, %s14
  $region1: #{tpu_custom_call.1} parent=0
    #allocation2 [shape = 'u8[65536]{0}', space=vmem, size = 0x10000, scoped, tag = 'input window, operand 2, single buffered']
    #allocation3 [shape = 's32[1]{0}', space=sflag, size = 0x4, scoped, tag = 'scoped memory for tpu_custom_call.1']
    #allocation4 [shape = 's32[1]{0}', space=sflag, size = 0x4, scoped, tag = 'scoped memory for tpu_custom_call.1']
    #allocation5 [shape = 'u8[65536]{0}', space=vmem, size = 0x10000, scoped, tag = 'input window, operand 3, single buffered']
    #allocation6 [shape = 's32[1]{0}', space=sflag, size = 0x4, scoped, tag = 'scoped memory for tpu_custom_call.1']
    #allocation7 [shape = 'u8[65536]{0}', space=vmem, size = 0x10000, scoped, tag = 'input window, operand 4, single buffered']
    #allocation8 [shape = 'u8[262144]{0}', space=vmem, size = 0x40000, scoped, tag = 'input window, operand 5, single buffered']
    #allocation9 [shape = 's32[1]{0}', space=sflag, size = 0x4, scoped, tag = 'scoped memory for tpu_custom_call.1']
    #allocation10 [shape = 'u8[1024]{0}', space=vmem, size = 0x400, scoped, tag = 'output window, operand 0, single buffered']
    #allocation11 [shape = 'u8[8192]{0}', space=vmem, size = 0x2000, scoped, tag = 'output window, operand 1, single buffered']
    #allocation12 [shape = 's32[1]{0}', space=sflag, size = 0x4, scoped, tag = 'scoped memory for tpu_custom_call.1']
    #allocation13 [shape = 'u8[1024]{0}', space=vmem, size = 0x400, scoped, tag = 'output window, operand 2, single buffered']
    #allocation14 [shape = 'u8[1024]{0}', space=vmem, size = 0x400, scoped, tag = 'output window, operand 3, single buffered']
    #allocation15 [shape = 's32[1]{0}', space=sflag, size = 0x4, scoped, tag = 'scoped memory for tpu_custom_call.1']
    %18 = vsyncpa [#allocation3], 0
    %19 = vsyncpa [#allocation6], 0
    %20 = vsyncpa [#allocation9], 0
    %21 = vsyncpa [#allocation4], 0
    %22 = vsyncpa [#allocation12], 0
    %23 = vsyncpa [#allocation15], 0
    // Predicated region
    $region2: #{tpu_custom_call.1} parent=1 // pred_check
      _
    $region3: #{tpu_custom_call.1} parent=1 // pred_check_branch
      %25 = sbr.rel (0) target = $region5
    $region4: #{tpu_custom_call.1} parent=1 // pred_region
      _
    $region5: #{tpu_custom_call.1} parent=1 // pred_fallthru
      _
    // Predicated region
    $region6: #{tpu_custom_call.1} parent=1 // pred_check
      _
    $region7: #{tpu_custom_call.1} parent=1 // pred_check_branch
      %27 = sbr.rel (0) target = $region9
    $region8: #{tpu_custom_call.1} parent=1 // pred_region
      _
    $region9: #{tpu_custom_call.1} parent=1 // pred_fallthru
      _
    // Predicated region
    $region10: #{tpu_custom_call.1} parent=1 // pred_check
      _
    $region11: #{tpu_custom_call.1} parent=1 // pred_check_branch
      %29 = sbr.rel (0) target = $region13
    $region12: #{tpu_custom_call.1} parent=1 // pred_region
      %31 = vsyncadd [#allocation3], 0
      %s32 = sshll.u32 %s2, 4
      %s33 = int_to_ptr.hbm [resolvable:$true] %s32
      %s34 = sshll.u32 [#allocation2], 4
      %s35 = int_to_ptr.vmem [resolvable:$true] %s34
      %40 = dma.hbm_to_vmem [thread:$0]  %s33, 2048, %s35, [#allocation3], 128, 128, 8
    $region13: #{tpu_custom_call.1} parent=1 // pred_fallthru
      _
    // Predicated region
    $region14: #{tpu_custom_call.1} parent=1 // pred_check
      _
    $region15: #{tpu_custom_call.1} parent=1 // pred_check_branch
      %42 = sbr.rel (0) target = $region17
    $region16: #{tpu_custom_call.1} parent=1 // pred_region
      %44 = vsyncadd [#allocation6], 0
      %s45 = sshll.u32 %s3, 4
      %s46 = int_to_ptr.hbm [resolvable:$true] %s45
      %s47 = sshll.u32 [#allocation5], 4
      %s48 = int_to_ptr.vmem [resolvable:$true] %s47
      %53 = dma.hbm_to_vmem [thread:$0]  %s46, 2048, %s48, [#allocation6], 128, 128, 8
    $region17: #{tpu_custom_call.1} parent=1 // pred_fallthru
      _
    // Predicated region
    $region18: #{tpu_custom_call.1} parent=1 // pred_check
      _
    $region19: #{tpu_custom_call.1} parent=1 // pred_check_branch
      %55 = sbr.rel (0) target = $region21
    $region20: #{tpu_custom_call.1} parent=1 // pred_region
      %57 = vsyncadd [#allocation6], 0
      %s58 = sshll.u32 %s4, 4
      %s59 = int_to_ptr.hbm [resolvable:$true] %s58
      %s60 = sshll.u32 [#allocation7], 4
      %s61 = int_to_ptr.vmem [resolvable:$true] %s60
      %66 = dma.hbm_to_vmem [thread:$0]  %s59, 2048, %s61, [#allocation6], 128, 128, 8
    $region21: #{tpu_custom_call.1} parent=1 // pred_fallthru
      _
    // Predicated region
    $region22: #{tpu_custom_call.1} parent=1 // pred_check
      _
    $region23: #{tpu_custom_call.1} parent=1 // pred_check_branch
      %68 = sbr.rel (0) target = $region25
    $region24: #{tpu_custom_call.1} parent=1 // pred_region
      %70 = vsyncadd [#allocation9], 0
      %s71 = sshll.u32 %s5, 4
      %s72 = int_to_ptr.hbm [resolvable:$true] %s71
      %s73 = sshll.u32 [#allocation8], 4
      %s74 = int_to_ptr.vmem [resolvable:$true] %s73
      %79 = dma.hbm_to_vmem [thread:$0]  %s72, 8192, %s74, [#allocation9], 1024, 1024, 64
    $region25: #{tpu_custom_call.1} parent=1 // pred_fallthru
      _
    // Predicated region
    $region26: #{tpu_custom_call.1} parent=1 // pred_check
      _
    $region27: #{tpu_custom_call.1} parent=1 // pred_check_branch
      %81 = sbr.rel (0) target = $region29
    $region28: #{tpu_custom_call.1} parent=1 // pred_region
      _
    $region29: #{tpu_custom_call.1} parent=1 // pred_fallthru
      _
    // Predicated region
    $region30: #{tpu_custom_call.1} parent=1 // pred_check
      _
    $region31: #{tpu_custom_call.1} parent=1 // pred_check_branch
      %83 = sbr.rel (0) target = $region33
    $region32: #{tpu_custom_call.1} parent=1 // pred_region
      _
    $region33: #{tpu_custom_call.1} parent=1 // pred_fallthru
      _
    // Predicated region
    $region34: #{tpu_custom_call.1} parent=1 // pred_check
      _
    $region35: #{tpu_custom_call.1} parent=1 // pred_check_branch
      %85 = sbr.rel (0) target = $region37
    $region36: #{tpu_custom_call.1} parent=1 // pred_region
      _
    $region37: #{tpu_custom_call.1} parent=1 // pred_fallthru
      _
    // Predicated region
    $region38: #{tpu_custom_call.1} parent=1 // pred_check
      _
    $region39: #{tpu_custom_call.1} parent=1 // pred_check_branch
      %87 = sbr.rel (0) target = $region41
    $region40: #{tpu_custom_call.1} parent=1 // pred_region
      %89 = dma.done [#allocation3], 2048
    $region41: #{tpu_custom_call.1} parent=1 // pred_fallthru
      _
    // Predicated region
    $region42: #{tpu_custom_call.1} parent=1 // pred_check
      _
    $region43: #{tpu_custom_call.1} parent=1 // pred_check_branch
      %91 = sbr.rel (0) target = $region45
    $region44: #{tpu_custom_call.1} parent=1 // pred_region
      %93 = dma.done [#allocation6], 2048
    $region45: #{tpu_custom_call.1} parent=1 // pred_fallthru
      _
    // Predicated region
    $region46: #{tpu_custom_call.1} parent=1 // pred_check
      _
    $region47: #{tpu_custom_call.1} parent=1 // pred_check_branch
      %95 = sbr.rel (0) target = $region49
    $region48: #{tpu_custom_call.1} parent=1 // pred_region
      %97 = dma.done [#allocation6], 2048
    $region49: #{tpu_custom_call.1} parent=1 // pred_fallthru
      _
    // Predicated region
    $region50: #{tpu_custom_call.1} parent=1 // pred_check
      _
    $region51: #{tpu_custom_call.1} parent=1 // pred_check_branch
      %99 = sbr.rel (0) target = $region53
    $region52: #{tpu_custom_call.1} parent=1 // pred_region
      %101 = dma.done [#allocation9], 8192
    $region53: #{tpu_custom_call.1} parent=1 // pred_fallthru
      _
    %v102 = vld [vmem:[%s6] sm:$0xff]
    %v103 = vld [vmem:[%s6 + $0x8] sm:$0x7f]
    %v104 = vld [vmem:[%s7] sm:$0xff]
    %v105 = vld [vmem:[%s0] sm:$0xff]
    %v106 = vld [vmem:[%s0 + $0x8] sm:$0xff]
    %v107 = vld [vmem:[%s1] sm:$0xff]
    %v108 = vld [vmem:[%s1 + $0x8] sm:$0xff]
    %v109 = vld [vmem:[%s1 + $0x10] sm:$0xff]
    %v110 = vld [vmem:[%s1 + $0x18] sm:$0xff]
    %v111 = vld [vmem:[%s1 + $0x20] sm:$0xff]
    %v112 = vld [vmem:[%s1 + $0x28] sm:$0xff]
    %v113 = vld [vmem:[%s1 + $0x30] sm:$0xff]
    %v114 = vld [vmem:[%s1 + $0x38] sm:$0xff]
    %v115 = vperm.slane %v102, 0
    %vm116 = vcmask 523264
    %v118 = vsel %vm116, %v105, 0
    %v121 = vsel %vm116, %v106, 0
    %123 = vmatpush.msra.mxu0 0.0
    %124 = vmatpush.msra.mxu0 0.0
    %125 = vmatpush.msra.mxu0 0.0
    %126 = vmatpush.msra.mxu0 0.0
    %127 = vmatpush.msra.mxu0 0.0
    %128 = vmatpush.msra.mxu0 0.0
    %129 = vmatpush.msra.mxu0 0.0
    %130 = vmatpush.msra.mxu0 0.0
    %131 = vmatpush.msra.mxu0 %v114
    %132 = vmatpush.msra.mxu0 %v113
    %133 = vmatpush.msra.mxu0 %v112
    %134 = vmatpush.msra.mxu0 %v111
    %135 = vmatpush.msra.mxu0 %v110
    %136 = vmatpush.msra.mxu0 %v109
    %137 = vmatpush.msra.mxu0 %v108
    %138 = vmatpush.msra.mxu0 %v107
    %139 = vmatmul.f32.gmra.mxu0 %v118
    %v140 = vpop.f32.mrf.mxu0
    %v141 = vadd.f32 %v115, %v140
    %142 = vmatmul.f32.gmra.mxu0 %v121
    %v143 = vpop.f32.mrf.mxu0
    %v144 = vadd.f32 %v115, %v143
    %145 = vdwg.mxu0
    %v146 = vmul.f32 %v141, %v141
    %v147 = vmul.f32 %v144, %v144
    %vm148 = vcmask 261120
    %v149 = vsel %vm148, %v146, 0.0
    %v150 = vrot.slane %v149, 4
    %v151 = vadd.f32 %v149, %v150
    %v152 = vrot.slane %v151, 2
    %v153 = vadd.f32 %v151, %v152
    %v154 = vrot.slane %v153, 1
    %v155 = vadd.f32 %v153, %v154
    %v156 = vsel %vm148, %v147, 0.0
    %v157 = vrot.slane %v156, 4
    %v158 = vadd.f32 %v156, %v157
    %v159 = vrot.slane %v158, 2
    %v160 = vadd.f32 %v158, %v159
    %v161 = vrot.slane %v160, 1
    %v162 = vadd.f32 %v160, %v161
    %v163 = vadd.f32 %v155, 1e-12
    %v164 = vadd.f32 %v162, 1e-12
    %v165 = vrsqrt.pop %v163
    %v166 = vmul.f32 %v165, %v163
    %v167 = vmul.f32 %v166, %v165
    %v168 = vmul.f32 0.5, %v167
    %v169 = vsub.f32 1.5, %v168
    %v170 = vmul.f32 %v165, %v169
    %vm171 = vweird.f32 %v163
    %vm172 = vweird.f32 %v165
    %vm173 = vmor %vm171, %vm172
    %v174 = vsel %vm173, %v165, %v170
    %v175 = vrsqrt.pop %v164
    %v176 = vmul.f32 %v175, %v164
    %v177 = vmul.f32 %v176, %v175
    %v178 = vmul.f32 0.5, %v177
    %v179 = vsub.f32 1.5, %v178
    %v180 = vmul.f32 %v175, %v179
    %vm181 = vweird.f32 %v164
    %vm182 = vweird.f32 %v175
    %vm183 = vmor %vm181, %vm182
    %v184 = vsel %vm183, %v175, %v180
    %v185 = vmul.f32 %v141, %v174
    %v186 = vmul.f32 %v144, %v184
    %v187 = vld [vmem:[#allocation2] sm:$0xff]
    %v188 = vld [vmem:[#allocation2 + $0x8] sm:$0xff]
    %v189 = vld [vmem:[#allocation2 + $0x10] sm:$0xff]
    %v190 = vld [vmem:[#allocation2 + $0x18] sm:$0xff]
    %v191 = vperm.slane %v104, 0
    %v193 = vsel %vm148, %v185, 0
    %v196 = vsel %vm148, %v186, 0
    %198 = vmatpush.msra.mxu0 0.0
    %199 = vmatpush.msra.mxu0 0.0
    %200 = vmatpush.msra.mxu0 0.0
    %201 = vmatpush.msra.mxu0 0.0
    %202 = vmatpush.msra.mxu0 0.0
    %203 = vmatpush.msra.mxu0 0.0
    %204 = vmatpush.msra.mxu0 0.0
    %205 = vmatpush.msra.mxu0 0.0
    %206 = vmatpush.msra.mxu0 0.0
    %207 = vmatpush.msra.mxu0 0.0
    %208 = vmatpush.msra.mxu0 0.0
    %209 = vmatpush.msra.mxu0 0.0
    %210 = vmatpush.msra.mxu0 %v190
    %211 = vmatpush.msra.mxu0 %v189
    %212 = vmatpush.msra.mxu0 %v188
    %213 = vmatpush.msra.mxu0 %v187
    %214 = vmatmul.f32.gmra.mxu0 %v193
    %v215 = vpop.f32.mrf.mxu0
    %v216 = vadd.f32 %v191, %v215
    %217 = vmatmul.f32.gmra.mxu0 %v196
    %v218 = vpop.f32.mrf.mxu0
    %v219 = vadd.f32 %v191, %v218
    %220 = vdwg.mxu0
    %222 = vrot.lane.b32.xlu0 %v216, 96
    %v223 = vpop.permute.xlu0 %222
    %224 = vrot.lane.b32.xlu0 %v216, 64
    %v225 = vpop.permute.xlu0 %224
    %v226 = vsel %vm148, %v223, 0
    %v228 = vsel %vm148, %v225, 0
    %230 = vmatpush.xpose.msra.mxu0 0.0
    %231 = vmatpush.xpose.msra.mxu0 0.0
    %232 = vmatpush.xpose.msra.mxu0 0.0
    %233 = vmatpush.xpose.msra.mxu0 0.0
    %234 = vmatpush.xpose.msra.mxu0 0.0
    %235 = vmatpush.xpose.msra.mxu0 0.0
    %236 = vmatpush.xpose.msra.mxu0 0.0
    %237 = vmatpush.xpose.msra.mxu0 0.0
    %238 = vmatpush.xpose.msra.mxu0 0.0
    %239 = vmatpush.xpose.msra.mxu0 0.0
    %240 = vmatpush.xpose.msra.mxu0 0.0
    %241 = vmatpush.xpose.msra.mxu0 0.0
    %242 = vmatpush.xpose.msra.mxu0 0.0
    %243 = vmatpush.xpose.msra.mxu0 0.0
    %244 = vmatpush.xpose.msra.mxu0 0.0
    %245 = vmatpush.xpose.msra.mxu0 %v228
    %246 = vmatmul.f32.gmra.mxu0 %v226
    %v247 = vpop.f32.mrf.mxu0
    %v248 = vadd.f32 0.0, %v247
    %249 = vdwg.mxu0
    %251 = vrot.lane.b32.xlu0 %v219, 96
    %v252 = vpop.permute.xlu0 %251
    %253 = vrot.lane.b32.xlu0 %v219, 64
    %v254 = vpop.permute.xlu0 %253
    %v255 = vsel %vm148, %v252, 0
    %v257 = vsel %vm148, %v254, 0
    %259 = vmatpush.xpose.msra.mxu0 0.0
    %260 = vmatpush.xpose.msra.mxu0 0.0
    %261 = vmatpush.xpose.msra.mxu0 0.0
    %262 = vmatpush.xpose.msra.mxu0 0.0
    %263 = vmatpush.xpose.msra.mxu0 0.0
    %264 = vmatpush.xpose.msra.mxu0 0.0
    %265 = vmatpush.xpose.msra.mxu0 0.0
    %266 = vmatpush.xpose.msra.mxu0 0.0
    %267 = vmatpush.xpose.msra.mxu0 0.0
    %268 = vmatpush.xpose.msra.mxu0 0.0
    %269 = vmatpush.xpose.msra.mxu0 0.0
    %270 = vmatpush.xpose.msra.mxu0 0.0
    %271 = vmatpush.xpose.msra.mxu0 0.0
    %272 = vmatpush.xpose.msra.mxu0 0.0
    %273 = vmatpush.xpose.msra.mxu0 0.0
    %274 = vmatpush.xpose.msra.mxu0 %v257
    %275 = vmatmul.f32.gmra.mxu0 %v255
    %v276 = vpop.f32.mrf.mxu0
    %v277 = vadd.f32 0.0, %v276
    %278 = vdwg.mxu0
    %v279 = vmul.f32 %v248, 0.125
    %v280 = vmul.f32 %v277, 0.125
    %vm281 = vcmask 64512
    %v283 = vsel %vm281, %v279, 0
    %285 = vmatpush.msra.mxu0 0.0
    %286 = vmatpush.msra.mxu0 0.0
    %287 = vmatpush.msra.mxu0 0.0
    %288 = vmatpush.msra.mxu0 0.0
    %289 = vmatpush.msra.mxu0 0.0
    %290 = vmatpush.msra.mxu0 0.0
    %291 = vmatpush.msra.mxu0 0.0
    %292 = vmatpush.msra.mxu0 0.0
    %293 = vmatpush.msra.mxu0 0.0
    %294 = vmatpush.msra.mxu0 0.0
    %295 = vmatpush.msra.mxu0 0.0
    %296 = vmatpush.msra.mxu0 0.0
    %297 = vmatpush.msra.mxu0 0.0
    %298 = vmatpush.msra.mxu0 0.0
    %299 = vmatpush.msra.mxu0 0.0
    %300 = vmatpush.msra.mxu0 %v216
    %301 = vmatmul.f32.gmra.mxu0 %v283
    %v302 = vpop.f32.mrf.mxu0
    %v303 = vadd.f32 0.0, %v302
    %304 = vdwg.mxu0
    %v306 = vsel %vm281, %v280, 0
    %308 = vmatpush.msra.mxu0 0.0
    %309 = vmatpush.msra.mxu0 0.0
    %310 = vmatpush.msra.mxu0 0.0
    %311 = vmatpush.msra.mxu0 0.0
    %312 = vmatpush.msra.mxu0 0.0
    %313 = vmatpush.msra.mxu0 0.0
    %314 = vmatpush.msra.mxu0 0.0
    %315 = vmatpush.msra.mxu0 0.0
    %316 = vmatpush.msra.mxu0 0.0
    %317 = vmatpush.msra.mxu0 0.0
    %318 = vmatpush.msra.mxu0 0.0
    %319 = vmatpush.msra.mxu0 0.0
    %320 = vmatpush.msra.mxu0 0.0
    %321 = vmatpush.msra.mxu0 0.0
    %322 = vmatpush.msra.mxu0 0.0
    %323 = vmatpush.msra.mxu0 %v219
    %324 = vmatmul.f32.gmra.mxu0 %v306
    %v325 = vpop.f32.mrf.mxu0
    %v326 = vadd.f32 0.0, %v325
    %327 = vdwg.mxu0
    %v328 = vld [vmem:[#allocation5] sm:$0xff]
    %v329 = vld [vmem:[#allocation5 + $0x8] sm:$0xff]
    %v330 = vld [vmem:[#allocation5 + $0x10] sm:$0xff]
    %v331 = vld [vmem:[#allocation5 + $0x18] sm:$0xff]
    %v332 = vperm.slane %v102, 1
    %v334 = vsel %vm148, %v303, 0
    %v337 = vsel %vm148, %v326, 0
    %339 = vmatpush.msra.mxu0 0.0
    %340 = vmatpush.msra.mxu0 0.0
    %341 = vmatpush.msra.mxu0 0.0
    %342 = vmatpush.msra.mxu0 0.0
    %343 = vmatpush.msra.mxu0 0.0
    %344 = vmatpush.msra.mxu0 0.0
    %345 = vmatpush.msra.mxu0 0.0
    %346 = vmatpush.msra.mxu0 0.0
    %347 = vmatpush.msra.mxu0 0.0
    %348 = vmatpush.msra.mxu0 0.0
    %349 = vmatpush.msra.mxu0 0.0
    %350 = vmatpush.msra.mxu0 0.0
    %351 = vmatpush.msra.mxu0 %v331
    %352 = vmatpush.msra.mxu0 %v330
    %353 = vmatpush.msra.mxu0 %v329
    %354 = vmatpush.msra.mxu0 %v328
    %355 = vmatmul.f32.gmra.mxu0 %v334
    %v356 = vpop.f32.mrf.mxu0
    %v357 = vadd.f32 %v332, %v356
    %358 = vmatmul.f32.gmra.mxu0 %v337
    %v359 = vpop.f32.mrf.mxu0
    %v360 = vadd.f32 %v332, %v359
    %361 = vdwg.mxu0
    %v362 = vperm.slane %v102, 5
    %v363 = vmul.f32 %v357, %v362
    %v364 = vmul.f32 %v360, %v362
    %v365 = vperm.slane %v103, 1
    %v366 = vadd.f32 %v363, %v365
    %v367 = vadd.f32 %v364, %v365
    %v368 = vadd.f32 %v366, %v185
    %v369 = vadd.f32 %v367, %v186
    %s370 = scalar_lea.vmem [#allocation2], 32
    %v371 = vld [vmem:[%s370] sm:$0xff]
    %v372 = vld [vmem:[%s370 + $0x8] sm:$0xff]
    %v373 = vld [vmem:[%s370 + $0x10] sm:$0xff]
    %v374 = vld [vmem:[%s370 + $0x18] sm:$0xff]
    %v375 = vperm.slane %v104, 1
    %v377 = vsel %vm148, %v368, 0
    %v380 = vsel %vm148, %v369, 0
    %382 = vmatpush.msra.mxu0 0.0
    %383 = vmatpush.msra.mxu0 0.0
    %384 = vmatpush.msra.mxu0 0.0
    %385 = vmatpush.msra.mxu0 0.0
    %386 = vmatpush.msra.mxu0 0.0
    %387 = vmatpush.msra.mxu0 0.0
    %388 = vmatpush.msra.mxu0 0.0
    %389 = vmatpush.msra.mxu0 0.0
    %390 = vmatpush.msra.mxu0 0.0
    %391 = vmatpush.msra.mxu0 0.0
    %392 = vmatpush.msra.mxu0 0.0
    %393 = vmatpush.msra.mxu0 0.0
    %394 = vmatpush.msra.mxu0 %v374
    %395 = vmatpush.msra.mxu0 %v373
    %396 = vmatpush.msra.mxu0 %v372
    %397 = vmatpush.msra.mxu0 %v371
    %398 = vmatmul.f32.gmra.mxu0 %v377
    %v399 = vpop.f32.mrf.mxu0
    %v400 = vadd.f32 %v375, %v399
    %401 = vmatmul.f32.gmra.mxu0 %v380
    %v402 = vpop.f32.mrf.mxu0
    %v403 = vadd.f32 %v375, %v402
    %404 = vdwg.mxu0
    %406 = vrot.lane.b32.xlu0 %v400, 96
    %v407 = vpop.permute.xlu0 %406
    %408 = vrot.lane.b32.xlu0 %v400, 64
    %v409 = vpop.permute.xlu0 %408
    %v410 = vsel %vm148, %v407, 0
    %v412 = vsel %vm148, %v409, 0
    %414 = vmatpush.xpose.msra.mxu0 0.0
    %415 = vmatpush.xpose.msra.mxu0 0.0
    %416 = vmatpush.xpose.msra.mxu0 0.0
    %417 = vmatpush.xpose.msra.mxu0 0.0
    %418 = vmatpush.xpose.msra.mxu0 0.0
    %419 = vmatpush.xpose.msra.mxu0 0.0
    %420 = vmatpush.xpose.msra.mxu0 0.0
    %421 = vmatpush.xpose.msra.mxu0 0.0
    %422 = vmatpush.xpose.msra.mxu0 0.0
    %423 = vmatpush.xpose.msra.mxu0 0.0
    %424 = vmatpush.xpose.msra.mxu0 0.0
    %425 = vmatpush.xpose.msra.mxu0 0.0
    %426 = vmatpush.xpose.msra.mxu0 0.0
    %427 = vmatpush.xpose.msra.mxu0 0.0
    %428 = vmatpush.xpose.msra.mxu0 0.0
    %429 = vmatpush.xpose.msra.mxu0 %v412
    %430 = vmatmul.f32.gmra.mxu0 %v410
    %v431 = vpop.f32.mrf.mxu0
    %v432 = vadd.f32 0.0, %v431
    %433 = vdwg.mxu0
    %435 = vrot.lane.b32.xlu0 %v403, 96
    %v436 = vpop.permute.xlu0 %435
    %437 = vrot.lane.b32.xlu0 %v403, 64
    %v438 = vpop.permute.xlu0 %437
    %v439 = vsel %vm148, %v436, 0
    %v441 = vsel %vm148, %v438, 0
    %443 = vmatpush.xpose.msra.mxu0 0.0
    %444 = vmatpush.xpose.msra.mxu0 0.0
    %445 = vmatpush.xpose.msra.mxu0 0.0
    %446 = vmatpush.xpose.msra.mxu0 0.0
    %447 = vmatpush.xpose.msra.mxu0 0.0
    %448 = vmatpush.xpose.msra.mxu0 0.0
    %449 = vmatpush.xpose.msra.mxu0 0.0
    %450 = vmatpush.xpose.msra.mxu0 0.0
    %451 = vmatpush.xpose.msra.mxu0 0.0
    %452 = vmatpush.xpose.msra.mxu0 0.0
    %453 = vmatpush.xpose.msra.mxu0 0.0
    %454 = vmatpush.xpose.msra.mxu0 0.0
    %455 = vmatpush.xpose.msra.mxu0 0.0
    %456 = vmatpush.xpose.msra.mxu0 0.0
    %457 = vmatpush.xpose.msra.mxu0 0.0
    %458 = vmatpush.xpose.msra.mxu0 %v441
    %459 = vmatmul.f32.gmra.mxu0 %v439
    %v460 = vpop.f32.mrf.mxu0
    %v461 = vadd.f32 0.0, %v460
    %462 = vdwg.mxu0
    %v463 = vmul.f32 %v432, 0.125
    %v464 = vmul.f32 %v461, 0.125
    %v466 = vsel %vm281, %v463, 0
    %468 = vmatpush.msra.mxu0 0.0
    %469 = vmatpush.msra.mxu0 0.0
    %470 = vmatpush.msra.mxu0 0.0
    %471 = vmatpush.msra.mxu0 0.0
    %472 = vmatpush.msra.mxu0 0.0
    %473 = vmatpush.msra.mxu0 0.0
    %474 = vmatpush.msra.mxu0 0.0
    %475 = vmatpush.msra.mxu0 0.0
    %476 = vmatpush.msra.mxu0 0.0
    %477 = vmatpush.msra.mxu0 0.0
    %478 = vmatpush.msra.mxu0 0.0
    %479 = vmatpush.msra.mxu0 0.0
    %480 = vmatpush.msra.mxu0 0.0
    %481 = vmatpush.msra.mxu0 0.0
    %482 = vmatpush.msra.mxu0 0.0
    %483 = vmatpush.msra.mxu0 %v400
    %484 = vmatmul.f32.gmra.mxu0 %v466
    %v485 = vpop.f32.mrf.mxu0
    %v486 = vadd.f32 0.0, %v485
    %487 = vdwg.mxu0
    %v489 = vsel %vm281, %v464, 0
    %491 = vmatpush.msra.mxu0 0.0
    %492 = vmatpush.msra.mxu0 0.0
    %493 = vmatpush.msra.mxu0 0.0
    %494 = vmatpush.msra.mxu0 0.0
    %495 = vmatpush.msra.mxu0 0.0
    %496 = vmatpush.msra.mxu0 0.0
    %497 = vmatpush.msra.mxu0 0.0
    %498 = vmatpush.msra.mxu0 0.0
    %499 = vmatpush.msra.mxu0 0.0
    %500 = vmatpush.msra.mxu0 0.0
    %501 = vmatpush.msra.mxu0 0.0
    %502 = vmatpush.msra.mxu0 0.0
    %503 = vmatpush.msra.mxu0 0.0
    %504 = vmatpush.msra.mxu0 0.0
    %505 = vmatpush.msra.mxu0 0.0
    %506 = vmatpush.msra.mxu0 %v403
    %507 = vmatmul.f32.gmra.mxu0 %v489
    %v508 = vpop.f32.mrf.mxu0
    %v509 = vadd.f32 0.0, %v508
    %510 = vdwg.mxu0
    %s511 = scalar_lea.vmem [#allocation5], 32
    %v512 = vld [vmem:[%s511] sm:$0xff]
    %v513 = vld [vmem:[%s511 + $0x8] sm:$0xff]
    %v514 = vld [vmem:[%s511 + $0x10] sm:$0xff]
    %v515 = vld [vmem:[%s511 + $0x18] sm:$0xff]
    %v516 = vperm.slane %v102, 2
    %v518 = vsel %vm148, %v486, 0
    %v521 = vsel %vm148, %v509, 0
    %523 = vmatpush.msra.mxu0 0.0
    %524 = vmatpush.msra.mxu0 0.0
    %525 = vmatpush.msra.mxu0 0.0
    %526 = vmatpush.msra.mxu0 0.0
    %527 = vmatpush.msra.mxu0 0.0
    %528 = vmatpush.msra.mxu0 0.0
    %529 = vmatpush.msra.mxu0 0.0
    %530 = vmatpush.msra.mxu0 0.0
    %531 = vmatpush.msra.mxu0 0.0
    %532 = vmatpush.msra.mxu0 0.0
    %533 = vmatpush.msra.mxu0 0.0
    %534 = vmatpush.msra.mxu0 0.0
    %535 = vmatpush.msra.mxu0 %v515
    %536 = vmatpush.msra.mxu0 %v514
    %537 = vmatpush.msra.mxu0 %v513
    %538 = vmatpush.msra.mxu0 %v512
    %539 = vmatmul.f32.gmra.mxu0 %v518
    %v540 = vpop.f32.mrf.mxu0
    %v541 = vadd.f32 %v516, %v540
    %542 = vmatmul.f32.gmra.mxu0 %v521
    %v543 = vpop.f32.mrf.mxu0
    %v544 = vadd.f32 %v516, %v543
    %545 = vdwg.mxu0
    %v546 = vperm.slane %v102, 6
    %v547 = vmul.f32 %v541, %v546
    %v548 = vmul.f32 %v544, %v546
    %v549 = vperm.slane %v103, 2
    %v550 = vadd.f32 %v547, %v549
    %v551 = vadd.f32 %v548, %v549
    %v552 = vadd.f32 %v550, %v368
    %v553 = vadd.f32 %v551, %v369
    %s554 = scalar_lea.vmem [#allocation2], 64
    %v555 = vld [vmem:[%s554] sm:$0xff]
    %v556 = vld [vmem:[%s554 + $0x8] sm:$0xff]
    %v557 = vld [vmem:[%s554 + $0x10] sm:$0xff]
    %v558 = vld [vmem:[%s554 + $0x18] sm:$0xff]
    %v559 = vperm.slane %v104, 2
    %v561 = vsel %vm148, %v552, 0
    %v564 = vsel %vm148, %v553, 0
    %566 = vmatpush.msra.mxu0 0.0
    %567 = vmatpush.msra.mxu0 0.0
    %568 = vmatpush.msra.mxu0 0.0
    %569 = vmatpush.msra.mxu0 0.0
    %570 = vmatpush.msra.mxu0 0.0
    %571 = vmatpush.msra.mxu0 0.0
    %572 = vmatpush.msra.mxu0 0.0
    %573 = vmatpush.msra.mxu0 0.0
    %574 = vmatpush.msra.mxu0 0.0
    %575 = vmatpush.msra.mxu0 0.0
    %576 = vmatpush.msra.mxu0 0.0
    %577 = vmatpush.msra.mxu0 0.0
    %578 = vmatpush.msra.mxu0 %v558
    %579 = vmatpush.msra.mxu0 %v557
    %580 = vmatpush.msra.mxu0 %v556
    %581 = vmatpush.msra.mxu0 %v555
    %582 = vmatmul.f32.gmra.mxu0 %v561
    %v583 = vpop.f32.mrf.mxu0
    %v584 = vadd.f32 %v559, %v583
    %585 = vmatmul.f32.gmra.mxu0 %v564
    %v586 = vpop.f32.mrf.mxu0
    %v587 = vadd.f32 %v559, %v586
    %588 = vdwg.mxu0
    %590 = vrot.lane.b32.xlu0 %v584, 96
    %v591 = vpop.permute.xlu0 %590
    %592 = vrot.lane.b32.xlu0 %v584, 64
    %v593 = vpop.permute.xlu0 %592
    %v594 = vsel %vm148, %v591, 0
    %v596 = vsel %vm148, %v593, 0
    %598 = vmatpush.xpose.msra.mxu0 0.0
    %599 = vmatpush.xpose.msra.mxu0 0.0
    %600 = vmatpush.xpose.msra.mxu0 0.0
    %601 = vmatpush.xpose.msra.mxu0 0.0
    %602 = vmatpush.xpose.msra.mxu0 0.0
    %603 = vmatpush.xpose.msra.mxu0 0.0
    %604 = vmatpush.xpose.msra.mxu0 0.0
    %605 = vmatpush.xpose.msra.mxu0 0.0
    %606 = vmatpush.xpose.msra.mxu0 0.0
    %607 = vmatpush.xpose.msra.mxu0 0.0
    %608 = vmatpush.xpose.msra.mxu0 0.0
    %609 = vmatpush.xpose.msra.mxu0 0.0
    %610 = vmatpush.xpose.msra.mxu0 0.0
    %611 = vmatpush.xpose.msra.mxu0 0.0
    %612 = vmatpush.xpose.msra.mxu0 0.0
    %613 = vmatpush.xpose.msra.mxu0 %v596
    %614 = vmatmul.f32.gmra.mxu0 %v594
    %v615 = vpop.f32.mrf.mxu0
    %v616 = vadd.f32 0.0, %v615
    %617 = vdwg.mxu0
    %619 = vrot.lane.b32.xlu0 %v587, 96
    %v620 = vpop.permute.xlu0 %619
    %621 = vrot.lane.b32.xlu0 %v587, 64
    %v622 = vpop.permute.xlu0 %621
    %v623 = vsel %vm148, %v620, 0
    %v625 = vsel %vm148, %v622, 0
    %627 = vmatpush.xpose.msra.mxu0 0.0
    %628 = vmatpush.xpose.msra.mxu0 0.0
    %629 = vmatpush.xpose.msra.mxu0 0.0
    %630 = vmatpush.xpose.msra.mxu0 0.0
    %631 = vmatpush.xpose.msra.mxu0 0.0
    %632 = vmatpush.xpose.msra.mxu0 0.0
    %633 = vmatpush.xpose.msra.mxu0 0.0
    %634 = vmatpush.xpose.msra.mxu0 0.0
    %635 = vmatpush.xpose.msra.mxu0 0.0
    %636 = vmatpush.xpose.msra.mxu0 0.0
    %637 = vmatpush.xpose.msra.mxu0 0.0
    %638 = vmatpush.xpose.msra.mxu0 0.0
    %639 = vmatpush.xpose.msra.mxu0 0.0
    %640 = vmatpush.xpose.msra.mxu0 0.0
    %641 = vmatpush.xpose.msra.mxu0 0.0
    %642 = vmatpush.xpose.msra.mxu0 %v625
    %643 = vmatmul.f32.gmra.mxu0 %v623
    %v644 = vpop.f32.mrf.mxu0
    %v645 = vadd.f32 0.0, %v644
    %646 = vdwg.mxu0
    %v647 = vmul.f32 %v616, 0.125
    %v648 = vmul.f32 %v645, 0.125
    %v650 = vsel %vm281, %v647, 0
    %652 = vmatpush.msra.mxu0 0.0
    %653 = vmatpush.msra.mxu0 0.0
    %654 = vmatpush.msra.mxu0 0.0
    %655 = vmatpush.msra.mxu0 0.0
    %656 = vmatpush.msra.mxu0 0.0
    %657 = vmatpush.msra.mxu0 0.0
    %658 = vmatpush.msra.mxu0 0.0
    %659 = vmatpush.msra.mxu0 0.0
    %660 = vmatpush.msra.mxu0 0.0
    %661 = vmatpush.msra.mxu0 0.0
    %662 = vmatpush.msra.mxu0 0.0
    %663 = vmatpush.msra.mxu0 0.0
    %664 = vmatpush.msra.mxu0 0.0
    %665 = vmatpush.msra.mxu0 0.0
    %666 = vmatpush.msra.mxu0 0.0
    %667 = vmatpush.msra.mxu0 %v584
    %668 = vmatmul.f32.gmra.mxu0 %v650
    %v669 = vpop.f32.mrf.mxu0
    %v670 = vadd.f32 0.0, %v669
    %671 = vdwg.mxu0
    %v673 = vsel %vm281, %v648, 0
    %675 = vmatpush.msra.mxu0 0.0
    %676 = vmatpush.msra.mxu0 0.0
    %677 = vmatpush.msra.mxu0 0.0
    %678 = vmatpush.msra.mxu0 0.0
    %679 = vmatpush.msra.mxu0 0.0
    %680 = vmatpush.msra.mxu0 0.0
    %681 = vmatpush.msra.mxu0 0.0
    %682 = vmatpush.msra.mxu0 0.0
    %683 = vmatpush.msra.mxu0 0.0
    %684 = vmatpush.msra.mxu0 0.0
    %685 = vmatpush.msra.mxu0 0.0
    %686 = vmatpush.msra.mxu0 0.0
    %687 = vmatpush.msra.mxu0 0.0
    %688 = vmatpush.msra.mxu0 0.0
    %689 = vmatpush.msra.mxu0 0.0
    %690 = vmatpush.msra.mxu0 %v587
    %691 = vmatmul.f32.gmra.mxu0 %v673
    %v692 = vpop.f32.mrf.mxu0
    %v693 = vadd.f32 0.0, %v692
    %694 = vdwg.mxu0
    %s695 = scalar_lea.vmem [#allocation5], 64
    %v696 = vld [vmem:[%s695] sm:$0xff]
    %v697 = vld [vmem:[%s695 + $0x8] sm:$0xff]
    %v698 = vld [vmem:[%s695 + $0x10] sm:$0xff]
    %v699 = vld [vmem:[%s695 + $0x18] sm:$0xff]
    %v700 = vperm.slane %v102, 3
    %v702 = vsel %vm148, %v670, 0
    %v705 = vsel %vm148, %v693, 0
    %707 = vmatpush.msra.mxu0 0.0
    %708 = vmatpush.msra.mxu0 0.0
    %709 = vmatpush.msra.mxu0 0.0
    %710 = vmatpush.msra.mxu0 0.0
    %711 = vmatpush.msra.mxu0 0.0
    %712 = vmatpush.msra.mxu0 0.0
    %713 = vmatpush.msra.mxu0 0.0
    %714 = vmatpush.msra.mxu0 0.0
    %715 = vmatpush.msra.mxu0 0.0
    %716 = vmatpush.msra.mxu0 0.0
    %717 = vmatpush.msra.mxu0 0.0
    %718 = vmatpush.msra.mxu0 0.0
    %719 = vmatpush.msra.mxu0 %v699
    %720 = vmatpush.msra.mxu0 %v698
    %721 = vmatpush.msra.mxu0 %v697
    %722 = vmatpush.msra.mxu0 %v696
    %723 = vmatmul.f32.gmra.mxu0 %v702
    %v724 = vpop.f32.mrf.mxu0
    %v725 = vadd.f32 %v700, %v724
    %726 = vmatmul.f32.gmra.mxu0 %v705
    %v727 = vpop.f32.mrf.mxu0
    %v728 = vadd.f32 %v700, %v727
    %729 = vdwg.mxu0
    %v730 = vperm.slane %v102, 7
    %v731 = vmul.f32 %v725, %v730
    %v732 = vmul.f32 %v728, %v730
    %v733 = vperm.slane %v103, 3
    %v734 = vadd.f32 %v731, %v733
    %v735 = vadd.f32 %v732, %v733
    %v736 = vadd.f32 %v734, %v552
    %v737 = vadd.f32 %v735, %v553
    %s738 = scalar_lea.vmem [#allocation2], 96
    %v739 = vld [vmem:[%s738] sm:$0xff]
    %v740 = vld [vmem:[%s738 + $0x8] sm:$0xff]
    %v741 = vld [vmem:[%s738 + $0x10] sm:$0xff]
    %v742 = vld [vmem:[%s738 + $0x18] sm:$0xff]
    %v743 = vperm.slane %v104, 3
    %v745 = vsel %vm148, %v736, 0
    %v748 = vsel %vm148, %v737, 0
    %750 = vmatpush.msra.mxu0 0.0
    %751 = vmatpush.msra.mxu0 0.0
    %752 = vmatpush.msra.mxu0 0.0
    %753 = vmatpush.msra.mxu0 0.0
    %754 = vmatpush.msra.mxu0 0.0
    %755 = vmatpush.msra.mxu0 0.0
    %756 = vmatpush.msra.mxu0 0.0
    %757 = vmatpush.msra.mxu0 0.0
    %758 = vmatpush.msra.mxu0 0.0
    %759 = vmatpush.msra.mxu0 0.0
    %760 = vmatpush.msra.mxu0 0.0
    %761 = vmatpush.msra.mxu0 0.0
    %762 = vmatpush.msra.mxu0 %v742
    %763 = vmatpush.msra.mxu0 %v741
    %764 = vmatpush.msra.mxu0 %v740
    %765 = vmatpush.msra.mxu0 %v739
    %766 = vmatmul.f32.gmra.mxu0 %v745
    %v767 = vpop.f32.mrf.mxu0
    %v768 = vadd.f32 %v743, %v767
    %769 = vmatmul.f32.gmra.mxu0 %v748
    %v770 = vpop.f32.mrf.mxu0
    %v771 = vadd.f32 %v743, %v770
    %772 = vdwg.mxu0
    %774 = vrot.lane.b32.xlu0 %v768, 96
    %v775 = vpop.permute.xlu0 %774
    %776 = vrot.lane.b32.xlu0 %v768, 64
    %v777 = vpop.permute.xlu0 %776
    %v778 = vsel %vm148, %v775, 0
    %v780 = vsel %vm148, %v777, 0
    %782 = vmatpush.xpose.msra.mxu0 0.0
    %783 = vmatpush.xpose.msra.mxu0 0.0
    %784 = vmatpush.xpose.msra.mxu0 0.0
    %785 = vmatpush.xpose.msra.mxu0 0.0
    %786 = vmatpush.xpose.msra.mxu0 0.0
    %787 = vmatpush.xpose.msra.mxu0 0.0
    %788 = vmatpush.xpose.msra.mxu0 0.0
    %789 = vmatpush.xpose.msra.mxu0 0.0
    %790 = vmatpush.xpose.msra.mxu0 0.0
    %791 = vmatpush.xpose.msra.mxu0 0.0
    %792 = vmatpush.xpose.msra.mxu0 0.0
    %793 = vmatpush.xpose.msra.mxu0 0.0
    %794 = vmatpush.xpose.msra.mxu0 0.0
    %795 = vmatpush.xpose.msra.mxu0 0.0
    %796 = vmatpush.xpose.msra.mxu0 0.0
    %797 = vmatpush.xpose.msra.mxu0 %v780
    %798 = vmatmul.f32.gmra.mxu0 %v778
    %v799 = vpop.f32.mrf.mxu0
    %v800 = vadd.f32 0.0, %v799
    %801 = vdwg.mxu0
    %803 = vrot.lane.b32.xlu0 %v771, 96
    %v804 = vpop.permute.xlu0 %803
    %805 = vrot.lane.b32.xlu0 %v771, 64
    %v806 = vpop.permute.xlu0 %805
    %v807 = vsel %vm148, %v804, 0
    %v809 = vsel %vm148, %v806, 0
    %811 = vmatpush.xpose.msra.mxu0 0.0
    %812 = vmatpush.xpose.msra.mxu0 0.0
    %813 = vmatpush.xpose.msra.mxu0 0.0
    %814 = vmatpush.xpose.msra.mxu0 0.0
    %815 = vmatpush.xpose.msra.mxu0 0.0
    %816 = vmatpush.xpose.msra.mxu0 0.0
    %817 = vmatpush.xpose.msra.mxu0 0.0
    %818 = vmatpush.xpose.msra.mxu0 0.0
    %819 = vmatpush.xpose.msra.mxu0 0.0
    %820 = vmatpush.xpose.msra.mxu0 0.0
    %821 = vmatpush.xpose.msra.mxu0 0.0
    %822 = vmatpush.xpose.msra.mxu0 0.0
    %823 = vmatpush.xpose.msra.mxu0 0.0
    %824 = vmatpush.xpose.msra.mxu0 0.0
    %825 = vmatpush.xpose.msra.mxu0 0.0
    %826 = vmatpush.xpose.msra.mxu0 %v809
    %827 = vmatmul.f32.gmra.mxu0 %v807
    %v828 = vpop.f32.mrf.mxu0
    %v829 = vadd.f32 0.0, %v828
    %830 = vdwg.mxu0
    %v831 = vmul.f32 %v800, 0.125
    %v832 = vmul.f32 %v829, 0.125
    %v834 = vsel %vm281, %v831, 0
    %836 = vmatpush.msra.mxu0 0.0
    %837 = vmatpush.msra.mxu0 0.0
    %838 = vmatpush.msra.mxu0 0.0
    %839 = vmatpush.msra.mxu0 0.0
    %840 = vmatpush.msra.mxu0 0.0
    %841 = vmatpush.msra.mxu0 0.0
    %842 = vmatpush.msra.mxu0 0.0
    %843 = vmatpush.msra.mxu0 0.0
    %844 = vmatpush.msra.mxu0 0.0
    %845 = vmatpush.msra.mxu0 0.0
    %846 = vmatpush.msra.mxu0 0.0
    %847 = vmatpush.msra.mxu0 0.0
    %848 = vmatpush.msra.mxu0 0.0
    %849 = vmatpush.msra.mxu0 0.0
    %850 = vmatpush.msra.mxu0 0.0
    %851 = vmatpush.msra.mxu0 %v768
    %852 = vmatmul.f32.gmra.mxu0 %v834
    %v853 = vpop.f32.mrf.mxu0
    %v854 = vadd.f32 0.0, %v853
    %855 = vdwg.mxu0
    %v857 = vsel %vm281, %v832, 0
    %859 = vmatpush.msra.mxu0 0.0
    %860 = vmatpush.msra.mxu0 0.0
    %861 = vmatpush.msra.mxu0 0.0
    %862 = vmatpush.msra.mxu0 0.0
    %863 = vmatpush.msra.mxu0 0.0
    %864 = vmatpush.msra.mxu0 0.0
    %865 = vmatpush.msra.mxu0 0.0
    %866 = vmatpush.msra.mxu0 0.0
    %867 = vmatpush.msra.mxu0 0.0
    %868 = vmatpush.msra.mxu0 0.0
    %869 = vmatpush.msra.mxu0 0.0
    %870 = vmatpush.msra.mxu0 0.0
    %871 = vmatpush.msra.mxu0 0.0
    %872 = vmatpush.msra.mxu0 0.0
    %873 = vmatpush.msra.mxu0 0.0
    %874 = vmatpush.msra.mxu0 %v771
    %875 = vmatmul.f32.gmra.mxu0 %v857
    %v876 = vpop.f32.mrf.mxu0
    %v877 = vadd.f32 0.0, %v876
    %878 = vdwg.mxu0
    %s879 = scalar_lea.vmem [#allocation5], 96
    %v880 = vld [vmem:[%s879] sm:$0xff]
    %v881 = vld [vmem:[%s879 + $0x8] sm:$0xff]
    %v882 = vld [vmem:[%s879 + $0x10] sm:$0xff]
    %v883 = vld [vmem:[%s879 + $0x18] sm:$0xff]
    %v884 = vperm.slane %v102, 4
    %v886 = vsel %vm148, %v854, 0
    %v889 = vsel %vm148, %v877, 0
    %891 = vmatpush.msra.mxu0 0.0
    %892 = vmatpush.msra.mxu0 0.0
    %893 = vmatpush.msra.mxu0 0.0
    %894 = vmatpush.msra.mxu0 0.0
    %895 = vmatpush.msra.mxu0 0.0
    %896 = vmatpush.msra.mxu0 0.0
    %897 = vmatpush.msra.mxu0 0.0
    %898 = vmatpush.msra.mxu0 0.0
    %899 = vmatpush.msra.mxu0 0.0
    %900 = vmatpush.msra.mxu0 0.0
    %901 = vmatpush.msra.mxu0 0.0
    %902 = vmatpush.msra.mxu0 0.0
    %903 = vmatpush.msra.mxu0 %v883
    %904 = vmatpush.msra.mxu0 %v882
    %905 = vmatpush.msra.mxu0 %v881
    %906 = vmatpush.msra.mxu0 %v880
    %907 = vmatmul.f32.gmra.mxu0 %v886
    %v908 = vpop.f32.mrf.mxu0
    %v909 = vadd.f32 %v884, %v908
    %910 = vmatmul.f32.gmra.mxu0 %v889
    %v911 = vpop.f32.mrf.mxu0
    %v912 = vadd.f32 %v884, %v911
    %913 = vdwg.mxu0
    %v914 = vperm.slane %v103, 0
    %v915 = vmul.f32 %v909, %v914
    %v916 = vmul.f32 %v912, %v914
    %v917 = vperm.slane %v103, 4
    %v918 = vadd.f32 %v915, %v917
    %v919 = vadd.f32 %v916, %v917
    %v920 = vadd.f32 %v918, %v736
    %v921 = vadd.f32 %v919, %v737
    %v922 = vmul.f32 %v920, %v920
    %v923 = vmul.f32 %v921, %v921
    %v924 = vsel %vm148, %v922, 0.0
    %v925 = vrot.slane %v924, 4
    %v926 = vadd.f32 %v924, %v925
    %v927 = vrot.slane %v926, 2
    %v928 = vadd.f32 %v926, %v927
    %v929 = vrot.slane %v928, 1
    %v930 = vadd.f32 %v928, %v929
    %v931 = vsel %vm148, %v923, 0.0
    %v932 = vrot.slane %v931, 4
    %v933 = vadd.f32 %v931, %v932
    %v934 = vrot.slane %v933, 2
    %v935 = vadd.f32 %v933, %v934
    %v936 = vrot.slane %v935, 1
    %v937 = vadd.f32 %v935, %v936
    %v938 = vadd.f32 %v930, 1e-12
    %v939 = vadd.f32 %v937, 1e-12
    %v940 = vrsqrt.pop %v938
    %v941 = vmul.f32 %v940, %v938
    %v942 = vmul.f32 %v941, %v940
    %v943 = vmul.f32 0.5, %v942
    %v944 = vsub.f32 1.5, %v943
    %v945 = vmul.f32 %v940, %v944
    %vm946 = vweird.f32 %v938
    %vm947 = vweird.f32 %v940
    %vm948 = vmor %vm946, %vm947
    %v949 = vsel %vm948, %v940, %v945
    %v950 = vrsqrt.pop %v939
    %v951 = vmul.f32 %v950, %v939
    %v952 = vmul.f32 %v951, %v950
    %v953 = vmul.f32 0.5, %v952
    %v954 = vsub.f32 1.5, %v953
    %v955 = vmul.f32 %v950, %v954
    %vm956 = vweird.f32 %v939
    %vm957 = vweird.f32 %v950
    %vm958 = vmor %vm956, %vm957
    %v959 = vsel %vm958, %v950, %v955
    %v960 = vmul.f32 %v920, %v949
    %v961 = vmul.f32 %v921, %v959
    %962 = vst.msk [vmem:[#allocation11] sm:$0xff] %vm148, %v960
    %963 = vst.msk [vmem:[#allocation11 + $0x8] sm:$0xff] %vm148, %v961
    %v964 = vrot.slane %v960, 4
    %vm965 = vcmask 1047556
    %v966 = vsel %vm965, 0.0, %v964
    %v968 = vunpack.c.l.s4 1983009808
    %v969 = vunpack.c.0.s8 %v968
    %v970 = vperm.slane %v960, %v969
    %v972 = vunpack.c.l.s4 1983009808
    %v973 = vunpack.c.0.s8 %v972
    %v974 = vperm.slane %v966, %v973
    %v975 = vrot.slane %v961, 4
    %v976 = vsel %vm965, 0.0, %v975
    %v978 = vunpack.c.l.s4 1983009808
    %v979 = vunpack.c.0.s8 %v978
    %v980 = vperm.slane %v961, %v979
    %v982 = vunpack.c.l.s4 1983009808
    %v983 = vunpack.c.0.s8 %v982
    %v984 = vperm.slane %v976, %v983
    %v985 = vrot.slane %v980, 4
    %v986 = vsel %vm965, %v985, %v970
    %v987 = vrot.slane %v970, 4
    %v988 = vsel %vm965, %v980, %v987
    %v990 = vunpack.c.l.s4 1934713408
    %v991 = vunpack.c.0.s8 %v990
    %v992 = vperm.slane %v986, %v991
    %v994 = vunpack.c.l.s4 1934713408
    %v995 = vunpack.c.0.s8 %v994
    %v996 = vperm.slane %v988, %v995
    %v997 = vrot.slane %v984, 4
    %v998 = vsel %vm965, %v997, %v974
    %v999 = vrot.slane %v974, 4
    %v1000 = vsel %vm965, %v984, %v999
    %v1002 = vunpack.c.l.s4 1934713408
    %v1003 = vunpack.c.0.s8 %v1002
    %v1004 = vperm.slane %v998, %v1003
    %v1006 = vunpack.c.l.s4 1934713408
    %v1007 = vunpack.c.0.s8 %v1006
    %v1008 = vperm.slane %v1000, %v1007
    %v1009 = vrot.slane %v992, 4
    %v1010 = vsel %vm965, 0.0, %v1009
    %v1011 = vrot.slane %v996, 4
    %v1012 = vsel %vm965, 0.0, %v1011
    %v1013 = vrot.slane %v1004, 4
    %v1014 = vsel %vm965, 0.0, %v1013
    %v1015 = vrot.slane %v1008, 4
    %v1016 = vsel %vm965, 0.0, %v1015
    %v1017 = vld [vmem:[#allocation7] sm:$0xff]
    %v1018 = vld [vmem:[#allocation7 + $0x8] sm:$0xff]
    %v1019 = vld [vmem:[#allocation7 + $0x10] sm:$0xff]
    %v1020 = vld [vmem:[#allocation7 + $0x18] sm:$0xff]
    %s1021 = scalar_lea.vmem [#allocation7], 32
    %v1022 = vld [vmem:[%s1021] sm:$0xff]
    %v1023 = vld [vmem:[%s1021 + $0x8] sm:$0xff]
    %v1024 = vld [vmem:[%s1021 + $0x10] sm:$0xff]
    %v1025 = vld [vmem:[%s1021 + $0x18] sm:$0xff]
    %s1026 = scalar_lea.vmem [#allocation7], 64
    %v1027 = vld [vmem:[%s1026] sm:$0xff]
    %v1028 = vld [vmem:[%s1026 + $0x8] sm:$0xff]
    %v1029 = vld [vmem:[%s1026 + $0x10] sm:$0xff]
    %v1030 = vld [vmem:[%s1026 + $0x18] sm:$0xff]
    %s1031 = scalar_lea.vmem [#allocation7], 96
    %v1032 = vld [vmem:[%s1031] sm:$0xff]
    %v1033 = vld [vmem:[%s1031 + $0x8] sm:$0xff]
    %v1034 = vld [vmem:[%s1031 + $0x10] sm:$0xff]
    %v1035 = vld [vmem:[%s1031 + $0x18] sm:$0xff]
    %v1036 = vperm.slane %v104, 4
    %1045 = vst [vmem:[#allocation1] ss:$4 sm:$0xff] %v992
    %s1046 = scalar_lea.vmem [#allocation1], 1
    %1047 = vst [vmem:[%s1046] ss:$4 sm:$0xff] %v1010
    %s1048 = scalar_lea.vmem [#allocation1], 2
    %1049 = vst [vmem:[%s1048] ss:$4 sm:$0xff] %v996
    %s1050 = scalar_lea.vmem [#allocation1], 3
    %1051 = vst [vmem:[%s1050] ss:$4 sm:$0xff] %v1012
    %s1052 = scalar_lea.vmem [#allocation1], 32
    %1053 = vst [vmem:[%s1052] ss:$4 sm:$0xff] %v1004
    %s1054 = scalar_lea.vmem [#allocation1], 33
    %1055 = vst [vmem:[%s1054] ss:$4 sm:$0xff] %v1014
    %s1056 = scalar_lea.vmem [#allocation1], 34
    %1057 = vst [vmem:[%s1056] ss:$4 sm:$0xff] %v1008
    %s1058 = scalar_lea.vmem [#allocation1], 35
    %1059 = vst [vmem:[%s1058] ss:$4 sm:$0xff] %v1016
    %v1060 = vld.sshfl [vmem:[#allocation1] sm:$0xff pattern:$0x73625140]
    %v1061 = vld.sshfl [vmem:[#allocation1 + $0x20] sm:$0xff pattern:$0x73625140]
    %v1062 = vsel %vm148, %v1060, 0
    %v1064 = vsel %vm148, %v1061, 0
    %1066 = vmatpush.msra.mxu0 0.0
    %1067 = vmatpush.msra.mxu0 0.0
    %1068 = vmatpush.msra.mxu0 0.0
    %1069 = vmatpush.msra.mxu0 0.0
    %1070 = vmatpush.msra.mxu0 0.0
    %1071 = vmatpush.msra.mxu0 0.0
    %1072 = vmatpush.msra.mxu0 0.0
    %1073 = vmatpush.msra.mxu0 0.0
    %1074 = vmatpush.msra.mxu0 0.0
    %1075 = vmatpush.msra.mxu0 0.0
    %1076 = vmatpush.msra.mxu0 0.0
    %1077 = vmatpush.msra.mxu0 0.0
    %1078 = vmatpush.msra.mxu0 %v1020
    %1079 = vmatpush.msra.mxu0 %v1019
    %1080 = vmatpush.msra.mxu0 %v1018
    %1081 = vmatpush.msra.mxu0 %v1017
    %1082 = vmatmul.f32.gmra.mxu0 %v1062
    %v1083 = vpop.f32.mrf.mxu0
    %v1084 = vadd.f32 %v1036, %v1083
    %1085 = vmatmul.f32.gmra.mxu0 %v1064
    %v1086 = vpop.f32.mrf.mxu0
    %v1087 = vadd.f32 %v1036, %v1086
    %1088 = vdwg.mxu0
    %v1089 = vmax.f32 %v992, 0.0
    %v1090 = vmax.f32 %v1010, 0.0
    %v1091 = vmax.f32 %v996, 0.0
    %v1092 = vmax.f32 %v1012, 0.0
    %v1093 = vmax.f32 %v1004, 0.0
    %v1094 = vmax.f32 %v1014, 0.0
    %v1095 = vmax.f32 %v1008, 0.0
    %v1096 = vmax.f32 %v1016, 0.0
    %v1097 = vld [vmem:[#allocation8] sm:$0xff]
    %v1098 = vld [vmem:[#allocation8 + $0x8] sm:$0xff]
    %v1099 = vld [vmem:[#allocation8 + $0x10] sm:$0xff]
    %v1100 = vld [vmem:[#allocation8 + $0x18] sm:$0xff]
    %v1101 = vld [vmem:[#allocation8 + $0x20] sm:$0xff]
    %v1102 = vld [vmem:[#allocation8 + $0x28] sm:$0xff]
    %v1103 = vld [vmem:[#allocation8 + $0x30] sm:$0xff]
    %v1104 = vld [vmem:[#allocation8 + $0x38] sm:$0xff]
    %v1105 = vld [vmem:[#allocation8 + $0x40] sm:$0xff]
    %v1106 = vld [vmem:[#allocation8 + $0x48] sm:$0xff]
    %v1107 = vld [vmem:[#allocation8 + $0x50] sm:$0xff]
    %v1108 = vld [vmem:[#allocation8 + $0x58] sm:$0xff]
    %v1109 = vld [vmem:[#allocation8 + $0x60] sm:$0xff]
    %v1110 = vld [vmem:[#allocation8 + $0x68] sm:$0xff]
    %v1111 = vld [vmem:[#allocation8 + $0x70] sm:$0xff]
    %v1112 = vld [vmem:[#allocation8 + $0x78] sm:$0xff]
    %v1113 = vld [vmem:[#allocation8 + $0x80] sm:$0xff]
    %v1114 = vld [vmem:[#allocation8 + $0x88] sm:$0xff]
    %v1115 = vld [vmem:[#allocation8 + $0x90] sm:$0xff]
    %v1116 = vld [vmem:[#allocation8 + $0x98] sm:$0xff]
    %v1117 = vld [vmem:[#allocation8 + $0xa0] sm:$0xff]
    %v1118 = vld [vmem:[#allocation8 + $0xa8] sm:$0xff]
    %v1119 = vld [vmem:[#allocation8 + $0xb0] sm:$0xff]
    %v1120 = vld [vmem:[#allocation8 + $0xb8] sm:$0xff]
    %v1121 = vld [vmem:[#allocation8 + $0xc0] sm:$0xff]
    %v1122 = vld [vmem:[#allocation8 + $0xc8] sm:$0xff]
    %v1123 = vld [vmem:[#allocation8 + $0xd0] sm:$0xff]
    %v1124 = vld [vmem:[#allocation8 + $0xd8] sm:$0xff]
    %v1125 = vld [vmem:[#allocation8 + $0xe0] sm:$0xff]
    %v1126 = vld [vmem:[#allocation8 + $0xe8] sm:$0xff]
    %v1127 = vld [vmem:[#allocation8 + $0xf0] sm:$0xff]
    %v1128 = vld [vmem:[#allocation8 + $0xf8] sm:$0xff]
    %v1129 = vld [vmem:[%s8] sm:$0xff]
    %v1131 = vperm.slane %v1129, 0
    %v1132 = vperm.slane %v1129, 1
    %v1133 = vperm.slane %v1129, 2
    %v1134 = vperm.slane %v1129, 3
    %v1135 = vperm.slane %v1129, 4
    %v1136 = vperm.slane %v1129, 5
    %v1137 = vperm.slane %v1129, 6
    %v1138 = vperm.slane %v1129, 7
    %1155 = vst [vmem:[#allocation1] ss:$4 sm:$0xff] %v1089
    %s1156 = scalar_lea.vmem [#allocation1], 1
    %1157 = vst [vmem:[%s1156] ss:$4 sm:$0xff] %v1090
    %s1158 = scalar_lea.vmem [#allocation1], 2
    %1159 = vst [vmem:[%s1158] ss:$4 sm:$0xff] %v1091
    %s1160 = scalar_lea.vmem [#allocation1], 3
    %1161 = vst [vmem:[%s1160] ss:$4 sm:$0xff] %v1092
    %s1162 = scalar_lea.vmem [#allocation1], 32
    %1163 = vst [vmem:[%s1162] ss:$4 sm:$0xff] %v1093
    %s1164 = scalar_lea.vmem [#allocation1], 33
    %1165 = vst [vmem:[%s1164] ss:$4 sm:$0xff] %v1094
    %s1166 = scalar_lea.vmem [#allocation1], 34
    %1167 = vst [vmem:[%s1166] ss:$4 sm:$0xff] %v1095
    %s1168 = scalar_lea.vmem [#allocation1], 35
    %1169 = vst [vmem:[%s1168] ss:$4 sm:$0xff] %v1096
    %v1170 = vld.sshfl [vmem:[#allocation1] sm:$0xff pattern:$0x73625140]
    %v1171 = vld.sshfl [vmem:[#allocation1 + $0x20] sm:$0xff pattern:$0x73625140]
    %v1172 = vsel %vm148, %v1170, 0
    %v1174 = vsel %vm148, %v1171, 0
    %1176 = vmatpush.msra.mxu0 0.0
    %1177 = vmatpush.msra.mxu0 0.0
    %1178 = vmatpush.msra.mxu0 0.0
    %1179 = vmatpush.msra.mxu0 0.0
    %1180 = vmatpush.msra.mxu0 0.0
    %1181 = vmatpush.msra.mxu0 0.0
    %1182 = vmatpush.msra.mxu0 0.0
    %1183 = vmatpush.msra.mxu0 0.0
    %1184 = vmatpush.msra.mxu0 0.0
    %1185 = vmatpush.msra.mxu0 0.0
    %1186 = vmatpush.msra.mxu0 0.0
    %1187 = vmatpush.msra.mxu0 0.0
    %1188 = vmatpush.msra.mxu0 %v1121
    %1189 = vmatpush.msra.mxu0 %v1113
    %1190 = vmatpush.msra.mxu0 %v1105
    %1191 = vmatpush.msra.mxu0 %v1097
    %1192 = vmatmul.f32.gmra.mxu0 %v1172
    %v1193 = vpop.f32.mrf.mxu0
    %v1194 = vadd.f32 %v1131, %v1193
    %1195 = vmatmul.f32.gmra.mxu0 %v1174
    %v1196 = vpop.f32.mrf.mxu0
    %v1197 = vadd.f32 %v1131, %v1196
    %1198 = vdwg.mxu0
    %1199 = vmatpush.msra.mxu0 0.0
    %1200 = vmatpush.msra.mxu0 0.0
    %1201 = vmatpush.msra.mxu0 0.0
    %1202 = vmatpush.msra.mxu0 0.0
    %1203 = vmatpush.msra.mxu0 0.0
    %1204 = vmatpush.msra.mxu0 0.0
    %1205 = vmatpush.msra.mxu0 0.0
    %1206 = vmatpush.msra.mxu0 0.0
    %1207 = vmatpush.msra.mxu0 0.0
    %1208 = vmatpush.msra.mxu0 0.0
    %1209 = vmatpush.msra.mxu0 0.0
    %1210 = vmatpush.msra.mxu0 0.0
    %1211 = vmatpush.msra.mxu0 %v1122
    %1212 = vmatpush.msra.mxu0 %v1114
    %1213 = vmatpush.msra.mxu0 %v1106
    %1214 = vmatpush.msra.mxu0 %v1098
    %1215 = vmatmul.f32.gmra.mxu0 %v1172
    %v1216 = vpop.f32.mrf.mxu0
    %v1217 = vadd.f32 %v1132, %v1216
    %1218 = vmatmul.f32.gmra.mxu0 %v1174
    %v1219 = vpop.f32.mrf.mxu0
    %v1220 = vadd.f32 %v1132, %v1219
    %1221 = vdwg.mxu0
    %1222 = vmatpush.msra.mxu0 0.0
    %1223 = vmatpush.msra.mxu0 0.0
    %1224 = vmatpush.msra.mxu0 0.0
    %1225 = vmatpush.msra.mxu0 0.0
    %1226 = vmatpush.msra.mxu0 0.0
    %1227 = vmatpush.msra.mxu0 0.0
    %1228 = vmatpush.msra.mxu0 0.0
    %1229 = vmatpush.msra.mxu0 0.0
    %1230 = vmatpush.msra.mxu0 0.0
    %1231 = vmatpush.msra.mxu0 0.0
    %1232 = vmatpush.msra.mxu0 0.0
    %1233 = vmatpush.msra.mxu0 0.0
    %1234 = vmatpush.msra.mxu0 %v1123
    %1235 = vmatpush.msra.mxu0 %v1115
    %1236 = vmatpush.msra.mxu0 %v1107
    %1237 = vmatpush.msra.mxu0 %v1099
    %1238 = vmatmul.f32.gmra.mxu0 %v1172
    %v1239 = vpop.f32.mrf.mxu0
    %v1240 = vadd.f32 %v1133, %v1239
    %1241 = vmatmul.f32.gmra.mxu0 %v1174
    %v1242 = vpop.f32.mrf.mxu0
    %v1243 = vadd.f32 %v1133, %v1242
    %1244 = vdwg.mxu0
    %1245 = vmatpush.msra.mxu0 0.0
    %1246 = vmatpush.msra.mxu0 0.0
    %1247 = vmatpush.msra.mxu0 0.0
    %1248 = vmatpush.msra.mxu0 0.0
    %1249 = vmatpush.msra.mxu0 0.0
    %1250 = vmatpush.msra.mxu0 0.0
    %1251 = vmatpush.msra.mxu0 0.0
    %1252 = vmatpush.msra.mxu0 0.0
    %1253 = vmatpush.msra.mxu0 0.0
    %1254 = vmatpush.msra.mxu0 0.0
    %1255 = vmatpush.msra.mxu0 0.0
    %1256 = vmatpush.msra.mxu0 0.0
    %1257 = vmatpush.msra.mxu0 %v1124
    %1258 = vmatpush.msra.mxu0 %v1116
    %1259 = vmatpush.msra.mxu0 %v1108
    %1260 = vmatpush.msra.mxu0 %v1100
    %1261 = vmatmul.f32.gmra.mxu0 %v1172
    %v1262 = vpop.f32.mrf.mxu0
    %v1263 = vadd.f32 %v1134, %v1262
    %1264 = vmatmul.f32.gmra.mxu0 %v1174
    %v1265 = vpop.f32.mrf.mxu0
    %v1266 = vadd.f32 %v1134, %v1265
    %1267 = vdwg.mxu0
    %1268 = vmatpush.msra.mxu0 0.0
    %1269 = vmatpush.msra.mxu0 0.0
    %1270 = vmatpush.msra.mxu0 0.0
    %1271 = vmatpush.msra.mxu0 0.0
    %1272 = vmatpush.msra.mxu0 0.0
    %1273 = vmatpush.msra.mxu0 0.0
    %1274 = vmatpush.msra.mxu0 0.0
    %1275 = vmatpush.msra.mxu0 0.0
    %1276 = vmatpush.msra.mxu0 0.0
    %1277 = vmatpush.msra.mxu0 0.0
    %1278 = vmatpush.msra.mxu0 0.0
    %1279 = vmatpush.msra.mxu0 0.0
    %1280 = vmatpush.msra.mxu0 %v1125
    %1281 = vmatpush.msra.mxu0 %v1117
    %1282 = vmatpush.msra.mxu0 %v1109
    %1283 = vmatpush.msra.mxu0 %v1101
    %1284 = vmatmul.f32.gmra.mxu0 %v1172
    %v1285 = vpop.f32.mrf.mxu0
    %v1286 = vadd.f32 %v1135, %v1285
    %1287 = vmatmul.f32.gmra.mxu0 %v1174
    %v1288 = vpop.f32.mrf.mxu0
    %v1289 = vadd.f32 %v1135, %v1288
    %1290 = vdwg.mxu0
    %1291 = vmatpush.msra.mxu0 0.0
    %1292 = vmatpush.msra.mxu0 0.0
    %1293 = vmatpush.msra.mxu0 0.0
    %1294 = vmatpush.msra.mxu0 0.0
    %1295 = vmatpush.msra.mxu0 0.0
    %1296 = vmatpush.msra.mxu0 0.0
    %1297 = vmatpush.msra.mxu0 0.0
    %1298 = vmatpush.msra.mxu0 0.0
    %1299 = vmatpush.msra.mxu0 0.0
    %1300 = vmatpush.msra.mxu0 0.0
    %1301 = vmatpush.msra.mxu0 0.0
    %1302 = vmatpush.msra.mxu0 0.0
    %1303 = vmatpush.msra.mxu0 %v1126
    %1304 = vmatpush.msra.mxu0 %v1118
    %1305 = vmatpush.msra.mxu0 %v1110
    %1306 = vmatpush.msra.mxu0 %v1102
    %1307 = vmatmul.f32.gmra.mxu0 %v1172
    %v1308 = vpop.f32.mrf.mxu0
    %v1309 = vadd.f32 %v1136, %v1308
    %1310 = vmatmul.f32.gmra.mxu0 %v1174
    %v1311 = vpop.f32.mrf.mxu0
    %v1312 = vadd.f32 %v1136, %v1311
    %1313 = vdwg.mxu0
    %1314 = vmatpush.msra.mxu0 0.0
    %1315 = vmatpush.msra.mxu0 0.0
    %1316 = vmatpush.msra.mxu0 0.0
    %1317 = vmatpush.msra.mxu0 0.0
    %1318 = vmatpush.msra.mxu0 0.0
    %1319 = vmatpush.msra.mxu0 0.0
    %1320 = vmatpush.msra.mxu0 0.0
    %1321 = vmatpush.msra.mxu0 0.0
    %1322 = vmatpush.msra.mxu0 0.0
    %1323 = vmatpush.msra.mxu0 0.0
    %1324 = vmatpush.msra.mxu0 0.0
    %1325 = vmatpush.msra.mxu0 0.0
    %1326 = vmatpush.msra.mxu0 %v1127
    %1327 = vmatpush.msra.mxu0 %v1119
    %1328 = vmatpush.msra.mxu0 %v1111
    %1329 = vmatpush.msra.mxu0 %v1103
    %1330 = vmatmul.f32.gmra.mxu0 %v1172
    %v1331 = vpop.f32.mrf.mxu0
    %v1332 = vadd.f32 %v1137, %v1331
    %1333 = vmatmul.f32.gmra.mxu0 %v1174
    %v1334 = vpop.f32.mrf.mxu0
    %v1335 = vadd.f32 %v1137, %v1334
    %1336 = vdwg.mxu0
    %1337 = vmatpush.msra.mxu0 0.0
    %1338 = vmatpush.msra.mxu0 0.0
    %1339 = vmatpush.msra.mxu0 0.0
    %1340 = vmatpush.msra.mxu0 0.0
    %1341 = vmatpush.msra.mxu0 0.0
    %1342 = vmatpush.msra.mxu0 0.0
    %1343 = vmatpush.msra.mxu0 0.0
    %1344 = vmatpush.msra.mxu0 0.0
    %1345 = vmatpush.msra.mxu0 0.0
    %1346 = vmatpush.msra.mxu0 0.0
    %1347 = vmatpush.msra.mxu0 0.0
    %1348 = vmatpush.msra.mxu0 0.0
    %1349 = vmatpush.msra.mxu0 %v1128
    %1350 = vmatpush.msra.mxu0 %v1120
    %1351 = vmatpush.msra.mxu0 %v1112
    %1352 = vmatpush.msra.mxu0 %v1104
    %1353 = vmatmul.f32.gmra.mxu0 %v1172
    %v1354 = vpop.f32.mrf.mxu0
    %v1355 = vadd.f32 %v1138, %v1354
    %1356 = vmatmul.f32.gmra.mxu0 %v1174
    %v1357 = vpop.f32.mrf.mxu0
    %v1358 = vadd.f32 %v1138, %v1357
    %1359 = vdwg.mxu0
    %s1360 = scalar_lea.vmem [#allocation8], 256
    %v1361 = vld [vmem:[%s1360] sm:$0xff]
    %v1362 = vld [vmem:[%s1360 + $0x8] sm:$0xff]
    %v1363 = vld [vmem:[%s1360 + $0x10] sm:$0xff]
    %v1364 = vld [vmem:[%s1360 + $0x18] sm:$0xff]
    %v1365 = vld [vmem:[%s1360 + $0x20] sm:$0xff]
    %v1366 = vld [vmem:[%s1360 + $0x28] sm:$0xff]
    %v1367 = vld [vmem:[%s1360 + $0x30] sm:$0xff]
    %v1368 = vld [vmem:[%s1360 + $0x38] sm:$0xff]
    %v1369 = vld [vmem:[%s1360 + $0x40] sm:$0xff]
    %v1370 = vld [vmem:[%s1360 + $0x48] sm:$0xff]
    %v1371 = vld [vmem:[%s1360 + $0x50] sm:$0xff]
    %v1372 = vld [vmem:[%s1360 + $0x58] sm:$0xff]
    %v1373 = vld [vmem:[%s1360 + $0x60] sm:$0xff]
    %v1374 = vld [vmem:[%s1360 + $0x68] sm:$0xff]
    %v1375 = vld [vmem:[%s1360 + $0x70] sm:$0xff]
    %v1376 = vld [vmem:[%s1360 + $0x78] sm:$0xff]
    %v1377 = vld [vmem:[%s1360 + $0x80] sm:$0xff]
    %v1378 = vld [vmem:[%s1360 + $0x88] sm:$0xff]
    %v1379 = vld [vmem:[%s1360 + $0x90] sm:$0xff]
    %v1380 = vld [vmem:[%s1360 + $0x98] sm:$0xff]
    %v1381 = vld [vmem:[%s1360 + $0xa0] sm:$0xff]
    %v1382 = vld [vmem:[%s1360 + $0xa8] sm:$0xff]
    %v1383 = vld [vmem:[%s1360 + $0xb0] sm:$0xff]
    %v1384 = vld [vmem:[%s1360 + $0xb8] sm:$0xff]
    %v1385 = vld [vmem:[%s1360 + $0xc0] sm:$0xff]
    %v1386 = vld [vmem:[%s1360 + $0xc8] sm:$0xff]
    %v1387 = vld [vmem:[%s1360 + $0xd0] sm:$0xff]
    %v1388 = vld [vmem:[%s1360 + $0xd8] sm:$0xff]
    %v1389 = vld [vmem:[%s1360 + $0xe0] sm:$0xff]
    %v1390 = vld [vmem:[%s1360 + $0xe8] sm:$0xff]
    %v1391 = vld [vmem:[%s1360 + $0xf0] sm:$0xff]
    %v1392 = vld [vmem:[%s1360 + $0xf8] sm:$0xff]
    %v1393 = vperm.slane %v104, 5
    %v1394 = vperm.slane %v104, 6
    %v1395 = vperm.slane %v104, 7
    %v1396 = vlaneseq
    %v1397 = vand.u32 %v1396, 127
    %v1398 = vadd.s32 %v1397, 128
    %v1399 = vadd.s32 %v1397, 256
    %v1400 = vadd.s32 %v1397, 384
    %v1402 = vsel %vm148, 0.0, 0
    %1404 = vmatpush.msra.mxu0 0.0
    %1405 = vmatpush.msra.mxu0 0.0
    %1406 = vmatpush.msra.mxu0 0.0
    %1407 = vmatpush.msra.mxu0 0.0
    %1408 = vmatpush.msra.mxu0 0.0
    %1409 = vmatpush.msra.mxu0 0.0
    %1410 = vmatpush.msra.mxu0 0.0
    %1411 = vmatpush.msra.mxu0 0.0
    %1412 = vmatpush.msra.mxu0 0.0
    %1413 = vmatpush.msra.mxu0 0.0
    %1414 = vmatpush.msra.mxu0 0.0
    %1415 = vmatpush.msra.mxu0 0.0
    %1416 = vmatpush.msra.mxu0 %v1025
    %1417 = vmatpush.msra.mxu0 %v1024
    %1418 = vmatpush.msra.mxu0 %v1023
    %1419 = vmatpush.msra.mxu0 %v1022
    %1420 = vmatmul.f32.gmra.mxu0 %v1402
    %v1421 = vpop.f32.mrf.mxu0
    %v1422 = vadd.f32 %v1393, %v1421
    %1423 = vdwg.mxu0
    %v1424 = vadd.f32 %v1084, %v1422
    %v1425 = vxor.u32 %v1424, 2147483648
    %v1426 = vmul.f32 %v1425, 1.442695
    %v1427 = vpow.pop %v1426
    %v1428 = vadd.f32 %v1427, 1.0
    %v1429 = vrcp.pop %v1428
    %v1430 = vmul.f32 %v1428, %v1429
    %v1431 = vsub.f32 1.0, %v1430
    %v1432 = vmul.f32 %v1429, %v1431
    %v1433 = vadd.f32 %v1429, %v1432
    %vm1434 = vweird.f32 %v1428
    %vm1435 = vweird.f32 %v1429
    %vm1436 = vmor %vm1434, %vm1435
    %v1437 = vsel %vm1436, %v1429, %v1433
    %v1438 = vand.u32 2147483647, %v1428
    %vm1439 = vcmp.eq.f32.partialorder %v1438, 8.507059e+37
    %v1440 = vand.u32 %v1428, 2147483648
    %v1441 = vor.u32 1.1754944e-38, %v1440
    %v1442 = vsel %vm1439, %v1441, %v1437
    %v1443 = vmul.f32 1.0, %v1442
    %1445 = vrot.lane.b32.xlu0 %v1422, 64
    %v1446 = vpop.permute.xlu0 %1445
    %v1448 = vmul.f32 %v1443, %v1446
    %1450 = vrot.lane.b32.xlu0 %v1448, 64
    %v1451 = vpop.permute.xlu0 %1450
    %v1453 = vadd.f32 %v1084, %v1451
    %v1454 = vtanh.pop %v1453
    %v1455 = vsub.f32 1.0, %v1443
    %1457 = vrot.lane.b32.xlu0 %v1454, 96
    %v1458 = vpop.permute.xlu0 %1457
    %v1460 = vmul.f32 %v1455, %v1458
    %v1461 = vmul.f32 %v1443, 0.0
    %v1462 = vadd.f32 %v1460, %v1461
    %v1463 = vmax.f32 %v1462, 0.0
    %1465 = vrot.lane.b32.xlu0 %v1463, 96
    %v1466 = vpop.permute.xlu0 %1465
    %v1467 = vsel %vm148, %v1466, 0
    %1469 = vmatpush.msra.mxu0 0.0
    %1470 = vmatpush.msra.mxu0 0.0
    %1471 = vmatpush.msra.mxu0 0.0
    %1472 = vmatpush.msra.mxu0 0.0
    %1473 = vmatpush.msra.mxu0 0.0
    %1474 = vmatpush.msra.mxu0 0.0
    %1475 = vmatpush.msra.mxu0 0.0
    %1476 = vmatpush.msra.mxu0 0.0
    %1477 = vmatpush.msra.mxu0 0.0
    %1478 = vmatpush.msra.mxu0 0.0
    %1479 = vmatpush.msra.mxu0 0.0
    %1480 = vmatpush.msra.mxu0 0.0
    %1481 = vmatpush.msra.mxu0 %v1385
    %1482 = vmatpush.msra.mxu0 %v1377
    %1483 = vmatpush.msra.mxu0 %v1369
    %1484 = vmatpush.msra.mxu0 %v1361
    %1485 = vmatmul.f32.gmra.mxu0 %v1467
    %v1486 = vpop.f32.mrf.mxu0
    %v1487 = vadd.f32 0.0, %v1486
    %1488 = vdwg.mxu0
    %1489 = vmatpush.msra.mxu0 0.0
    %1490 = vmatpush.msra.mxu0 0.0
    %1491 = vmatpush.msra.mxu0 0.0
    %1492 = vmatpush.msra.mxu0 0.0
    %1493 = vmatpush.msra.mxu0 0.0
    %1494 = vmatpush.msra.mxu0 0.0
    %1495 = vmatpush.msra.mxu0 0.0
    %1496 = vmatpush.msra.mxu0 0.0
    %1497 = vmatpush.msra.mxu0 0.0
    %1498 = vmatpush.msra.mxu0 0.0
    %1499 = vmatpush.msra.mxu0 0.0
    %1500 = vmatpush.msra.mxu0 0.0
    %1501 = vmatpush.msra.mxu0 %v1386
    %1502 = vmatpush.msra.mxu0 %v1378
    %1503 = vmatpush.msra.mxu0 %v1370
    %1504 = vmatpush.msra.mxu0 %v1362
    %1505 = vmatmul.f32.gmra.mxu0 %v1467
    %v1506 = vpop.f32.mrf.mxu0
    %v1507 = vadd.f32 0.0, %v1506
    %1508 = vdwg.mxu0
    %1509 = vmatpush.msra.mxu0 0.0
    %1510 = vmatpush.msra.mxu0 0.0
    %1511 = vmatpush.msra.mxu0 0.0
    %1512 = vmatpush.msra.mxu0 0.0
    %1513 = vmatpush.msra.mxu0 0.0
    %1514 = vmatpush.msra.mxu0 0.0
    %1515 = vmatpush.msra.mxu0 0.0
    %1516 = vmatpush.msra.mxu0 0.0
    %1517 = vmatpush.msra.mxu0 0.0
    %1518 = vmatpush.msra.mxu0 0.0
    %1519 = vmatpush.msra.mxu0 0.0
    %1520 = vmatpush.msra.mxu0 0.0
    %1521 = vmatpush.msra.mxu0 %v1387
    %1522 = vmatpush.msra.mxu0 %v1379
    %1523 = vmatpush.msra.mxu0 %v1371
    %1524 = vmatpush.msra.mxu0 %v1363
    %1525 = vmatmul.f32.gmra.mxu0 %v1467
    %v1526 = vpop.f32.mrf.mxu0
    %v1527 = vadd.f32 0.0, %v1526
    %1528 = vdwg.mxu0
    %1529 = vmatpush.msra.mxu0 0.0
    %1530 = vmatpush.msra.mxu0 0.0
    %1531 = vmatpush.msra.mxu0 0.0
    %1532 = vmatpush.msra.mxu0 0.0
    %1533 = vmatpush.msra.mxu0 0.0
    %1534 = vmatpush.msra.mxu0 0.0
    %1535 = vmatpush.msra.mxu0 0.0
    %1536 = vmatpush.msra.mxu0 0.0
    %1537 = vmatpush.msra.mxu0 0.0
    %1538 = vmatpush.msra.mxu0 0.0
    %1539 = vmatpush.msra.mxu0 0.0
    %1540 = vmatpush.msra.mxu0 0.0
    %1541 = vmatpush.msra.mxu0 %v1388
    %1542 = vmatpush.msra.mxu0 %v1380
    %1543 = vmatpush.msra.mxu0 %v1372
    %1544 = vmatpush.msra.mxu0 %v1364
    %1545 = vmatmul.f32.gmra.mxu0 %v1467
    %v1546 = vpop.f32.mrf.mxu0
    %v1547 = vadd.f32 0.0, %v1546
    %1548 = vdwg.mxu0
    %1549 = vmatpush.msra.mxu0 0.0
    %1550 = vmatpush.msra.mxu0 0.0
    %1551 = vmatpush.msra.mxu0 0.0
    %1552 = vmatpush.msra.mxu0 0.0
    %1553 = vmatpush.msra.mxu0 0.0
    %1554 = vmatpush.msra.mxu0 0.0
    %1555 = vmatpush.msra.mxu0 0.0
    %1556 = vmatpush.msra.mxu0 0.0
    %1557 = vmatpush.msra.mxu0 0.0
    %1558 = vmatpush.msra.mxu0 0.0
    %1559 = vmatpush.msra.mxu0 0.0
    %1560 = vmatpush.msra.mxu0 0.0
    %1561 = vmatpush.msra.mxu0 %v1389
    %1562 = vmatpush.msra.mxu0 %v1381
    %1563 = vmatpush.msra.mxu0 %v1373
    %1564 = vmatpush.msra.mxu0 %v1365
    %1565 = vmatmul.f32.gmra.mxu0 %v1467
    %v1566 = vpop.f32.mrf.mxu0
    %v1567 = vadd.f32 0.0, %v1566
    %1568 = vdwg.mxu0
    %1569 = vmatpush.msra.mxu0 0.0
    %1570 = vmatpush.msra.mxu0 0.0
    %1571 = vmatpush.msra.mxu0 0.0
    %1572 = vmatpush.msra.mxu0 0.0
    %1573 = vmatpush.msra.mxu0 0.0
    %1574 = vmatpush.msra.mxu0 0.0
    %1575 = vmatpush.msra.mxu0 0.0
    %1576 = vmatpush.msra.mxu0 0.0
    %1577 = vmatpush.msra.mxu0 0.0
    %1578 = vmatpush.msra.mxu0 0.0
    %1579 = vmatpush.msra.mxu0 0.0
    %1580 = vmatpush.msra.mxu0 0.0
    %1581 = vmatpush.msra.mxu0 %v1390
    %1582 = vmatpush.msra.mxu0 %v1382
    %1583 = vmatpush.msra.mxu0 %v1374
    %1584 = vmatpush.msra.mxu0 %v1366
    %1585 = vmatmul.f32.gmra.mxu0 %v1467
    %v1586 = vpop.f32.mrf.mxu0
    %v1587 = vadd.f32 0.0, %v1586
    %1588 = vdwg.mxu0
    %1589 = vmatpush.msra.mxu0 0.0
    %1590 = vmatpush.msra.mxu0 0.0
    %1591 = vmatpush.msra.mxu0 0.0
    %1592 = vmatpush.msra.mxu0 0.0
    %1593 = vmatpush.msra.mxu0 0.0
    %1594 = vmatpush.msra.mxu0 0.0
    %1595 = vmatpush.msra.mxu0 0.0
    %1596 = vmatpush.msra.mxu0 0.0
    %1597 = vmatpush.msra.mxu0 0.0
    %1598 = vmatpush.msra.mxu0 0.0
    %1599 = vmatpush.msra.mxu0 0.0
    %1600 = vmatpush.msra.mxu0 0.0
    %1601 = vmatpush.msra.mxu0 %v1391
    %1602 = vmatpush.msra.mxu0 %v1383
    %1603 = vmatpush.msra.mxu0 %v1375
    %1604 = vmatpush.msra.mxu0 %v1367
    %1605 = vmatmul.f32.gmra.mxu0 %v1467
    %v1606 = vpop.f32.mrf.mxu0
    %v1607 = vadd.f32 0.0, %v1606
    %1608 = vdwg.mxu0
    %1609 = vmatpush.msra.mxu0 0.0
    %1610 = vmatpush.msra.mxu0 0.0
    %1611 = vmatpush.msra.mxu0 0.0
    %1612 = vmatpush.msra.mxu0 0.0
    %1613 = vmatpush.msra.mxu0 0.0
    %1614 = vmatpush.msra.mxu0 0.0
    %1615 = vmatpush.msra.mxu0 0.0
    %1616 = vmatpush.msra.mxu0 0.0
    %1617 = vmatpush.msra.mxu0 0.0
    %1618 = vmatpush.msra.mxu0 0.0
    %1619 = vmatpush.msra.mxu0 0.0
    %1620 = vmatpush.msra.mxu0 0.0
    %1621 = vmatpush.msra.mxu0 %v1392
    %1622 = vmatpush.msra.mxu0 %v1384
    %1623 = vmatpush.msra.mxu0 %v1376
    %1624 = vmatpush.msra.mxu0 %v1368
    %1625 = vmatmul.f32.gmra.mxu0 %v1467
    %v1626 = vpop.f32.mrf.mxu0
    %v1627 = vadd.f32 0.0, %v1626
    %1628 = vdwg.mxu0
    %v1629 = vadd.f32 %v1194, %v1487
    %v1630 = vadd.f32 %v1217, %v1507
    %v1631 = vadd.f32 %v1240, %v1527
    %v1632 = vadd.f32 %v1263, %v1547
    %v1633 = vadd.f32 %v1286, %v1567
    %v1634 = vadd.f32 %v1309, %v1587
    %v1635 = vadd.f32 %v1332, %v1607
    %v1636 = vadd.f32 %v1355, %v1627
    %v1645 = vrot.slane %v1630, 6
    %v1646 = vrot.slane %v1631, 4
    %v1647 = vrot.slane %v1632, 2
    %v1648 = vrot.slane %v1634, 6
    %v1649 = vrot.slane %v1635, 4
    %v1650 = vrot.slane %v1636, 2
    %vm1651 = vcmask 1041408
    %v1652 = vsel %vm1651, %v1629, %v1645
    %vm1653 = vcmask 1045508
    %v1654 = vsel %vm1653, %v1646, %v1647
    %vm1655 = vcmask 1043456
    %v1656 = vsel %vm1655, %v1652, %v1654
    %v1657 = vsel %vm1651, %v1633, %v1648
    %v1658 = vsel %vm1653, %v1649, %v1650
    %v1659 = vsel %vm1655, %v1657, %v1658
    %v1662 = vrot.slane %v1659, 4
    %v1663 = vsel %vm965, %v1662, %v1656
    %v1664 = vrot.slane %v1656, 4
    %v1665 = vsel %vm965, %v1659, %v1664
    %v1667 = vunpack.c.l.s4 1934713408
    %v1668 = vunpack.c.0.s8 %v1667
    %v1669 = vperm.slane %v1663, %v1668
    %v1671 = vunpack.c.l.s4 1934713408
    %v1672 = vunpack.c.0.s8 %v1671
    %v1673 = vperm.slane %v1665, %v1672
    %v1674 = vrot.slane %v1673, 4
    %v1675 = vsel %vm965, %v1674, %v1669
    %v1676 = vrot.slane %v1669, 4
    %v1677 = vsel %vm965, %v1673, %v1676
    %v1678 = vmul.f32 %v1675, 1.25
    %v1679 = vmul.f32 %v1677, 1.25
    %1682 = vst [vmem:[#allocation1] ss:$4 sm:$0xff] %v1678
    %v1683 = vld.sshfl [vmem:[#allocation1] sm:$0xff pattern:$0x73625140]
    %v1684 = vld.sshfl [vmem:[#allocation1 + $0x8] sm:$0xff pattern:$0x73625140]
    %v1685 = vld.sshfl [vmem:[#allocation1 + $0x10] sm:$0xff pattern:$0x73625140]
    %v1686 = vld.sshfl [vmem:[#allocation1 + $0x18] sm:$0xff pattern:$0x73625140]
    %s1687 = scalar_lea.vmem [#allocation1], 32
    %1688 = vst [vmem:[%s1687] ss:$4 sm:$0xff] %v1679
    %v1689 = vld.sshfl [vmem:[#allocation1 + $0x20] sm:$0xff pattern:$0x73625140]
    %v1690 = vld.sshfl [vmem:[#allocation1 + $0x28] sm:$0xff pattern:$0x73625140]
    %v1691 = vld.sshfl [vmem:[#allocation1 + $0x30] sm:$0xff pattern:$0x73625140]
    %v1692 = vld.sshfl [vmem:[#allocation1 + $0x38] sm:$0xff pattern:$0x73625140]
    %v1701 = vsel %vm1651, %v1683, -inf
    %v1702 = vsel %vm1651, %v1684, -inf
    %v1703 = vsel %vm1651, %v1685, -inf
    %v1704 = vmax.f32 %v1701, %v1703
    %v1705 = vsel %vm1651, %v1686, -inf
    %v1706 = vmax.f32 %v1702, %v1705
    %v1707 = vmax.f32 %v1704, %v1706
    %1708 = vmax.xlane.f32.xlu0 %v1707
    %v1709 = vpop.xlane.xlu0 %1708
    %v1710 = vsel %vm1651, %v1689, -inf
    %v1711 = vsel %vm1651, %v1690, -inf
    %v1712 = vsel %vm1651, %v1691, -inf
    %v1713 = vmax.f32 %v1710, %v1712
    %v1714 = vsel %vm1651, %v1692, -inf
    %v1715 = vmax.f32 %v1711, %v1714
    %v1716 = vmax.f32 %v1713, %v1715
    %1717 = vmax.xlane.f32.xlu0 %v1716
    %v1718 = vpop.xlane.xlu0 %1717
    %v1722 = vunpack.c.l.s4 269488144
    %v1723 = vunpack.c.0.s8 %v1722
    %v1724 = vperm.slane %v1709, %v1723
    %v1726 = vunpack.c.l.s4 269488144
    %v1727 = vunpack.c.0.s8 %v1726
    %v1728 = vperm.slane %v1718, %v1727
    %v1731 = vsub.f32 %v1678, %v1724
    %v1732 = vsub.f32 %v1679, %v1728
    %v1733 = vmul.f32 %v1731, 1.442695
    %v1734 = vpow.pop %v1733
    %v1735 = vmul.f32 %v1732, 1.442695
    %v1736 = vpow.pop %v1735
    %1739 = vst [vmem:[#allocation1] ss:$4 sm:$0xff] %v1734
    %v1740 = vld.sshfl [vmem:[#allocation1] sm:$0xff pattern:$0x73625140]
    %v1741 = vld.sshfl [vmem:[#allocation1 + $0x8] sm:$0xff pattern:$0x73625140]
    %v1742 = vld.sshfl [vmem:[#allocation1 + $0x10] sm:$0xff pattern:$0x73625140]
    %v1743 = vld.sshfl [vmem:[#allocation1 + $0x18] sm:$0xff pattern:$0x73625140]
    %s1744 = scalar_lea.vmem [#allocation1], 32
    %1745 = vst [vmem:[%s1744] ss:$4 sm:$0xff] %v1736
    %v1746 = vld.sshfl [vmem:[#allocation1 + $0x20] sm:$0xff pattern:$0x73625140]
    %v1747 = vld.sshfl [vmem:[#allocation1 + $0x28] sm:$0xff pattern:$0x73625140]
    %v1748 = vld.sshfl [vmem:[#allocation1 + $0x30] sm:$0xff pattern:$0x73625140]
    %v1749 = vld.sshfl [vmem:[#allocation1 + $0x38] sm:$0xff pattern:$0x73625140]
    %v1758 = vsel %vm1651, %v1740, 0.0
    %v1759 = vsel %vm1651, %v1741, 0.0
    %v1760 = vadd.f32 %v1758, %v1759
    %v1761 = vsel %vm1651, %v1742, 0.0
    %v1762 = vadd.f32 %v1760, %v1761
    %v1763 = vsel %vm1651, %v1743, 0.0
    %v1764 = vadd.f32 %v1762, %v1763
    %1765 = vadd.xlane.f32.xlu0 %v1764
    %v1766 = vpop.xlane.xlu0 %1765
    %v1767 = vsel %vm1651, %v1746, 0.0
    %v1768 = vsel %vm1651, %v1747, 0.0
    %v1769 = vadd.f32 %v1767, %v1768
    %v1770 = vsel %vm1651, %v1748, 0.0
    %v1771 = vadd.f32 %v1769, %v1770
    %v1772 = vsel %vm1651, %v1749, 0.0
    %v1773 = vadd.f32 %v1771, %v1772
    %1774 = vadd.xlane.f32.xlu0 %v1773
    %v1775 = vpop.xlane.xlu0 %1774
    %v1776 = vlog2.pop %v1766
    %v1777 = vmul.f32 %v1776, 0.6931472
    %v1778 = vlog2.pop %v1775
    %v1779 = vmul.f32 %v1778, 0.6931472
    %v1780 = vsub.f32 0.0, %v1777
    %v1781 = vsub.f32 0.0, %v1779
    %vm1782 = vcmp.eq.f32.partialorder %v1678, %v1724
    %vm1783 = vcmp.eq.f32.partialorder %v1679, %v1728
    %v1784 = vrot.slane %v1398, 6
    %v1785 = vrot.slane %v1399, 4
    %v1786 = vrot.slane %v1400, 2
    %v1787 = vsel %vm1651, %v1397, %v1784
    %v1788 = vsel %vm1653, %v1785, %v1786
    %v1789 = vsel %vm1655, %v1787, %v1788
    %v1790 = vsel %vm1782, %v1789, 512
    %v1791 = vsel %vm1783, %v1789, 512
    %1792 = vst [vmem:[#allocation1] ss:$4 sm:$0xff] %v1790
    %v1793 = vld.sshfl [vmem:[#allocation1] sm:$0xff pattern:$0x73625140]
    %v1794 = vld.sshfl [vmem:[#allocation1 + $0x8] sm:$0xff pattern:$0x73625140]
    %v1795 = vld.sshfl [vmem:[#allocation1 + $0x10] sm:$0xff pattern:$0x73625140]
    %v1796 = vld.sshfl [vmem:[#allocation1 + $0x18] sm:$0xff pattern:$0x73625140]
    %s1797 = scalar_lea.vmem [#allocation1], 32
    %1798 = vst [vmem:[%s1797] ss:$4 sm:$0xff] %v1791
    %v1799 = vld.sshfl [vmem:[#allocation1 + $0x20] sm:$0xff pattern:$0x73625140]
    %v1800 = vld.sshfl [vmem:[#allocation1 + $0x28] sm:$0xff pattern:$0x73625140]
    %v1801 = vld.sshfl [vmem:[#allocation1 + $0x30] sm:$0xff pattern:$0x73625140]
    %v1802 = vld.sshfl [vmem:[#allocation1 + $0x38] sm:$0xff pattern:$0x73625140]
    %v1803 = vsel %vm1651, %v1793, 2147483647
    %v1804 = vsel %vm1651, %v1794, 2147483647
    %v1805 = vsel %vm1651, %v1795, 2147483647
    %vm1806 = vcmp.lt.s32.totalorder %v1803, %v1805
    %v1807 = vsel %vm1806, %v1803, %v1805
    %v1808 = vsel %vm1651, %v1796, 2147483647
    %vm1809 = vcmp.lt.s32.totalorder %v1804, %v1808
    %v1810 = vsel %vm1809, %v1804, %v1808
    %vm1811 = vcmp.lt.s32.totalorder %v1807, %v1810
    %v1812 = vsel %vm1811, %v1807, %v1810
    %v1813 = vand.u32 %v1812, 65535
    %v1814 = vshra.s32 %v1812, 16
    %v1815 = vcvt.s32.f32 %v1813
    %v1816 = vcvt.s32.f32 %v1814
    %1817 = vmin.xlane.f32.xlu0 %v1816
    %v1818 = vpop.xlane.xlu0 %1817
    %vm1819 = vcmp.eq.f32.partialorder %v1816, %v1818
    %v1820 = vsel %vm1819, %v1815, inf
    %1821 = vmin.xlane.f32.xlu0 %v1820
    %v1822 = vpop.xlane.xlu0 %1821
    %v1823 = vcvt.f32.s32 %v1822
    %v1824 = vcvt.f32.s32 %v1818
    %v1825 = vshll.u32 %v1824, 16
    %v1826 = vadd.s32 %v1825, %v1823
    %v1827 = vsel %vm1651, %v1799, 2147483647
    %v1828 = vsel %vm1651, %v1800, 2147483647
    %v1829 = vsel %vm1651, %v1801, 2147483647
    %vm1830 = vcmp.lt.s32.totalorder %v1827, %v1829
    %v1831 = vsel %vm1830, %v1827, %v1829
    %v1832 = vsel %vm1651, %v1802, 2147483647
    %vm1833 = vcmp.lt.s32.totalorder %v1828, %v1832
    %v1834 = vsel %vm1833, %v1828, %v1832
    %vm1835 = vcmp.lt.s32.totalorder %v1831, %v1834
    %v1836 = vsel %vm1835, %v1831, %v1834
    %v1837 = vand.u32 %v1836, 65535
    %v1838 = vshra.s32 %v1836, 16
    %v1839 = vcvt.s32.f32 %v1837
    %v1840 = vcvt.s32.f32 %v1838
    %1841 = vmin.xlane.f32.xlu0 %v1840
    %v1842 = vpop.xlane.xlu0 %1841
    %vm1843 = vcmp.eq.f32.partialorder %v1840, %v1842
    %v1844 = vsel %vm1843, %v1839, inf
    %1845 = vmin.xlane.f32.xlu0 %v1844
    %v1846 = vpop.xlane.xlu0 %1845
    %v1847 = vcvt.f32.s32 %v1846
    %v1848 = vcvt.f32.s32 %v1842
    %v1849 = vshll.u32 %v1848, 16
    %v1850 = vadd.s32 %v1849, %v1847
    %v1851 = vcvt.s32.f32 %v1826
    %v1852 = vcvt.s32.f32 %v1850
    %v1853 = vmul.f32 %v1851, 0.002
    %v1854 = vmul.f32 %v1852, 0.002
    %v1855 = vxor.u32 %v1853, 2147483648
    %v1856 = vxor.u32 %v1854, 2147483648
    %v1857 = vmul.f32 %v1855, 1.442695
    %v1858 = vpow.pop %v1857
    %v1859 = vmul.f32 %v1856, 1.442695
    %v1860 = vpow.pop %v1859
    %v1861 = vadd.f32 %v1858, 1.0
    %v1862 = vadd.f32 %v1860, 1.0
    %v1863 = vrcp.pop %v1861
    %v1864 = vmul.f32 %v1861, %v1863
    %v1865 = vsub.f32 1.0, %v1864
    %v1866 = vmul.f32 %v1863, %v1865
    %v1867 = vadd.f32 %v1863, %v1866
    %vm1868 = vweird.f32 %v1861
    %vm1869 = vweird.f32 %v1863
    %vm1870 = vmor %vm1868, %vm1869
    %v1871 = vsel %vm1870, %v1863, %v1867
    %v1872 = vand.u32 2147483647, %v1861
    %vm1873 = vcmp.eq.f32.partialorder %v1872, 8.507059e+37
    %v1874 = vand.u32 %v1861, 2147483648
    %v1875 = vor.u32 1.1754944e-38, %v1874
    %v1876 = vsel %vm1873, %v1875, %v1871
    %v1877 = vmul.f32 1.0, %v1876
    %v1878 = vrcp.pop %v1862
    %v1879 = vmul.f32 %v1862, %v1878
    %v1880 = vsub.f32 1.0, %v1879
    %v1881 = vmul.f32 %v1878, %v1880
    %v1882 = vadd.f32 %v1878, %v1881
    %vm1883 = vweird.f32 %v1862
    %vm1884 = vweird.f32 %v1878
    %vm1885 = vmor %vm1883, %vm1884
    %v1886 = vsel %vm1885, %v1878, %v1882
    %v1887 = vand.u32 2147483647, %v1862
    %vm1888 = vcmp.eq.f32.partialorder %v1887, 8.507059e+37
    %v1889 = vand.u32 %v1862, 2147483648
    %v1890 = vor.u32 1.1754944e-38, %v1889
    %v1891 = vsel %vm1888, %v1890, %v1886
    %v1892 = vmul.f32 1.0, %v1891
    %v1893 = vmul.f32 %v1877, 20.0
    %v1894 = vmul.f32 %v1892, 20.0
    %vm1895 = vcmp.ge.s32.totalorder %v1397, 16
    %v1898 = vrot.slane %v1893, 1
    %vm1899 = vcmask 1041409
    %v1900 = vsel %vm1899, %v1894, %v1898
    %v1902 = vrot.slane %v1894, 7
    %v1903 = vsel %vm1899, %v1902, %v1893
    %v1905 = vsel %vm1895, %v1900, %v1903
    %v1906 = vmul.f32 %v992, %v1905
    %v1907 = vadd.f32 %v1906, 0.0
    %v1909 = vsel %vm148, %v1906, 0
    %1911 = vmatpush.msra.mxu0 0.0
    %1912 = vmatpush.msra.mxu0 0.0
    %1913 = vmatpush.msra.mxu0 0.0
    %1914 = vmatpush.msra.mxu0 0.0
    %1915 = vmatpush.msra.mxu0 0.0
    %1916 = vmatpush.msra.mxu0 0.0
    %1917 = vmatpush.msra.mxu0 0.0
    %1918 = vmatpush.msra.mxu0 0.0
    %1919 = vmatpush.msra.mxu0 0.0
    %1920 = vmatpush.msra.mxu0 0.0
    %1921 = vmatpush.msra.mxu0 0.0
    %1922 = vmatpush.msra.mxu0 0.0
    %1923 = vmatpush.msra.mxu0 %v1030
    %1924 = vmatpush.msra.mxu0 %v1029
    %1925 = vmatpush.msra.mxu0 %v1028
    %1926 = vmatpush.msra.mxu0 %v1027
    %1927 = vmatmul.f32.gmra.mxu0 %v1909
    %v1928 = vpop.f32.mrf.mxu0
    %v1929 = vadd.f32 %v1394, %v1928
    %1930 = vdwg.mxu0
    %1931 = vmatpush.msra.mxu0 0.0
    %1932 = vmatpush.msra.mxu0 0.0
    %1933 = vmatpush.msra.mxu0 0.0
    %1934 = vmatpush.msra.mxu0 0.0
    %1935 = vmatpush.msra.mxu0 0.0
    %1936 = vmatpush.msra.mxu0 0.0
    %1937 = vmatpush.msra.mxu0 0.0
    %1938 = vmatpush.msra.mxu0 0.0
    %1939 = vmatpush.msra.mxu0 0.0
    %1940 = vmatpush.msra.mxu0 0.0
    %1941 = vmatpush.msra.mxu0 0.0
    %1942 = vmatpush.msra.mxu0 0.0
    %1943 = vmatpush.msra.mxu0 %v1035
    %1944 = vmatpush.msra.mxu0 %v1034
    %1945 = vmatpush.msra.mxu0 %v1033
    %1946 = vmatpush.msra.mxu0 %v1032
    %1947 = vmatmul.f32.gmra.mxu0 %v1402
    %v1948 = vpop.f32.mrf.mxu0
    %v1949 = vadd.f32 %v1395, %v1948
    %1950 = vdwg.mxu0
    %v1951 = vadd.f32 %v1929, %v1949
    %v1952 = vxor.u32 %v1951, 2147483648
    %v1953 = vmul.f32 %v1952, 1.442695
    %v1954 = vpow.pop %v1953
    %v1955 = vadd.f32 %v1954, 1.0
    %v1956 = vrcp.pop %v1955
    %v1957 = vmul.f32 %v1955, %v1956
    %v1958 = vsub.f32 1.0, %v1957
    %v1959 = vmul.f32 %v1956, %v1958
    %v1960 = vadd.f32 %v1956, %v1959
    %vm1961 = vweird.f32 %v1955
    %vm1962 = vweird.f32 %v1956
    %vm1963 = vmor %vm1961, %vm1962
    %v1964 = vsel %vm1963, %v1956, %v1960
    %v1965 = vand.u32 2147483647, %v1955
    %vm1966 = vcmp.eq.f32.partialorder %v1965, 8.507059e+37
    %v1967 = vand.u32 %v1955, 2147483648
    %v1968 = vor.u32 1.1754944e-38, %v1967
    %v1969 = vsel %vm1966, %v1968, %v1964
    %v1970 = vmul.f32 1.0, %v1969
    %1972 = vrot.lane.b32.xlu0 %v1949, 64
    %v1973 = vpop.permute.xlu0 %1972
    %v1975 = vmul.f32 %v1970, %v1973
    %1977 = vrot.lane.b32.xlu0 %v1975, 64
    %v1978 = vpop.permute.xlu0 %1977
    %v1980 = vadd.f32 %v1929, %v1978
    %v1981 = vtanh.pop %v1980
    %v1982 = vsub.f32 1.0, %v1970
    %1984 = vrot.lane.b32.xlu0 %v1981, 96
    %v1985 = vpop.permute.xlu0 %1984
    %v1987 = vmul.f32 %v1982, %v1985
    %v1988 = vmul.f32 %v1970, 0.0
    %v1989 = vadd.f32 %v1987, %v1988
    %1991 = vrot.lane.b32.xlu0 %v1462, 96
    %v1992 = vpop.permute.xlu0 %1991
    %v1993 = vsel %vm148, %v1992, 0
    %1995 = vmatpush.msra.mxu0 0.0
    %1996 = vmatpush.msra.mxu0 0.0
    %1997 = vmatpush.msra.mxu0 0.0
    %1998 = vmatpush.msra.mxu0 0.0
    %1999 = vmatpush.msra.mxu0 0.0
    %2000 = vmatpush.msra.mxu0 0.0
    %2001 = vmatpush.msra.mxu0 0.0
    %2002 = vmatpush.msra.mxu0 0.0
    %2003 = vmatpush.msra.mxu0 0.0
    %2004 = vmatpush.msra.mxu0 0.0
    %2005 = vmatpush.msra.mxu0 0.0
    %2006 = vmatpush.msra.mxu0 0.0
    %2007 = vmatpush.msra.mxu0 %v1025
    %2008 = vmatpush.msra.mxu0 %v1024
    %2009 = vmatpush.msra.mxu0 %v1023
    %2010 = vmatpush.msra.mxu0 %v1022
    %2011 = vmatmul.f32.gmra.mxu0 %v1993
    %v2012 = vpop.f32.mrf.mxu0
    %v2013 = vadd.f32 %v1393, %v2012
    %2014 = vdwg.mxu0
    %v2016 = vrot.slane %v2013, 6
    %v2018 = vadd.f32 %v1084, %v2016
    %v2019 = vxor.u32 %v2018, 2147483648
    %v2020 = vmul.f32 %v2019, 1.442695
    %v2021 = vpow.pop %v2020
    %v2022 = vadd.f32 %v2021, 1.0
    %v2023 = vrcp.pop %v2022
    %v2024 = vmul.f32 %v2022, %v2023
    %v2025 = vsub.f32 1.0, %v2024
    %v2026 = vmul.f32 %v2023, %v2025
    %v2027 = vadd.f32 %v2023, %v2026
    %vm2028 = vweird.f32 %v2022
    %vm2029 = vweird.f32 %v2023
    %vm2030 = vmor %vm2028, %vm2029
    %v2031 = vsel %vm2030, %v2023, %v2027
    %v2032 = vand.u32 2147483647, %v2022
    %vm2033 = vcmp.eq.f32.partialorder %v2032, 8.507059e+37
    %v2034 = vand.u32 %v2022, 2147483648
    %v2035 = vor.u32 1.1754944e-38, %v2034
    %v2036 = vsel %vm2033, %v2035, %v2031
    %v2037 = vmul.f32 1.0, %v2036
    %2038 = vrot.lane.b32.xlu0 %v2016, 64
    %v2039 = vpop.permute.xlu0 %2038
    %v2041 = vmul.f32 %v2037, %v2039
    %2043 = vrot.lane.b32.xlu0 %v2041, 64
    %v2044 = vpop.permute.xlu0 %2043
    %v2046 = vadd.f32 %v1084, %v2044
    %v2047 = vtanh.pop %v2046
    %v2048 = vsub.f32 1.0, %v2037
    %2050 = vrot.lane.b32.xlu0 %v2047, 96
    %v2051 = vpop.permute.xlu0 %2050
    %v2053 = vmul.f32 %v2048, %v2051
    %v2054 = vrot.slane %v1462, 6
    %v2056 = vmul.f32 %v2037, %v2054
    %v2057 = vadd.f32 %v2053, %v2056
    %v2058 = vmax.f32 %v2057, 0.0
    %v2060 = vrot.slane %v2058, 2
    %2061 = vrot.lane.b32.xlu0 %v2060, 96
    %v2062 = vpop.permute.xlu0 %2061
    %v2063 = vsel %vm148, %v2062, 0
    %2065 = vmatpush.msra.mxu0 0.0
    %2066 = vmatpush.msra.mxu0 0.0
    %2067 = vmatpush.msra.mxu0 0.0
    %2068 = vmatpush.msra.mxu0 0.0
    %2069 = vmatpush.msra.mxu0 0.0
    %2070 = vmatpush.msra.mxu0 0.0
    %2071 = vmatpush.msra.mxu0 0.0
    %2072 = vmatpush.msra.mxu0 0.0
    %2073 = vmatpush.msra.mxu0 0.0
    %2074 = vmatpush.msra.mxu0 0.0
    %2075 = vmatpush.msra.mxu0 0.0
    %2076 = vmatpush.msra.mxu0 0.0
    %2077 = vmatpush.msra.mxu0 %v1385
    %2078 = vmatpush.msra.mxu0 %v1377
    %2079 = vmatpush.msra.mxu0 %v1369
    %2080 = vmatpush.msra.mxu0 %v1361
    %2081 = vmatmul.f32.gmra.mxu0 %v2063
    %v2082 = vpop.f32.mrf.mxu0
    %v2083 = vadd.f32 0.0, %v2082
    %2084 = vdwg.mxu0
    %2085 = vmatpush.msra.mxu0 0.0
    %2086 = vmatpush.msra.mxu0 0.0
    %2087 = vmatpush.msra.mxu0 0.0
    %2088 = vmatpush.msra.mxu0 0.0
    %2089 = vmatpush.msra.mxu0 0.0
    %2090 = vmatpush.msra.mxu0 0.0
    %2091 = vmatpush.msra.mxu0 0.0
    %2092 = vmatpush.msra.mxu0 0.0
    %2093 = vmatpush.msra.mxu0 0.0
    %2094 = vmatpush.msra.mxu0 0.0
    %2095 = vmatpush.msra.mxu0 0.0
    %2096 = vmatpush.msra.mxu0 0.0
    %2097 = vmatpush.msra.mxu0 %v1386
    %2098 = vmatpush.msra.mxu0 %v1378
    %2099 = vmatpush.msra.mxu0 %v1370
    %2100 = vmatpush.msra.mxu0 %v1362
    %2101 = vmatmul.f32.gmra.mxu0 %v2063
    %v2102 = vpop.f32.mrf.mxu0
    %v2103 = vadd.f32 0.0, %v2102
    %2104 = vdwg.mxu0
    %2105 = vmatpush.msra.mxu0 0.0
    %2106 = vmatpush.msra.mxu0 0.0
    %2107 = vmatpush.msra.mxu0 0.0
    %2108 = vmatpush.msra.mxu0 0.0
    %2109 = vmatpush.msra.mxu0 0.0
    %2110 = vmatpush.msra.mxu0 0.0
    %2111 = vmatpush.msra.mxu0 0.0
    %2112 = vmatpush.msra.mxu0 0.0
    %2113 = vmatpush.msra.mxu0 0.0
    %2114 = vmatpush.msra.mxu0 0.0
    %2115 = vmatpush.msra.mxu0 0.0
    %2116 = vmatpush.msra.mxu0 0.0
    %2117 = vmatpush.msra.mxu0 %v1387
    %2118 = vmatpush.msra.mxu0 %v1379
    %2119 = vmatpush.msra.mxu0 %v1371
    %2120 = vmatpush.msra.mxu0 %v1363
    %2121 = vmatmul.f32.gmra.mxu0 %v2063
    %v2122 = vpop.f32.mrf.mxu0
    %v2123 = vadd.f32 0.0, %v2122
    %2124 = vdwg.mxu0
    %2125 = vmatpush.msra.mxu0 0.0
    %2126 = vmatpush.msra.mxu0 0.0
    %2127 = vmatpush.msra.mxu0 0.0
    %2128 = vmatpush.msra.mxu0 0.0
    %2129 = vmatpush.msra.mxu0 0.0
    %2130 = vmatpush.msra.mxu0 0.0
    %2131 = vmatpush.msra.mxu0 0.0
    %2132 = vmatpush.msra.mxu0 0.0
    %2133 = vmatpush.msra.mxu0 0.0
    %2134 = vmatpush.msra.mxu0 0.0
    %2135 = vmatpush.msra.mxu0 0.0
    %2136 = vmatpush.msra.mxu0 0.0
    %2137 = vmatpush.msra.mxu0 %v1388
    %2138 = vmatpush.msra.mxu0 %v1380
    %2139 = vmatpush.msra.mxu0 %v1372
    %2140 = vmatpush.msra.mxu0 %v1364
    %2141 = vmatmul.f32.gmra.mxu0 %v2063
    %v2142 = vpop.f32.mrf.mxu0
    %v2143 = vadd.f32 0.0, %v2142
    %2144 = vdwg.mxu0
    %2145 = vmatpush.msra.mxu0 0.0
    %2146 = vmatpush.msra.mxu0 0.0
    %2147 = vmatpush.msra.mxu0 0.0
    %2148 = vmatpush.msra.mxu0 0.0
    %2149 = vmatpush.msra.mxu0 0.0
    %2150 = vmatpush.msra.mxu0 0.0
    %2151 = vmatpush.msra.mxu0 0.0
    %2152 = vmatpush.msra.mxu0 0.0
    %2153 = vmatpush.msra.mxu0 0.0
    %2154 = vmatpush.msra.mxu0 0.0
    %2155 = vmatpush.msra.mxu0 0.0
    %2156 = vmatpush.msra.mxu0 0.0
    %2157 = vmatpush.msra.mxu0 %v1389
    %2158 = vmatpush.msra.mxu0 %v1381
    %2159 = vmatpush.msra.mxu0 %v1373
    %2160 = vmatpush.msra.mxu0 %v1365
    %2161 = vmatmul.f32.gmra.mxu0 %v2063
    %v2162 = vpop.f32.mrf.mxu0
    %v2163 = vadd.f32 0.0, %v2162
    %2164 = vdwg.mxu0
    %2165 = vmatpush.msra.mxu0 0.0
    %2166 = vmatpush.msra.mxu0 0.0
    %2167 = vmatpush.msra.mxu0 0.0
    %2168 = vmatpush.msra.mxu0 0.0
    %2169 = vmatpush.msra.mxu0 0.0
    %2170 = vmatpush.msra.mxu0 0.0
    %2171 = vmatpush.msra.mxu0 0.0
    %2172 = vmatpush.msra.mxu0 0.0
    %2173 = vmatpush.msra.mxu0 0.0
    %2174 = vmatpush.msra.mxu0 0.0
    %2175 = vmatpush.msra.mxu0 0.0
    %2176 = vmatpush.msra.mxu0 0.0
    %2177 = vmatpush.msra.mxu0 %v1390
    %2178 = vmatpush.msra.mxu0 %v1382
    %2179 = vmatpush.msra.mxu0 %v1374
    %2180 = vmatpush.msra.mxu0 %v1366
    %2181 = vmatmul.f32.gmra.mxu0 %v2063
    %v2182 = vpop.f32.mrf.mxu0
    %v2183 = vadd.f32 0.0, %v2182
    %2184 = vdwg.mxu0
    %2185 = vmatpush.msra.mxu0 0.0
    %2186 = vmatpush.msra.mxu0 0.0
    %2187 = vmatpush.msra.mxu0 0.0
    %2188 = vmatpush.msra.mxu0 0.0
    %2189 = vmatpush.msra.mxu0 0.0
    %2190 = vmatpush.msra.mxu0 0.0
    %2191 = vmatpush.msra.mxu0 0.0
    %2192 = vmatpush.msra.mxu0 0.0
    %2193 = vmatpush.msra.mxu0 0.0
    %2194 = vmatpush.msra.mxu0 0.0
    %2195 = vmatpush.msra.mxu0 0.0
    %2196 = vmatpush.msra.mxu0 0.0
    %2197 = vmatpush.msra.mxu0 %v1391
    %2198 = vmatpush.msra.mxu0 %v1383
    %2199 = vmatpush.msra.mxu0 %v1375
    %2200 = vmatpush.msra.mxu0 %v1367
    %2201 = vmatmul.f32.gmra.mxu0 %v2063
    %v2202 = vpop.f32.mrf.mxu0
    %v2203 = vadd.f32 0.0, %v2202
    %2204 = vdwg.mxu0
    %2205 = vmatpush.msra.mxu0 0.0
    %2206 = vmatpush.msra.mxu0 0.0
    %2207 = vmatpush.msra.mxu0 0.0
    %2208 = vmatpush.msra.mxu0 0.0
    %2209 = vmatpush.msra.mxu0 0.0
    %2210 = vmatpush.msra.mxu0 0.0
    %2211 = vmatpush.msra.mxu0 0.0
    %2212 = vmatpush.msra.mxu0 0.0
    %2213 = vmatpush.msra.mxu0 0.0
    %2214 = vmatpush.msra.mxu0 0.0
    %2215 = vmatpush.msra.mxu0 0.0
    %2216 = vmatpush.msra.mxu0 0.0
    %2217 = vmatpush.msra.mxu0 %v1392
    %2218 = vmatpush.msra.mxu0 %v1384
    %2219 = vmatpush.msra.mxu0 %v1376
    %2220 = vmatpush.msra.mxu0 %v1368
    %2221 = vmatmul.f32.gmra.mxu0 %v2063
    %v2222 = vpop.f32.mrf.mxu0
    %v2223 = vadd.f32 0.0, %v2222
    %2224 = vdwg.mxu0
    %v2233 = vrot.slane %v2083, 6
    %v2234 = vrot.slane %v2103, 6
    %v2235 = vrot.slane %v2123, 6
    %v2236 = vrot.slane %v2143, 6
    %v2237 = vrot.slane %v2163, 6
    %v2238 = vrot.slane %v2183, 6
    %v2239 = vrot.slane %v2203, 6
    %v2240 = vrot.slane %v2223, 6
    %v2249 = vadd.f32 %v1194, %v2233
    %v2250 = vadd.f32 %v1217, %v2234
    %v2251 = vadd.f32 %v1240, %v2235
    %v2252 = vadd.f32 %v1263, %v2236
    %v2253 = vadd.f32 %v1286, %v2237
    %v2254 = vadd.f32 %v1309, %v2238
    %v2255 = vadd.f32 %v1332, %v2239
    %v2256 = vadd.f32 %v1355, %v2240
    %2265 = vst.sshfl [vmem:[#allocation1] sm:$0xff pattern:$0x73625140] %v2249
    %2266 = vst.sshfl [vmem:[#allocation1 + $0x8] sm:$0xff pattern:$0x73625140] %v2250
    %2267 = vst.sshfl [vmem:[#allocation1 + $0x10] sm:$0xff pattern:$0x73625140] %v2251
    %2268 = vst.sshfl [vmem:[#allocation1 + $0x18] sm:$0xff pattern:$0x73625140] %v2252
    %s2269 = scalar_lea.vmem [#allocation1], 1
    %v2270 = vld [vmem:[%s2269] ss:$4 sm:$0xff]
    %2271 = vst.sshfl [vmem:[#allocation1 + $0x20] sm:$0xff pattern:$0x73625140] %v2253
    %2272 = vst.sshfl [vmem:[#allocation1 + $0x28] sm:$0xff pattern:$0x73625140] %v2254
    %2273 = vst.sshfl [vmem:[#allocation1 + $0x30] sm:$0xff pattern:$0x73625140] %v2255
    %2274 = vst.sshfl [vmem:[#allocation1 + $0x38] sm:$0xff pattern:$0x73625140] %v2256
    %s2275 = scalar_lea.vmem [#allocation1], 33
    %v2276 = vld [vmem:[%s2275] ss:$4 sm:$0xff]
    %v2279 = vrot.slane %v2276, 4
    %v2280 = vsel %vm965, %v2279, %v2270
    %v2281 = vrot.slane %v2270, 4
    %v2282 = vsel %vm965, %v2276, %v2281
    %v2284 = vunpack.c.l.s4 1934713408
    %v2285 = vunpack.c.0.s8 %v2284
    %v2286 = vperm.slane %v2280, %v2285
    %v2288 = vunpack.c.l.s4 1934713408
    %v2289 = vunpack.c.0.s8 %v2288
    %v2290 = vperm.slane %v2282, %v2289
    %v2291 = vrot.slane %v2290, 4
    %v2292 = vsel %vm965, %v2291, %v2286
    %v2293 = vrot.slane %v2286, 4
    %v2294 = vsel %vm965, %v2290, %v2293
    %v2295 = vmul.f32 %v2292, 1.25
    %v2296 = vmul.f32 %v2294, 1.25
    %2299 = vst [vmem:[#allocation1] ss:$4 sm:$0xff] %v2295
    %v2300 = vld.sshfl [vmem:[#allocation1] sm:$0xff pattern:$0x73625140]
    %v2301 = vld.sshfl [vmem:[#allocation1 + $0x8] sm:$0xff pattern:$0x73625140]
    %v2302 = vld.sshfl [vmem:[#allocation1 + $0x10] sm:$0xff pattern:$0x73625140]
    %v2303 = vld.sshfl [vmem:[#allocation1 + $0x18] sm:$0xff pattern:$0x73625140]
    %s2304 = scalar_lea.vmem [#allocation1], 32
    %2305 = vst [vmem:[%s2304] ss:$4 sm:$0xff] %v2296
    %v2306 = vld.sshfl [vmem:[#allocation1 + $0x20] sm:$0xff pattern:$0x73625140]
    %v2307 = vld.sshfl [vmem:[#allocation1 + $0x28] sm:$0xff pattern:$0x73625140]
    %v2308 = vld.sshfl [vmem:[#allocation1 + $0x30] sm:$0xff pattern:$0x73625140]
    %v2309 = vld.sshfl [vmem:[#allocation1 + $0x38] sm:$0xff pattern:$0x73625140]
    %v2318 = vsel %vm1651, %v2300, -inf
    %v2319 = vsel %vm1651, %v2301, -inf
    %v2320 = vsel %vm1651, %v2302, -inf
    %v2321 = vmax.f32 %v2318, %v2320
    %v2322 = vsel %vm1651, %v2303, -inf
    %v2323 = vmax.f32 %v2319, %v2322
    %v2324 = vmax.f32 %v2321, %v2323
    %2325 = vmax.xlane.f32.xlu0 %v2324
    %v2326 = vpop.xlane.xlu0 %2325
    %v2327 = vsel %vm1651, %v2306, -inf
    %v2328 = vsel %vm1651, %v2307, -inf
    %v2329 = vsel %vm1651, %v2308, -inf
    %v2330 = vmax.f32 %v2327, %v2329
    %v2331 = vsel %vm1651, %v2309, -inf
    %v2332 = vmax.f32 %v2328, %v2331
    %v2333 = vmax.f32 %v2330, %v2332
    %2334 = vmax.xlane.f32.xlu0 %v2333
    %v2335 = vpop.xlane.xlu0 %2334
    %v2339 = vunpack.c.l.s4 269488144
    %v2340 = vunpack.c.0.s8 %v2339
    %v2341 = vperm.slane %v2326, %v2340
    %v2343 = vunpack.c.l.s4 269488144
    %v2344 = vunpack.c.0.s8 %v2343
    %v2345 = vperm.slane %v2335, %v2344
    %v2348 = vsub.f32 %v2295, %v2341
    %v2349 = vsub.f32 %v2296, %v2345
    %v2350 = vmul.f32 %v2348, 1.442695
    %v2351 = vpow.pop %v2350
    %v2352 = vmul.f32 %v2349, 1.442695
    %v2353 = vpow.pop %v2352
    %2356 = vst [vmem:[#allocation1] ss:$4 sm:$0xff] %v2351
    %v2357 = vld.sshfl [vmem:[#allocation1] sm:$0xff pattern:$0x73625140]
    %v2358 = vld.sshfl [vmem:[#allocation1 + $0x8] sm:$0xff pattern:$0x73625140]
    %v2359 = vld.sshfl [vmem:[#allocation1 + $0x10] sm:$0xff pattern:$0x73625140]
    %v2360 = vld.sshfl [vmem:[#allocation1 + $0x18] sm:$0xff pattern:$0x73625140]
    %s2361 = scalar_lea.vmem [#allocation1], 32
    %2362 = vst [vmem:[%s2361] ss:$4 sm:$0xff] %v2353
    %v2363 = vld.sshfl [vmem:[#allocation1 + $0x20] sm:$0xff pattern:$0x73625140]
    %v2364 = vld.sshfl [vmem:[#allocation1 + $0x28] sm:$0xff pattern:$0x73625140]
    %v2365 = vld.sshfl [vmem:[#allocation1 + $0x30] sm:$0xff pattern:$0x73625140]
    %v2366 = vld.sshfl [vmem:[#allocation1 + $0x38] sm:$0xff pattern:$0x73625140]
    %v2375 = vsel %vm1651, %v2357, 0.0
    %v2376 = vsel %vm1651, %v2358, 0.0
    %v2377 = vadd.f32 %v2375, %v2376
    %v2378 = vsel %vm1651, %v2359, 0.0
    %v2379 = vadd.f32 %v2377, %v2378
    %v2380 = vsel %vm1651, %v2360, 0.0
    %v2381 = vadd.f32 %v2379, %v2380
    %2382 = vadd.xlane.f32.xlu0 %v2381
    %v2383 = vpop.xlane.xlu0 %2382
    %v2384 = vsel %vm1651, %v2363, 0.0
    %v2385 = vsel %vm1651, %v2364, 0.0
    %v2386 = vadd.f32 %v2384, %v2385
    %v2387 = vsel %vm1651, %v2365, 0.0
    %v2388 = vadd.f32 %v2386, %v2387
    %v2389 = vsel %vm1651, %v2366, 0.0
    %v2390 = vadd.f32 %v2388, %v2389
    %2391 = vadd.xlane.f32.xlu0 %v2390
    %v2392 = vpop.xlane.xlu0 %2391
    %v2393 = vlog2.pop %v2383
    %v2394 = vmul.f32 %v2393, 0.6931472
    %v2395 = vlog2.pop %v2392
    %v2396 = vmul.f32 %v2395, 0.6931472
    %v2397 = vsub.f32 0.0, %v2394
    %v2398 = vsub.f32 0.0, %v2396
    %vm2399 = vcmp.eq.f32.partialorder %v2295, %v2341
    %vm2400 = vcmp.eq.f32.partialorder %v2296, %v2345
    %v2401 = vsel %vm2399, %v1789, 512
    %v2402 = vsel %vm2400, %v1789, 512
    %2403 = vst [vmem:[#allocation1] ss:$4 sm:$0xff] %v2401
    %v2404 = vld.sshfl [vmem:[#allocation1] sm:$0xff pattern:$0x73625140]
    %v2405 = vld.sshfl [vmem:[#allocation1 + $0x8] sm:$0xff pattern:$0x73625140]
    %v2406 = vld.sshfl [vmem:[#allocation1 + $0x10] sm:$0xff pattern:$0x73625140]
    %v2407 = vld.sshfl [vmem:[#allocation1 + $0x18] sm:$0xff pattern:$0x73625140]
    %s2408 = scalar_lea.vmem [#allocation1], 32
    %2409 = vst [vmem:[%s2408] ss:$4 sm:$0xff] %v2402
    %v2410 = vld.sshfl [vmem:[#allocation1 + $0x20] sm:$0xff pattern:$0x73625140]
    %v2411 = vld.sshfl [vmem:[#allocation1 + $0x28] sm:$0xff pattern:$0x73625140]
    %v2412 = vld.sshfl [vmem:[#allocation1 + $0x30] sm:$0xff pattern:$0x73625140]
    %v2413 = vld.sshfl [vmem:[#allocation1 + $0x38] sm:$0xff pattern:$0x73625140]
    %v2414 = vsel %vm1651, %v2404, 2147483647
    %v2415 = vsel %vm1651, %v2405, 2147483647
    %v2416 = vsel %vm1651, %v2406, 2147483647
    %vm2417 = vcmp.lt.s32.totalorder %v2414, %v2416
    %v2418 = vsel %vm2417, %v2414, %v2416
    %v2419 = vsel %vm1651, %v2407, 2147483647
    %vm2420 = vcmp.lt.s32.totalorder %v2415, %v2419
    %v2421 = vsel %vm2420, %v2415, %v2419
    %vm2422 = vcmp.lt.s32.totalorder %v2418, %v2421
    %v2423 = vsel %vm2422, %v2418, %v2421
    %v2424 = vand.u32 %v2423, 65535
    %v2425 = vshra.s32 %v2423, 16
    %v2426 = vcvt.s32.f32 %v2424
    %v2427 = vcvt.s32.f32 %v2425
    %2428 = vmin.xlane.f32.xlu0 %v2427
    %v2429 = vpop.xlane.xlu0 %2428
    %vm2430 = vcmp.eq.f32.partialorder %v2427, %v2429
    %v2431 = vsel %vm2430, %v2426, inf
    %2432 = vmin.xlane.f32.xlu0 %v2431
    %v2433 = vpop.xlane.xlu0 %2432
    %v2434 = vcvt.f32.s32 %v2433
    %v2435 = vcvt.f32.s32 %v2429
    %v2436 = vshll.u32 %v2435, 16
    %v2437 = vadd.s32 %v2436, %v2434
    %v2438 = vsel %vm1651, %v2410, 2147483647
    %v2439 = vsel %vm1651, %v2411, 2147483647
    %v2440 = vsel %vm1651, %v2412, 2147483647
    %vm2441 = vcmp.lt.s32.totalorder %v2438, %v2440
    %v2442 = vsel %vm2441, %v2438, %v2440
    %v2443 = vsel %vm1651, %v2413, 2147483647
    %vm2444 = vcmp.lt.s32.totalorder %v2439, %v2443
    %v2445 = vsel %vm2444, %v2439, %v2443
    %vm2446 = vcmp.lt.s32.totalorder %v2442, %v2445
    %v2447 = vsel %vm2446, %v2442, %v2445
    %v2448 = vand.u32 %v2447, 65535
    %v2449 = vshra.s32 %v2447, 16
    %v2450 = vcvt.s32.f32 %v2448
    %v2451 = vcvt.s32.f32 %v2449
    %2452 = vmin.xlane.f32.xlu0 %v2451
    %v2453 = vpop.xlane.xlu0 %2452
    %vm2454 = vcmp.eq.f32.partialorder %v2451, %v2453
    %v2455 = vsel %vm2454, %v2450, inf
    %2456 = vmin.xlane.f32.xlu0 %v2455
    %v2457 = vpop.xlane.xlu0 %2456
    %v2458 = vcvt.f32.s32 %v2457
    %v2459 = vcvt.f32.s32 %v2453
    %v2460 = vshll.u32 %v2459, 16
    %v2461 = vadd.s32 %v2460, %v2458
    %v2462 = vcvt.s32.f32 %v2437
    %v2463 = vcvt.s32.f32 %v2461
    %v2464 = vmul.f32 %v2462, 0.002
    %v2465 = vmul.f32 %v2463, 0.002
    %v2466 = vxor.u32 %v2464, 2147483648
    %v2467 = vxor.u32 %v2465, 2147483648
    %v2468 = vmul.f32 %v2466, 1.442695
    %v2469 = vpow.pop %v2468
    %v2470 = vmul.f32 %v2467, 1.442695
    %v2471 = vpow.pop %v2470
    %v2472 = vadd.f32 %v2469, 1.0
    %v2473 = vadd.f32 %v2471, 1.0
    %v2474 = vrcp.pop %v2472
    %v2475 = vmul.f32 %v2472, %v2474
    %v2476 = vsub.f32 1.0, %v2475
    %v2477 = vmul.f32 %v2474, %v2476
    %v2478 = vadd.f32 %v2474, %v2477
    %vm2479 = vweird.f32 %v2472
    %vm2480 = vweird.f32 %v2474
    %vm2481 = vmor %vm2479, %vm2480
    %v2482 = vsel %vm2481, %v2474, %v2478
    %v2483 = vand.u32 2147483647, %v2472
    %vm2484 = vcmp.eq.f32.partialorder %v2483, 8.507059e+37
    %v2485 = vand.u32 %v2472, 2147483648
    %v2486 = vor.u32 1.1754944e-38, %v2485
    %v2487 = vsel %vm2484, %v2486, %v2482
    %v2488 = vmul.f32 1.0, %v2487
    %v2489 = vrcp.pop %v2473
    %v2490 = vmul.f32 %v2473, %v2489
    %v2491 = vsub.f32 1.0, %v2490
    %v2492 = vmul.f32 %v2489, %v2491
    %v2493 = vadd.f32 %v2489, %v2492
    %vm2494 = vweird.f32 %v2473
    %vm2495 = vweird.f32 %v2489
    %vm2496 = vmor %vm2494, %vm2495
    %v2497 = vsel %vm2496, %v2489, %v2493
    %v2498 = vand.u32 2147483647, %v2473
    %vm2499 = vcmp.eq.f32.partialorder %v2498, 8.507059e+37
    %v2500 = vand.u32 %v2473, 2147483648
    %v2501 = vor.u32 1.1754944e-38, %v2500
    %v2502 = vsel %vm2499, %v2501, %v2497
    %v2503 = vmul.f32 1.0, %v2502
    %v2504 = vmul.f32 %v2488, 20.0
    %v2505 = vmul.f32 %v2503, 20.0
    %v2508 = vrot.slane %v2504, 1
    %v2509 = vsel %vm1899, %v2505, %v2508
    %v2511 = vrot.slane %v2505, 7
    %v2512 = vsel %vm1899, %v2511, %v2504
    %v2514 = vsel %vm1895, %v2509, %v2512
    %v2515 = vmul.f32 %v1010, %v2514
    %v2516 = vadd.f32 %v1907, %v2515
    %v2518 = vsel %vm148, %v2515, 0
    %2520 = vmatpush.msra.mxu0 0.0
    %2521 = vmatpush.msra.mxu0 0.0
    %2522 = vmatpush.msra.mxu0 0.0
    %2523 = vmatpush.msra.mxu0 0.0
    %2524 = vmatpush.msra.mxu0 0.0
    %2525 = vmatpush.msra.mxu0 0.0
    %2526 = vmatpush.msra.mxu0 0.0
    %2527 = vmatpush.msra.mxu0 0.0
    %2528 = vmatpush.msra.mxu0 0.0
    %2529 = vmatpush.msra.mxu0 0.0
    %2530 = vmatpush.msra.mxu0 0.0
    %2531 = vmatpush.msra.mxu0 0.0
    %2532 = vmatpush.msra.mxu0 %v1030
    %2533 = vmatpush.msra.mxu0 %v1029
    %2534 = vmatpush.msra.mxu0 %v1028
    %2535 = vmatpush.msra.mxu0 %v1027
    %2536 = vmatmul.f32.gmra.mxu0 %v2518
    %v2537 = vpop.f32.mrf.mxu0
    %v2538 = vadd.f32 %v1394, %v2537
    %2539 = vdwg.mxu0
    %2541 = vrot.lane.b32.xlu0 %v1989, 96
    %v2542 = vpop.permute.xlu0 %2541
    %v2543 = vsel %vm148, %v2542, 0
    %2545 = vmatpush.msra.mxu0 0.0
    %2546 = vmatpush.msra.mxu0 0.0
    %2547 = vmatpush.msra.mxu0 0.0
    %2548 = vmatpush.msra.mxu0 0.0
    %2549 = vmatpush.msra.mxu0 0.0
    %2550 = vmatpush.msra.mxu0 0.0
    %2551 = vmatpush.msra.mxu0 0.0
    %2552 = vmatpush.msra.mxu0 0.0
    %2553 = vmatpush.msra.mxu0 0.0
    %2554 = vmatpush.msra.mxu0 0.0
    %2555 = vmatpush.msra.mxu0 0.0
    %2556 = vmatpush.msra.mxu0 0.0
    %2557 = vmatpush.msra.mxu0 %v1035
    %2558 = vmatpush.msra.mxu0 %v1034
    %2559 = vmatpush.msra.mxu0 %v1033
    %2560 = vmatpush.msra.mxu0 %v1032
    %2561 = vmatmul.f32.gmra.mxu0 %v2543
    %v2562 = vpop.f32.mrf.mxu0
    %v2563 = vadd.f32 %v1395, %v2562
    %2564 = vdwg.mxu0
    %v2565 = vadd.f32 %v2538, %v2563
    %v2566 = vxor.u32 %v2565, 2147483648
    %v2567 = vmul.f32 %v2566, 1.442695
    %v2568 = vpow.pop %v2567
    %v2569 = vadd.f32 %v2568, 1.0
    %v2570 = vrcp.pop %v2569
    %v2571 = vmul.f32 %v2569, %v2570
    %v2572 = vsub.f32 1.0, %v2571
    %v2573 = vmul.f32 %v2570, %v2572
    %v2574 = vadd.f32 %v2570, %v2573
    %vm2575 = vweird.f32 %v2569
    %vm2576 = vweird.f32 %v2570
    %vm2577 = vmor %vm2575, %vm2576
    %v2578 = vsel %vm2577, %v2570, %v2574
    %v2579 = vand.u32 2147483647, %v2569
    %vm2580 = vcmp.eq.f32.partialorder %v2579, 8.507059e+37
    %v2581 = vand.u32 %v2569, 2147483648
    %v2582 = vor.u32 1.1754944e-38, %v2581
    %v2583 = vsel %vm2580, %v2582, %v2578
    %v2584 = vmul.f32 1.0, %v2583
    %2586 = vrot.lane.b32.xlu0 %v2563, 64
    %v2587 = vpop.permute.xlu0 %2586
    %v2589 = vmul.f32 %v2584, %v2587
    %2591 = vrot.lane.b32.xlu0 %v2589, 64
    %v2592 = vpop.permute.xlu0 %2591
    %v2594 = vadd.f32 %v2538, %v2592
    %v2595 = vtanh.pop %v2594
    %v2596 = vsub.f32 1.0, %v2584
    %2598 = vrot.lane.b32.xlu0 %v2595, 96
    %v2599 = vpop.permute.xlu0 %2598
    %v2601 = vmul.f32 %v2596, %v2599
    %v2602 = vmul.f32 %v2584, %v1989
    %v2603 = vadd.f32 %v2601, %v2602
    %v2605 = vrot.slane %v2057, 2
    %2606 = vrot.lane.b32.xlu0 %v2605, 96
    %v2607 = vpop.permute.xlu0 %2606
    %v2608 = vsel %vm148, %v2607, 0
    %2610 = vmatpush.msra.mxu0 0.0
    %2611 = vmatpush.msra.mxu0 0.0
    %2612 = vmatpush.msra.mxu0 0.0
    %2613 = vmatpush.msra.mxu0 0.0
    %2614 = vmatpush.msra.mxu0 0.0
    %2615 = vmatpush.msra.mxu0 0.0
    %2616 = vmatpush.msra.mxu0 0.0
    %2617 = vmatpush.msra.mxu0 0.0
    %2618 = vmatpush.msra.mxu0 0.0
    %2619 = vmatpush.msra.mxu0 0.0
    %2620 = vmatpush.msra.mxu0 0.0
    %2621 = vmatpush.msra.mxu0 0.0
    %2622 = vmatpush.msra.mxu0 %v1025
    %2623 = vmatpush.msra.mxu0 %v1024
    %2624 = vmatpush.msra.mxu0 %v1023
    %2625 = vmatpush.msra.mxu0 %v1022
    %2626 = vmatmul.f32.gmra.mxu0 %v2608
    %v2627 = vpop.f32.mrf.mxu0
    %v2628 = vadd.f32 %v1393, %v2627
    %2629 = vdwg.mxu0
    %v2631 = vrot.slane %v2628, 4
    %v2633 = vadd.f32 %v1084, %v2631
    %v2634 = vxor.u32 %v2633, 2147483648
    %v2635 = vmul.f32 %v2634, 1.442695
    %v2636 = vpow.pop %v2635
    %v2637 = vadd.f32 %v2636, 1.0
    %v2638 = vrcp.pop %v2637
    %v2639 = vmul.f32 %v2637, %v2638
    %v2640 = vsub.f32 1.0, %v2639
    %v2641 = vmul.f32 %v2638, %v2640
    %v2642 = vadd.f32 %v2638, %v2641
    %vm2643 = vweird.f32 %v2637
    %vm2644 = vweird.f32 %v2638
    %vm2645 = vmor %vm2643, %vm2644
    %v2646 = vsel %vm2645, %v2638, %v2642
    %v2647 = vand.u32 2147483647, %v2637
    %vm2648 = vcmp.eq.f32.partialorder %v2647, 8.507059e+37
    %v2649 = vand.u32 %v2637, 2147483648
    %v2650 = vor.u32 1.1754944e-38, %v2649
    %v2651 = vsel %vm2648, %v2650, %v2646
    %v2652 = vmul.f32 1.0, %v2651
    %2653 = vrot.lane.b32.xlu0 %v2631, 64
    %v2654 = vpop.permute.xlu0 %2653
    %v2656 = vmul.f32 %v2652, %v2654
    %2658 = vrot.lane.b32.xlu0 %v2656, 64
    %v2659 = vpop.permute.xlu0 %2658
    %v2661 = vadd.f32 %v1084, %v2659
    %v2662 = vtanh.pop %v2661
    %v2663 = vsub.f32 1.0, %v2652
    %2665 = vrot.lane.b32.xlu0 %v2662, 96
    %v2666 = vpop.permute.xlu0 %2665
    %v2668 = vmul.f32 %v2663, %v2666
    %v2669 = vrot.slane %v2057, 6
    %v2671 = vmul.f32 %v2652, %v2669
    %v2672 = vadd.f32 %v2668, %v2671
    %v2673 = vmax.f32 %v2672, 0.0
    %v2675 = vrot.slane %v2673, 4
    %2676 = vrot.lane.b32.xlu0 %v2675, 96
    %v2677 = vpop.permute.xlu0 %2676
    %v2678 = vsel %vm148, %v2677, 0
    %2680 = vmatpush.msra.mxu0 0.0
    %2681 = vmatpush.msra.mxu0 0.0
    %2682 = vmatpush.msra.mxu0 0.0
    %2683 = vmatpush.msra.mxu0 0.0
    %2684 = vmatpush.msra.mxu0 0.0
    %2685 = vmatpush.msra.mxu0 0.0
    %2686 = vmatpush.msra.mxu0 0.0
    %2687 = vmatpush.msra.mxu0 0.0
    %2688 = vmatpush.msra.mxu0 0.0
    %2689 = vmatpush.msra.mxu0 0.0
    %2690 = vmatpush.msra.mxu0 0.0
    %2691 = vmatpush.msra.mxu0 0.0
    %2692 = vmatpush.msra.mxu0 %v1385
    %2693 = vmatpush.msra.mxu0 %v1377
    %2694 = vmatpush.msra.mxu0 %v1369
    %2695 = vmatpush.msra.mxu0 %v1361
    %2696 = vmatmul.f32.gmra.mxu0 %v2678
    %v2697 = vpop.f32.mrf.mxu0
    %v2698 = vadd.f32 0.0, %v2697
    %2699 = vdwg.mxu0
    %2700 = vmatpush.msra.mxu0 0.0
    %2701 = vmatpush.msra.mxu0 0.0
    %2702 = vmatpush.msra.mxu0 0.0
    %2703 = vmatpush.msra.mxu0 0.0
    %2704 = vmatpush.msra.mxu0 0.0
    %2705 = vmatpush.msra.mxu0 0.0
    %2706 = vmatpush.msra.mxu0 0.0
    %2707 = vmatpush.msra.mxu0 0.0
    %2708 = vmatpush.msra.mxu0 0.0
    %2709 = vmatpush.msra.mxu0 0.0
    %2710 = vmatpush.msra.mxu0 0.0
    %2711 = vmatpush.msra.mxu0 0.0
    %2712 = vmatpush.msra.mxu0 %v1386
    %2713 = vmatpush.msra.mxu0 %v1378
    %2714 = vmatpush.msra.mxu0 %v1370
    %2715 = vmatpush.msra.mxu0 %v1362
    %2716 = vmatmul.f32.gmra.mxu0 %v2678
    %v2717 = vpop.f32.mrf.mxu0
    %v2718 = vadd.f32 0.0, %v2717
    %2719 = vdwg.mxu0
    %2720 = vmatpush.msra.mxu0 0.0
    %2721 = vmatpush.msra.mxu0 0.0
    %2722 = vmatpush.msra.mxu0 0.0
    %2723 = vmatpush.msra.mxu0 0.0
    %2724 = vmatpush.msra.mxu0 0.0
    %2725 = vmatpush.msra.mxu0 0.0
    %2726 = vmatpush.msra.mxu0 0.0
    %2727 = vmatpush.msra.mxu0 0.0
    %2728 = vmatpush.msra.mxu0 0.0
    %2729 = vmatpush.msra.mxu0 0.0
    %2730 = vmatpush.msra.mxu0 0.0
    %2731 = vmatpush.msra.mxu0 0.0
    %2732 = vmatpush.msra.mxu0 %v1387
    %2733 = vmatpush.msra.mxu0 %v1379
    %2734 = vmatpush.msra.mxu0 %v1371
    %2735 = vmatpush.msra.mxu0 %v1363
    %2736 = vmatmul.f32.gmra.mxu0 %v2678
    %v2737 = vpop.f32.mrf.mxu0
    %v2738 = vadd.f32 0.0, %v2737
    %2739 = vdwg.mxu0
    %2740 = vmatpush.msra.mxu0 0.0
    %2741 = vmatpush.msra.mxu0 0.0
    %2742 = vmatpush.msra.mxu0 0.0
    %2743 = vmatpush.msra.mxu0 0.0
    %2744 = vmatpush.msra.mxu0 0.0
    %2745 = vmatpush.msra.mxu0 0.0
    %2746 = vmatpush.msra.mxu0 0.0
    %2747 = vmatpush.msra.mxu0 0.0
    %2748 = vmatpush.msra.mxu0 0.0
    %2749 = vmatpush.msra.mxu0 0.0
    %2750 = vmatpush.msra.mxu0 0.0
    %2751 = vmatpush.msra.mxu0 0.0
    %2752 = vmatpush.msra.mxu0 %v1388
    %2753 = vmatpush.msra.mxu0 %v1380
    %2754 = vmatpush.msra.mxu0 %v1372
    %2755 = vmatpush.msra.mxu0 %v1364
    %2756 = vmatmul.f32.gmra.mxu0 %v2678
    %v2757 = vpop.f32.mrf.mxu0
    %v2758 = vadd.f32 0.0, %v2757
    %2759 = vdwg.mxu0
    %2760 = vmatpush.msra.mxu0 0.0
    %2761 = vmatpush.msra.mxu0 0.0
    %2762 = vmatpush.msra.mxu0 0.0
    %2763 = vmatpush.msra.mxu0 0.0
    %2764 = vmatpush.msra.mxu0 0.0
    %2765 = vmatpush.msra.mxu0 0.0
    %2766 = vmatpush.msra.mxu0 0.0
    %2767 = vmatpush.msra.mxu0 0.0
    %2768 = vmatpush.msra.mxu0 0.0
    %2769 = vmatpush.msra.mxu0 0.0
    %2770 = vmatpush.msra.mxu0 0.0
    %2771 = vmatpush.msra.mxu0 0.0
    %2772 = vmatpush.msra.mxu0 %v1389
    %2773 = vmatpush.msra.mxu0 %v1381
    %2774 = vmatpush.msra.mxu0 %v1373
    %2775 = vmatpush.msra.mxu0 %v1365
    %2776 = vmatmul.f32.gmra.mxu0 %v2678
    %v2777 = vpop.f32.mrf.mxu0
    %v2778 = vadd.f32 0.0, %v2777
    %2779 = vdwg.mxu0
    %2780 = vmatpush.msra.mxu0 0.0
    %2781 = vmatpush.msra.mxu0 0.0
    %2782 = vmatpush.msra.mxu0 0.0
    %2783 = vmatpush.msra.mxu0 0.0
    %2784 = vmatpush.msra.mxu0 0.0
    %2785 = vmatpush.msra.mxu0 0.0
    %2786 = vmatpush.msra.mxu0 0.0
    %2787 = vmatpush.msra.mxu0 0.0
    %2788 = vmatpush.msra.mxu0 0.0
    %2789 = vmatpush.msra.mxu0 0.0
    %2790 = vmatpush.msra.mxu0 0.0
    %2791 = vmatpush.msra.mxu0 0.0
    %2792 = vmatpush.msra.mxu0 %v1390
    %2793 = vmatpush.msra.mxu0 %v1382
    %2794 = vmatpush.msra.mxu0 %v1374
    %2795 = vmatpush.msra.mxu0 %v1366
    %2796 = vmatmul.f32.gmra.mxu0 %v2678
    %v2797 = vpop.f32.mrf.mxu0
    %v2798 = vadd.f32 0.0, %v2797
    %2799 = vdwg.mxu0
    %2800 = vmatpush.msra.mxu0 0.0
    %2801 = vmatpush.msra.mxu0 0.0
    %2802 = vmatpush.msra.mxu0 0.0
    %2803 = vmatpush.msra.mxu0 0.0
    %2804 = vmatpush.msra.mxu0 0.0
    %2805 = vmatpush.msra.mxu0 0.0
    %2806 = vmatpush.msra.mxu0 0.0
    %2807 = vmatpush.msra.mxu0 0.0
    %2808 = vmatpush.msra.mxu0 0.0
    %2809 = vmatpush.msra.mxu0 0.0
    %2810 = vmatpush.msra.mxu0 0.0
    %2811 = vmatpush.msra.mxu0 0.0
    %2812 = vmatpush.msra.mxu0 %v1391
    %2813 = vmatpush.msra.mxu0 %v1383
    %2814 = vmatpush.msra.mxu0 %v1375
    %2815 = vmatpush.msra.mxu0 %v1367
    %2816 = vmatmul.f32.gmra.mxu0 %v2678
    %v2817 = vpop.f32.mrf.mxu0
    %v2818 = vadd.f32 0.0, %v2817
    %2819 = vdwg.mxu0
    %2820 = vmatpush.msra.mxu0 0.0
    %2821 = vmatpush.msra.mxu0 0.0
    %2822 = vmatpush.msra.mxu0 0.0
    %2823 = vmatpush.msra.mxu0 0.0
    %2824 = vmatpush.msra.mxu0 0.0
    %2825 = vmatpush.msra.mxu0 0.0
    %2826 = vmatpush.msra.mxu0 0.0
    %2827 = vmatpush.msra.mxu0 0.0
    %2828 = vmatpush.msra.mxu0 0.0
    %2829 = vmatpush.msra.mxu0 0.0
    %2830 = vmatpush.msra.mxu0 0.0
    %2831 = vmatpush.msra.mxu0 0.0
    %2832 = vmatpush.msra.mxu0 %v1392
    %2833 = vmatpush.msra.mxu0 %v1384
    %2834 = vmatpush.msra.mxu0 %v1376
    %2835 = vmatpush.msra.mxu0 %v1368
    %2836 = vmatmul.f32.gmra.mxu0 %v2678
    %v2837 = vpop.f32.mrf.mxu0
    %v2838 = vadd.f32 0.0, %v2837
    %2839 = vdwg.mxu0
    %v2848 = vrot.slane %v2698, 4
    %v2849 = vrot.slane %v2718, 4
    %v2850 = vrot.slane %v2738, 4
    %v2851 = vrot.slane %v2758, 4
    %v2852 = vrot.slane %v2778, 4
    %v2853 = vrot.slane %v2798, 4
    %v2854 = vrot.slane %v2818, 4
    %v2855 = vrot.slane %v2838, 4
    %v2864 = vadd.f32 %v1194, %v2848
    %v2865 = vadd.f32 %v1217, %v2849
    %v2866 = vadd.f32 %v1240, %v2850
    %v2867 = vadd.f32 %v1263, %v2851
    %v2868 = vadd.f32 %v1286, %v2852
    %v2869 = vadd.f32 %v1309, %v2853
    %v2870 = vadd.f32 %v1332, %v2854
    %v2871 = vadd.f32 %v1355, %v2855
    %2880 = vst.sshfl [vmem:[#allocation1] sm:$0xff pattern:$0x73625140] %v2864
    %2881 = vst.sshfl [vmem:[#allocation1 + $0x8] sm:$0xff pattern:$0x73625140] %v2865
    %2882 = vst.sshfl [vmem:[#allocation1 + $0x10] sm:$0xff pattern:$0x73625140] %v2866
    %2883 = vst.sshfl [vmem:[#allocation1 + $0x18] sm:$0xff pattern:$0x73625140] %v2867
    %s2884 = scalar_lea.vmem [#allocation1], 2
    %v2885 = vld [vmem:[%s2884] ss:$4 sm:$0xff]
    %2886 = vst.sshfl [vmem:[#allocation1 + $0x20] sm:$0xff pattern:$0x73625140] %v2868
    %2887 = vst.sshfl [vmem:[#allocation1 + $0x28] sm:$0xff pattern:$0x73625140] %v2869
    %2888 = vst.sshfl [vmem:[#allocation1 + $0x30] sm:$0xff pattern:$0x73625140] %v2870
    %2889 = vst.sshfl [vmem:[#allocation1 + $0x38] sm:$0xff pattern:$0x73625140] %v2871
    %s2890 = scalar_lea.vmem [#allocation1], 34
    %v2891 = vld [vmem:[%s2890] ss:$4 sm:$0xff]
    %v2894 = vrot.slane %v2891, 4
    %v2895 = vsel %vm965, %v2894, %v2885
    %v2896 = vrot.slane %v2885, 4
    %v2897 = vsel %vm965, %v2891, %v2896
    %v2899 = vunpack.c.l.s4 1934713408
    %v2900 = vunpack.c.0.s8 %v2899
    %v2901 = vperm.slane %v2895, %v2900
    %v2903 = vunpack.c.l.s4 1934713408
    %v2904 = vunpack.c.0.s8 %v2903
    %v2905 = vperm.slane %v2897, %v2904
    %v2906 = vrot.slane %v2905, 4
    %v2907 = vsel %vm965, %v2906, %v2901
    %v2908 = vrot.slane %v2901, 4
    %v2909 = vsel %vm965, %v2905, %v2908
    %v2910 = vmul.f32 %v2907, 1.25
    %v2911 = vmul.f32 %v2909, 1.25
    %2914 = vst [vmem:[#allocation1] ss:$4 sm:$0xff] %v2910
    %v2915 = vld.sshfl [vmem:[#allocation1] sm:$0xff pattern:$0x73625140]
    %v2916 = vld.sshfl [vmem:[#allocation1 + $0x8] sm:$0xff pattern:$0x73625140]
    %v2917 = vld.sshfl [vmem:[#allocation1 + $0x10] sm:$0xff pattern:$0x73625140]
    %v2918 = vld.sshfl [vmem:[#allocation1 + $0x18] sm:$0xff pattern:$0x73625140]
    %s2919 = scalar_lea.vmem [#allocation1], 32
    %2920 = vst [vmem:[%s2919] ss:$4 sm:$0xff] %v2911
    %v2921 = vld.sshfl [vmem:[#allocation1 + $0x20] sm:$0xff pattern:$0x73625140]
    %v2922 = vld.sshfl [vmem:[#allocation1 + $0x28] sm:$0xff pattern:$0x73625140]
    %v2923 = vld.sshfl [vmem:[#allocation1 + $0x30] sm:$0xff pattern:$0x73625140]
    %v2924 = vld.sshfl [vmem:[#allocation1 + $0x38] sm:$0xff pattern:$0x73625140]
    %v2933 = vsel %vm1651, %v2915, -inf
    %v2934 = vsel %vm1651, %v2916, -inf
    %v2935 = vsel %vm1651, %v2917, -inf
    %v2936 = vmax.f32 %v2933, %v2935
    %v2937 = vsel %vm1651, %v2918, -inf
    %v2938 = vmax.f32 %v2934, %v2937
    %v2939 = vmax.f32 %v2936, %v2938
    %2940 = vmax.xlane.f32.xlu0 %v2939
    %v2941 = vpop.xlane.xlu0 %2940
    %v2942 = vsel %vm1651, %v2921, -inf
    %v2943 = vsel %vm1651, %v2922, -inf
    %v2944 = vsel %vm1651, %v2923, -inf
    %v2945 = vmax.f32 %v2942, %v2944
    %v2946 = vsel %vm1651, %v2924, -inf
    %v2947 = vmax.f32 %v2943, %v2946
    %v2948 = vmax.f32 %v2945, %v2947
    %2949 = vmax.xlane.f32.xlu0 %v2948
    %v2950 = vpop.xlane.xlu0 %2949
    %v2954 = vunpack.c.l.s4 269488144
    %v2955 = vunpack.c.0.s8 %v2954
    %v2956 = vperm.slane %v2941, %v2955
    %v2958 = vunpack.c.l.s4 269488144
    %v2959 = vunpack.c.0.s8 %v2958
    %v2960 = vperm.slane %v2950, %v2959
    %v2963 = vsub.f32 %v2910, %v2956
    %v2964 = vsub.f32 %v2911, %v2960
    %v2965 = vmul.f32 %v2963, 1.442695
    %v2966 = vpow.pop %v2965
    %v2967 = vmul.f32 %v2964, 1.442695
    %v2968 = vpow.pop %v2967
    %2971 = vst [vmem:[#allocation1] ss:$4 sm:$0xff] %v2966
    %v2972 = vld.sshfl [vmem:[#allocation1] sm:$0xff pattern:$0x73625140]
    %v2973 = vld.sshfl [vmem:[#allocation1 + $0x8] sm:$0xff pattern:$0x73625140]
    %v2974 = vld.sshfl [vmem:[#allocation1 + $0x10] sm:$0xff pattern:$0x73625140]
    %v2975 = vld.sshfl [vmem:[#allocation1 + $0x18] sm:$0xff pattern:$0x73625140]
    %s2976 = scalar_lea.vmem [#allocation1], 32
    %2977 = vst [vmem:[%s2976] ss:$4 sm:$0xff] %v2968
    %v2978 = vld.sshfl [vmem:[#allocation1 + $0x20] sm:$0xff pattern:$0x73625140]
    %v2979 = vld.sshfl [vmem:[#allocation1 + $0x28] sm:$0xff pattern:$0x73625140]
    %v2980 = vld.sshfl [vmem:[#allocation1 + $0x30] sm:$0xff pattern:$0x73625140]
    %v2981 = vld.sshfl [vmem:[#allocation1 + $0x38] sm:$0xff pattern:$0x73625140]
    %v2990 = vsel %vm1651, %v2972, 0.0
    %v2991 = vsel %vm1651, %v2973, 0.0
    %v2992 = vadd.f32 %v2990, %v2991
    %v2993 = vsel %vm1651, %v2974, 0.0
    %v2994 = vadd.f32 %v2992, %v2993
    %v2995 = vsel %vm1651, %v2975, 0.0
    %v2996 = vadd.f32 %v2994, %v2995
    %2997 = vadd.xlane.f32.xlu0 %v2996
    %v2998 = vpop.xlane.xlu0 %2997
    %v2999 = vsel %vm1651, %v2978, 0.0
    %v3000 = vsel %vm1651, %v2979, 0.0
    %v3001 = vadd.f32 %v2999, %v3000
    %v3002 = vsel %vm1651, %v2980, 0.0
    %v3003 = vadd.f32 %v3001, %v3002
    %v3004 = vsel %vm1651, %v2981, 0.0
    %v3005 = vadd.f32 %v3003, %v3004
    %3006 = vadd.xlane.f32.xlu0 %v3005
    %v3007 = vpop.xlane.xlu0 %3006
    %v3008 = vlog2.pop %v2998
    %v3009 = vmul.f32 %v3008, 0.6931472
    %v3010 = vlog2.pop %v3007
    %v3011 = vmul.f32 %v3010, 0.6931472
    %v3012 = vsub.f32 0.0, %v3009
    %v3013 = vsub.f32 0.0, %v3011
    %vm3014 = vcmp.eq.f32.partialorder %v2910, %v2956
    %vm3015 = vcmp.eq.f32.partialorder %v2911, %v2960
    %v3016 = vsel %vm3014, %v1789, 512
    %v3017 = vsel %vm3015, %v1789, 512
    %3018 = vst [vmem:[#allocation1] ss:$4 sm:$0xff] %v3016
    %v3019 = vld.sshfl [vmem:[#allocation1] sm:$0xff pattern:$0x73625140]
    %v3020 = vld.sshfl [vmem:[#allocation1 + $0x8] sm:$0xff pattern:$0x73625140]
    %v3021 = vld.sshfl [vmem:[#allocation1 + $0x10] sm:$0xff pattern:$0x73625140]
    %v3022 = vld.sshfl [vmem:[#allocation1 + $0x18] sm:$0xff pattern:$0x73625140]
    %s3023 = scalar_lea.vmem [#allocation1], 32
    %3024 = vst [vmem:[%s3023] ss:$4 sm:$0xff] %v3017
    %v3025 = vld.sshfl [vmem:[#allocation1 + $0x20] sm:$0xff pattern:$0x73625140]
    %v3026 = vld.sshfl [vmem:[#allocation1 + $0x28] sm:$0xff pattern:$0x73625140]
    %v3027 = vld.sshfl [vmem:[#allocation1 + $0x30] sm:$0xff pattern:$0x73625140]
    %v3028 = vld.sshfl [vmem:[#allocation1 + $0x38] sm:$0xff pattern:$0x73625140]
    %v3029 = vsel %vm1651, %v3019, 2147483647
    %v3030 = vsel %vm1651, %v3020, 2147483647
    %v3031 = vsel %vm1651, %v3021, 2147483647
    %vm3032 = vcmp.lt.s32.totalorder %v3029, %v3031
    %v3033 = vsel %vm3032, %v3029, %v3031
    %v3034 = vsel %vm1651, %v3022, 2147483647
    %vm3035 = vcmp.lt.s32.totalorder %v3030, %v3034
    %v3036 = vsel %vm3035, %v3030, %v3034
    %vm3037 = vcmp.lt.s32.totalorder %v3033, %v3036
    %v3038 = vsel %vm3037, %v3033, %v3036
    %v3039 = vand.u32 %v3038, 65535
    %v3040 = vshra.s32 %v3038, 16
    %v3041 = vcvt.s32.f32 %v3039
    %v3042 = vcvt.s32.f32 %v3040
    %3043 = vmin.xlane.f32.xlu0 %v3042
    %v3044 = vpop.xlane.xlu0 %3043
    %vm3045 = vcmp.eq.f32.partialorder %v3042, %v3044
    %v3046 = vsel %vm3045, %v3041, inf
    %3047 = vmin.xlane.f32.xlu0 %v3046
    %v3048 = vpop.xlane.xlu0 %3047
    %v3049 = vcvt.f32.s32 %v3048
    %v3050 = vcvt.f32.s32 %v3044
    %v3051 = vshll.u32 %v3050, 16
    %v3052 = vadd.s32 %v3051, %v3049
    %v3053 = vsel %vm1651, %v3025, 2147483647
    %v3054 = vsel %vm1651, %v3026, 2147483647
    %v3055 = vsel %vm1651, %v3027, 2147483647
    %vm3056 = vcmp.lt.s32.totalorder %v3053, %v3055
    %v3057 = vsel %vm3056, %v3053, %v3055
    %v3058 = vsel %vm1651, %v3028, 2147483647
    %vm3059 = vcmp.lt.s32.totalorder %v3054, %v3058
    %v3060 = vsel %vm3059, %v3054, %v3058
    %vm3061 = vcmp.lt.s32.totalorder %v3057, %v3060
    %v3062 = vsel %vm3061, %v3057, %v3060
    %v3063 = vand.u32 %v3062, 65535
    %v3064 = vshra.s32 %v3062, 16
    %v3065 = vcvt.s32.f32 %v3063
    %v3066 = vcvt.s32.f32 %v3064
    %3067 = vmin.xlane.f32.xlu0 %v3066
    %v3068 = vpop.xlane.xlu0 %3067
    %vm3069 = vcmp.eq.f32.partialorder %v3066, %v3068
    %v3070 = vsel %vm3069, %v3065, inf
    %3071 = vmin.xlane.f32.xlu0 %v3070
    %v3072 = vpop.xlane.xlu0 %3071
    %v3073 = vcvt.f32.s32 %v3072
    %v3074 = vcvt.f32.s32 %v3068
    %v3075 = vshll.u32 %v3074, 16
    %v3076 = vadd.s32 %v3075, %v3073
    %v3077 = vcvt.s32.f32 %v3052
    %v3078 = vcvt.s32.f32 %v3076
    %v3079 = vmul.f32 %v3077, 0.002
    %v3080 = vmul.f32 %v3078, 0.002
    %v3081 = vxor.u32 %v3079, 2147483648
    %v3082 = vxor.u32 %v3080, 2147483648
    %v3083 = vmul.f32 %v3081, 1.442695
    %v3084 = vpow.pop %v3083
    %v3085 = vmul.f32 %v3082, 1.442695
    %v3086 = vpow.pop %v3085
    %v3087 = vadd.f32 %v3084, 1.0
    %v3088 = vadd.f32 %v3086, 1.0
    %v3089 = vrcp.pop %v3087
    %v3090 = vmul.f32 %v3087, %v3089
    %v3091 = vsub.f32 1.0, %v3090
    %v3092 = vmul.f32 %v3089, %v3091
    %v3093 = vadd.f32 %v3089, %v3092
    %vm3094 = vweird.f32 %v3087
    %vm3095 = vweird.f32 %v3089
    %vm3096 = vmor %vm3094, %vm3095
    %v3097 = vsel %vm3096, %v3089, %v3093
    %v3098 = vand.u32 2147483647, %v3087
    %vm3099 = vcmp.eq.f32.partialorder %v3098, 8.507059e+37
    %v3100 = vand.u32 %v3087, 2147483648
    %v3101 = vor.u32 1.1754944e-38, %v3100
    %v3102 = vsel %vm3099, %v3101, %v3097
    %v3103 = vmul.f32 1.0, %v3102
    %v3104 = vrcp.pop %v3088
    %v3105 = vmul.f32 %v3088, %v3104
    %v3106 = vsub.f32 1.0, %v3105
    %v3107 = vmul.f32 %v3104, %v3106
    %v3108 = vadd.f32 %v3104, %v3107
    %vm3109 = vweird.f32 %v3088
    %vm3110 = vweird.f32 %v3104
    %vm3111 = vmor %vm3109, %vm3110
    %v3112 = vsel %vm3111, %v3104, %v3108
    %v3113 = vand.u32 2147483647, %v3088
    %vm3114 = vcmp.eq.f32.partialorder %v3113, 8.507059e+37
    %v3115 = vand.u32 %v3088, 2147483648
    %v3116 = vor.u32 1.1754944e-38, %v3115
    %v3117 = vsel %vm3114, %v3116, %v3112
    %v3118 = vmul.f32 1.0, %v3117
    %v3119 = vmul.f32 %v3103, 20.0
    %v3120 = vmul.f32 %v3118, 20.0
    %v3123 = vrot.slane %v3119, 1
    %v3124 = vsel %vm1899, %v3120, %v3123
    %v3126 = vrot.slane %v3120, 7
    %v3127 = vsel %vm1899, %v3126, %v3119
    %v3129 = vsel %vm1895, %v3124, %v3127
    %v3130 = vmul.f32 %v996, %v3129
    %v3131 = vadd.f32 %v2516, %v3130
    %v3133 = vsel %vm148, %v3130, 0
    %3135 = vmatpush.msra.mxu0 0.0
    %3136 = vmatpush.msra.mxu0 0.0
    %3137 = vmatpush.msra.mxu0 0.0
    %3138 = vmatpush.msra.mxu0 0.0
    %3139 = vmatpush.msra.mxu0 0.0
    %3140 = vmatpush.msra.mxu0 0.0
    %3141 = vmatpush.msra.mxu0 0.0
    %3142 = vmatpush.msra.mxu0 0.0
    %3143 = vmatpush.msra.mxu0 0.0
    %3144 = vmatpush.msra.mxu0 0.0
    %3145 = vmatpush.msra.mxu0 0.0
    %3146 = vmatpush.msra.mxu0 0.0
    %3147 = vmatpush.msra.mxu0 %v1030
    %3148 = vmatpush.msra.mxu0 %v1029
    %3149 = vmatpush.msra.mxu0 %v1028
    %3150 = vmatpush.msra.mxu0 %v1027
    %3151 = vmatmul.f32.gmra.mxu0 %v3133
    %v3152 = vpop.f32.mrf.mxu0
    %v3153 = vadd.f32 %v1394, %v3152
    %3154 = vdwg.mxu0
    %3156 = vrot.lane.b32.xlu0 %v2603, 96
    %v3157 = vpop.permute.xlu0 %3156
    %v3158 = vsel %vm148, %v3157, 0
    %3160 = vmatpush.msra.mxu0 0.0
    %3161 = vmatpush.msra.mxu0 0.0
    %3162 = vmatpush.msra.mxu0 0.0
    %3163 = vmatpush.msra.mxu0 0.0
    %3164 = vmatpush.msra.mxu0 0.0
    %3165 = vmatpush.msra.mxu0 0.0
    %3166 = vmatpush.msra.mxu0 0.0
    %3167 = vmatpush.msra.mxu0 0.0
    %3168 = vmatpush.msra.mxu0 0.0
    %3169 = vmatpush.msra.mxu0 0.0
    %3170 = vmatpush.msra.mxu0 0.0
    %3171 = vmatpush.msra.mxu0 0.0
    %3172 = vmatpush.msra.mxu0 %v1035
    %3173 = vmatpush.msra.mxu0 %v1034
    %3174 = vmatpush.msra.mxu0 %v1033
    %3175 = vmatpush.msra.mxu0 %v1032
    %3176 = vmatmul.f32.gmra.mxu0 %v3158
    %v3177 = vpop.f32.mrf.mxu0
    %v3178 = vadd.f32 %v1395, %v3177
    %3179 = vdwg.mxu0
    %v3180 = vadd.f32 %v3153, %v3178
    %v3181 = vxor.u32 %v3180, 2147483648
    %v3182 = vmul.f32 %v3181, 1.442695
    %v3183 = vpow.pop %v3182
    %v3184 = vadd.f32 %v3183, 1.0
    %v3185 = vrcp.pop %v3184
    %v3186 = vmul.f32 %v3184, %v3185
    %v3187 = vsub.f32 1.0, %v3186
    %v3188 = vmul.f32 %v3185, %v3187
    %v3189 = vadd.f32 %v3185, %v3188
    %vm3190 = vweird.f32 %v3184
    %vm3191 = vweird.f32 %v3185
    %vm3192 = vmor %vm3190, %vm3191
    %v3193 = vsel %vm3192, %v3185, %v3189
    %v3194 = vand.u32 2147483647, %v3184
    %vm3195 = vcmp.eq.f32.partialorder %v3194, 8.507059e+37
    %v3196 = vand.u32 %v3184, 2147483648
    %v3197 = vor.u32 1.1754944e-38, %v3196
    %v3198 = vsel %vm3195, %v3197, %v3193
    %v3199 = vmul.f32 1.0, %v3198
    %3201 = vrot.lane.b32.xlu0 %v3178, 64
    %v3202 = vpop.permute.xlu0 %3201
    %v3204 = vmul.f32 %v3199, %v3202
    %3206 = vrot.lane.b32.xlu0 %v3204, 64
    %v3207 = vpop.permute.xlu0 %3206
    %v3209 = vadd.f32 %v3153, %v3207
    %v3210 = vtanh.pop %v3209
    %v3211 = vsub.f32 1.0, %v3199
    %3213 = vrot.lane.b32.xlu0 %v3210, 96
    %v3214 = vpop.permute.xlu0 %3213
    %v3216 = vmul.f32 %v3211, %v3214
    %v3217 = vmul.f32 %v3199, %v2603
    %v3218 = vadd.f32 %v3216, %v3217
    %v3220 = vrot.slane %v2672, 4
    %3221 = vrot.lane.b32.xlu0 %v3220, 96
    %v3222 = vpop.permute.xlu0 %3221
    %v3223 = vsel %vm148, %v3222, 0
    %3225 = vmatpush.msra.mxu0 0.0
    %3226 = vmatpush.msra.mxu0 0.0
    %3227 = vmatpush.msra.mxu0 0.0
    %3228 = vmatpush.msra.mxu0 0.0
    %3229 = vmatpush.msra.mxu0 0.0
    %3230 = vmatpush.msra.mxu0 0.0
    %3231 = vmatpush.msra.mxu0 0.0
    %3232 = vmatpush.msra.mxu0 0.0
    %3233 = vmatpush.msra.mxu0 0.0
    %3234 = vmatpush.msra.mxu0 0.0
    %3235 = vmatpush.msra.mxu0 0.0
    %3236 = vmatpush.msra.mxu0 0.0
    %3237 = vmatpush.msra.mxu0 %v1025
    %3238 = vmatpush.msra.mxu0 %v1024
    %3239 = vmatpush.msra.mxu0 %v1023
    %3240 = vmatpush.msra.mxu0 %v1022
    %3241 = vmatmul.f32.gmra.mxu0 %v3223
    %v3242 = vpop.f32.mrf.mxu0
    %v3243 = vadd.f32 %v1393, %v3242
    %3244 = vdwg.mxu0
    %v3246 = vrot.slane %v3243, 2
    %v3248 = vadd.f32 %v1084, %v3246
    %v3249 = vxor.u32 %v3248, 2147483648
    %v3250 = vmul.f32 %v3249, 1.442695
    %v3251 = vpow.pop %v3250
    %v3252 = vadd.f32 %v3251, 1.0
    %v3253 = vrcp.pop %v3252
    %v3254 = vmul.f32 %v3252, %v3253
    %v3255 = vsub.f32 1.0, %v3254
    %v3256 = vmul.f32 %v3253, %v3255
    %v3257 = vadd.f32 %v3253, %v3256
    %vm3258 = vweird.f32 %v3252
    %vm3259 = vweird.f32 %v3253
    %vm3260 = vmor %vm3258, %vm3259
    %v3261 = vsel %vm3260, %v3253, %v3257
    %v3262 = vand.u32 2147483647, %v3252
    %vm3263 = vcmp.eq.f32.partialorder %v3262, 8.507059e+37
    %v3264 = vand.u32 %v3252, 2147483648
    %v3265 = vor.u32 1.1754944e-38, %v3264
    %v3266 = vsel %vm3263, %v3265, %v3261
    %v3267 = vmul.f32 1.0, %v3266
    %3268 = vrot.lane.b32.xlu0 %v3246, 64
    %v3269 = vpop.permute.xlu0 %3268
    %v3271 = vmul.f32 %v3267, %v3269
    %3273 = vrot.lane.b32.xlu0 %v3271, 64
    %v3274 = vpop.permute.xlu0 %3273
    %v3276 = vadd.f32 %v1084, %v3274
    %v3277 = vtanh.pop %v3276
    %v3278 = vsub.f32 1.0, %v3267
    %3280 = vrot.lane.b32.xlu0 %v3277, 96
    %v3281 = vpop.permute.xlu0 %3280
    %v3283 = vmul.f32 %v3278, %v3281
    %v3284 = vrot.slane %v2672, 6
    %v3286 = vmul.f32 %v3267, %v3284
    %v3287 = vadd.f32 %v3283, %v3286
    %v3288 = vmax.f32 %v3287, 0.0
    %v3290 = vrot.slane %v3288, 6
    %3291 = vrot.lane.b32.xlu0 %v3290, 96
    %v3292 = vpop.permute.xlu0 %3291
    %v3293 = vsel %vm148, %v3292, 0
    %3295 = vmatpush.msra.mxu0 0.0
    %3296 = vmatpush.msra.mxu0 0.0
    %3297 = vmatpush.msra.mxu0 0.0
    %3298 = vmatpush.msra.mxu0 0.0
    %3299 = vmatpush.msra.mxu0 0.0
    %3300 = vmatpush.msra.mxu0 0.0
    %3301 = vmatpush.msra.mxu0 0.0
    %3302 = vmatpush.msra.mxu0 0.0
    %3303 = vmatpush.msra.mxu0 0.0
    %3304 = vmatpush.msra.mxu0 0.0
    %3305 = vmatpush.msra.mxu0 0.0
    %3306 = vmatpush.msra.mxu0 0.0
    %3307 = vmatpush.msra.mxu0 %v1385
    %3308 = vmatpush.msra.mxu0 %v1377
    %3309 = vmatpush.msra.mxu0 %v1369
    %3310 = vmatpush.msra.mxu0 %v1361
    %3311 = vmatmul.f32.gmra.mxu0 %v3293
    %v3312 = vpop.f32.mrf.mxu0
    %v3313 = vadd.f32 0.0, %v3312
    %3314 = vdwg.mxu0
    %3315 = vmatpush.msra.mxu0 0.0
    %3316 = vmatpush.msra.mxu0 0.0
    %3317 = vmatpush.msra.mxu0 0.0
    %3318 = vmatpush.msra.mxu0 0.0
    %3319 = vmatpush.msra.mxu0 0.0
    %3320 = vmatpush.msra.mxu0 0.0
    %3321 = vmatpush.msra.mxu0 0.0
    %3322 = vmatpush.msra.mxu0 0.0
    %3323 = vmatpush.msra.mxu0 0.0
    %3324 = vmatpush.msra.mxu0 0.0
    %3325 = vmatpush.msra.mxu0 0.0
    %3326 = vmatpush.msra.mxu0 0.0
    %3327 = vmatpush.msra.mxu0 %v1386
    %3328 = vmatpush.msra.mxu0 %v1378
    %3329 = vmatpush.msra.mxu0 %v1370
    %3330 = vmatpush.msra.mxu0 %v1362
    %3331 = vmatmul.f32.gmra.mxu0 %v3293
    %v3332 = vpop.f32.mrf.mxu0
    %v3333 = vadd.f32 0.0, %v3332
    %3334 = vdwg.mxu0
    %3335 = vmatpush.msra.mxu0 0.0
    %3336 = vmatpush.msra.mxu0 0.0
    %3337 = vmatpush.msra.mxu0 0.0
    %3338 = vmatpush.msra.mxu0 0.0
    %3339 = vmatpush.msra.mxu0 0.0
    %3340 = vmatpush.msra.mxu0 0.0
    %3341 = vmatpush.msra.mxu0 0.0
    %3342 = vmatpush.msra.mxu0 0.0
    %3343 = vmatpush.msra.mxu0 0.0
    %3344 = vmatpush.msra.mxu0 0.0
    %3345 = vmatpush.msra.mxu0 0.0
    %3346 = vmatpush.msra.mxu0 0.0
    %3347 = vmatpush.msra.mxu0 %v1387
    %3348 = vmatpush.msra.mxu0 %v1379
    %3349 = vmatpush.msra.mxu0 %v1371
    %3350 = vmatpush.msra.mxu0 %v1363
    %3351 = vmatmul.f32.gmra.mxu0 %v3293
    %v3352 = vpop.f32.mrf.mxu0
    %v3353 = vadd.f32 0.0, %v3352
    %3354 = vdwg.mxu0
    %3355 = vmatpush.msra.mxu0 0.0
    %3356 = vmatpush.msra.mxu0 0.0
    %3357 = vmatpush.msra.mxu0 0.0
    %3358 = vmatpush.msra.mxu0 0.0
    %3359 = vmatpush.msra.mxu0 0.0
    %3360 = vmatpush.msra.mxu0 0.0
    %3361 = vmatpush.msra.mxu0 0.0
    %3362 = vmatpush.msra.mxu0 0.0
    %3363 = vmatpush.msra.mxu0 0.0
    %3364 = vmatpush.msra.mxu0 0.0
    %3365 = vmatpush.msra.mxu0 0.0
    %3366 = vmatpush.msra.mxu0 0.0
    %3367 = vmatpush.msra.mxu0 %v1388
    %3368 = vmatpush.msra.mxu0 %v1380
    %3369 = vmatpush.msra.mxu0 %v1372
    %3370 = vmatpush.msra.mxu0 %v1364
    %3371 = vmatmul.f32.gmra.mxu0 %v3293
    %v3372 = vpop.f32.mrf.mxu0
    %v3373 = vadd.f32 0.0, %v3372
    %3374 = vdwg.mxu0
    %3375 = vmatpush.msra.mxu0 0.0
    %3376 = vmatpush.msra.mxu0 0.0
    %3377 = vmatpush.msra.mxu0 0.0
    %3378 = vmatpush.msra.mxu0 0.0
    %3379 = vmatpush.msra.mxu0 0.0
    %3380 = vmatpush.msra.mxu0 0.0
    %3381 = vmatpush.msra.mxu0 0.0
    %3382 = vmatpush.msra.mxu0 0.0
    %3383 = vmatpush.msra.mxu0 0.0
    %3384 = vmatpush.msra.mxu0 0.0
    %3385 = vmatpush.msra.mxu0 0.0
    %3386 = vmatpush.msra.mxu0 0.0
    %3387 = vmatpush.msra.mxu0 %v1389
    %3388 = vmatpush.msra.mxu0 %v1381
    %3389 = vmatpush.msra.mxu0 %v1373
    %3390 = vmatpush.msra.mxu0 %v1365
    %3391 = vmatmul.f32.gmra.mxu0 %v3293
    %v3392 = vpop.f32.mrf.mxu0
    %v3393 = vadd.f32 0.0, %v3392
    %3394 = vdwg.mxu0
    %3395 = vmatpush.msra.mxu0 0.0
    %3396 = vmatpush.msra.mxu0 0.0
    %3397 = vmatpush.msra.mxu0 0.0
    %3398 = vmatpush.msra.mxu0 0.0
    %3399 = vmatpush.msra.mxu0 0.0
    %3400 = vmatpush.msra.mxu0 0.0
    %3401 = vmatpush.msra.mxu0 0.0
    %3402 = vmatpush.msra.mxu0 0.0
    %3403 = vmatpush.msra.mxu0 0.0
    %3404 = vmatpush.msra.mxu0 0.0
    %3405 = vmatpush.msra.mxu0 0.0
    %3406 = vmatpush.msra.mxu0 0.0
    %3407 = vmatpush.msra.mxu0 %v1390
    %3408 = vmatpush.msra.mxu0 %v1382
    %3409 = vmatpush.msra.mxu0 %v1374
    %3410 = vmatpush.msra.mxu0 %v1366
    %3411 = vmatmul.f32.gmra.mxu0 %v3293
    %v3412 = vpop.f32.mrf.mxu0
    %v3413 = vadd.f32 0.0, %v3412
    %3414 = vdwg.mxu0
    %3415 = vmatpush.msra.mxu0 0.0
    %3416 = vmatpush.msra.mxu0 0.0
    %3417 = vmatpush.msra.mxu0 0.0
    %3418 = vmatpush.msra.mxu0 0.0
    %3419 = vmatpush.msra.mxu0 0.0
    %3420 = vmatpush.msra.mxu0 0.0
    %3421 = vmatpush.msra.mxu0 0.0
    %3422 = vmatpush.msra.mxu0 0.0
    %3423 = vmatpush.msra.mxu0 0.0
    %3424 = vmatpush.msra.mxu0 0.0
    %3425 = vmatpush.msra.mxu0 0.0
    %3426 = vmatpush.msra.mxu0 0.0
    %3427 = vmatpush.msra.mxu0 %v1391
    %3428 = vmatpush.msra.mxu0 %v1383
    %3429 = vmatpush.msra.mxu0 %v1375
    %3430 = vmatpush.msra.mxu0 %v1367
    %3431 = vmatmul.f32.gmra.mxu0 %v3293
    %v3432 = vpop.f32.mrf.mxu0
    %v3433 = vadd.f32 0.0, %v3432
    %3434 = vdwg.mxu0
    %3435 = vmatpush.msra.mxu0 0.0
    %3436 = vmatpush.msra.mxu0 0.0
    %3437 = vmatpush.msra.mxu0 0.0
    %3438 = vmatpush.msra.mxu0 0.0
    %3439 = vmatpush.msra.mxu0 0.0
    %3440 = vmatpush.msra.mxu0 0.0
    %3441 = vmatpush.msra.mxu0 0.0
    %3442 = vmatpush.msra.mxu0 0.0
    %3443 = vmatpush.msra.mxu0 0.0
    %3444 = vmatpush.msra.mxu0 0.0
    %3445 = vmatpush.msra.mxu0 0.0
    %3446 = vmatpush.msra.mxu0 0.0
    %3447 = vmatpush.msra.mxu0 %v1392
    %3448 = vmatpush.msra.mxu0 %v1384
    %3449 = vmatpush.msra.mxu0 %v1376
    %3450 = vmatpush.msra.mxu0 %v1368
    %3451 = vmatmul.f32.gmra.mxu0 %v3293
    %v3452 = vpop.f32.mrf.mxu0
    %v3453 = vadd.f32 0.0, %v3452
    %3454 = vdwg.mxu0
    %v3463 = vrot.slane %v3313, 2
    %v3464 = vrot.slane %v3333, 2
    %v3465 = vrot.slane %v3353, 2
    %v3466 = vrot.slane %v3373, 2
    %v3467 = vrot.slane %v3393, 2
    %v3468 = vrot.slane %v3413, 2
    %v3469 = vrot.slane %v3433, 2
    %v3470 = vrot.slane %v3453, 2
    %v3479 = vadd.f32 %v1194, %v3463
    %v3480 = vadd.f32 %v1217, %v3464
    %v3481 = vadd.f32 %v1240, %v3465
    %v3482 = vadd.f32 %v1263, %v3466
    %v3483 = vadd.f32 %v1286, %v3467
    %v3484 = vadd.f32 %v1309, %v3468
    %v3485 = vadd.f32 %v1332, %v3469
    %v3486 = vadd.f32 %v1355, %v3470
    %3495 = vst.sshfl [vmem:[#allocation1] sm:$0xff pattern:$0x73625140] %v3479
    %3496 = vst.sshfl [vmem:[#allocation1 + $0x8] sm:$0xff pattern:$0x73625140] %v3480
    %3497 = vst.sshfl [vmem:[#allocation1 + $0x10] sm:$0xff pattern:$0x73625140] %v3481
    %3498 = vst.sshfl [vmem:[#allocation1 + $0x18] sm:$0xff pattern:$0x73625140] %v3482
    %s3499 = scalar_lea.vmem [#allocation1], 3
    %v3500 = vld [vmem:[%s3499] ss:$4 sm:$0xff]
    %3501 = vst.sshfl [vmem:[#allocation1 + $0x20] sm:$0xff pattern:$0x73625140] %v3483
    %3502 = vst.sshfl [vmem:[#allocation1 + $0x28] sm:$0xff pattern:$0x73625140] %v3484
    %3503 = vst.sshfl [vmem:[#allocation1 + $0x30] sm:$0xff pattern:$0x73625140] %v3485
    %3504 = vst.sshfl [vmem:[#allocation1 + $0x38] sm:$0xff pattern:$0x73625140] %v3486
    %s3505 = scalar_lea.vmem [#allocation1], 35
    %v3506 = vld [vmem:[%s3505] ss:$4 sm:$0xff]
    %v3509 = vrot.slane %v3506, 4
    %v3510 = vsel %vm965, %v3509, %v3500
    %v3511 = vrot.slane %v3500, 4
    %v3512 = vsel %vm965, %v3506, %v3511
    %v3514 = vunpack.c.l.s4 1934713408
    %v3515 = vunpack.c.0.s8 %v3514
    %v3516 = vperm.slane %v3510, %v3515
    %v3518 = vunpack.c.l.s4 1934713408
    %v3519 = vunpack.c.0.s8 %v3518
    %v3520 = vperm.slane %v3512, %v3519
    %v3521 = vrot.slane %v3520, 4
    %v3522 = vsel %vm965, %v3521, %v3516
    %v3523 = vrot.slane %v3516, 4
    %v3524 = vsel %vm965, %v3520, %v3523
    %v3525 = vmul.f32 %v3522, 1.25
    %v3526 = vmul.f32 %v3524, 1.25
    %3529 = vst [vmem:[#allocation1] ss:$4 sm:$0xff] %v3525
    %v3530 = vld.sshfl [vmem:[#allocation1] sm:$0xff pattern:$0x73625140]
    %v3531 = vld.sshfl [vmem:[#allocation1 + $0x8] sm:$0xff pattern:$0x73625140]
    %v3532 = vld.sshfl [vmem:[#allocation1 + $0x10] sm:$0xff pattern:$0x73625140]
    %v3533 = vld.sshfl [vmem:[#allocation1 + $0x18] sm:$0xff pattern:$0x73625140]
    %s3534 = scalar_lea.vmem [#allocation1], 32
    %3535 = vst [vmem:[%s3534] ss:$4 sm:$0xff] %v3526
    %v3536 = vld.sshfl [vmem:[#allocation1 + $0x20] sm:$0xff pattern:$0x73625140]
    %v3537 = vld.sshfl [vmem:[#allocation1 + $0x28] sm:$0xff pattern:$0x73625140]
    %v3538 = vld.sshfl [vmem:[#allocation1 + $0x30] sm:$0xff pattern:$0x73625140]
    %v3539 = vld.sshfl [vmem:[#allocation1 + $0x38] sm:$0xff pattern:$0x73625140]
    %v3548 = vsel %vm1651, %v3530, -inf
    %v3549 = vsel %vm1651, %v3531, -inf
    %v3550 = vsel %vm1651, %v3532, -inf
    %v3551 = vmax.f32 %v3548, %v3550
    %v3552 = vsel %vm1651, %v3533, -inf
    %v3553 = vmax.f32 %v3549, %v3552
    %v3554 = vmax.f32 %v3551, %v3553
    %3555 = vmax.xlane.f32.xlu0 %v3554
    %v3556 = vpop.xlane.xlu0 %3555
    %v3557 = vsel %vm1651, %v3536, -inf
    %v3558 = vsel %vm1651, %v3537, -inf
    %v3559 = vsel %vm1651, %v3538, -inf
    %v3560 = vmax.f32 %v3557, %v3559
    %v3561 = vsel %vm1651, %v3539, -inf
    %v3562 = vmax.f32 %v3558, %v3561
    %v3563 = vmax.f32 %v3560, %v3562
    %3564 = vmax.xlane.f32.xlu0 %v3563
    %v3565 = vpop.xlane.xlu0 %3564
    %v3569 = vunpack.c.l.s4 269488144
    %v3570 = vunpack.c.0.s8 %v3569
    %v3571 = vperm.slane %v3556, %v3570
    %v3573 = vunpack.c.l.s4 269488144
    %v3574 = vunpack.c.0.s8 %v3573
    %v3575 = vperm.slane %v3565, %v3574
    %v3578 = vsub.f32 %v3525, %v3571
    %v3579 = vsub.f32 %v3526, %v3575
    %v3580 = vmul.f32 %v3578, 1.442695
    %v3581 = vpow.pop %v3580
    %v3582 = vmul.f32 %v3579, 1.442695
    %v3583 = vpow.pop %v3582
    %3586 = vst [vmem:[#allocation1] ss:$4 sm:$0xff] %v3581
    %v3587 = vld.sshfl [vmem:[#allocation1] sm:$0xff pattern:$0x73625140]
    %v3588 = vld.sshfl [vmem:[#allocation1 + $0x8] sm:$0xff pattern:$0x73625140]
    %v3589 = vld.sshfl [vmem:[#allocation1 + $0x10] sm:$0xff pattern:$0x73625140]
    %v3590 = vld.sshfl [vmem:[#allocation1 + $0x18] sm:$0xff pattern:$0x73625140]
    %s3591 = scalar_lea.vmem [#allocation1], 32
    %3592 = vst [vmem:[%s3591] ss:$4 sm:$0xff] %v3583
    %v3593 = vld.sshfl [vmem:[#allocation1 + $0x20] sm:$0xff pattern:$0x73625140]
    %v3594 = vld.sshfl [vmem:[#allocation1 + $0x28] sm:$0xff pattern:$0x73625140]
    %v3595 = vld.sshfl [vmem:[#allocation1 + $0x30] sm:$0xff pattern:$0x73625140]
    %v3596 = vld.sshfl [vmem:[#allocation1 + $0x38] sm:$0xff pattern:$0x73625140]
    %v3605 = vsel %vm1651, %v3587, 0.0
    %v3606 = vsel %vm1651, %v3588, 0.0
    %v3607 = vadd.f32 %v3605, %v3606
    %v3608 = vsel %vm1651, %v3589, 0.0
    %v3609 = vadd.f32 %v3607, %v3608
    %v3610 = vsel %vm1651, %v3590, 0.0
    %v3611 = vadd.f32 %v3609, %v3610
    %3612 = vadd.xlane.f32.xlu0 %v3611
    %v3613 = vpop.xlane.xlu0 %3612
    %v3614 = vsel %vm1651, %v3593, 0.0
    %v3615 = vsel %vm1651, %v3594, 0.0
    %v3616 = vadd.f32 %v3614, %v3615
    %v3617 = vsel %vm1651, %v3595, 0.0
    %v3618 = vadd.f32 %v3616, %v3617
    %v3619 = vsel %vm1651, %v3596, 0.0
    %v3620 = vadd.f32 %v3618, %v3619
    %3621 = vadd.xlane.f32.xlu0 %v3620
    %v3622 = vpop.xlane.xlu0 %3621
    %v3623 = vlog2.pop %v3613
    %v3624 = vmul.f32 %v3623, 0.6931472
    %v3625 = vlog2.pop %v3622
    %v3626 = vmul.f32 %v3625, 0.6931472
    %v3627 = vsub.f32 0.0, %v3624
    %v3628 = vsub.f32 0.0, %v3626
    %vm3629 = vcmp.eq.f32.partialorder %v3525, %v3571
    %vm3630 = vcmp.eq.f32.partialorder %v3526, %v3575
    %v3631 = vsel %vm3629, %v1789, 512
    %v3632 = vsel %vm3630, %v1789, 512
    %3633 = vst [vmem:[#allocation1] ss:$4 sm:$0xff] %v3631
    %v3634 = vld.sshfl [vmem:[#allocation1] sm:$0xff pattern:$0x73625140]
    %v3635 = vld.sshfl [vmem:[#allocation1 + $0x8] sm:$0xff pattern:$0x73625140]
    %v3636 = vld.sshfl [vmem:[#allocation1 + $0x10] sm:$0xff pattern:$0x73625140]
    %v3637 = vld.sshfl [vmem:[#allocation1 + $0x18] sm:$0xff pattern:$0x73625140]
    %s3638 = scalar_lea.vmem [#allocation1], 32
    %3639 = vst [vmem:[%s3638] ss:$4 sm:$0xff] %v3632
    %v3640 = vld.sshfl [vmem:[#allocation1 + $0x20] sm:$0xff pattern:$0x73625140]
    %v3641 = vld.sshfl [vmem:[#allocation1 + $0x28] sm:$0xff pattern:$0x73625140]
    %v3642 = vld.sshfl [vmem:[#allocation1 + $0x30] sm:$0xff pattern:$0x73625140]
    %v3643 = vld.sshfl [vmem:[#allocation1 + $0x38] sm:$0xff pattern:$0x73625140]
    %v3644 = vsel %vm1651, %v3634, 2147483647
    %v3645 = vsel %vm1651, %v3635, 2147483647
    %v3646 = vsel %vm1651, %v3636, 2147483647
    %vm3647 = vcmp.lt.s32.totalorder %v3644, %v3646
    %v3648 = vsel %vm3647, %v3644, %v3646
    %v3649 = vsel %vm1651, %v3637, 2147483647
    %vm3650 = vcmp.lt.s32.totalorder %v3645, %v3649
    %v3651 = vsel %vm3650, %v3645, %v3649
    %vm3652 = vcmp.lt.s32.totalorder %v3648, %v3651
    %v3653 = vsel %vm3652, %v3648, %v3651
    %v3654 = vand.u32 %v3653, 65535
    %v3655 = vshra.s32 %v3653, 16
    %v3656 = vcvt.s32.f32 %v3654
    %v3657 = vcvt.s32.f32 %v3655
    %3658 = vmin.xlane.f32.xlu0 %v3657
    %v3659 = vpop.xlane.xlu0 %3658
    %vm3660 = vcmp.eq.f32.partialorder %v3657, %v3659
    %v3661 = vsel %vm3660, %v3656, inf
    %3662 = vmin.xlane.f32.xlu0 %v3661
    %v3663 = vpop.xlane.xlu0 %3662
    %v3664 = vcvt.f32.s32 %v3663
    %v3665 = vcvt.f32.s32 %v3659
    %v3666 = vshll.u32 %v3665, 16
    %v3667 = vadd.s32 %v3666, %v3664
    %v3668 = vsel %vm1651, %v3640, 2147483647
    %v3669 = vsel %vm1651, %v3641, 2147483647
    %v3670 = vsel %vm1651, %v3642, 2147483647
    %vm3671 = vcmp.lt.s32.totalorder %v3668, %v3670
    %v3672 = vsel %vm3671, %v3668, %v3670
    %v3673 = vsel %vm1651, %v3643, 2147483647
    %vm3674 = vcmp.lt.s32.totalorder %v3669, %v3673
    %v3675 = vsel %vm3674, %v3669, %v3673
    %vm3676 = vcmp.lt.s32.totalorder %v3672, %v3675
    %v3677 = vsel %vm3676, %v3672, %v3675
    %v3678 = vand.u32 %v3677, 65535
    %v3679 = vshra.s32 %v3677, 16
    %v3680 = vcvt.s32.f32 %v3678
    %v3681 = vcvt.s32.f32 %v3679
    %3682 = vmin.xlane.f32.xlu0 %v3681
    %v3683 = vpop.xlane.xlu0 %3682
    %vm3684 = vcmp.eq.f32.partialorder %v3681, %v3683
    %v3685 = vsel %vm3684, %v3680, inf
    %3686 = vmin.xlane.f32.xlu0 %v3685
    %v3687 = vpop.xlane.xlu0 %3686
    %v3688 = vcvt.f32.s32 %v3687
    %v3689 = vcvt.f32.s32 %v3683
    %v3690 = vshll.u32 %v3689, 16
    %v3691 = vadd.s32 %v3690, %v3688
    %v3692 = vcvt.s32.f32 %v3667
    %v3693 = vcvt.s32.f32 %v3691
    %v3694 = vmul.f32 %v3692, 0.002
    %v3695 = vmul.f32 %v3693, 0.002
    %v3696 = vxor.u32 %v3694, 2147483648
    %v3697 = vxor.u32 %v3695, 2147483648
    %v3698 = vmul.f32 %v3696, 1.442695
    %v3699 = vpow.pop %v3698
    %v3700 = vmul.f32 %v3697, 1.442695
    %v3701 = vpow.pop %v3700
    %v3702 = vadd.f32 %v3699, 1.0
    %v3703 = vadd.f32 %v3701, 1.0
    %v3704 = vrcp.pop %v3702
    %v3705 = vmul.f32 %v3702, %v3704
    %v3706 = vsub.f32 1.0, %v3705
    %v3707 = vmul.f32 %v3704, %v3706
    %v3708 = vadd.f32 %v3704, %v3707
    %vm3709 = vweird.f32 %v3702
    %vm3710 = vweird.f32 %v3704
    %vm3711 = vmor %vm3709, %vm3710
    %v3712 = vsel %vm3711, %v3704, %v3708
    %v3713 = vand.u32 2147483647, %v3702
    %vm3714 = vcmp.eq.f32.partialorder %v3713, 8.507059e+37
    %v3715 = vand.u32 %v3702, 2147483648
    %v3716 = vor.u32 1.1754944e-38, %v3715
    %v3717 = vsel %vm3714, %v3716, %v3712
    %v3718 = vmul.f32 1.0, %v3717
    %v3719 = vrcp.pop %v3703
    %v3720 = vmul.f32 %v3703, %v3719
    %v3721 = vsub.f32 1.0, %v3720
    %v3722 = vmul.f32 %v3719, %v3721
    %v3723 = vadd.f32 %v3719, %v3722
    %vm3724 = vweird.f32 %v3703
    %vm3725 = vweird.f32 %v3719
    %vm3726 = vmor %vm3724, %vm3725
    %v3727 = vsel %vm3726, %v3719, %v3723
    %v3728 = vand.u32 2147483647, %v3703
    %vm3729 = vcmp.eq.f32.partialorder %v3728, 8.507059e+37
    %v3730 = vand.u32 %v3703, 2147483648
    %v3731 = vor.u32 1.1754944e-38, %v3730
    %v3732 = vsel %vm3729, %v3731, %v3727
    %v3733 = vmul.f32 1.0, %v3732
    %v3734 = vmul.f32 %v3718, 20.0
    %v3735 = vmul.f32 %v3733, 20.0
    %v3738 = vrot.slane %v3734, 1
    %v3739 = vsel %vm1899, %v3735, %v3738
    %v3741 = vrot.slane %v3735, 7
    %v3742 = vsel %vm1899, %v3741, %v3734
    %v3744 = vsel %vm1895, %v3739, %v3742
    %v3745 = vmul.f32 %v1012, %v3744
    %v3746 = vadd.f32 %v3131, %v3745
    %v3748 = vsel %vm148, %v3745, 0
    %3750 = vmatpush.msra.mxu0 0.0
    %3751 = vmatpush.msra.mxu0 0.0
    %3752 = vmatpush.msra.mxu0 0.0
    %3753 = vmatpush.msra.mxu0 0.0
    %3754 = vmatpush.msra.mxu0 0.0
    %3755 = vmatpush.msra.mxu0 0.0
    %3756 = vmatpush.msra.mxu0 0.0
    %3757 = vmatpush.msra.mxu0 0.0
    %3758 = vmatpush.msra.mxu0 0.0
    %3759 = vmatpush.msra.mxu0 0.0
    %3760 = vmatpush.msra.mxu0 0.0
    %3761 = vmatpush.msra.mxu0 0.0
    %3762 = vmatpush.msra.mxu0 %v1030
    %3763 = vmatpush.msra.mxu0 %v1029
    %3764 = vmatpush.msra.mxu0 %v1028
    %3765 = vmatpush.msra.mxu0 %v1027
    %3766 = vmatmul.f32.gmra.mxu0 %v3748
    %v3767 = vpop.f32.mrf.mxu0
    %v3768 = vadd.f32 %v1394, %v3767
    %3769 = vdwg.mxu0
    %3771 = vrot.lane.b32.xlu0 %v3218, 96
    %v3772 = vpop.permute.xlu0 %3771
    %v3773 = vsel %vm148, %v3772, 0
    %3775 = vmatpush.msra.mxu0 0.0
    %3776 = vmatpush.msra.mxu0 0.0
    %3777 = vmatpush.msra.mxu0 0.0
    %3778 = vmatpush.msra.mxu0 0.0
    %3779 = vmatpush.msra.mxu0 0.0
    %3780 = vmatpush.msra.mxu0 0.0
    %3781 = vmatpush.msra.mxu0 0.0
    %3782 = vmatpush.msra.mxu0 0.0
    %3783 = vmatpush.msra.mxu0 0.0
    %3784 = vmatpush.msra.mxu0 0.0
    %3785 = vmatpush.msra.mxu0 0.0
    %3786 = vmatpush.msra.mxu0 0.0
    %3787 = vmatpush.msra.mxu0 %v1035
    %3788 = vmatpush.msra.mxu0 %v1034
    %3789 = vmatpush.msra.mxu0 %v1033
    %3790 = vmatpush.msra.mxu0 %v1032
    %3791 = vmatmul.f32.gmra.mxu0 %v3773
    %v3792 = vpop.f32.mrf.mxu0
    %v3793 = vadd.f32 %v1395, %v3792
    %3794 = vdwg.mxu0
    %v3795 = vadd.f32 %v3768, %v3793
    %v3796 = vxor.u32 %v3795, 2147483648
    %v3797 = vmul.f32 %v3796, 1.442695
    %v3798 = vpow.pop %v3797
    %v3799 = vadd.f32 %v3798, 1.0
    %v3800 = vrcp.pop %v3799
    %v3801 = vmul.f32 %v3799, %v3800
    %v3802 = vsub.f32 1.0, %v3801
    %v3803 = vmul.f32 %v3800, %v3802
    %v3804 = vadd.f32 %v3800, %v3803
    %vm3805 = vweird.f32 %v3799
    %vm3806 = vweird.f32 %v3800
    %vm3807 = vmor %vm3805, %vm3806
    %v3808 = vsel %vm3807, %v3800, %v3804
    %v3809 = vand.u32 2147483647, %v3799
    %vm3810 = vcmp.eq.f32.partialorder %v3809, 8.507059e+37
    %v3811 = vand.u32 %v3799, 2147483648
    %v3812 = vor.u32 1.1754944e-38, %v3811
    %v3813 = vsel %vm3810, %v3812, %v3808
    %v3814 = vmul.f32 1.0, %v3813
    %3816 = vrot.lane.b32.xlu0 %v3793, 64
    %v3817 = vpop.permute.xlu0 %3816
    %v3819 = vmul.f32 %v3814, %v3817
    %3821 = vrot.lane.b32.xlu0 %v3819, 64
    %v3822 = vpop.permute.xlu0 %3821
    %v3824 = vadd.f32 %v3768, %v3822
    %v3825 = vtanh.pop %v3824
    %v3826 = vsub.f32 1.0, %v3814
    %3828 = vrot.lane.b32.xlu0 %v3825, 96
    %v3829 = vpop.permute.xlu0 %3828
    %v3831 = vmul.f32 %v3826, %v3829
    %v3832 = vmul.f32 %v3814, %v3218
    %v3833 = vadd.f32 %v3831, %v3832
    %v3835 = vrot.slane %v3287, 6
    %3836 = vrot.lane.b32.xlu0 %v3835, 96
    %v3837 = vpop.permute.xlu0 %3836
    %v3838 = vsel %vm148, %v3837, 0
    %3840 = vmatpush.msra.mxu0 0.0
    %3841 = vmatpush.msra.mxu0 0.0
    %3842 = vmatpush.msra.mxu0 0.0
    %3843 = vmatpush.msra.mxu0 0.0
    %3844 = vmatpush.msra.mxu0 0.0
    %3845 = vmatpush.msra.mxu0 0.0
    %3846 = vmatpush.msra.mxu0 0.0
    %3847 = vmatpush.msra.mxu0 0.0
    %3848 = vmatpush.msra.mxu0 0.0
    %3849 = vmatpush.msra.mxu0 0.0
    %3850 = vmatpush.msra.mxu0 0.0
    %3851 = vmatpush.msra.mxu0 0.0
    %3852 = vmatpush.msra.mxu0 %v1025
    %3853 = vmatpush.msra.mxu0 %v1024
    %3854 = vmatpush.msra.mxu0 %v1023
    %3855 = vmatpush.msra.mxu0 %v1022
    %3856 = vmatmul.f32.gmra.mxu0 %v3838
    %v3857 = vpop.f32.mrf.mxu0
    %v3858 = vadd.f32 %v1393, %v3857
    %3859 = vdwg.mxu0
    %v3860 = vadd.f32 %v1087, %v3858
    %v3861 = vxor.u32 %v3860, 2147483648
    %v3862 = vmul.f32 %v3861, 1.442695
    %v3863 = vpow.pop %v3862
    %v3864 = vadd.f32 %v3863, 1.0
    %v3865 = vrcp.pop %v3864
    %v3866 = vmul.f32 %v3864, %v3865
    %v3867 = vsub.f32 1.0, %v3866
    %v3868 = vmul.f32 %v3865, %v3867
    %v3869 = vadd.f32 %v3865, %v3868
    %vm3870 = vweird.f32 %v3864
    %vm3871 = vweird.f32 %v3865
    %vm3872 = vmor %vm3870, %vm3871
    %v3873 = vsel %vm3872, %v3865, %v3869
    %v3874 = vand.u32 2147483647, %v3864
    %vm3875 = vcmp.eq.f32.partialorder %v3874, 8.507059e+37
    %v3876 = vand.u32 %v3864, 2147483648
    %v3877 = vor.u32 1.1754944e-38, %v3876
    %v3878 = vsel %vm3875, %v3877, %v3873
    %v3879 = vmul.f32 1.0, %v3878
    %3881 = vrot.lane.b32.xlu0 %v3858, 64
    %v3882 = vpop.permute.xlu0 %3881
    %v3884 = vmul.f32 %v3879, %v3882
    %3886 = vrot.lane.b32.xlu0 %v3884, 64
    %v3887 = vpop.permute.xlu0 %3886
    %v3889 = vadd.f32 %v1087, %v3887
    %v3890 = vtanh.pop %v3889
    %v3891 = vsub.f32 1.0, %v3879
    %3893 = vrot.lane.b32.xlu0 %v3890, 96
    %v3894 = vpop.permute.xlu0 %3893
    %v3896 = vmul.f32 %v3891, %v3894
    %v3898 = vmul.f32 %v3879, %v3835
    %v3899 = vadd.f32 %v3896, %v3898
    %v3900 = vmax.f32 %v3899, 0.0
    %3902 = vrot.lane.b32.xlu0 %v3900, 96
    %v3903 = vpop.permute.xlu0 %3902
    %v3904 = vsel %vm148, %v3903, 0
    %3906 = vmatpush.msra.mxu0 0.0
    %3907 = vmatpush.msra.mxu0 0.0
    %3908 = vmatpush.msra.mxu0 0.0
    %3909 = vmatpush.msra.mxu0 0.0
    %3910 = vmatpush.msra.mxu0 0.0
    %3911 = vmatpush.msra.mxu0 0.0
    %3912 = vmatpush.msra.mxu0 0.0
    %3913 = vmatpush.msra.mxu0 0.0
    %3914 = vmatpush.msra.mxu0 0.0
    %3915 = vmatpush.msra.mxu0 0.0
    %3916 = vmatpush.msra.mxu0 0.0
    %3917 = vmatpush.msra.mxu0 0.0
    %3918 = vmatpush.msra.mxu0 %v1385
    %3919 = vmatpush.msra.mxu0 %v1377
    %3920 = vmatpush.msra.mxu0 %v1369
    %3921 = vmatpush.msra.mxu0 %v1361
    %3922 = vmatmul.f32.gmra.mxu0 %v3904
    %v3923 = vpop.f32.mrf.mxu0
    %v3924 = vadd.f32 0.0, %v3923
    %3925 = vdwg.mxu0
    %3926 = vmatpush.msra.mxu0 0.0
    %3927 = vmatpush.msra.mxu0 0.0
    %3928 = vmatpush.msra.mxu0 0.0
    %3929 = vmatpush.msra.mxu0 0.0
    %3930 = vmatpush.msra.mxu0 0.0
    %3931 = vmatpush.msra.mxu0 0.0
    %3932 = vmatpush.msra.mxu0 0.0
    %3933 = vmatpush.msra.mxu0 0.0
    %3934 = vmatpush.msra.mxu0 0.0
    %3935 = vmatpush.msra.mxu0 0.0
    %3936 = vmatpush.msra.mxu0 0.0
    %3937 = vmatpush.msra.mxu0 0.0
    %3938 = vmatpush.msra.mxu0 %v1386
    %3939 = vmatpush.msra.mxu0 %v1378
    %3940 = vmatpush.msra.mxu0 %v1370
    %3941 = vmatpush.msra.mxu0 %v1362
    %3942 = vmatmul.f32.gmra.mxu0 %v3904
    %v3943 = vpop.f32.mrf.mxu0
    %v3944 = vadd.f32 0.0, %v3943
    %3945 = vdwg.mxu0
    %3946 = vmatpush.msra.mxu0 0.0
    %3947 = vmatpush.msra.mxu0 0.0
    %3948 = vmatpush.msra.mxu0 0.0
    %3949 = vmatpush.msra.mxu0 0.0
    %3950 = vmatpush.msra.mxu0 0.0
    %3951 = vmatpush.msra.mxu0 0.0
    %3952 = vmatpush.msra.mxu0 0.0
    %3953 = vmatpush.msra.mxu0 0.0
    %3954 = vmatpush.msra.mxu0 0.0
    %3955 = vmatpush.msra.mxu0 0.0
    %3956 = vmatpush.msra.mxu0 0.0
    %3957 = vmatpush.msra.mxu0 0.0
    %3958 = vmatpush.msra.mxu0 %v1387
    %3959 = vmatpush.msra.mxu0 %v1379
    %3960 = vmatpush.msra.mxu0 %v1371
    %3961 = vmatpush.msra.mxu0 %v1363
    %3962 = vmatmul.f32.gmra.mxu0 %v3904
    %v3963 = vpop.f32.mrf.mxu0
    %v3964 = vadd.f32 0.0, %v3963
    %3965 = vdwg.mxu0
    %3966 = vmatpush.msra.mxu0 0.0
    %3967 = vmatpush.msra.mxu0 0.0
    %3968 = vmatpush.msra.mxu0 0.0
    %3969 = vmatpush.msra.mxu0 0.0
    %3970 = vmatpush.msra.mxu0 0.0
    %3971 = vmatpush.msra.mxu0 0.0
    %3972 = vmatpush.msra.mxu0 0.0
    %3973 = vmatpush.msra.mxu0 0.0
    %3974 = vmatpush.msra.mxu0 0.0
    %3975 = vmatpush.msra.mxu0 0.0
    %3976 = vmatpush.msra.mxu0 0.0
    %3977 = vmatpush.msra.mxu0 0.0
    %3978 = vmatpush.msra.mxu0 %v1388
    %3979 = vmatpush.msra.mxu0 %v1380
    %3980 = vmatpush.msra.mxu0 %v1372
    %3981 = vmatpush.msra.mxu0 %v1364
    %3982 = vmatmul.f32.gmra.mxu0 %v3904
    %v3983 = vpop.f32.mrf.mxu0
    %v3984 = vadd.f32 0.0, %v3983
    %3985 = vdwg.mxu0
    %3986 = vmatpush.msra.mxu0 0.0
    %3987 = vmatpush.msra.mxu0 0.0
    %3988 = vmatpush.msra.mxu0 0.0
    %3989 = vmatpush.msra.mxu0 0.0
    %3990 = vmatpush.msra.mxu0 0.0
    %3991 = vmatpush.msra.mxu0 0.0
    %3992 = vmatpush.msra.mxu0 0.0
    %3993 = vmatpush.msra.mxu0 0.0
    %3994 = vmatpush.msra.mxu0 0.0
    %3995 = vmatpush.msra.mxu0 0.0
    %3996 = vmatpush.msra.mxu0 0.0
    %3997 = vmatpush.msra.mxu0 0.0
    %3998 = vmatpush.msra.mxu0 %v1389
    %3999 = vmatpush.msra.mxu0 %v1381
    %4000 = vmatpush.msra.mxu0 %v1373
    %4001 = vmatpush.msra.mxu0 %v1365
    %4002 = vmatmul.f32.gmra.mxu0 %v3904
    %v4003 = vpop.f32.mrf.mxu0
    %v4004 = vadd.f32 0.0, %v4003
    %4005 = vdwg.mxu0
    %4006 = vmatpush.msra.mxu0 0.0
    %4007 = vmatpush.msra.mxu0 0.0
    %4008 = vmatpush.msra.mxu0 0.0
    %4009 = vmatpush.msra.mxu0 0.0
    %4010 = vmatpush.msra.mxu0 0.0
    %4011 = vmatpush.msra.mxu0 0.0
    %4012 = vmatpush.msra.mxu0 0.0
    %4013 = vmatpush.msra.mxu0 0.0
    %4014 = vmatpush.msra.mxu0 0.0
    %4015 = vmatpush.msra.mxu0 0.0
    %4016 = vmatpush.msra.mxu0 0.0
    %4017 = vmatpush.msra.mxu0 0.0
    %4018 = vmatpush.msra.mxu0 %v1390
    %4019 = vmatpush.msra.mxu0 %v1382
    %4020 = vmatpush.msra.mxu0 %v1374
    %4021 = vmatpush.msra.mxu0 %v1366
    %4022 = vmatmul.f32.gmra.mxu0 %v3904
    %v4023 = vpop.f32.mrf.mxu0
    %v4024 = vadd.f32 0.0, %v4023
    %4025 = vdwg.mxu0
    %4026 = vmatpush.msra.mxu0 0.0
    %4027 = vmatpush.msra.mxu0 0.0
    %4028 = vmatpush.msra.mxu0 0.0
    %4029 = vmatpush.msra.mxu0 0.0
    %4030 = vmatpush.msra.mxu0 0.0
    %4031 = vmatpush.msra.mxu0 0.0
    %4032 = vmatpush.msra.mxu0 0.0
    %4033 = vmatpush.msra.mxu0 0.0
    %4034 = vmatpush.msra.mxu0 0.0
    %4035 = vmatpush.msra.mxu0 0.0
    %4036 = vmatpush.msra.mxu0 0.0
    %4037 = vmatpush.msra.mxu0 0.0
    %4038 = vmatpush.msra.mxu0 %v1391
    %4039 = vmatpush.msra.mxu0 %v1383
    %4040 = vmatpush.msra.mxu0 %v1375
    %4041 = vmatpush.msra.mxu0 %v1367
    %4042 = vmatmul.f32.gmra.mxu0 %v3904
    %v4043 = vpop.f32.mrf.mxu0
    %v4044 = vadd.f32 0.0, %v4043
    %4045 = vdwg.mxu0
    %4046 = vmatpush.msra.mxu0 0.0
    %4047 = vmatpush.msra.mxu0 0.0
    %4048 = vmatpush.msra.mxu0 0.0
    %4049 = vmatpush.msra.mxu0 0.0
    %4050 = vmatpush.msra.mxu0 0.0
    %4051 = vmatpush.msra.mxu0 0.0
    %4052 = vmatpush.msra.mxu0 0.0
    %4053 = vmatpush.msra.mxu0 0.0
    %4054 = vmatpush.msra.mxu0 0.0
    %4055 = vmatpush.msra.mxu0 0.0
    %4056 = vmatpush.msra.mxu0 0.0
    %4057 = vmatpush.msra.mxu0 0.0
    %4058 = vmatpush.msra.mxu0 %v1392
    %4059 = vmatpush.msra.mxu0 %v1384
    %4060 = vmatpush.msra.mxu0 %v1376
    %4061 = vmatpush.msra.mxu0 %v1368
    %4062 = vmatmul.f32.gmra.mxu0 %v3904
    %v4063 = vpop.f32.mrf.mxu0
    %v4064 = vadd.f32 0.0, %v4063
    %4065 = vdwg.mxu0
    %v4066 = vadd.f32 %v1197, %v3924
    %v4067 = vadd.f32 %v1220, %v3944
    %v4068 = vadd.f32 %v1243, %v3964
    %v4069 = vadd.f32 %v1266, %v3984
    %v4070 = vadd.f32 %v1289, %v4004
    %v4071 = vadd.f32 %v1312, %v4024
    %v4072 = vadd.f32 %v1335, %v4044
    %v4073 = vadd.f32 %v1358, %v4064
    %v4082 = vrot.slane %v4067, 6
    %v4083 = vrot.slane %v4068, 4
    %v4084 = vrot.slane %v4069, 2
    %v4085 = vrot.slane %v4071, 6
    %v4086 = vrot.slane %v4072, 4
    %v4087 = vrot.slane %v4073, 2
    %v4088 = vsel %vm1651, %v4066, %v4082
    %v4089 = vsel %vm1653, %v4083, %v4084
    %v4090 = vsel %vm1655, %v4088, %v4089
    %v4091 = vsel %vm1651, %v4070, %v4085
    %v4092 = vsel %vm1653, %v4086, %v4087
    %v4093 = vsel %vm1655, %v4091, %v4092
    %v4096 = vrot.slane %v4093, 4
    %v4097 = vsel %vm965, %v4096, %v4090
    %v4098 = vrot.slane %v4090, 4
    %v4099 = vsel %vm965, %v4093, %v4098
    %v4101 = vunpack.c.l.s4 1934713408
    %v4102 = vunpack.c.0.s8 %v4101
    %v4103 = vperm.slane %v4097, %v4102
    %v4105 = vunpack.c.l.s4 1934713408
    %v4106 = vunpack.c.0.s8 %v4105
    %v4107 = vperm.slane %v4099, %v4106
    %v4108 = vrot.slane %v4107, 4
    %v4109 = vsel %vm965, %v4108, %v4103
    %v4110 = vrot.slane %v4103, 4
    %v4111 = vsel %vm965, %v4107, %v4110
    %v4112 = vmul.f32 %v4109, 1.25
    %v4113 = vmul.f32 %v4111, 1.25
    %4116 = vst [vmem:[#allocation1] ss:$4 sm:$0xff] %v4112
    %v4117 = vld.sshfl [vmem:[#allocation1] sm:$0xff pattern:$0x73625140]
    %v4118 = vld.sshfl [vmem:[#allocation1 + $0x8] sm:$0xff pattern:$0x73625140]
    %v4119 = vld.sshfl [vmem:[#allocation1 + $0x10] sm:$0xff pattern:$0x73625140]
    %v4120 = vld.sshfl [vmem:[#allocation1 + $0x18] sm:$0xff pattern:$0x73625140]
    %s4121 = scalar_lea.vmem [#allocation1], 32
    %4122 = vst [vmem:[%s4121] ss:$4 sm:$0xff] %v4113
    %v4123 = vld.sshfl [vmem:[#allocation1 + $0x20] sm:$0xff pattern:$0x73625140]
    %v4124 = vld.sshfl [vmem:[#allocation1 + $0x28] sm:$0xff pattern:$0x73625140]
    %v4125 = vld.sshfl [vmem:[#allocation1 + $0x30] sm:$0xff pattern:$0x73625140]
    %v4126 = vld.sshfl [vmem:[#allocation1 + $0x38] sm:$0xff pattern:$0x73625140]
    %v4135 = vsel %vm1651, %v4117, -inf
    %v4136 = vsel %vm1651, %v4118, -inf
    %v4137 = vsel %vm1651, %v4119, -inf
    %v4138 = vmax.f32 %v4135, %v4137
    %v4139 = vsel %vm1651, %v4120, -inf
    %v4140 = vmax.f32 %v4136, %v4139
    %v4141 = vmax.f32 %v4138, %v4140
    %4142 = vmax.xlane.f32.xlu0 %v4141
    %v4143 = vpop.xlane.xlu0 %4142
    %v4144 = vsel %vm1651, %v4123, -inf
    %v4145 = vsel %vm1651, %v4124, -inf
    %v4146 = vsel %vm1651, %v4125, -inf
    %v4147 = vmax.f32 %v4144, %v4146
    %v4148 = vsel %vm1651, %v4126, -inf
    %v4149 = vmax.f32 %v4145, %v4148
    %v4150 = vmax.f32 %v4147, %v4149
    %4151 = vmax.xlane.f32.xlu0 %v4150
    %v4152 = vpop.xlane.xlu0 %4151
    %v4156 = vunpack.c.l.s4 269488144
    %v4157 = vunpack.c.0.s8 %v4156
    %v4158 = vperm.slane %v4143, %v4157
    %v4160 = vunpack.c.l.s4 269488144
    %v4161 = vunpack.c.0.s8 %v4160
    %v4162 = vperm.slane %v4152, %v4161
    %v4165 = vsub.f32 %v4112, %v4158
    %v4166 = vsub.f32 %v4113, %v4162
    %v4167 = vmul.f32 %v4165, 1.442695
    %v4168 = vpow.pop %v4167
    %v4169 = vmul.f32 %v4166, 1.442695
    %v4170 = vpow.pop %v4169
    %4173 = vst [vmem:[#allocation1] ss:$4 sm:$0xff] %v4168
    %v4174 = vld.sshfl [vmem:[#allocation1] sm:$0xff pattern:$0x73625140]
    %v4175 = vld.sshfl [vmem:[#allocation1 + $0x8] sm:$0xff pattern:$0x73625140]
    %v4176 = vld.sshfl [vmem:[#allocation1 + $0x10] sm:$0xff pattern:$0x73625140]
    %v4177 = vld.sshfl [vmem:[#allocation1 + $0x18] sm:$0xff pattern:$0x73625140]
    %s4178 = scalar_lea.vmem [#allocation1], 32
    %4179 = vst [vmem:[%s4178] ss:$4 sm:$0xff] %v4170
    %v4180 = vld.sshfl [vmem:[#allocation1 + $0x20] sm:$0xff pattern:$0x73625140]
    %v4181 = vld.sshfl [vmem:[#allocation1 + $0x28] sm:$0xff pattern:$0x73625140]
    %v4182 = vld.sshfl [vmem:[#allocation1 + $0x30] sm:$0xff pattern:$0x73625140]
    %v4183 = vld.sshfl [vmem:[#allocation1 + $0x38] sm:$0xff pattern:$0x73625140]
    %v4192 = vsel %vm1651, %v4174, 0.0
    %v4193 = vsel %vm1651, %v4175, 0.0
    %v4194 = vadd.f32 %v4192, %v4193
    %v4195 = vsel %vm1651, %v4176, 0.0
    %v4196 = vadd.f32 %v4194, %v4195
    %v4197 = vsel %vm1651, %v4177, 0.0
    %v4198 = vadd.f32 %v4196, %v4197
    %4199 = vadd.xlane.f32.xlu0 %v4198
    %v4200 = vpop.xlane.xlu0 %4199
    %v4201 = vsel %vm1651, %v4180, 0.0
    %v4202 = vsel %vm1651, %v4181, 0.0
    %v4203 = vadd.f32 %v4201, %v4202
    %v4204 = vsel %vm1651, %v4182, 0.0
    %v4205 = vadd.f32 %v4203, %v4204
    %v4206 = vsel %vm1651, %v4183, 0.0
    %v4207 = vadd.f32 %v4205, %v4206
    %4208 = vadd.xlane.f32.xlu0 %v4207
    %v4209 = vpop.xlane.xlu0 %4208
    %v4210 = vlog2.pop %v4200
    %v4211 = vmul.f32 %v4210, 0.6931472
    %v4212 = vlog2.pop %v4209
    %v4213 = vmul.f32 %v4212, 0.6931472
    %v4214 = vsub.f32 0.0, %v4211
    %v4215 = vsub.f32 0.0, %v4213
    %vm4216 = vcmp.eq.f32.partialorder %v4112, %v4158
    %vm4217 = vcmp.eq.f32.partialorder %v4113, %v4162
    %v4218 = vsel %vm4216, %v1789, 512
    %v4219 = vsel %vm4217, %v1789, 512
    %4220 = vst [vmem:[#allocation1] ss:$4 sm:$0xff] %v4218
    %v4221 = vld.sshfl [vmem:[#allocation1] sm:$0xff pattern:$0x73625140]
    %v4222 = vld.sshfl [vmem:[#allocation1 + $0x8] sm:$0xff pattern:$0x73625140]
    %v4223 = vld.sshfl [vmem:[#allocation1 + $0x10] sm:$0xff pattern:$0x73625140]
    %v4224 = vld.sshfl [vmem:[#allocation1 + $0x18] sm:$0xff pattern:$0x73625140]
    %s4225 = scalar_lea.vmem [#allocation1], 32
    %4226 = vst [vmem:[%s4225] ss:$4 sm:$0xff] %v4219
    %v4227 = vld.sshfl [vmem:[#allocation1 + $0x20] sm:$0xff pattern:$0x73625140]
    %v4228 = vld.sshfl [vmem:[#allocation1 + $0x28] sm:$0xff pattern:$0x73625140]
    %v4229 = vld.sshfl [vmem:[#allocation1 + $0x30] sm:$0xff pattern:$0x73625140]
    %v4230 = vld.sshfl [vmem:[#allocation1 + $0x38] sm:$0xff pattern:$0x73625140]
    %v4231 = vsel %vm1651, %v4221, 2147483647
    %v4232 = vsel %vm1651, %v4222, 2147483647
    %v4233 = vsel %vm1651, %v4223, 2147483647
    %vm4234 = vcmp.lt.s32.totalorder %v4231, %v4233
    %v4235 = vsel %vm4234, %v4231, %v4233
    %v4236 = vsel %vm1651, %v4224, 2147483647
    %vm4237 = vcmp.lt.s32.totalorder %v4232, %v4236
    %v4238 = vsel %vm4237, %v4232, %v4236
    %vm4239 = vcmp.lt.s32.totalorder %v4235, %v4238
    %v4240 = vsel %vm4239, %v4235, %v4238
    %v4241 = vand.u32 %v4240, 65535
    %v4242 = vshra.s32 %v4240, 16
    %v4243 = vcvt.s32.f32 %v4241
    %v4244 = vcvt.s32.f32 %v4242
    %4245 = vmin.xlane.f32.xlu0 %v4244
    %v4246 = vpop.xlane.xlu0 %4245
    %vm4247 = vcmp.eq.f32.partialorder %v4244, %v4246
    %v4248 = vsel %vm4247, %v4243, inf
    %4249 = vmin.xlane.f32.xlu0 %v4248
    %v4250 = vpop.xlane.xlu0 %4249
    %v4251 = vcvt.f32.s32 %v4250
    %v4252 = vcvt.f32.s32 %v4246
    %v4253 = vshll.u32 %v4252, 16
    %v4254 = vadd.s32 %v4253, %v4251
    %v4255 = vsel %vm1651, %v4227, 2147483647
    %v4256 = vsel %vm1651, %v4228, 2147483647
    %v4257 = vsel %vm1651, %v4229, 2147483647
    %vm4258 = vcmp.lt.s32.totalorder %v4255, %v4257
    %v4259 = vsel %vm4258, %v4255, %v4257
    %v4260 = vsel %vm1651, %v4230, 2147483647
    %vm4261 = vcmp.lt.s32.totalorder %v4256, %v4260
    %v4262 = vsel %vm4261, %v4256, %v4260
    %vm4263 = vcmp.lt.s32.totalorder %v4259, %v4262
    %v4264 = vsel %vm4263, %v4259, %v4262
    %v4265 = vand.u32 %v4264, 65535
    %v4266 = vshra.s32 %v4264, 16
    %v4267 = vcvt.s32.f32 %v4265
    %v4268 = vcvt.s32.f32 %v4266
    %4269 = vmin.xlane.f32.xlu0 %v4268
    %v4270 = vpop.xlane.xlu0 %4269
    %vm4271 = vcmp.eq.f32.partialorder %v4268, %v4270
    %v4272 = vsel %vm4271, %v4267, inf
    %4273 = vmin.xlane.f32.xlu0 %v4272
    %v4274 = vpop.xlane.xlu0 %4273
    %v4275 = vcvt.f32.s32 %v4274
    %v4276 = vcvt.f32.s32 %v4270
    %v4277 = vshll.u32 %v4276, 16
    %v4278 = vadd.s32 %v4277, %v4275
    %v4279 = vcvt.s32.f32 %v4254
    %v4280 = vcvt.s32.f32 %v4278
    %v4281 = vmul.f32 %v4279, 0.002
    %v4282 = vmul.f32 %v4280, 0.002
    %v4283 = vxor.u32 %v4281, 2147483648
    %v4284 = vxor.u32 %v4282, 2147483648
    %v4285 = vmul.f32 %v4283, 1.442695
    %v4286 = vpow.pop %v4285
    %v4287 = vmul.f32 %v4284, 1.442695
    %v4288 = vpow.pop %v4287
    %v4289 = vadd.f32 %v4286, 1.0
    %v4290 = vadd.f32 %v4288, 1.0
    %v4291 = vrcp.pop %v4289
    %v4292 = vmul.f32 %v4289, %v4291
    %v4293 = vsub.f32 1.0, %v4292
    %v4294 = vmul.f32 %v4291, %v4293
    %v4295 = vadd.f32 %v4291, %v4294
    %vm4296 = vweird.f32 %v4289
    %vm4297 = vweird.f32 %v4291
    %vm4298 = vmor %vm4296, %vm4297
    %v4299 = vsel %vm4298, %v4291, %v4295
    %v4300 = vand.u32 2147483647, %v4289
    %vm4301 = vcmp.eq.f32.partialorder %v4300, 8.507059e+37
    %v4302 = vand.u32 %v4289, 2147483648
    %v4303 = vor.u32 1.1754944e-38, %v4302
    %v4304 = vsel %vm4301, %v4303, %v4299
    %v4305 = vmul.f32 1.0, %v4304
    %v4306 = vrcp.pop %v4290
    %v4307 = vmul.f32 %v4290, %v4306
    %v4308 = vsub.f32 1.0, %v4307
    %v4309 = vmul.f32 %v4306, %v4308
    %v4310 = vadd.f32 %v4306, %v4309
    %vm4311 = vweird.f32 %v4290
    %vm4312 = vweird.f32 %v4306
    %vm4313 = vmor %vm4311, %vm4312
    %v4314 = vsel %vm4313, %v4306, %v4310
    %v4315 = vand.u32 2147483647, %v4290
    %vm4316 = vcmp.eq.f32.partialorder %v4315, 8.507059e+37
    %v4317 = vand.u32 %v4290, 2147483648
    %v4318 = vor.u32 1.1754944e-38, %v4317
    %v4319 = vsel %vm4316, %v4318, %v4314
    %v4320 = vmul.f32 1.0, %v4319
    %v4321 = vmul.f32 %v4305, 20.0
    %v4322 = vmul.f32 %v4320, 20.0
    %v4325 = vrot.slane %v4321, 1
    %v4326 = vsel %vm1899, %v4322, %v4325
    %v4328 = vrot.slane %v4322, 7
    %v4329 = vsel %vm1899, %v4328, %v4321
    %v4331 = vsel %vm1895, %v4326, %v4329
    %v4332 = vmul.f32 %v1004, %v4331
    %v4333 = vadd.f32 %v3746, %v4332
    %v4335 = vsel %vm148, %v4332, 0
    %4337 = vmatpush.msra.mxu0 0.0
    %4338 = vmatpush.msra.mxu0 0.0
    %4339 = vmatpush.msra.mxu0 0.0
    %4340 = vmatpush.msra.mxu0 0.0
    %4341 = vmatpush.msra.mxu0 0.0
    %4342 = vmatpush.msra.mxu0 0.0
    %4343 = vmatpush.msra.mxu0 0.0
    %4344 = vmatpush.msra.mxu0 0.0
    %4345 = vmatpush.msra.mxu0 0.0
    %4346 = vmatpush.msra.mxu0 0.0
    %4347 = vmatpush.msra.mxu0 0.0
    %4348 = vmatpush.msra.mxu0 0.0
    %4349 = vmatpush.msra.mxu0 %v1030
    %4350 = vmatpush.msra.mxu0 %v1029
    %4351 = vmatpush.msra.mxu0 %v1028
    %4352 = vmatpush.msra.mxu0 %v1027
    %4353 = vmatmul.f32.gmra.mxu0 %v4335
    %v4354 = vpop.f32.mrf.mxu0
    %v4355 = vadd.f32 %v1394, %v4354
    %4356 = vdwg.mxu0
    %4358 = vrot.lane.b32.xlu0 %v3833, 96
    %v4359 = vpop.permute.xlu0 %4358
    %v4360 = vsel %vm148, %v4359, 0
    %4362 = vmatpush.msra.mxu0 0.0
    %4363 = vmatpush.msra.mxu0 0.0
    %4364 = vmatpush.msra.mxu0 0.0
    %4365 = vmatpush.msra.mxu0 0.0
    %4366 = vmatpush.msra.mxu0 0.0
    %4367 = vmatpush.msra.mxu0 0.0
    %4368 = vmatpush.msra.mxu0 0.0
    %4369 = vmatpush.msra.mxu0 0.0
    %4370 = vmatpush.msra.mxu0 0.0
    %4371 = vmatpush.msra.mxu0 0.0
    %4372 = vmatpush.msra.mxu0 0.0
    %4373 = vmatpush.msra.mxu0 0.0
    %4374 = vmatpush.msra.mxu0 %v1035
    %4375 = vmatpush.msra.mxu0 %v1034
    %4376 = vmatpush.msra.mxu0 %v1033
    %4377 = vmatpush.msra.mxu0 %v1032
    %4378 = vmatmul.f32.gmra.mxu0 %v4360
    %v4379 = vpop.f32.mrf.mxu0
    %v4380 = vadd.f32 %v1395, %v4379
    %4381 = vdwg.mxu0
    %v4382 = vadd.f32 %v4355, %v4380
    %v4383 = vxor.u32 %v4382, 2147483648
    %v4384 = vmul.f32 %v4383, 1.442695
    %v4385 = vpow.pop %v4384
    %v4386 = vadd.f32 %v4385, 1.0
    %v4387 = vrcp.pop %v4386
    %v4388 = vmul.f32 %v4386, %v4387
    %v4389 = vsub.f32 1.0, %v4388
    %v4390 = vmul.f32 %v4387, %v4389
    %v4391 = vadd.f32 %v4387, %v4390
    %vm4392 = vweird.f32 %v4386
    %vm4393 = vweird.f32 %v4387
    %vm4394 = vmor %vm4392, %vm4393
    %v4395 = vsel %vm4394, %v4387, %v4391
    %v4396 = vand.u32 2147483647, %v4386
    %vm4397 = vcmp.eq.f32.partialorder %v4396, 8.507059e+37
    %v4398 = vand.u32 %v4386, 2147483648
    %v4399 = vor.u32 1.1754944e-38, %v4398
    %v4400 = vsel %vm4397, %v4399, %v4395
    %v4401 = vmul.f32 1.0, %v4400
    %4403 = vrot.lane.b32.xlu0 %v4380, 64
    %v4404 = vpop.permute.xlu0 %4403
    %v4406 = vmul.f32 %v4401, %v4404
    %4408 = vrot.lane.b32.xlu0 %v4406, 64
    %v4409 = vpop.permute.xlu0 %4408
    %v4411 = vadd.f32 %v4355, %v4409
    %v4412 = vtanh.pop %v4411
    %v4413 = vsub.f32 1.0, %v4401
    %4415 = vrot.lane.b32.xlu0 %v4412, 96
    %v4416 = vpop.permute.xlu0 %4415
    %v4418 = vmul.f32 %v4413, %v4416
    %v4419 = vmul.f32 %v4401, %v3833
    %v4420 = vadd.f32 %v4418, %v4419
    %4422 = vrot.lane.b32.xlu0 %v3899, 96
    %v4423 = vpop.permute.xlu0 %4422
    %v4424 = vsel %vm148, %v4423, 0
    %4426 = vmatpush.msra.mxu0 0.0
    %4427 = vmatpush.msra.mxu0 0.0
    %4428 = vmatpush.msra.mxu0 0.0
    %4429 = vmatpush.msra.mxu0 0.0
    %4430 = vmatpush.msra.mxu0 0.0
    %4431 = vmatpush.msra.mxu0 0.0
    %4432 = vmatpush.msra.mxu0 0.0
    %4433 = vmatpush.msra.mxu0 0.0
    %4434 = vmatpush.msra.mxu0 0.0
    %4435 = vmatpush.msra.mxu0 0.0
    %4436 = vmatpush.msra.mxu0 0.0
    %4437 = vmatpush.msra.mxu0 0.0
    %4438 = vmatpush.msra.mxu0 %v1025
    %4439 = vmatpush.msra.mxu0 %v1024
    %4440 = vmatpush.msra.mxu0 %v1023
    %4441 = vmatpush.msra.mxu0 %v1022
    %4442 = vmatmul.f32.gmra.mxu0 %v4424
    %v4443 = vpop.f32.mrf.mxu0
    %v4444 = vadd.f32 %v1393, %v4443
    %4445 = vdwg.mxu0
    %v4447 = vrot.slane %v4444, 6
    %v4449 = vadd.f32 %v1087, %v4447
    %v4450 = vxor.u32 %v4449, 2147483648
    %v4451 = vmul.f32 %v4450, 1.442695
    %v4452 = vpow.pop %v4451
    %v4453 = vadd.f32 %v4452, 1.0
    %v4454 = vrcp.pop %v4453
    %v4455 = vmul.f32 %v4453, %v4454
    %v4456 = vsub.f32 1.0, %v4455
    %v4457 = vmul.f32 %v4454, %v4456
    %v4458 = vadd.f32 %v4454, %v4457
    %vm4459 = vweird.f32 %v4453
    %vm4460 = vweird.f32 %v4454
    %vm4461 = vmor %vm4459, %vm4460
    %v4462 = vsel %vm4461, %v4454, %v4458
    %v4463 = vand.u32 2147483647, %v4453
    %vm4464 = vcmp.eq.f32.partialorder %v4463, 8.507059e+37
    %v4465 = vand.u32 %v4453, 2147483648
    %v4466 = vor.u32 1.1754944e-38, %v4465
    %v4467 = vsel %vm4464, %v4466, %v4462
    %v4468 = vmul.f32 1.0, %v4467
    %4469 = vrot.lane.b32.xlu0 %v4447, 64
    %v4470 = vpop.permute.xlu0 %4469
    %v4472 = vmul.f32 %v4468, %v4470
    %4474 = vrot.lane.b32.xlu0 %v4472, 64
    %v4475 = vpop.permute.xlu0 %4474
    %v4477 = vadd.f32 %v1087, %v4475
    %v4478 = vtanh.pop %v4477
    %v4479 = vsub.f32 1.0, %v4468
    %4481 = vrot.lane.b32.xlu0 %v4478, 96
    %v4482 = vpop.permute.xlu0 %4481
    %v4484 = vmul.f32 %v4479, %v4482
    %v4485 = vrot.slane %v3899, 6
    %v4487 = vmul.f32 %v4468, %v4485
    %v4488 = vadd.f32 %v4484, %v4487
    %v4489 = vmax.f32 %v4488, 0.0
    %v4491 = vrot.slane %v4489, 2
    %4492 = vrot.lane.b32.xlu0 %v4491, 96
    %v4493 = vpop.permute.xlu0 %4492
    %v4494 = vsel %vm148, %v4493, 0
    %4496 = vmatpush.msra.mxu0 0.0
    %4497 = vmatpush.msra.mxu0 0.0
    %4498 = vmatpush.msra.mxu0 0.0
    %4499 = vmatpush.msra.mxu0 0.0
    %4500 = vmatpush.msra.mxu0 0.0
    %4501 = vmatpush.msra.mxu0 0.0
    %4502 = vmatpush.msra.mxu0 0.0
    %4503 = vmatpush.msra.mxu0 0.0
    %4504 = vmatpush.msra.mxu0 0.0
    %4505 = vmatpush.msra.mxu0 0.0
    %4506 = vmatpush.msra.mxu0 0.0
    %4507 = vmatpush.msra.mxu0 0.0
    %4508 = vmatpush.msra.mxu0 %v1385
    %4509 = vmatpush.msra.mxu0 %v1377
    %4510 = vmatpush.msra.mxu0 %v1369
    %4511 = vmatpush.msra.mxu0 %v1361
    %4512 = vmatmul.f32.gmra.mxu0 %v4494
    %v4513 = vpop.f32.mrf.mxu0
    %v4514 = vadd.f32 0.0, %v4513
    %4515 = vdwg.mxu0
    %4516 = vmatpush.msra.mxu0 0.0
    %4517 = vmatpush.msra.mxu0 0.0
    %4518 = vmatpush.msra.mxu0 0.0
    %4519 = vmatpush.msra.mxu0 0.0
    %4520 = vmatpush.msra.mxu0 0.0
    %4521 = vmatpush.msra.mxu0 0.0
    %4522 = vmatpush.msra.mxu0 0.0
    %4523 = vmatpush.msra.mxu0 0.0
    %4524 = vmatpush.msra.mxu0 0.0
    %4525 = vmatpush.msra.mxu0 0.0
    %4526 = vmatpush.msra.mxu0 0.0
    %4527 = vmatpush.msra.mxu0 0.0
    %4528 = vmatpush.msra.mxu0 %v1386
    %4529 = vmatpush.msra.mxu0 %v1378
    %4530 = vmatpush.msra.mxu0 %v1370
    %4531 = vmatpush.msra.mxu0 %v1362
    %4532 = vmatmul.f32.gmra.mxu0 %v4494
    %v4533 = vpop.f32.mrf.mxu0
    %v4534 = vadd.f32 0.0, %v4533
    %4535 = vdwg.mxu0
    %4536 = vmatpush.msra.mxu0 0.0
    %4537 = vmatpush.msra.mxu0 0.0
    %4538 = vmatpush.msra.mxu0 0.0
    %4539 = vmatpush.msra.mxu0 0.0
    %4540 = vmatpush.msra.mxu0 0.0
    %4541 = vmatpush.msra.mxu0 0.0
    %4542 = vmatpush.msra.mxu0 0.0
    %4543 = vmatpush.msra.mxu0 0.0
    %4544 = vmatpush.msra.mxu0 0.0
    %4545 = vmatpush.msra.mxu0 0.0
    %4546 = vmatpush.msra.mxu0 0.0
    %4547 = vmatpush.msra.mxu0 0.0
    %4548 = vmatpush.msra.mxu0 %v1387
    %4549 = vmatpush.msra.mxu0 %v1379
    %4550 = vmatpush.msra.mxu0 %v1371
    %4551 = vmatpush.msra.mxu0 %v1363
    %4552 = vmatmul.f32.gmra.mxu0 %v4494
    %v4553 = vpop.f32.mrf.mxu0
    %v4554 = vadd.f32 0.0, %v4553
    %4555 = vdwg.mxu0
    %4556 = vmatpush.msra.mxu0 0.0
    %4557 = vmatpush.msra.mxu0 0.0
    %4558 = vmatpush.msra.mxu0 0.0
    %4559 = vmatpush.msra.mxu0 0.0
    %4560 = vmatpush.msra.mxu0 0.0
    %4561 = vmatpush.msra.mxu0 0.0
    %4562 = vmatpush.msra.mxu0 0.0
    %4563 = vmatpush.msra.mxu0 0.0
    %4564 = vmatpush.msra.mxu0 0.0
    %4565 = vmatpush.msra.mxu0 0.0
    %4566 = vmatpush.msra.mxu0 0.0
    %4567 = vmatpush.msra.mxu0 0.0
    %4568 = vmatpush.msra.mxu0 %v1388
    %4569 = vmatpush.msra.mxu0 %v1380
    %4570 = vmatpush.msra.mxu0 %v1372
    %4571 = vmatpush.msra.mxu0 %v1364
    %4572 = vmatmul.f32.gmra.mxu0 %v4494
    %v4573 = vpop.f32.mrf.mxu0
    %v4574 = vadd.f32 0.0, %v4573
    %4575 = vdwg.mxu0
    %4576 = vmatpush.msra.mxu0 0.0
    %4577 = vmatpush.msra.mxu0 0.0
    %4578 = vmatpush.msra.mxu0 0.0
    %4579 = vmatpush.msra.mxu0 0.0
    %4580 = vmatpush.msra.mxu0 0.0
    %4581 = vmatpush.msra.mxu0 0.0
    %4582 = vmatpush.msra.mxu0 0.0
    %4583 = vmatpush.msra.mxu0 0.0
    %4584 = vmatpush.msra.mxu0 0.0
    %4585 = vmatpush.msra.mxu0 0.0
    %4586 = vmatpush.msra.mxu0 0.0
    %4587 = vmatpush.msra.mxu0 0.0
    %4588 = vmatpush.msra.mxu0 %v1389
    %4589 = vmatpush.msra.mxu0 %v1381
    %4590 = vmatpush.msra.mxu0 %v1373
    %4591 = vmatpush.msra.mxu0 %v1365
    %4592 = vmatmul.f32.gmra.mxu0 %v4494
    %v4593 = vpop.f32.mrf.mxu0
    %v4594 = vadd.f32 0.0, %v4593
    %4595 = vdwg.mxu0
    %4596 = vmatpush.msra.mxu0 0.0
    %4597 = vmatpush.msra.mxu0 0.0
    %4598 = vmatpush.msra.mxu0 0.0
    %4599 = vmatpush.msra.mxu0 0.0
    %4600 = vmatpush.msra.mxu0 0.0
    %4601 = vmatpush.msra.mxu0 0.0
    %4602 = vmatpush.msra.mxu0 0.0
    %4603 = vmatpush.msra.mxu0 0.0
    %4604 = vmatpush.msra.mxu0 0.0
    %4605 = vmatpush.msra.mxu0 0.0
    %4606 = vmatpush.msra.mxu0 0.0
    %4607 = vmatpush.msra.mxu0 0.0
    %4608 = vmatpush.msra.mxu0 %v1390
    %4609 = vmatpush.msra.mxu0 %v1382
    %4610 = vmatpush.msra.mxu0 %v1374
    %4611 = vmatpush.msra.mxu0 %v1366
    %4612 = vmatmul.f32.gmra.mxu0 %v4494
    %v4613 = vpop.f32.mrf.mxu0
    %v4614 = vadd.f32 0.0, %v4613
    %4615 = vdwg.mxu0
    %4616 = vmatpush.msra.mxu0 0.0
    %4617 = vmatpush.msra.mxu0 0.0
    %4618 = vmatpush.msra.mxu0 0.0
    %4619 = vmatpush.msra.mxu0 0.0
    %4620 = vmatpush.msra.mxu0 0.0
    %4621 = vmatpush.msra.mxu0 0.0
    %4622 = vmatpush.msra.mxu0 0.0
    %4623 = vmatpush.msra.mxu0 0.0
    %4624 = vmatpush.msra.mxu0 0.0
    %4625 = vmatpush.msra.mxu0 0.0
    %4626 = vmatpush.msra.mxu0 0.0
    %4627 = vmatpush.msra.mxu0 0.0
    %4628 = vmatpush.msra.mxu0 %v1391
    %4629 = vmatpush.msra.mxu0 %v1383
    %4630 = vmatpush.msra.mxu0 %v1375
    %4631 = vmatpush.msra.mxu0 %v1367
    %4632 = vmatmul.f32.gmra.mxu0 %v4494
    %v4633 = vpop.f32.mrf.mxu0
    %v4634 = vadd.f32 0.0, %v4633
    %4635 = vdwg.mxu0
    %4636 = vmatpush.msra.mxu0 0.0
    %4637 = vmatpush.msra.mxu0 0.0
    %4638 = vmatpush.msra.mxu0 0.0
    %4639 = vmatpush.msra.mxu0 0.0
    %4640 = vmatpush.msra.mxu0 0.0
    %4641 = vmatpush.msra.mxu0 0.0
    %4642 = vmatpush.msra.mxu0 0.0
    %4643 = vmatpush.msra.mxu0 0.0
    %4644 = vmatpush.msra.mxu0 0.0
    %4645 = vmatpush.msra.mxu0 0.0
    %4646 = vmatpush.msra.mxu0 0.0
    %4647 = vmatpush.msra.mxu0 0.0
    %4648 = vmatpush.msra.mxu0 %v1392
    %4649 = vmatpush.msra.mxu0 %v1384
    %4650 = vmatpush.msra.mxu0 %v1376
    %4651 = vmatpush.msra.mxu0 %v1368
    %4652 = vmatmul.f32.gmra.mxu0 %v4494
    %v4653 = vpop.f32.mrf.mxu0
    %v4654 = vadd.f32 0.0, %v4653
    %4655 = vdwg.mxu0
    %v4664 = vrot.slane %v4514, 6
    %v4665 = vrot.slane %v4534, 6
    %v4666 = vrot.slane %v4554, 6
    %v4667 = vrot.slane %v4574, 6
    %v4668 = vrot.slane %v4594, 6
    %v4669 = vrot.slane %v4614, 6
    %v4670 = vrot.slane %v4634, 6
    %v4671 = vrot.slane %v4654, 6
    %v4680 = vadd.f32 %v1197, %v4664
    %v4681 = vadd.f32 %v1220, %v4665
    %v4682 = vadd.f32 %v1243, %v4666
    %v4683 = vadd.f32 %v1266, %v4667
    %v4684 = vadd.f32 %v1289, %v4668
    %v4685 = vadd.f32 %v1312, %v4669
    %v4686 = vadd.f32 %v1335, %v4670
    %v4687 = vadd.f32 %v1358, %v4671
    %4696 = vst.sshfl [vmem:[#allocation1] sm:$0xff pattern:$0x73625140] %v4680
    %4697 = vst.sshfl [vmem:[#allocation1 + $0x8] sm:$0xff pattern:$0x73625140] %v4681
    %4698 = vst.sshfl [vmem:[#allocation1 + $0x10] sm:$0xff pattern:$0x73625140] %v4682
    %4699 = vst.sshfl [vmem:[#allocation1 + $0x18] sm:$0xff pattern:$0x73625140] %v4683
    %s4700 = scalar_lea.vmem [#allocation1], 1
    %v4701 = vld [vmem:[%s4700] ss:$4 sm:$0xff]
    %4702 = vst.sshfl [vmem:[#allocation1 + $0x20] sm:$0xff pattern:$0x73625140] %v4684
    %4703 = vst.sshfl [vmem:[#allocation1 + $0x28] sm:$0xff pattern:$0x73625140] %v4685
    %4704 = vst.sshfl [vmem:[#allocation1 + $0x30] sm:$0xff pattern:$0x73625140] %v4686
    %4705 = vst.sshfl [vmem:[#allocation1 + $0x38] sm:$0xff pattern:$0x73625140] %v4687
    %s4706 = scalar_lea.vmem [#allocation1], 33
    %v4707 = vld [vmem:[%s4706] ss:$4 sm:$0xff]
    %v4710 = vrot.slane %v4707, 4
    %v4711 = vsel %vm965, %v4710, %v4701
    %v4712 = vrot.slane %v4701, 4
    %v4713 = vsel %vm965, %v4707, %v4712
    %v4715 = vunpack.c.l.s4 1934713408
    %v4716 = vunpack.c.0.s8 %v4715
    %v4717 = vperm.slane %v4711, %v4716
    %v4719 = vunpack.c.l.s4 1934713408
    %v4720 = vunpack.c.0.s8 %v4719
    %v4721 = vperm.slane %v4713, %v4720
    %v4722 = vrot.slane %v4721, 4
    %v4723 = vsel %vm965, %v4722, %v4717
    %v4724 = vrot.slane %v4717, 4
    %v4725 = vsel %vm965, %v4721, %v4724
    %v4726 = vmul.f32 %v4723, 1.25
    %v4727 = vmul.f32 %v4725, 1.25
    %4730 = vst [vmem:[#allocation1] ss:$4 sm:$0xff] %v4726
    %v4731 = vld.sshfl [vmem:[#allocation1] sm:$0xff pattern:$0x73625140]
    %v4732 = vld.sshfl [vmem:[#allocation1 + $0x8] sm:$0xff pattern:$0x73625140]
    %v4733 = vld.sshfl [vmem:[#allocation1 + $0x10] sm:$0xff pattern:$0x73625140]
    %v4734 = vld.sshfl [vmem:[#allocation1 + $0x18] sm:$0xff pattern:$0x73625140]
    %s4735 = scalar_lea.vmem [#allocation1], 32
    %4736 = vst [vmem:[%s4735] ss:$4 sm:$0xff] %v4727
    %v4737 = vld.sshfl [vmem:[#allocation1 + $0x20] sm:$0xff pattern:$0x73625140]
    %v4738 = vld.sshfl [vmem:[#allocation1 + $0x28] sm:$0xff pattern:$0x73625140]
    %v4739 = vld.sshfl [vmem:[#allocation1 + $0x30] sm:$0xff pattern:$0x73625140]
    %v4740 = vld.sshfl [vmem:[#allocation1 + $0x38] sm:$0xff pattern:$0x73625140]
    %v4749 = vsel %vm1651, %v4731, -inf
    %v4750 = vsel %vm1651, %v4732, -inf
    %v4751 = vsel %vm1651, %v4733, -inf
    %v4752 = vmax.f32 %v4749, %v4751
    %v4753 = vsel %vm1651, %v4734, -inf
    %v4754 = vmax.f32 %v4750, %v4753
    %v4755 = vmax.f32 %v4752, %v4754
    %4756 = vmax.xlane.f32.xlu0 %v4755
    %v4757 = vpop.xlane.xlu0 %4756
    %v4758 = vsel %vm1651, %v4737, -inf
    %v4759 = vsel %vm1651, %v4738, -inf
    %v4760 = vsel %vm1651, %v4739, -inf
    %v4761 = vmax.f32 %v4758, %v4760
    %v4762 = vsel %vm1651, %v4740, -inf
    %v4763 = vmax.f32 %v4759, %v4762
    %v4764 = vmax.f32 %v4761, %v4763
    %4765 = vmax.xlane.f32.xlu0 %v4764
    %v4766 = vpop.xlane.xlu0 %4765
    %v4770 = vunpack.c.l.s4 269488144
    %v4771 = vunpack.c.0.s8 %v4770
    %v4772 = vperm.slane %v4757, %v4771
    %v4774 = vunpack.c.l.s4 269488144
    %v4775 = vunpack.c.0.s8 %v4774
    %v4776 = vperm.slane %v4766, %v4775
    %v4779 = vsub.f32 %v4726, %v4772
    %v4780 = vsub.f32 %v4727, %v4776
    %v4781 = vmul.f32 %v4779, 1.442695
    %v4782 = vpow.pop %v4781
    %v4783 = vmul.f32 %v4780, 1.442695
    %v4784 = vpow.pop %v4783
    %4787 = vst [vmem:[#allocation1] ss:$4 sm:$0xff] %v4782
    %v4788 = vld.sshfl [vmem:[#allocation1] sm:$0xff pattern:$0x73625140]
    %v4789 = vld.sshfl [vmem:[#allocation1 + $0x8] sm:$0xff pattern:$0x73625140]
    %v4790 = vld.sshfl [vmem:[#allocation1 + $0x10] sm:$0xff pattern:$0x73625140]
    %v4791 = vld.sshfl [vmem:[#allocation1 + $0x18] sm:$0xff pattern:$0x73625140]
    %s4792 = scalar_lea.vmem [#allocation1], 32
    %4793 = vst [vmem:[%s4792] ss:$4 sm:$0xff] %v4784
    %v4794 = vld.sshfl [vmem:[#allocation1 + $0x20] sm:$0xff pattern:$0x73625140]
    %v4795 = vld.sshfl [vmem:[#allocation1 + $0x28] sm:$0xff pattern:$0x73625140]
    %v4796 = vld.sshfl [vmem:[#allocation1 + $0x30] sm:$0xff pattern:$0x73625140]
    %v4797 = vld.sshfl [vmem:[#allocation1 + $0x38] sm:$0xff pattern:$0x73625140]
    %v4806 = vsel %vm1651, %v4788, 0.0
    %v4807 = vsel %vm1651, %v4789, 0.0
    %v4808 = vadd.f32 %v4806, %v4807
    %v4809 = vsel %vm1651, %v4790, 0.0
    %v4810 = vadd.f32 %v4808, %v4809
    %v4811 = vsel %vm1651, %v4791, 0.0
    %v4812 = vadd.f32 %v4810, %v4811
    %4813 = vadd.xlane.f32.xlu0 %v4812
    %v4814 = vpop.xlane.xlu0 %4813
    %v4815 = vsel %vm1651, %v4794, 0.0
    %v4816 = vsel %vm1651, %v4795, 0.0
    %v4817 = vadd.f32 %v4815, %v4816
    %v4818 = vsel %vm1651, %v4796, 0.0
    %v4819 = vadd.f32 %v4817, %v4818
    %v4820 = vsel %vm1651, %v4797, 0.0
    %v4821 = vadd.f32 %v4819, %v4820
    %4822 = vadd.xlane.f32.xlu0 %v4821
    %v4823 = vpop.xlane.xlu0 %4822
    %v4824 = vlog2.pop %v4814
    %v4825 = vmul.f32 %v4824, 0.6931472
    %v4826 = vlog2.pop %v4823
    %v4827 = vmul.f32 %v4826, 0.6931472
    %v4828 = vsub.f32 0.0, %v4825
    %v4829 = vsub.f32 0.0, %v4827
    %vm4830 = vcmp.eq.f32.partialorder %v4726, %v4772
    %vm4831 = vcmp.eq.f32.partialorder %v4727, %v4776
    %v4832 = vsel %vm4830, %v1789, 512
    %v4833 = vsel %vm4831, %v1789, 512
    %4834 = vst [vmem:[#allocation1] ss:$4 sm:$0xff] %v4832
    %v4835 = vld.sshfl [vmem:[#allocation1] sm:$0xff pattern:$0x73625140]
    %v4836 = vld.sshfl [vmem:[#allocation1 + $0x8] sm:$0xff pattern:$0x73625140]
    %v4837 = vld.sshfl [vmem:[#allocation1 + $0x10] sm:$0xff pattern:$0x73625140]
    %v4838 = vld.sshfl [vmem:[#allocation1 + $0x18] sm:$0xff pattern:$0x73625140]
    %s4839 = scalar_lea.vmem [#allocation1], 32
    %4840 = vst [vmem:[%s4839] ss:$4 sm:$0xff] %v4833
    %v4841 = vld.sshfl [vmem:[#allocation1 + $0x20] sm:$0xff pattern:$0x73625140]
    %v4842 = vld.sshfl [vmem:[#allocation1 + $0x28] sm:$0xff pattern:$0x73625140]
    %v4843 = vld.sshfl [vmem:[#allocation1 + $0x30] sm:$0xff pattern:$0x73625140]
    %v4844 = vld.sshfl [vmem:[#allocation1 + $0x38] sm:$0xff pattern:$0x73625140]
    %v4845 = vsel %vm1651, %v4835, 2147483647
    %v4846 = vsel %vm1651, %v4836, 2147483647
    %v4847 = vsel %vm1651, %v4837, 2147483647
    %vm4848 = vcmp.lt.s32.totalorder %v4845, %v4847
    %v4849 = vsel %vm4848, %v4845, %v4847
    %v4850 = vsel %vm1651, %v4838, 2147483647
    %vm4851 = vcmp.lt.s32.totalorder %v4846, %v4850
    %v4852 = vsel %vm4851, %v4846, %v4850
    %vm4853 = vcmp.lt.s32.totalorder %v4849, %v4852
    %v4854 = vsel %vm4853, %v4849, %v4852
    %v4855 = vand.u32 %v4854, 65535
    %v4856 = vshra.s32 %v4854, 16
    %v4857 = vcvt.s32.f32 %v4855
    %v4858 = vcvt.s32.f32 %v4856
    %4859 = vmin.xlane.f32.xlu0 %v4858
    %v4860 = vpop.xlane.xlu0 %4859
    %vm4861 = vcmp.eq.f32.partialorder %v4858, %v4860
    %v4862 = vsel %vm4861, %v4857, inf
    %4863 = vmin.xlane.f32.xlu0 %v4862
    %v4864 = vpop.xlane.xlu0 %4863
    %v4865 = vcvt.f32.s32 %v4864
    %v4866 = vcvt.f32.s32 %v4860
    %v4867 = vshll.u32 %v4866, 16
    %v4868 = vadd.s32 %v4867, %v4865
    %v4869 = vsel %vm1651, %v4841, 2147483647
    %v4870 = vsel %vm1651, %v4842, 2147483647
    %v4871 = vsel %vm1651, %v4843, 2147483647
    %vm4872 = vcmp.lt.s32.totalorder %v4869, %v4871
    %v4873 = vsel %vm4872, %v4869, %v4871
    %v4874 = vsel %vm1651, %v4844, 2147483647
    %vm4875 = vcmp.lt.s32.totalorder %v4870, %v4874
    %v4876 = vsel %vm4875, %v4870, %v4874
    %vm4877 = vcmp.lt.s32.totalorder %v4873, %v4876
    %v4878 = vsel %vm4877, %v4873, %v4876
    %v4879 = vand.u32 %v4878, 65535
    %v4880 = vshra.s32 %v4878, 16
    %v4881 = vcvt.s32.f32 %v4879
    %v4882 = vcvt.s32.f32 %v4880
    %4883 = vmin.xlane.f32.xlu0 %v4882
    %v4884 = vpop.xlane.xlu0 %4883
    %vm4885 = vcmp.eq.f32.partialorder %v4882, %v4884
    %v4886 = vsel %vm4885, %v4881, inf
    %4887 = vmin.xlane.f32.xlu0 %v4886
    %v4888 = vpop.xlane.xlu0 %4887
    %v4889 = vcvt.f32.s32 %v4888
    %v4890 = vcvt.f32.s32 %v4884
    %v4891 = vshll.u32 %v4890, 16
    %v4892 = vadd.s32 %v4891, %v4889
    %v4893 = vcvt.s32.f32 %v4868
    %v4894 = vcvt.s32.f32 %v4892
    %v4895 = vmul.f32 %v4893, 0.002
    %v4896 = vmul.f32 %v4894, 0.002
    %v4897 = vxor.u32 %v4895, 2147483648
    %v4898 = vxor.u32 %v4896, 2147483648
    %v4899 = vmul.f32 %v4897, 1.442695
    %v4900 = vpow.pop %v4899
    %v4901 = vmul.f32 %v4898, 1.442695
    %v4902 = vpow.pop %v4901
    %v4903 = vadd.f32 %v4900, 1.0
    %v4904 = vadd.f32 %v4902, 1.0
    %v4905 = vrcp.pop %v4903
    %v4906 = vmul.f32 %v4903, %v4905
    %v4907 = vsub.f32 1.0, %v4906
    %v4908 = vmul.f32 %v4905, %v4907
    %v4909 = vadd.f32 %v4905, %v4908
    %vm4910 = vweird.f32 %v4903
    %vm4911 = vweird.f32 %v4905
    %vm4912 = vmor %vm4910, %vm4911
    %v4913 = vsel %vm4912, %v4905, %v4909
    %v4914 = vand.u32 2147483647, %v4903
    %vm4915 = vcmp.eq.f32.partialorder %v4914, 8.507059e+37
    %v4916 = vand.u32 %v4903, 2147483648
    %v4917 = vor.u32 1.1754944e-38, %v4916
    %v4918 = vsel %vm4915, %v4917, %v4913
    %v4919 = vmul.f32 1.0, %v4918
    %v4920 = vrcp.pop %v4904
    %v4921 = vmul.f32 %v4904, %v4920
    %v4922 = vsub.f32 1.0, %v4921
    %v4923 = vmul.f32 %v4920, %v4922
    %v4924 = vadd.f32 %v4920, %v4923
    %vm4925 = vweird.f32 %v4904
    %vm4926 = vweird.f32 %v4920
    %vm4927 = vmor %vm4925, %vm4926
    %v4928 = vsel %vm4927, %v4920, %v4924
    %v4929 = vand.u32 2147483647, %v4904
    %vm4930 = vcmp.eq.f32.partialorder %v4929, 8.507059e+37
    %v4931 = vand.u32 %v4904, 2147483648
    %v4932 = vor.u32 1.1754944e-38, %v4931
    %v4933 = vsel %vm4930, %v4932, %v4928
    %v4934 = vmul.f32 1.0, %v4933
    %v4935 = vmul.f32 %v4919, 20.0
    %v4936 = vmul.f32 %v4934, 20.0
    %v4939 = vrot.slane %v4935, 1
    %v4940 = vsel %vm1899, %v4936, %v4939
    %v4942 = vrot.slane %v4936, 7
    %v4943 = vsel %vm1899, %v4942, %v4935
    %v4945 = vsel %vm1895, %v4940, %v4943
    %v4946 = vmul.f32 %v1014, %v4945
    %v4947 = vadd.f32 %v4333, %v4946
    %v4949 = vsel %vm148, %v4946, 0
    %4951 = vmatpush.msra.mxu0 0.0
    %4952 = vmatpush.msra.mxu0 0.0
    %4953 = vmatpush.msra.mxu0 0.0
    %4954 = vmatpush.msra.mxu0 0.0
    %4955 = vmatpush.msra.mxu0 0.0
    %4956 = vmatpush.msra.mxu0 0.0
    %4957 = vmatpush.msra.mxu0 0.0
    %4958 = vmatpush.msra.mxu0 0.0
    %4959 = vmatpush.msra.mxu0 0.0
    %4960 = vmatpush.msra.mxu0 0.0
    %4961 = vmatpush.msra.mxu0 0.0
    %4962 = vmatpush.msra.mxu0 0.0
    %4963 = vmatpush.msra.mxu0 %v1030
    %4964 = vmatpush.msra.mxu0 %v1029
    %4965 = vmatpush.msra.mxu0 %v1028
    %4966 = vmatpush.msra.mxu0 %v1027
    %4967 = vmatmul.f32.gmra.mxu0 %v4949
    %v4968 = vpop.f32.mrf.mxu0
    %v4969 = vadd.f32 %v1394, %v4968
    %4970 = vdwg.mxu0
    %4972 = vrot.lane.b32.xlu0 %v4420, 96
    %v4973 = vpop.permute.xlu0 %4972
    %v4974 = vsel %vm148, %v4973, 0
    %4976 = vmatpush.msra.mxu0 0.0
    %4977 = vmatpush.msra.mxu0 0.0
    %4978 = vmatpush.msra.mxu0 0.0
    %4979 = vmatpush.msra.mxu0 0.0
    %4980 = vmatpush.msra.mxu0 0.0
    %4981 = vmatpush.msra.mxu0 0.0
    %4982 = vmatpush.msra.mxu0 0.0
    %4983 = vmatpush.msra.mxu0 0.0
    %4984 = vmatpush.msra.mxu0 0.0
    %4985 = vmatpush.msra.mxu0 0.0
    %4986 = vmatpush.msra.mxu0 0.0
    %4987 = vmatpush.msra.mxu0 0.0
    %4988 = vmatpush.msra.mxu0 %v1035
    %4989 = vmatpush.msra.mxu0 %v1034
    %4990 = vmatpush.msra.mxu0 %v1033
    %4991 = vmatpush.msra.mxu0 %v1032
    %4992 = vmatmul.f32.gmra.mxu0 %v4974
    %v4993 = vpop.f32.mrf.mxu0
    %v4994 = vadd.f32 %v1395, %v4993
    %4995 = vdwg.mxu0
    %v4996 = vadd.f32 %v4969, %v4994
    %v4997 = vxor.u32 %v4996, 2147483648
    %v4998 = vmul.f32 %v4997, 1.442695
    %v4999 = vpow.pop %v4998
    %v5000 = vadd.f32 %v4999, 1.0
    %v5001 = vrcp.pop %v5000
    %v5002 = vmul.f32 %v5000, %v5001
    %v5003 = vsub.f32 1.0, %v5002
    %v5004 = vmul.f32 %v5001, %v5003
    %v5005 = vadd.f32 %v5001, %v5004
    %vm5006 = vweird.f32 %v5000
    %vm5007 = vweird.f32 %v5001
    %vm5008 = vmor %vm5006, %vm5007
    %v5009 = vsel %vm5008, %v5001, %v5005
    %v5010 = vand.u32 2147483647, %v5000
    %vm5011 = vcmp.eq.f32.partialorder %v5010, 8.507059e+37
    %v5012 = vand.u32 %v5000, 2147483648
    %v5013 = vor.u32 1.1754944e-38, %v5012
    %v5014 = vsel %vm5011, %v5013, %v5009
    %v5015 = vmul.f32 1.0, %v5014
    %5017 = vrot.lane.b32.xlu0 %v4994, 64
    %v5018 = vpop.permute.xlu0 %5017
    %v5020 = vmul.f32 %v5015, %v5018
    %5022 = vrot.lane.b32.xlu0 %v5020, 64
    %v5023 = vpop.permute.xlu0 %5022
    %v5025 = vadd.f32 %v4969, %v5023
    %v5026 = vtanh.pop %v5025
    %v5027 = vsub.f32 1.0, %v5015
    %5029 = vrot.lane.b32.xlu0 %v5026, 96
    %v5030 = vpop.permute.xlu0 %5029
    %v5032 = vmul.f32 %v5027, %v5030
    %v5033 = vmul.f32 %v5015, %v4420
    %v5034 = vadd.f32 %v5032, %v5033
    %v5036 = vrot.slane %v4488, 2
    %5037 = vrot.lane.b32.xlu0 %v5036, 96
    %v5038 = vpop.permute.xlu0 %5037
    %v5039 = vsel %vm148, %v5038, 0
    %5041 = vmatpush.msra.mxu0 0.0
    %5042 = vmatpush.msra.mxu0 0.0
    %5043 = vmatpush.msra.mxu0 0.0
    %5044 = vmatpush.msra.mxu0 0.0
    %5045 = vmatpush.msra.mxu0 0.0
    %5046 = vmatpush.msra.mxu0 0.0
    %5047 = vmatpush.msra.mxu0 0.0
    %5048 = vmatpush.msra.mxu0 0.0
    %5049 = vmatpush.msra.mxu0 0.0
    %5050 = vmatpush.msra.mxu0 0.0
    %5051 = vmatpush.msra.mxu0 0.0
    %5052 = vmatpush.msra.mxu0 0.0
    %5053 = vmatpush.msra.mxu0 %v1025
    %5054 = vmatpush.msra.mxu0 %v1024
    %5055 = vmatpush.msra.mxu0 %v1023
    %5056 = vmatpush.msra.mxu0 %v1022
    %5057 = vmatmul.f32.gmra.mxu0 %v5039
    %v5058 = vpop.f32.mrf.mxu0
    %v5059 = vadd.f32 %v1393, %v5058
    %5060 = vdwg.mxu0
    %v5062 = vrot.slane %v5059, 4
    %v5064 = vadd.f32 %v1087, %v5062
    %v5065 = vxor.u32 %v5064, 2147483648
    %v5066 = vmul.f32 %v5065, 1.442695
    %v5067 = vpow.pop %v5066
    %v5068 = vadd.f32 %v5067, 1.0
    %v5069 = vrcp.pop %v5068
    %v5070 = vmul.f32 %v5068, %v5069
    %v5071 = vsub.f32 1.0, %v5070
    %v5072 = vmul.f32 %v5069, %v5071
    %v5073 = vadd.f32 %v5069, %v5072
    %vm5074 = vweird.f32 %v5068
    %vm5075 = vweird.f32 %v5069
    %vm5076 = vmor %vm5074, %vm5075
    %v5077 = vsel %vm5076, %v5069, %v5073
    %v5078 = vand.u32 2147483647, %v5068
    %vm5079 = vcmp.eq.f32.partialorder %v5078, 8.507059e+37
    %v5080 = vand.u32 %v5068, 2147483648
    %v5081 = vor.u32 1.1754944e-38, %v5080
    %v5082 = vsel %vm5079, %v5081, %v5077
    %v5083 = vmul.f32 1.0, %v5082
    %5084 = vrot.lane.b32.xlu0 %v5062, 64
    %v5085 = vpop.permute.xlu0 %5084
    %v5087 = vmul.f32 %v5083, %v5085
    %5089 = vrot.lane.b32.xlu0 %v5087, 64
    %v5090 = vpop.permute.xlu0 %5089
    %v5092 = vadd.f32 %v1087, %v5090
    %v5093 = vtanh.pop %v5092
    %v5094 = vsub.f32 1.0, %v5083
    %5096 = vrot.lane.b32.xlu0 %v5093, 96
    %v5097 = vpop.permute.xlu0 %5096
    %v5099 = vmul.f32 %v5094, %v5097
    %v5100 = vrot.slane %v4488, 6
    %v5102 = vmul.f32 %v5083, %v5100
    %v5103 = vadd.f32 %v5099, %v5102
    %v5104 = vmax.f32 %v5103, 0.0
    %v5106 = vrot.slane %v5104, 4
    %5107 = vrot.lane.b32.xlu0 %v5106, 96
    %v5108 = vpop.permute.xlu0 %5107
    %v5109 = vsel %vm148, %v5108, 0
    %5111 = vmatpush.msra.mxu0 0.0
    %5112 = vmatpush.msra.mxu0 0.0
    %5113 = vmatpush.msra.mxu0 0.0
    %5114 = vmatpush.msra.mxu0 0.0
    %5115 = vmatpush.msra.mxu0 0.0
    %5116 = vmatpush.msra.mxu0 0.0
    %5117 = vmatpush.msra.mxu0 0.0
    %5118 = vmatpush.msra.mxu0 0.0
    %5119 = vmatpush.msra.mxu0 0.0
    %5120 = vmatpush.msra.mxu0 0.0
    %5121 = vmatpush.msra.mxu0 0.0
    %5122 = vmatpush.msra.mxu0 0.0
    %5123 = vmatpush.msra.mxu0 %v1385
    %5124 = vmatpush.msra.mxu0 %v1377
    %5125 = vmatpush.msra.mxu0 %v1369
    %5126 = vmatpush.msra.mxu0 %v1361
    %5127 = vmatmul.f32.gmra.mxu0 %v5109
    %v5128 = vpop.f32.mrf.mxu0
    %v5129 = vadd.f32 0.0, %v5128
    %5130 = vdwg.mxu0
    %5131 = vmatpush.msra.mxu0 0.0
    %5132 = vmatpush.msra.mxu0 0.0
    %5133 = vmatpush.msra.mxu0 0.0
    %5134 = vmatpush.msra.mxu0 0.0
    %5135 = vmatpush.msra.mxu0 0.0
    %5136 = vmatpush.msra.mxu0 0.0
    %5137 = vmatpush.msra.mxu0 0.0
    %5138 = vmatpush.msra.mxu0 0.0
    %5139 = vmatpush.msra.mxu0 0.0
    %5140 = vmatpush.msra.mxu0 0.0
    %5141 = vmatpush.msra.mxu0 0.0
    %5142 = vmatpush.msra.mxu0 0.0
    %5143 = vmatpush.msra.mxu0 %v1386
    %5144 = vmatpush.msra.mxu0 %v1378
    %5145 = vmatpush.msra.mxu0 %v1370
    %5146 = vmatpush.msra.mxu0 %v1362
    %5147 = vmatmul.f32.gmra.mxu0 %v5109
    %v5148 = vpop.f32.mrf.mxu0
    %v5149 = vadd.f32 0.0, %v5148
    %5150 = vdwg.mxu0
    %5151 = vmatpush.msra.mxu0 0.0
    %5152 = vmatpush.msra.mxu0 0.0
    %5153 = vmatpush.msra.mxu0 0.0
    %5154 = vmatpush.msra.mxu0 0.0
    %5155 = vmatpush.msra.mxu0 0.0
    %5156 = vmatpush.msra.mxu0 0.0
    %5157 = vmatpush.msra.mxu0 0.0
    %5158 = vmatpush.msra.mxu0 0.0
    %5159 = vmatpush.msra.mxu0 0.0
    %5160 = vmatpush.msra.mxu0 0.0
    %5161 = vmatpush.msra.mxu0 0.0
    %5162 = vmatpush.msra.mxu0 0.0
    %5163 = vmatpush.msra.mxu0 %v1387
    %5164 = vmatpush.msra.mxu0 %v1379
    %5165 = vmatpush.msra.mxu0 %v1371
    %5166 = vmatpush.msra.mxu0 %v1363
    %5167 = vmatmul.f32.gmra.mxu0 %v5109
    %v5168 = vpop.f32.mrf.mxu0
    %v5169 = vadd.f32 0.0, %v5168
    %5170 = vdwg.mxu0
    %5171 = vmatpush.msra.mxu0 0.0
    %5172 = vmatpush.msra.mxu0 0.0
    %5173 = vmatpush.msra.mxu0 0.0
    %5174 = vmatpush.msra.mxu0 0.0
    %5175 = vmatpush.msra.mxu0 0.0
    %5176 = vmatpush.msra.mxu0 0.0
    %5177 = vmatpush.msra.mxu0 0.0
    %5178 = vmatpush.msra.mxu0 0.0
    %5179 = vmatpush.msra.mxu0 0.0
    %5180 = vmatpush.msra.mxu0 0.0
    %5181 = vmatpush.msra.mxu0 0.0
    %5182 = vmatpush.msra.mxu0 0.0
    %5183 = vmatpush.msra.mxu0 %v1388
    %5184 = vmatpush.msra.mxu0 %v1380
    %5185 = vmatpush.msra.mxu0 %v1372
    %5186 = vmatpush.msra.mxu0 %v1364
    %5187 = vmatmul.f32.gmra.mxu0 %v5109
    %v5188 = vpop.f32.mrf.mxu0
    %v5189 = vadd.f32 0.0, %v5188
    %5190 = vdwg.mxu0
    %5191 = vmatpush.msra.mxu0 0.0
    %5192 = vmatpush.msra.mxu0 0.0
    %5193 = vmatpush.msra.mxu0 0.0
    %5194 = vmatpush.msra.mxu0 0.0
    %5195 = vmatpush.msra.mxu0 0.0
    %5196 = vmatpush.msra.mxu0 0.0
    %5197 = vmatpush.msra.mxu0 0.0
    %5198 = vmatpush.msra.mxu0 0.0
    %5199 = vmatpush.msra.mxu0 0.0
    %5200 = vmatpush.msra.mxu0 0.0
    %5201 = vmatpush.msra.mxu0 0.0
    %5202 = vmatpush.msra.mxu0 0.0
    %5203 = vmatpush.msra.mxu0 %v1389
    %5204 = vmatpush.msra.mxu0 %v1381
    %5205 = vmatpush.msra.mxu0 %v1373
    %5206 = vmatpush.msra.mxu0 %v1365
    %5207 = vmatmul.f32.gmra.mxu0 %v5109
    %v5208 = vpop.f32.mrf.mxu0
    %v5209 = vadd.f32 0.0, %v5208
    %5210 = vdwg.mxu0
    %5211 = vmatpush.msra.mxu0 0.0
    %5212 = vmatpush.msra.mxu0 0.0
    %5213 = vmatpush.msra.mxu0 0.0
    %5214 = vmatpush.msra.mxu0 0.0
    %5215 = vmatpush.msra.mxu0 0.0
    %5216 = vmatpush.msra.mxu0 0.0
    %5217 = vmatpush.msra.mxu0 0.0
    %5218 = vmatpush.msra.mxu0 0.0
    %5219 = vmatpush.msra.mxu0 0.0
    %5220 = vmatpush.msra.mxu0 0.0
    %5221 = vmatpush.msra.mxu0 0.0
    %5222 = vmatpush.msra.mxu0 0.0
    %5223 = vmatpush.msra.mxu0 %v1390
    %5224 = vmatpush.msra.mxu0 %v1382
    %5225 = vmatpush.msra.mxu0 %v1374
    %5226 = vmatpush.msra.mxu0 %v1366
    %5227 = vmatmul.f32.gmra.mxu0 %v5109
    %v5228 = vpop.f32.mrf.mxu0
    %v5229 = vadd.f32 0.0, %v5228
    %5230 = vdwg.mxu0
    %5231 = vmatpush.msra.mxu0 0.0
    %5232 = vmatpush.msra.mxu0 0.0
    %5233 = vmatpush.msra.mxu0 0.0
    %5234 = vmatpush.msra.mxu0 0.0
    %5235 = vmatpush.msra.mxu0 0.0
    %5236 = vmatpush.msra.mxu0 0.0
    %5237 = vmatpush.msra.mxu0 0.0
    %5238 = vmatpush.msra.mxu0 0.0
    %5239 = vmatpush.msra.mxu0 0.0
    %5240 = vmatpush.msra.mxu0 0.0
    %5241 = vmatpush.msra.mxu0 0.0
    %5242 = vmatpush.msra.mxu0 0.0
    %5243 = vmatpush.msra.mxu0 %v1391
    %5244 = vmatpush.msra.mxu0 %v1383
    %5245 = vmatpush.msra.mxu0 %v1375
    %5246 = vmatpush.msra.mxu0 %v1367
    %5247 = vmatmul.f32.gmra.mxu0 %v5109
    %v5248 = vpop.f32.mrf.mxu0
    %v5249 = vadd.f32 0.0, %v5248
    %5250 = vdwg.mxu0
    %5251 = vmatpush.msra.mxu0 0.0
    %5252 = vmatpush.msra.mxu0 0.0
    %5253 = vmatpush.msra.mxu0 0.0
    %5254 = vmatpush.msra.mxu0 0.0
    %5255 = vmatpush.msra.mxu0 0.0
    %5256 = vmatpush.msra.mxu0 0.0
    %5257 = vmatpush.msra.mxu0 0.0
    %5258 = vmatpush.msra.mxu0 0.0
    %5259 = vmatpush.msra.mxu0 0.0
    %5260 = vmatpush.msra.mxu0 0.0
    %5261 = vmatpush.msra.mxu0 0.0
    %5262 = vmatpush.msra.mxu0 0.0
    %5263 = vmatpush.msra.mxu0 %v1392
    %5264 = vmatpush.msra.mxu0 %v1384
    %5265 = vmatpush.msra.mxu0 %v1376
    %5266 = vmatpush.msra.mxu0 %v1368
    %5267 = vmatmul.f32.gmra.mxu0 %v5109
    %v5268 = vpop.f32.mrf.mxu0
    %v5269 = vadd.f32 0.0, %v5268
    %5270 = vdwg.mxu0
    %v5279 = vrot.slane %v5129, 4
    %v5280 = vrot.slane %v5149, 4
    %v5281 = vrot.slane %v5169, 4
    %v5282 = vrot.slane %v5189, 4
    %v5283 = vrot.slane %v5209, 4
    %v5284 = vrot.slane %v5229, 4
    %v5285 = vrot.slane %v5249, 4
    %v5286 = vrot.slane %v5269, 4
    %v5295 = vadd.f32 %v1197, %v5279
    %v5296 = vadd.f32 %v1220, %v5280
    %v5297 = vadd.f32 %v1243, %v5281
    %v5298 = vadd.f32 %v1266, %v5282
    %v5299 = vadd.f32 %v1289, %v5283
    %v5300 = vadd.f32 %v1312, %v5284
    %v5301 = vadd.f32 %v1335, %v5285
    %v5302 = vadd.f32 %v1358, %v5286
    %5311 = vst.sshfl [vmem:[#allocation1] sm:$0xff pattern:$0x73625140] %v5295
    %5312 = vst.sshfl [vmem:[#allocation1 + $0x8] sm:$0xff pattern:$0x73625140] %v5296
    %5313 = vst.sshfl [vmem:[#allocation1 + $0x10] sm:$0xff pattern:$0x73625140] %v5297
    %5314 = vst.sshfl [vmem:[#allocation1 + $0x18] sm:$0xff pattern:$0x73625140] %v5298
    %s5315 = scalar_lea.vmem [#allocation1], 2
    %v5316 = vld [vmem:[%s5315] ss:$4 sm:$0xff]
    %5317 = vst.sshfl [vmem:[#allocation1 + $0x20] sm:$0xff pattern:$0x73625140] %v5299
    %5318 = vst.sshfl [vmem:[#allocation1 + $0x28] sm:$0xff pattern:$0x73625140] %v5300
    %5319 = vst.sshfl [vmem:[#allocation1 + $0x30] sm:$0xff pattern:$0x73625140] %v5301
    %5320 = vst.sshfl [vmem:[#allocation1 + $0x38] sm:$0xff pattern:$0x73625140] %v5302
    %s5321 = scalar_lea.vmem [#allocation1], 34
    %v5322 = vld [vmem:[%s5321] ss:$4 sm:$0xff]
    %v5325 = vrot.slane %v5322, 4
    %v5326 = vsel %vm965, %v5325, %v5316
    %v5327 = vrot.slane %v5316, 4
    %v5328 = vsel %vm965, %v5322, %v5327
    %v5330 = vunpack.c.l.s4 1934713408
    %v5331 = vunpack.c.0.s8 %v5330
    %v5332 = vperm.slane %v5326, %v5331
    %v5334 = vunpack.c.l.s4 1934713408
    %v5335 = vunpack.c.0.s8 %v5334
    %v5336 = vperm.slane %v5328, %v5335
    %v5337 = vrot.slane %v5336, 4
    %v5338 = vsel %vm965, %v5337, %v5332
    %v5339 = vrot.slane %v5332, 4
    %v5340 = vsel %vm965, %v5336, %v5339
    %v5341 = vmul.f32 %v5338, 1.25
    %v5342 = vmul.f32 %v5340, 1.25
    %5345 = vst [vmem:[#allocation1] ss:$4 sm:$0xff] %v5341
    %v5346 = vld.sshfl [vmem:[#allocation1] sm:$0xff pattern:$0x73625140]
    %v5347 = vld.sshfl [vmem:[#allocation1 + $0x8] sm:$0xff pattern:$0x73625140]
    %v5348 = vld.sshfl [vmem:[#allocation1 + $0x10] sm:$0xff pattern:$0x73625140]
    %v5349 = vld.sshfl [vmem:[#allocation1 + $0x18] sm:$0xff pattern:$0x73625140]
    %s5350 = scalar_lea.vmem [#allocation1], 32
    %5351 = vst [vmem:[%s5350] ss:$4 sm:$0xff] %v5342
    %v5352 = vld.sshfl [vmem:[#allocation1 + $0x20] sm:$0xff pattern:$0x73625140]
    %v5353 = vld.sshfl [vmem:[#allocation1 + $0x28] sm:$0xff pattern:$0x73625140]
    %v5354 = vld.sshfl [vmem:[#allocation1 + $0x30] sm:$0xff pattern:$0x73625140]
    %v5355 = vld.sshfl [vmem:[#allocation1 + $0x38] sm:$0xff pattern:$0x73625140]
    %v5364 = vsel %vm1651, %v5346, -inf
    %v5365 = vsel %vm1651, %v5347, -inf
    %v5366 = vsel %vm1651, %v5348, -inf
    %v5367 = vmax.f32 %v5364, %v5366
    %v5368 = vsel %vm1651, %v5349, -inf
    %v5369 = vmax.f32 %v5365, %v5368
    %v5370 = vmax.f32 %v5367, %v5369
    %5371 = vmax.xlane.f32.xlu0 %v5370
    %v5372 = vpop.xlane.xlu0 %5371
    %v5373 = vsel %vm1651, %v5352, -inf
    %v5374 = vsel %vm1651, %v5353, -inf
    %v5375 = vsel %vm1651, %v5354, -inf
    %v5376 = vmax.f32 %v5373, %v5375
    %v5377 = vsel %vm1651, %v5355, -inf
    %v5378 = vmax.f32 %v5374, %v5377
    %v5379 = vmax.f32 %v5376, %v5378
    %5380 = vmax.xlane.f32.xlu0 %v5379
    %v5381 = vpop.xlane.xlu0 %5380
    %v5385 = vunpack.c.l.s4 269488144
    %v5386 = vunpack.c.0.s8 %v5385
    %v5387 = vperm.slane %v5372, %v5386
    %v5389 = vunpack.c.l.s4 269488144
    %v5390 = vunpack.c.0.s8 %v5389
    %v5391 = vperm.slane %v5381, %v5390
    %v5394 = vsub.f32 %v5341, %v5387
    %v5395 = vsub.f32 %v5342, %v5391
    %v5396 = vmul.f32 %v5394, 1.442695
    %v5397 = vpow.pop %v5396
    %v5398 = vmul.f32 %v5395, 1.442695
    %v5399 = vpow.pop %v5398
    %5402 = vst [vmem:[#allocation1] ss:$4 sm:$0xff] %v5397
    %v5403 = vld.sshfl [vmem:[#allocation1] sm:$0xff pattern:$0x73625140]
    %v5404 = vld.sshfl [vmem:[#allocation1 + $0x8] sm:$0xff pattern:$0x73625140]
    %v5405 = vld.sshfl [vmem:[#allocation1 + $0x10] sm:$0xff pattern:$0x73625140]
    %v5406 = vld.sshfl [vmem:[#allocation1 + $0x18] sm:$0xff pattern:$0x73625140]
    %s5407 = scalar_lea.vmem [#allocation1], 32
    %5408 = vst [vmem:[%s5407] ss:$4 sm:$0xff] %v5399
    %v5409 = vld.sshfl [vmem:[#allocation1 + $0x20] sm:$0xff pattern:$0x73625140]
    %v5410 = vld.sshfl [vmem:[#allocation1 + $0x28] sm:$0xff pattern:$0x73625140]
    %v5411 = vld.sshfl [vmem:[#allocation1 + $0x30] sm:$0xff pattern:$0x73625140]
    %v5412 = vld.sshfl [vmem:[#allocation1 + $0x38] sm:$0xff pattern:$0x73625140]
    %v5421 = vsel %vm1651, %v5403, 0.0
    %v5422 = vsel %vm1651, %v5404, 0.0
    %v5423 = vadd.f32 %v5421, %v5422
    %v5424 = vsel %vm1651, %v5405, 0.0
    %v5425 = vadd.f32 %v5423, %v5424
    %v5426 = vsel %vm1651, %v5406, 0.0
    %v5427 = vadd.f32 %v5425, %v5426
    %5428 = vadd.xlane.f32.xlu0 %v5427
    %v5429 = vpop.xlane.xlu0 %5428
    %v5430 = vsel %vm1651, %v5409, 0.0
    %v5431 = vsel %vm1651, %v5410, 0.0
    %v5432 = vadd.f32 %v5430, %v5431
    %v5433 = vsel %vm1651, %v5411, 0.0
    %v5434 = vadd.f32 %v5432, %v5433
    %v5435 = vsel %vm1651, %v5412, 0.0
    %v5436 = vadd.f32 %v5434, %v5435
    %5437 = vadd.xlane.f32.xlu0 %v5436
    %v5438 = vpop.xlane.xlu0 %5437
    %v5439 = vlog2.pop %v5429
    %v5440 = vmul.f32 %v5439, 0.6931472
    %v5441 = vlog2.pop %v5438
    %v5442 = vmul.f32 %v5441, 0.6931472
    %v5443 = vsub.f32 0.0, %v5440
    %v5444 = vsub.f32 0.0, %v5442
    %vm5445 = vcmp.eq.f32.partialorder %v5341, %v5387
    %vm5446 = vcmp.eq.f32.partialorder %v5342, %v5391
    %v5447 = vsel %vm5445, %v1789, 512
    %v5448 = vsel %vm5446, %v1789, 512
    %5449 = vst [vmem:[#allocation1] ss:$4 sm:$0xff] %v5447
    %v5450 = vld.sshfl [vmem:[#allocation1] sm:$0xff pattern:$0x73625140]
    %v5451 = vld.sshfl [vmem:[#allocation1 + $0x8] sm:$0xff pattern:$0x73625140]
    %v5452 = vld.sshfl [vmem:[#allocation1 + $0x10] sm:$0xff pattern:$0x73625140]
    %v5453 = vld.sshfl [vmem:[#allocation1 + $0x18] sm:$0xff pattern:$0x73625140]
    %s5454 = scalar_lea.vmem [#allocation1], 32
    %5455 = vst [vmem:[%s5454] ss:$4 sm:$0xff] %v5448
    %v5456 = vld.sshfl [vmem:[#allocation1 + $0x20] sm:$0xff pattern:$0x73625140]
    %v5457 = vld.sshfl [vmem:[#allocation1 + $0x28] sm:$0xff pattern:$0x73625140]
    %v5458 = vld.sshfl [vmem:[#allocation1 + $0x30] sm:$0xff pattern:$0x73625140]
    %v5459 = vld.sshfl [vmem:[#allocation1 + $0x38] sm:$0xff pattern:$0x73625140]
    %v5460 = vsel %vm1651, %v5450, 2147483647
    %v5461 = vsel %vm1651, %v5451, 2147483647
    %v5462 = vsel %vm1651, %v5452, 2147483647
    %vm5463 = vcmp.lt.s32.totalorder %v5460, %v5462
    %v5464 = vsel %vm5463, %v5460, %v5462
    %v5465 = vsel %vm1651, %v5453, 2147483647
    %vm5466 = vcmp.lt.s32.totalorder %v5461, %v5465
    %v5467 = vsel %vm5466, %v5461, %v5465
    %vm5468 = vcmp.lt.s32.totalorder %v5464, %v5467
    %v5469 = vsel %vm5468, %v5464, %v5467
    %v5470 = vand.u32 %v5469, 65535
    %v5471 = vshra.s32 %v5469, 16
    %v5472 = vcvt.s32.f32 %v5470
    %v5473 = vcvt.s32.f32 %v5471
    %5474 = vmin.xlane.f32.xlu0 %v5473
    %v5475 = vpop.xlane.xlu0 %5474
    %vm5476 = vcmp.eq.f32.partialorder %v5473, %v5475
    %v5477 = vsel %vm5476, %v5472, inf
    %5478 = vmin.xlane.f32.xlu0 %v5477
    %v5479 = vpop.xlane.xlu0 %5478
    %v5480 = vcvt.f32.s32 %v5479
    %v5481 = vcvt.f32.s32 %v5475
    %v5482 = vshll.u32 %v5481, 16
    %v5483 = vadd.s32 %v5482, %v5480
    %v5484 = vsel %vm1651, %v5456, 2147483647
    %v5485 = vsel %vm1651, %v5457, 2147483647
    %v5486 = vsel %vm1651, %v5458, 2147483647
    %vm5487 = vcmp.lt.s32.totalorder %v5484, %v5486
    %v5488 = vsel %vm5487, %v5484, %v5486
    %v5489 = vsel %vm1651, %v5459, 2147483647
    %vm5490 = vcmp.lt.s32.totalorder %v5485, %v5489
    %v5491 = vsel %vm5490, %v5485, %v5489
    %vm5492 = vcmp.lt.s32.totalorder %v5488, %v5491
    %v5493 = vsel %vm5492, %v5488, %v5491
    %v5494 = vand.u32 %v5493, 65535
    %v5495 = vshra.s32 %v5493, 16
    %v5496 = vcvt.s32.f32 %v5494
    %v5497 = vcvt.s32.f32 %v5495
    %5498 = vmin.xlane.f32.xlu0 %v5497
    %v5499 = vpop.xlane.xlu0 %5498
    %vm5500 = vcmp.eq.f32.partialorder %v5497, %v5499
    %v5501 = vsel %vm5500, %v5496, inf
    %5502 = vmin.xlane.f32.xlu0 %v5501
    %v5503 = vpop.xlane.xlu0 %5502
    %v5504 = vcvt.f32.s32 %v5503
    %v5505 = vcvt.f32.s32 %v5499
    %v5506 = vshll.u32 %v5505, 16
    %v5507 = vadd.s32 %v5506, %v5504
    %v5508 = vcvt.s32.f32 %v5483
    %v5509 = vcvt.s32.f32 %v5507
    %v5510 = vmul.f32 %v5508, 0.002
    %v5511 = vmul.f32 %v5509, 0.002
    %v5512 = vxor.u32 %v5510, 2147483648
    %v5513 = vxor.u32 %v5511, 2147483648
    %v5514 = vmul.f32 %v5512, 1.442695
    %v5515 = vpow.pop %v5514
    %v5516 = vmul.f32 %v5513, 1.442695
    %v5517 = vpow.pop %v5516
    %v5518 = vadd.f32 %v5515, 1.0
    %v5519 = vadd.f32 %v5517, 1.0
    %v5520 = vrcp.pop %v5518
    %v5521 = vmul.f32 %v5518, %v5520
    %v5522 = vsub.f32 1.0, %v5521
    %v5523 = vmul.f32 %v5520, %v5522
    %v5524 = vadd.f32 %v5520, %v5523
    %vm5525 = vweird.f32 %v5518
    %vm5526 = vweird.f32 %v5520
    %vm5527 = vmor %vm5525, %vm5526
    %v5528 = vsel %vm5527, %v5520, %v5524
    %v5529 = vand.u32 2147483647, %v5518
    %vm5530 = vcmp.eq.f32.partialorder %v5529, 8.507059e+37
    %v5531 = vand.u32 %v5518, 2147483648
    %v5532 = vor.u32 1.1754944e-38, %v5531
    %v5533 = vsel %vm5530, %v5532, %v5528
    %v5534 = vmul.f32 1.0, %v5533
    %v5535 = vrcp.pop %v5519
    %v5536 = vmul.f32 %v5519, %v5535
    %v5537 = vsub.f32 1.0, %v5536
    %v5538 = vmul.f32 %v5535, %v5537
    %v5539 = vadd.f32 %v5535, %v5538
    %vm5540 = vweird.f32 %v5519
    %vm5541 = vweird.f32 %v5535
    %vm5542 = vmor %vm5540, %vm5541
    %v5543 = vsel %vm5542, %v5535, %v5539
    %v5544 = vand.u32 2147483647, %v5519
    %vm5545 = vcmp.eq.f32.partialorder %v5544, 8.507059e+37
    %v5546 = vand.u32 %v5519, 2147483648
    %v5547 = vor.u32 1.1754944e-38, %v5546
    %v5548 = vsel %vm5545, %v5547, %v5543
    %v5549 = vmul.f32 1.0, %v5548
    %v5550 = vmul.f32 %v5534, 20.0
    %v5551 = vmul.f32 %v5549, 20.0
    %v5554 = vrot.slane %v5550, 1
    %v5555 = vsel %vm1899, %v5551, %v5554
    %v5557 = vrot.slane %v5551, 7
    %v5558 = vsel %vm1899, %v5557, %v5550
    %v5560 = vsel %vm1895, %v5555, %v5558
    %v5561 = vmul.f32 %v1008, %v5560
    %v5562 = vadd.f32 %v4947, %v5561
    %v5564 = vsel %vm148, %v5561, 0
    %5566 = vmatpush.msra.mxu0 0.0
    %5567 = vmatpush.msra.mxu0 0.0
    %5568 = vmatpush.msra.mxu0 0.0
    %5569 = vmatpush.msra.mxu0 0.0
    %5570 = vmatpush.msra.mxu0 0.0
    %5571 = vmatpush.msra.mxu0 0.0
    %5572 = vmatpush.msra.mxu0 0.0
    %5573 = vmatpush.msra.mxu0 0.0
    %5574 = vmatpush.msra.mxu0 0.0
    %5575 = vmatpush.msra.mxu0 0.0
    %5576 = vmatpush.msra.mxu0 0.0
    %5577 = vmatpush.msra.mxu0 0.0
    %5578 = vmatpush.msra.mxu0 %v1030
    %5579 = vmatpush.msra.mxu0 %v1029
    %5580 = vmatpush.msra.mxu0 %v1028
    %5581 = vmatpush.msra.mxu0 %v1027
    %5582 = vmatmul.f32.gmra.mxu0 %v5564
    %v5583 = vpop.f32.mrf.mxu0
    %v5584 = vadd.f32 %v1394, %v5583
    %5585 = vdwg.mxu0
    %5587 = vrot.lane.b32.xlu0 %v5034, 96
    %v5588 = vpop.permute.xlu0 %5587
    %v5589 = vsel %vm148, %v5588, 0
    %5591 = vmatpush.msra.mxu0 0.0
    %5592 = vmatpush.msra.mxu0 0.0
    %5593 = vmatpush.msra.mxu0 0.0
    %5594 = vmatpush.msra.mxu0 0.0
    %5595 = vmatpush.msra.mxu0 0.0
    %5596 = vmatpush.msra.mxu0 0.0
    %5597 = vmatpush.msra.mxu0 0.0
    %5598 = vmatpush.msra.mxu0 0.0
    %5599 = vmatpush.msra.mxu0 0.0
    %5600 = vmatpush.msra.mxu0 0.0
    %5601 = vmatpush.msra.mxu0 0.0
    %5602 = vmatpush.msra.mxu0 0.0
    %5603 = vmatpush.msra.mxu0 %v1035
    %5604 = vmatpush.msra.mxu0 %v1034
    %5605 = vmatpush.msra.mxu0 %v1033
    %5606 = vmatpush.msra.mxu0 %v1032
    %5607 = vmatmul.f32.gmra.mxu0 %v5589
    %v5608 = vpop.f32.mrf.mxu0
    %v5609 = vadd.f32 %v1395, %v5608
    %5610 = vdwg.mxu0
    %v5611 = vadd.f32 %v5584, %v5609
    %v5612 = vxor.u32 %v5611, 2147483648
    %v5613 = vmul.f32 %v5612, 1.442695
    %v5614 = vpow.pop %v5613
    %v5615 = vadd.f32 %v5614, 1.0
    %v5616 = vrcp.pop %v5615
    %v5617 = vmul.f32 %v5615, %v5616
    %v5618 = vsub.f32 1.0, %v5617
    %v5619 = vmul.f32 %v5616, %v5618
    %v5620 = vadd.f32 %v5616, %v5619
    %vm5621 = vweird.f32 %v5615
    %vm5622 = vweird.f32 %v5616
    %vm5623 = vmor %vm5621, %vm5622
    %v5624 = vsel %vm5623, %v5616, %v5620
    %v5625 = vand.u32 2147483647, %v5615
    %vm5626 = vcmp.eq.f32.partialorder %v5625, 8.507059e+37
    %v5627 = vand.u32 %v5615, 2147483648
    %v5628 = vor.u32 1.1754944e-38, %v5627
    %v5629 = vsel %vm5626, %v5628, %v5624
    %v5630 = vmul.f32 1.0, %v5629
    %5632 = vrot.lane.b32.xlu0 %v5609, 64
    %v5633 = vpop.permute.xlu0 %5632
    %v5635 = vmul.f32 %v5630, %v5633
    %5637 = vrot.lane.b32.xlu0 %v5635, 64
    %v5638 = vpop.permute.xlu0 %5637
    %v5640 = vadd.f32 %v5584, %v5638
    %v5641 = vtanh.pop %v5640
    %v5642 = vsub.f32 1.0, %v5630
    %5644 = vrot.lane.b32.xlu0 %v5641, 96
    %v5645 = vpop.permute.xlu0 %5644
    %v5647 = vmul.f32 %v5642, %v5645
    %v5648 = vmul.f32 %v5630, %v5034
    %v5649 = vadd.f32 %v5647, %v5648
    %v5651 = vrot.slane %v5103, 4
    %5652 = vrot.lane.b32.xlu0 %v5651, 96
    %v5653 = vpop.permute.xlu0 %5652
    %v5654 = vsel %vm148, %v5653, 0
    %5656 = vmatpush.msra.mxu0 0.0
    %5657 = vmatpush.msra.mxu0 0.0
    %5658 = vmatpush.msra.mxu0 0.0
    %5659 = vmatpush.msra.mxu0 0.0
    %5660 = vmatpush.msra.mxu0 0.0
    %5661 = vmatpush.msra.mxu0 0.0
    %5662 = vmatpush.msra.mxu0 0.0
    %5663 = vmatpush.msra.mxu0 0.0
    %5664 = vmatpush.msra.mxu0 0.0
    %5665 = vmatpush.msra.mxu0 0.0
    %5666 = vmatpush.msra.mxu0 0.0
    %5667 = vmatpush.msra.mxu0 0.0
    %5668 = vmatpush.msra.mxu0 %v1025
    %5669 = vmatpush.msra.mxu0 %v1024
    %5670 = vmatpush.msra.mxu0 %v1023
    %5671 = vmatpush.msra.mxu0 %v1022
    %5672 = vmatmul.f32.gmra.mxu0 %v5654
    %v5673 = vpop.f32.mrf.mxu0
    %v5674 = vadd.f32 %v1393, %v5673
    %5675 = vdwg.mxu0
    %v5677 = vrot.slane %v5674, 2
    %v5679 = vadd.f32 %v1087, %v5677
    %v5680 = vxor.u32 %v5679, 2147483648
    %v5681 = vmul.f32 %v5680, 1.442695
    %v5682 = vpow.pop %v5681
    %v5683 = vadd.f32 %v5682, 1.0
    %v5684 = vrcp.pop %v5683
    %v5685 = vmul.f32 %v5683, %v5684
    %v5686 = vsub.f32 1.0, %v5685
    %v5687 = vmul.f32 %v5684, %v5686
    %v5688 = vadd.f32 %v5684, %v5687
    %vm5689 = vweird.f32 %v5683
    %vm5690 = vweird.f32 %v5684
    %vm5691 = vmor %vm5689, %vm5690
    %v5692 = vsel %vm5691, %v5684, %v5688
    %v5693 = vand.u32 2147483647, %v5683
    %vm5694 = vcmp.eq.f32.partialorder %v5693, 8.507059e+37
    %v5695 = vand.u32 %v5683, 2147483648
    %v5696 = vor.u32 1.1754944e-38, %v5695
    %v5697 = vsel %vm5694, %v5696, %v5692
    %v5698 = vmul.f32 1.0, %v5697
    %5699 = vrot.lane.b32.xlu0 %v5677, 64
    %v5700 = vpop.permute.xlu0 %5699
    %v5702 = vmul.f32 %v5698, %v5700
    %5704 = vrot.lane.b32.xlu0 %v5702, 64
    %v5705 = vpop.permute.xlu0 %5704
    %v5707 = vadd.f32 %v1087, %v5705
    %v5708 = vtanh.pop %v5707
    %v5709 = vsub.f32 1.0, %v5698
    %5711 = vrot.lane.b32.xlu0 %v5708, 96
    %v5712 = vpop.permute.xlu0 %5711
    %v5714 = vmul.f32 %v5709, %v5712
    %v5715 = vrot.slane %v5103, 6
    %v5717 = vmul.f32 %v5698, %v5715
    %v5718 = vadd.f32 %v5714, %v5717
    %v5719 = vmax.f32 %v5718, 0.0
    %v5721 = vrot.slane %v5719, 6
    %5722 = vrot.lane.b32.xlu0 %v5721, 96
    %v5723 = vpop.permute.xlu0 %5722
    %v5724 = vsel %vm148, %v5723, 0
    %5726 = vmatpush.msra.mxu0 0.0
    %5727 = vmatpush.msra.mxu0 0.0
    %5728 = vmatpush.msra.mxu0 0.0
    %5729 = vmatpush.msra.mxu0 0.0
    %5730 = vmatpush.msra.mxu0 0.0
    %5731 = vmatpush.msra.mxu0 0.0
    %5732 = vmatpush.msra.mxu0 0.0
    %5733 = vmatpush.msra.mxu0 0.0
    %5734 = vmatpush.msra.mxu0 0.0
    %5735 = vmatpush.msra.mxu0 0.0
    %5736 = vmatpush.msra.mxu0 0.0
    %5737 = vmatpush.msra.mxu0 0.0
    %5738 = vmatpush.msra.mxu0 %v1385
    %5739 = vmatpush.msra.mxu0 %v1377
    %5740 = vmatpush.msra.mxu0 %v1369
    %5741 = vmatpush.msra.mxu0 %v1361
    %5742 = vmatmul.f32.gmra.mxu0 %v5724
    %v5743 = vpop.f32.mrf.mxu0
    %v5744 = vadd.f32 0.0, %v5743
    %5745 = vdwg.mxu0
    %5746 = vmatpush.msra.mxu0 0.0
    %5747 = vmatpush.msra.mxu0 0.0
    %5748 = vmatpush.msra.mxu0 0.0
    %5749 = vmatpush.msra.mxu0 0.0
    %5750 = vmatpush.msra.mxu0 0.0
    %5751 = vmatpush.msra.mxu0 0.0
    %5752 = vmatpush.msra.mxu0 0.0
    %5753 = vmatpush.msra.mxu0 0.0
    %5754 = vmatpush.msra.mxu0 0.0
    %5755 = vmatpush.msra.mxu0 0.0
    %5756 = vmatpush.msra.mxu0 0.0
    %5757 = vmatpush.msra.mxu0 0.0
    %5758 = vmatpush.msra.mxu0 %v1386
    %5759 = vmatpush.msra.mxu0 %v1378
    %5760 = vmatpush.msra.mxu0 %v1370
    %5761 = vmatpush.msra.mxu0 %v1362
    %5762 = vmatmul.f32.gmra.mxu0 %v5724
    %v5763 = vpop.f32.mrf.mxu0
    %v5764 = vadd.f32 0.0, %v5763
    %5765 = vdwg.mxu0
    %5766 = vmatpush.msra.mxu0 0.0
    %5767 = vmatpush.msra.mxu0 0.0
    %5768 = vmatpush.msra.mxu0 0.0
    %5769 = vmatpush.msra.mxu0 0.0
    %5770 = vmatpush.msra.mxu0 0.0
    %5771 = vmatpush.msra.mxu0 0.0
    %5772 = vmatpush.msra.mxu0 0.0
    %5773 = vmatpush.msra.mxu0 0.0
    %5774 = vmatpush.msra.mxu0 0.0
    %5775 = vmatpush.msra.mxu0 0.0
    %5776 = vmatpush.msra.mxu0 0.0
    %5777 = vmatpush.msra.mxu0 0.0
    %5778 = vmatpush.msra.mxu0 %v1387
    %5779 = vmatpush.msra.mxu0 %v1379
    %5780 = vmatpush.msra.mxu0 %v1371
    %5781 = vmatpush.msra.mxu0 %v1363
    %5782 = vmatmul.f32.gmra.mxu0 %v5724
    %v5783 = vpop.f32.mrf.mxu0
    %v5784 = vadd.f32 0.0, %v5783
    %5785 = vdwg.mxu0
    %5786 = vmatpush.msra.mxu0 0.0
    %5787 = vmatpush.msra.mxu0 0.0
    %5788 = vmatpush.msra.mxu0 0.0
    %5789 = vmatpush.msra.mxu0 0.0
    %5790 = vmatpush.msra.mxu0 0.0
    %5791 = vmatpush.msra.mxu0 0.0
    %5792 = vmatpush.msra.mxu0 0.0
    %5793 = vmatpush.msra.mxu0 0.0
    %5794 = vmatpush.msra.mxu0 0.0
    %5795 = vmatpush.msra.mxu0 0.0
    %5796 = vmatpush.msra.mxu0 0.0
    %5797 = vmatpush.msra.mxu0 0.0
    %5798 = vmatpush.msra.mxu0 %v1388
    %5799 = vmatpush.msra.mxu0 %v1380
    %5800 = vmatpush.msra.mxu0 %v1372
    %5801 = vmatpush.msra.mxu0 %v1364
    %5802 = vmatmul.f32.gmra.mxu0 %v5724
    %v5803 = vpop.f32.mrf.mxu0
    %v5804 = vadd.f32 0.0, %v5803
    %5805 = vdwg.mxu0
    %5806 = vmatpush.msra.mxu0 0.0
    %5807 = vmatpush.msra.mxu0 0.0
    %5808 = vmatpush.msra.mxu0 0.0
    %5809 = vmatpush.msra.mxu0 0.0
    %5810 = vmatpush.msra.mxu0 0.0
    %5811 = vmatpush.msra.mxu0 0.0
    %5812 = vmatpush.msra.mxu0 0.0
    %5813 = vmatpush.msra.mxu0 0.0
    %5814 = vmatpush.msra.mxu0 0.0
    %5815 = vmatpush.msra.mxu0 0.0
    %5816 = vmatpush.msra.mxu0 0.0
    %5817 = vmatpush.msra.mxu0 0.0
    %5818 = vmatpush.msra.mxu0 %v1389
    %5819 = vmatpush.msra.mxu0 %v1381
    %5820 = vmatpush.msra.mxu0 %v1373
    %5821 = vmatpush.msra.mxu0 %v1365
    %5822 = vmatmul.f32.gmra.mxu0 %v5724
    %v5823 = vpop.f32.mrf.mxu0
    %v5824 = vadd.f32 0.0, %v5823
    %5825 = vdwg.mxu0
    %5826 = vmatpush.msra.mxu0 0.0
    %5827 = vmatpush.msra.mxu0 0.0
    %5828 = vmatpush.msra.mxu0 0.0
    %5829 = vmatpush.msra.mxu0 0.0
    %5830 = vmatpush.msra.mxu0 0.0
    %5831 = vmatpush.msra.mxu0 0.0
    %5832 = vmatpush.msra.mxu0 0.0
    %5833 = vmatpush.msra.mxu0 0.0
    %5834 = vmatpush.msra.mxu0 0.0
    %5835 = vmatpush.msra.mxu0 0.0
    %5836 = vmatpush.msra.mxu0 0.0
    %5837 = vmatpush.msra.mxu0 0.0
    %5838 = vmatpush.msra.mxu0 %v1390
    %5839 = vmatpush.msra.mxu0 %v1382
    %5840 = vmatpush.msra.mxu0 %v1374
    %5841 = vmatpush.msra.mxu0 %v1366
    %5842 = vmatmul.f32.gmra.mxu0 %v5724
    %v5843 = vpop.f32.mrf.mxu0
    %v5844 = vadd.f32 0.0, %v5843
    %5845 = vdwg.mxu0
    %5846 = vmatpush.msra.mxu0 0.0
    %5847 = vmatpush.msra.mxu0 0.0
    %5848 = vmatpush.msra.mxu0 0.0
    %5849 = vmatpush.msra.mxu0 0.0
    %5850 = vmatpush.msra.mxu0 0.0
    %5851 = vmatpush.msra.mxu0 0.0
    %5852 = vmatpush.msra.mxu0 0.0
    %5853 = vmatpush.msra.mxu0 0.0
    %5854 = vmatpush.msra.mxu0 0.0
    %5855 = vmatpush.msra.mxu0 0.0
    %5856 = vmatpush.msra.mxu0 0.0
    %5857 = vmatpush.msra.mxu0 0.0
    %5858 = vmatpush.msra.mxu0 %v1391
    %5859 = vmatpush.msra.mxu0 %v1383
    %5860 = vmatpush.msra.mxu0 %v1375
    %5861 = vmatpush.msra.mxu0 %v1367
    %5862 = vmatmul.f32.gmra.mxu0 %v5724
    %v5863 = vpop.f32.mrf.mxu0
    %v5864 = vadd.f32 0.0, %v5863
    %5865 = vdwg.mxu0
    %5866 = vmatpush.msra.mxu0 0.0
    %5867 = vmatpush.msra.mxu0 0.0
    %5868 = vmatpush.msra.mxu0 0.0
    %5869 = vmatpush.msra.mxu0 0.0
    %5870 = vmatpush.msra.mxu0 0.0
    %5871 = vmatpush.msra.mxu0 0.0
    %5872 = vmatpush.msra.mxu0 0.0
    %5873 = vmatpush.msra.mxu0 0.0
    %5874 = vmatpush.msra.mxu0 0.0
    %5875 = vmatpush.msra.mxu0 0.0
    %5876 = vmatpush.msra.mxu0 0.0
    %5877 = vmatpush.msra.mxu0 0.0
    %5878 = vmatpush.msra.mxu0 %v1392
    %5879 = vmatpush.msra.mxu0 %v1384
    %5880 = vmatpush.msra.mxu0 %v1376
    %5881 = vmatpush.msra.mxu0 %v1368
    %5882 = vmatmul.f32.gmra.mxu0 %v5724
    %v5883 = vpop.f32.mrf.mxu0
    %v5884 = vadd.f32 0.0, %v5883
    %5885 = vdwg.mxu0
    %v5894 = vrot.slane %v5744, 2
    %v5895 = vrot.slane %v5764, 2
    %v5896 = vrot.slane %v5784, 2
    %v5897 = vrot.slane %v5804, 2
    %v5898 = vrot.slane %v5824, 2
    %v5899 = vrot.slane %v5844, 2
    %v5900 = vrot.slane %v5864, 2
    %v5901 = vrot.slane %v5884, 2
    %v5910 = vadd.f32 %v1197, %v5894
    %v5911 = vadd.f32 %v1220, %v5895
    %v5912 = vadd.f32 %v1243, %v5896
    %v5913 = vadd.f32 %v1266, %v5897
    %v5914 = vadd.f32 %v1289, %v5898
    %v5915 = vadd.f32 %v1312, %v5899
    %v5916 = vadd.f32 %v1335, %v5900
    %v5917 = vadd.f32 %v1358, %v5901
    %5926 = vst.sshfl [vmem:[#allocation1] sm:$0xff pattern:$0x73625140] %v5910
    %5927 = vst.sshfl [vmem:[#allocation1 + $0x8] sm:$0xff pattern:$0x73625140] %v5911
    %5928 = vst.sshfl [vmem:[#allocation1 + $0x10] sm:$0xff pattern:$0x73625140] %v5912
    %5929 = vst.sshfl [vmem:[#allocation1 + $0x18] sm:$0xff pattern:$0x73625140] %v5913
    %s5930 = scalar_lea.vmem [#allocation1], 3
    %v5931 = vld [vmem:[%s5930] ss:$4 sm:$0xff]
    %5932 = vst.sshfl [vmem:[#allocation1 + $0x20] sm:$0xff pattern:$0x73625140] %v5914
    %5933 = vst.sshfl [vmem:[#allocation1 + $0x28] sm:$0xff pattern:$0x73625140] %v5915
    %5934 = vst.sshfl [vmem:[#allocation1 + $0x30] sm:$0xff pattern:$0x73625140] %v5916
    %5935 = vst.sshfl [vmem:[#allocation1 + $0x38] sm:$0xff pattern:$0x73625140] %v5917
    %s5936 = scalar_lea.vmem [#allocation1], 35
    %v5937 = vld [vmem:[%s5936] ss:$4 sm:$0xff]
    %v5940 = vrot.slane %v5937, 4
    %v5941 = vsel %vm965, %v5940, %v5931
    %v5942 = vrot.slane %v5931, 4
    %v5943 = vsel %vm965, %v5937, %v5942
    %v5945 = vunpack.c.l.s4 1934713408
    %v5946 = vunpack.c.0.s8 %v5945
    %v5947 = vperm.slane %v5941, %v5946
    %v5949 = vunpack.c.l.s4 1934713408
    %v5950 = vunpack.c.0.s8 %v5949
    %v5951 = vperm.slane %v5943, %v5950
    %v5952 = vrot.slane %v5951, 4
    %v5953 = vsel %vm965, %v5952, %v5947
    %v5954 = vrot.slane %v5947, 4
    %v5955 = vsel %vm965, %v5951, %v5954
    %v5956 = vmul.f32 %v5953, 1.25
    %v5957 = vmul.f32 %v5955, 1.25
    %5960 = vst [vmem:[#allocation1] ss:$4 sm:$0xff] %v5956
    %v5961 = vld.sshfl [vmem:[#allocation1] sm:$0xff pattern:$0x73625140]
    %v5962 = vld.sshfl [vmem:[#allocation1 + $0x8] sm:$0xff pattern:$0x73625140]
    %v5963 = vld.sshfl [vmem:[#allocation1 + $0x10] sm:$0xff pattern:$0x73625140]
    %v5964 = vld.sshfl [vmem:[#allocation1 + $0x18] sm:$0xff pattern:$0x73625140]
    %s5965 = scalar_lea.vmem [#allocation1], 32
    %5966 = vst [vmem:[%s5965] ss:$4 sm:$0xff] %v5957
    %v5967 = vld.sshfl [vmem:[#allocation1 + $0x20] sm:$0xff pattern:$0x73625140]
    %v5968 = vld.sshfl [vmem:[#allocation1 + $0x28] sm:$0xff pattern:$0x73625140]
    %v5969 = vld.sshfl [vmem:[#allocation1 + $0x30] sm:$0xff pattern:$0x73625140]
    %v5970 = vld.sshfl [vmem:[#allocation1 + $0x38] sm:$0xff pattern:$0x73625140]
    %v5979 = vsel %vm1651, %v5961, -inf
    %v5980 = vsel %vm1651, %v5962, -inf
    %v5981 = vsel %vm1651, %v5963, -inf
    %v5982 = vmax.f32 %v5979, %v5981
    %v5983 = vsel %vm1651, %v5964, -inf
    %v5984 = vmax.f32 %v5980, %v5983
    %v5985 = vmax.f32 %v5982, %v5984
    %5986 = vmax.xlane.f32.xlu0 %v5985
    %v5987 = vpop.xlane.xlu0 %5986
    %v5988 = vsel %vm1651, %v5967, -inf
    %v5989 = vsel %vm1651, %v5968, -inf
    %v5990 = vsel %vm1651, %v5969, -inf
    %v5991 = vmax.f32 %v5988, %v5990
    %v5992 = vsel %vm1651, %v5970, -inf
    %v5993 = vmax.f32 %v5989, %v5992
    %v5994 = vmax.f32 %v5991, %v5993
    %5995 = vmax.xlane.f32.xlu0 %v5994
    %v5996 = vpop.xlane.xlu0 %5995
    %v6000 = vunpack.c.l.s4 269488144
    %v6001 = vunpack.c.0.s8 %v6000
    %v6002 = vperm.slane %v5987, %v6001
    %v6004 = vunpack.c.l.s4 269488144
    %v6005 = vunpack.c.0.s8 %v6004
    %v6006 = vperm.slane %v5996, %v6005
    %v6009 = vsub.f32 %v5956, %v6002
    %v6010 = vsub.f32 %v5957, %v6006
    %v6011 = vmul.f32 %v6009, 1.442695
    %v6012 = vpow.pop %v6011
    %v6013 = vmul.f32 %v6010, 1.442695
    %v6014 = vpow.pop %v6013
    %6017 = vst [vmem:[#allocation1] ss:$4 sm:$0xff] %v6012
    %v6018 = vld.sshfl [vmem:[#allocation1] sm:$0xff pattern:$0x73625140]
    %v6019 = vld.sshfl [vmem:[#allocation1 + $0x8] sm:$0xff pattern:$0x73625140]
    %v6020 = vld.sshfl [vmem:[#allocation1 + $0x10] sm:$0xff pattern:$0x73625140]
    %v6021 = vld.sshfl [vmem:[#allocation1 + $0x18] sm:$0xff pattern:$0x73625140]
    %s6022 = scalar_lea.vmem [#allocation1], 32
    %6023 = vst [vmem:[%s6022] ss:$4 sm:$0xff] %v6014
    %v6024 = vld.sshfl [vmem:[#allocation1 + $0x20] sm:$0xff pattern:$0x73625140]
    %v6025 = vld.sshfl [vmem:[#allocation1 + $0x28] sm:$0xff pattern:$0x73625140]
    %v6026 = vld.sshfl [vmem:[#allocation1 + $0x30] sm:$0xff pattern:$0x73625140]
    %v6027 = vld.sshfl [vmem:[#allocation1 + $0x38] sm:$0xff pattern:$0x73625140]
    %v6036 = vsel %vm1651, %v6018, 0.0
    %v6037 = vsel %vm1651, %v6019, 0.0
    %v6038 = vadd.f32 %v6036, %v6037
    %v6039 = vsel %vm1651, %v6020, 0.0
    %v6040 = vadd.f32 %v6038, %v6039
    %v6041 = vsel %vm1651, %v6021, 0.0
    %v6042 = vadd.f32 %v6040, %v6041
    %6043 = vadd.xlane.f32.xlu0 %v6042
    %v6044 = vpop.xlane.xlu0 %6043
    %v6045 = vsel %vm1651, %v6024, 0.0
    %v6046 = vsel %vm1651, %v6025, 0.0
    %v6047 = vadd.f32 %v6045, %v6046
    %v6048 = vsel %vm1651, %v6026, 0.0
    %v6049 = vadd.f32 %v6047, %v6048
    %v6050 = vsel %vm1651, %v6027, 0.0
    %v6051 = vadd.f32 %v6049, %v6050
    %6052 = vadd.xlane.f32.xlu0 %v6051
    %v6053 = vpop.xlane.xlu0 %6052
    %v6054 = vlog2.pop %v6044
    %v6055 = vmul.f32 %v6054, 0.6931472
    %v6056 = vlog2.pop %v6053
    %v6057 = vmul.f32 %v6056, 0.6931472
    %v6058 = vsub.f32 0.0, %v6055
    %v6059 = vsub.f32 0.0, %v6057
    %vm6060 = vcmp.eq.f32.partialorder %v5956, %v6002
    %vm6061 = vcmp.eq.f32.partialorder %v5957, %v6006
    %v6062 = vsel %vm6060, %v1789, 512
    %v6063 = vsel %vm6061, %v1789, 512
    %6064 = vst [vmem:[#allocation1] ss:$4 sm:$0xff] %v6062
    %v6065 = vld.sshfl [vmem:[#allocation1] sm:$0xff pattern:$0x73625140]
    %v6066 = vld.sshfl [vmem:[#allocation1 + $0x8] sm:$0xff pattern:$0x73625140]
    %v6067 = vld.sshfl [vmem:[#allocation1 + $0x10] sm:$0xff pattern:$0x73625140]
    %v6068 = vld.sshfl [vmem:[#allocation1 + $0x18] sm:$0xff pattern:$0x73625140]
    %s6069 = scalar_lea.vmem [#allocation1], 32
    %6070 = vst [vmem:[%s6069] ss:$4 sm:$0xff] %v6063
    %v6071 = vld.sshfl [vmem:[#allocation1 + $0x20] sm:$0xff pattern:$0x73625140]
    %v6072 = vld.sshfl [vmem:[#allocation1 + $0x28] sm:$0xff pattern:$0x73625140]
    %v6073 = vld.sshfl [vmem:[#allocation1 + $0x30] sm:$0xff pattern:$0x73625140]
    %v6074 = vld.sshfl [vmem:[#allocation1 + $0x38] sm:$0xff pattern:$0x73625140]
    %v6075 = vsel %vm1651, %v6065, 2147483647
    %v6076 = vsel %vm1651, %v6066, 2147483647
    %v6077 = vsel %vm1651, %v6067, 2147483647
    %vm6078 = vcmp.lt.s32.totalorder %v6075, %v6077
    %v6079 = vsel %vm6078, %v6075, %v6077
    %v6080 = vsel %vm1651, %v6068, 2147483647
    %vm6081 = vcmp.lt.s32.totalorder %v6076, %v6080
    %v6082 = vsel %vm6081, %v6076, %v6080
    %vm6083 = vcmp.lt.s32.totalorder %v6079, %v6082
    %v6084 = vsel %vm6083, %v6079, %v6082
    %v6085 = vand.u32 %v6084, 65535
    %v6086 = vshra.s32 %v6084, 16
    %v6087 = vcvt.s32.f32 %v6085
    %v6088 = vcvt.s32.f32 %v6086
    %6089 = vmin.xlane.f32.xlu0 %v6088
    %v6090 = vpop.xlane.xlu0 %6089
    %vm6091 = vcmp.eq.f32.partialorder %v6088, %v6090
    %v6092 = vsel %vm6091, %v6087, inf
    %6093 = vmin.xlane.f32.xlu0 %v6092
    %v6094 = vpop.xlane.xlu0 %6093
    %v6095 = vcvt.f32.s32 %v6094
    %v6096 = vcvt.f32.s32 %v6090
    %v6097 = vshll.u32 %v6096, 16
    %v6098 = vadd.s32 %v6097, %v6095
    %v6099 = vsel %vm1651, %v6071, 2147483647
    %v6100 = vsel %vm1651, %v6072, 2147483647
    %v6101 = vsel %vm1651, %v6073, 2147483647
    %vm6102 = vcmp.lt.s32.totalorder %v6099, %v6101
    %v6103 = vsel %vm6102, %v6099, %v6101
    %v6104 = vsel %vm1651, %v6074, 2147483647
    %vm6105 = vcmp.lt.s32.totalorder %v6100, %v6104
    %v6106 = vsel %vm6105, %v6100, %v6104
    %vm6107 = vcmp.lt.s32.totalorder %v6103, %v6106
    %v6108 = vsel %vm6107, %v6103, %v6106
    %v6109 = vand.u32 %v6108, 65535
    %v6110 = vshra.s32 %v6108, 16
    %v6111 = vcvt.s32.f32 %v6109
    %v6112 = vcvt.s32.f32 %v6110
    %6113 = vmin.xlane.f32.xlu0 %v6112
    %v6114 = vpop.xlane.xlu0 %6113
    %vm6115 = vcmp.eq.f32.partialorder %v6112, %v6114
    %v6116 = vsel %vm6115, %v6111, inf
    %6117 = vmin.xlane.f32.xlu0 %v6116
    %v6118 = vpop.xlane.xlu0 %6117
    %v6119 = vcvt.f32.s32 %v6118
    %v6120 = vcvt.f32.s32 %v6114
    %v6121 = vshll.u32 %v6120, 16
    %v6122 = vadd.s32 %v6121, %v6119
    %v6123 = vcvt.s32.f32 %v6098
    %v6124 = vcvt.s32.f32 %v6122
    %v6125 = vmul.f32 %v6123, 0.002
    %v6126 = vmul.f32 %v6124, 0.002
    %v6127 = vxor.u32 %v6125, 2147483648
    %v6128 = vxor.u32 %v6126, 2147483648
    %v6129 = vmul.f32 %v6127, 1.442695
    %v6130 = vpow.pop %v6129
    %v6131 = vmul.f32 %v6128, 1.442695
    %v6132 = vpow.pop %v6131
    %v6133 = vadd.f32 %v6130, 1.0
    %v6134 = vadd.f32 %v6132, 1.0
    %v6135 = vrcp.pop %v6133
    %v6136 = vmul.f32 %v6133, %v6135
    %v6137 = vsub.f32 1.0, %v6136
    %v6138 = vmul.f32 %v6135, %v6137
    %v6139 = vadd.f32 %v6135, %v6138
    %vm6140 = vweird.f32 %v6133
    %vm6141 = vweird.f32 %v6135
    %vm6142 = vmor %vm6140, %vm6141
    %v6143 = vsel %vm6142, %v6135, %v6139
    %v6144 = vand.u32 2147483647, %v6133
    %vm6145 = vcmp.eq.f32.partialorder %v6144, 8.507059e+37
    %v6146 = vand.u32 %v6133, 2147483648
    %v6147 = vor.u32 1.1754944e-38, %v6146
    %v6148 = vsel %vm6145, %v6147, %v6143
    %v6149 = vmul.f32 1.0, %v6148
    %v6150 = vrcp.pop %v6134
    %v6151 = vmul.f32 %v6134, %v6150
    %v6152 = vsub.f32 1.0, %v6151
    %v6153 = vmul.f32 %v6150, %v6152
    %v6154 = vadd.f32 %v6150, %v6153
    %vm6155 = vweird.f32 %v6134
    %vm6156 = vweird.f32 %v6150
    %vm6157 = vmor %vm6155, %vm6156
    %v6158 = vsel %vm6157, %v6150, %v6154
    %v6159 = vand.u32 2147483647, %v6134
    %vm6160 = vcmp.eq.f32.partialorder %v6159, 8.507059e+37
    %v6161 = vand.u32 %v6134, 2147483648
    %v6162 = vor.u32 1.1754944e-38, %v6161
    %v6163 = vsel %vm6160, %v6162, %v6158
    %v6164 = vmul.f32 1.0, %v6163
    %v6165 = vmul.f32 %v6149, 20.0
    %v6166 = vmul.f32 %v6164, 20.0
    %v6169 = vrot.slane %v6165, 1
    %v6170 = vsel %vm1899, %v6166, %v6169
    %v6172 = vrot.slane %v6166, 7
    %v6173 = vsel %vm1899, %v6172, %v6165
    %v6175 = vsel %vm1895, %v6170, %v6173
    %v6176 = vmul.f32 %v1016, %v6175
    %v6177 = vadd.f32 %v5562, %v6176
    %v6179 = vsel %vm148, %v6176, 0
    %6181 = vmatpush.msra.mxu0 0.0
    %6182 = vmatpush.msra.mxu0 0.0
    %6183 = vmatpush.msra.mxu0 0.0
    %6184 = vmatpush.msra.mxu0 0.0
    %6185 = vmatpush.msra.mxu0 0.0
    %6186 = vmatpush.msra.mxu0 0.0
    %6187 = vmatpush.msra.mxu0 0.0
    %6188 = vmatpush.msra.mxu0 0.0
    %6189 = vmatpush.msra.mxu0 0.0
    %6190 = vmatpush.msra.mxu0 0.0
    %6191 = vmatpush.msra.mxu0 0.0
    %6192 = vmatpush.msra.mxu0 0.0
    %6193 = vmatpush.msra.mxu0 %v1030
    %6194 = vmatpush.msra.mxu0 %v1029
    %6195 = vmatpush.msra.mxu0 %v1028
    %6196 = vmatpush.msra.mxu0 %v1027
    %6197 = vmatmul.f32.gmra.mxu0 %v6179
    %v6198 = vpop.f32.mrf.mxu0
    %v6199 = vadd.f32 %v1394, %v6198
    %6200 = vdwg.mxu0
    %6202 = vrot.lane.b32.xlu0 %v5649, 96
    %v6203 = vpop.permute.xlu0 %6202
    %v6204 = vsel %vm148, %v6203, 0
    %6206 = vmatpush.msra.mxu0 0.0
    %6207 = vmatpush.msra.mxu0 0.0
    %6208 = vmatpush.msra.mxu0 0.0
    %6209 = vmatpush.msra.mxu0 0.0
    %6210 = vmatpush.msra.mxu0 0.0
    %6211 = vmatpush.msra.mxu0 0.0
    %6212 = vmatpush.msra.mxu0 0.0
    %6213 = vmatpush.msra.mxu0 0.0
    %6214 = vmatpush.msra.mxu0 0.0
    %6215 = vmatpush.msra.mxu0 0.0
    %6216 = vmatpush.msra.mxu0 0.0
    %6217 = vmatpush.msra.mxu0 0.0
    %6218 = vmatpush.msra.mxu0 %v1035
    %6219 = vmatpush.msra.mxu0 %v1034
    %6220 = vmatpush.msra.mxu0 %v1033
    %6221 = vmatpush.msra.mxu0 %v1032
    %6222 = vmatmul.f32.gmra.mxu0 %v6204
    %v6223 = vpop.f32.mrf.mxu0
    %v6224 = vadd.f32 %v1395, %v6223
    %6225 = vdwg.mxu0
    %v6226 = vadd.f32 %v6199, %v6224
    %v6227 = vxor.u32 %v6226, 2147483648
    %v6228 = vmul.f32 %v6227, 1.442695
    %v6229 = vpow.pop %v6228
    %v6230 = vadd.f32 %v6229, 1.0
    %v6231 = vrcp.pop %v6230
    %v6232 = vmul.f32 %v6230, %v6231
    %v6233 = vsub.f32 1.0, %v6232
    %v6234 = vmul.f32 %v6231, %v6233
    %v6235 = vadd.f32 %v6231, %v6234
    %vm6236 = vweird.f32 %v6230
    %vm6237 = vweird.f32 %v6231
    %vm6238 = vmor %vm6236, %vm6237
    %v6239 = vsel %vm6238, %v6231, %v6235
    %v6240 = vand.u32 2147483647, %v6230
    %vm6241 = vcmp.eq.f32.partialorder %v6240, 8.507059e+37
    %v6242 = vand.u32 %v6230, 2147483648
    %v6243 = vor.u32 1.1754944e-38, %v6242
    %v6244 = vsel %vm6241, %v6243, %v6239
    %v6245 = vmul.f32 1.0, %v6244
    %6247 = vrot.lane.b32.xlu0 %v6224, 64
    %v6248 = vpop.permute.xlu0 %6247
    %v6250 = vmul.f32 %v6245, %v6248
    %6252 = vrot.lane.b32.xlu0 %v6250, 64
    %v6253 = vpop.permute.xlu0 %6252
    %v6255 = vadd.f32 %v6199, %v6253
    %v6256 = vtanh.pop %v6255
    %v6257 = vsub.f32 1.0, %v6245
    %6259 = vrot.lane.b32.xlu0 %v6256, 96
    %v6260 = vpop.permute.xlu0 %6259
    %v6262 = vmul.f32 %v6257, %v6260
    %v6263 = vmul.f32 %v6245, %v5649
    %v6264 = vadd.f32 %v6262, %v6263
    %v6267 = vperm.slane %v1780, %v1397
    %v6268 = vperm.slane %v1781, %v1397
    %v6269 = vsel %vm1899, %v6268, %v6267
    %v6273 = vadd.s32 %v1397, 4294967294
    %v6274 = vperm.slane %v2397, %v6273
    %v6275 = vperm.slane %v2398, %v6273
    %v6276 = vsel %vm1899, %v6275, %v6274
    %v6280 = vadd.s32 %v1397, 4294967292
    %v6281 = vperm.slane %v3012, %v6280
    %v6282 = vperm.slane %v3013, %v6280
    %v6283 = vsel %vm1899, %v6282, %v6281
    %v6287 = vadd.s32 %v1397, 4294967290
    %v6288 = vperm.slane %v3627, %v6287
    %v6289 = vperm.slane %v3628, %v6287
    %v6290 = vsel %vm1899, %v6289, %v6288
    %v6294 = vadd.s32 %v1397, 4294967288
    %v6295 = vperm.slane %v4214, %v6294
    %v6296 = vperm.slane %v4215, %v6294
    %v6297 = vsel %vm1899, %v6296, %v6295
    %v6301 = vadd.s32 %v1397, 4294967286
    %v6302 = vperm.slane %v4828, %v6301
    %v6303 = vperm.slane %v4829, %v6301
    %v6304 = vsel %vm1899, %v6303, %v6302
    %v6308 = vadd.s32 %v1397, 4294967284
    %v6309 = vperm.slane %v5443, %v6308
    %v6310 = vperm.slane %v5444, %v6308
    %v6311 = vsel %vm1899, %v6310, %v6309
    %v6315 = vadd.s32 %v1397, 4294967282
    %v6316 = vperm.slane %v6058, %v6315
    %v6317 = vperm.slane %v6059, %v6315
    %v6318 = vsel %vm1899, %v6317, %v6316
    %vm6320 = vcmask 15360
    %v6321 = vsel %vm6320, %v6269, %v6276
    %vm6322 = vcmask 31744
    %v6323 = vsel %vm6322, %v6321, %v6283
    %vm6324 = vcmask 48128
    %v6325 = vsel %vm6324, %v6323, %v6290
    %v6326 = vsel %vm281, %v6325, %v6297
    %vm6327 = vcmask 80896
    %v6328 = vsel %vm6327, %v6326, %v6304
    %vm6329 = vcmask 97280
    %v6330 = vsel %vm6329, %v6328, %v6311
    %vm6331 = vcmask 113664
    %v6332 = vsel %vm6331, %v6330, %v6318
    %vm6333 = vcmask 123904
    %6334 = vst.msk [vmem:[#allocation13] sm:$0x3] %vm6333, %v6332
    %v6337 = vperm.slane %v1853, %v1397
    %v6338 = vperm.slane %v1854, %v1397
    %v6339 = vsel %vm1899, %v6338, %v6337
    %v6343 = vperm.slane %v2464, %v6273
    %v6344 = vperm.slane %v2465, %v6273
    %v6345 = vsel %vm1899, %v6344, %v6343
    %v6349 = vperm.slane %v3079, %v6280
    %v6350 = vperm.slane %v3080, %v6280
    %v6351 = vsel %vm1899, %v6350, %v6349
    %v6355 = vperm.slane %v3694, %v6287
    %v6356 = vperm.slane %v3695, %v6287
    %v6357 = vsel %vm1899, %v6356, %v6355
    %v6361 = vperm.slane %v4281, %v6294
    %v6362 = vperm.slane %v4282, %v6294
    %v6363 = vsel %vm1899, %v6362, %v6361
    %v6367 = vperm.slane %v4895, %v6301
    %v6368 = vperm.slane %v4896, %v6301
    %v6369 = vsel %vm1899, %v6368, %v6367
    %v6373 = vperm.slane %v5510, %v6308
    %v6374 = vperm.slane %v5511, %v6308
    %v6375 = vsel %vm1899, %v6374, %v6373
    %v6379 = vperm.slane %v6125, %v6315
    %v6380 = vperm.slane %v6126, %v6315
    %v6381 = vsel %vm1899, %v6380, %v6379
    %v6383 = vsel %vm6320, %v6339, %v6345
    %v6384 = vsel %vm6322, %v6383, %v6351
    %v6385 = vsel %vm6324, %v6384, %v6357
    %v6386 = vsel %vm281, %v6385, %v6363
    %v6387 = vsel %vm6327, %v6386, %v6369
    %v6388 = vsel %vm6329, %v6387, %v6375
    %v6389 = vsel %vm6331, %v6388, %v6381
    %6390 = vst.msk [vmem:[#allocation14] sm:$0x3] %vm6333, %v6389
    %v6391 = vmul.f32 %v6177, 0.125
    %6393 = vrot.lane.b32.xlu0 %v6264, 96
    %v6394 = vpop.permute.xlu0 %6393
    %v6396 = vadd.f32 %v6391, %v6394
    %vm6397 = vcmask 254976
    %v6398 = vsel %vm6397, %v6396, 0.0
    %v6399 = vrot.slane %v6398, 4
    %v6400 = vadd.f32 %v6398, %v6399
    %v6401 = vrot.slane %v6400, 2
    %v6402 = vadd.f32 %v6400, %v6401
    %v6403 = vrot.slane %v6402, 1
    %v6404 = vadd.f32 %v6402, %v6403
    %v6405 = vrcp.pop 2.0
    %v6406 = vmul.f32 2.0, %v6405
    %v6407 = vsub.f32 1.0, %v6406
    %v6408 = vmul.f32 %v6405, %v6407
    %v6409 = vadd.f32 %v6405, %v6408
    %vm6410 = vweird.f32 %v6405
    %v6411 = vsel %vm6410, %v6405, %v6409
    %v6412 = vmul.f32 %v6404, %v6411
    %v6413 = vsub.f32 %v6396, %v6412
    %v6414 = vmul.f32 %v6413, %v6413
    %v6415 = vsel %vm6397, %v6414, 0.0
    %v6416 = vrot.slane %v6415, 4
    %v6417 = vadd.f32 %v6415, %v6416
    %v6418 = vrot.slane %v6417, 2
    %v6419 = vadd.f32 %v6417, %v6418
    %v6420 = vrot.slane %v6419, 1
    %v6421 = vadd.f32 %v6419, %v6420
    %v6422 = vmul.f32 %v6421, %v6411
    %v6423 = vadd.f32 %v6422, 1e-05
    %v6424 = vrsqrt.pop %v6423
    %v6425 = vmul.f32 %v6424, %v6423
    %v6426 = vmul.f32 %v6425, %v6424
    %v6427 = vmul.f32 0.5, %v6426
    %v6428 = vsub.f32 1.5, %v6427
    %v6429 = vmul.f32 %v6424, %v6428
    %vm6430 = vweird.f32 %v6423
    %vm6431 = vweird.f32 %v6424
    %vm6432 = vmor %vm6430, %vm6431
    %v6433 = vsel %vm6432, %v6424, %v6429
    %v6434 = vmul.f32 %v6413, %v6433
    %v6435 = vperm.slane %v103, 5
    %v6436 = vmul.f32 %v6434, %v6435
    %v6437 = vperm.slane %v103, 6
    %v6438 = vadd.f32 %v6436, %v6437
    %6439 = vst.msk [vmem:[#allocation10] sm:$0x3] %vm6397, %v6438
    // Predicated region
    $region54: #{tpu_custom_call.1} parent=1 // pred_check
      _
    $region55: #{tpu_custom_call.1} parent=1 // pred_check_branch
      %6441 = sbr.rel (0) target = $region57
    $region56: #{tpu_custom_call.1} parent=1 // pred_region
      %6443 = vsyncadd [#allocation4], 0
      %s6445 = sshll.u32 [#allocation10], 4
      %s6446 = int_to_ptr.vmem [resolvable:$true] %s6445
      %s6447 = sshll.u32 %s9, 4
      %s6448 = int_to_ptr.hbm [resolvable:$true] %s6447
      %6450 = dma.vmem_to_hbm [thread:$0]  %s6446, 32, %s6448, [#allocation4]
    $region57: #{tpu_custom_call.1} parent=1 // pred_fallthru
      _
    // Predicated region
    $region58: #{tpu_custom_call.1} parent=1 // pred_check
      _
    $region59: #{tpu_custom_call.1} parent=1 // pred_check_branch
      %6452 = sbr.rel (0) target = $region61
    $region60: #{tpu_custom_call.1} parent=1 // pred_region
      %6454 = vsyncadd [#allocation12], 0
      %s6455 = sshll.u32 [#allocation11], 4
      %s6456 = int_to_ptr.vmem [resolvable:$true] %s6455
      %s6457 = sshll.u32 %s10, 4
      %s6458 = int_to_ptr.hbm [resolvable:$true] %s6457
      %6463 = dma.vmem_to_hbm [thread:$0]  %s6456, 256, %s6458, [#allocation12], 128, 128, 8
    $region61: #{tpu_custom_call.1} parent=1 // pred_fallthru
      _
    // Predicated region
    $region62: #{tpu_custom_call.1} parent=1 // pred_check
      _
    $region63: #{tpu_custom_call.1} parent=1 // pred_check_branch
      %6465 = sbr.rel (0) target = $region65
    $region64: #{tpu_custom_call.1} parent=1 // pred_region
      %6467 = vsyncadd [#allocation12], 0
      %s6469 = sshll.u32 [#allocation13], 4
      %s6470 = int_to_ptr.vmem [resolvable:$true] %s6469
      %s6471 = sshll.u32 %s11, 4
      %s6472 = int_to_ptr.hbm [resolvable:$true] %s6471
      %6474 = dma.vmem_to_hbm [thread:$0]  %s6470, 32, %s6472, [#allocation12]
    $region65: #{tpu_custom_call.1} parent=1 // pred_fallthru
      _
    // Predicated region
    $region66: #{tpu_custom_call.1} parent=1 // pred_check
      _
    $region67: #{tpu_custom_call.1} parent=1 // pred_check_branch
      %6476 = sbr.rel (0) target = $region69
    $region68: #{tpu_custom_call.1} parent=1 // pred_region
      %6478 = vsyncadd [#allocation15], 0
      %s6480 = sshll.u32 [#allocation14], 4
      %s6481 = int_to_ptr.vmem [resolvable:$true] %s6480
      %s6482 = sshll.u32 %s12, 4
      %s6483 = int_to_ptr.hbm [resolvable:$true] %s6482
      %6485 = dma.vmem_to_hbm [thread:$0]  %s6481, 32, %s6483, [#allocation15]
    $region69: #{tpu_custom_call.1} parent=1 // pred_fallthru
      _
    // Predicated region
    $region70: #{tpu_custom_call.1} parent=1 // pred_check
      _
    $region71: #{tpu_custom_call.1} parent=1 // pred_check_branch
      %6487 = sbr.rel (0) target = $region73
    $region72: #{tpu_custom_call.1} parent=1 // pred_region
      %6489 = dma.done [#allocation4], 32
    $region73: #{tpu_custom_call.1} parent=1 // pred_fallthru
      _
    // Predicated region
    $region74: #{tpu_custom_call.1} parent=1 // pred_check
      _
    $region75: #{tpu_custom_call.1} parent=1 // pred_check_branch
      %6491 = sbr.rel (0) target = $region77
    $region76: #{tpu_custom_call.1} parent=1 // pred_region
      %6493 = dma.done [#allocation12], 256
    $region77: #{tpu_custom_call.1} parent=1 // pred_fallthru
      _
    // Predicated region
    $region78: #{tpu_custom_call.1} parent=1 // pred_check
      _
    $region79: #{tpu_custom_call.1} parent=1 // pred_check_branch
      %6495 = sbr.rel (0) target = $region81
    $region80: #{tpu_custom_call.1} parent=1 // pred_region
      %6497 = dma.done [#allocation12], 32
    $region81: #{tpu_custom_call.1} parent=1 // pred_fallthru
      _
    // Predicated region
    $region82: #{tpu_custom_call.1} parent=1 // pred_check
      _
    $region83: #{tpu_custom_call.1} parent=1 // pred_check_branch
      %6499 = sbr.rel (0) target = $region85
    $region84: #{tpu_custom_call.1} parent=1 // pred_region
      %6501 = dma.done [#allocation15], 32
    $region85: #{tpu_custom_call.1} parent=1 // pred_fallthru
      _
    %6502 = vsyncpa [#allocation3], 1
    %6503 = vsyncpa [#allocation6], 1
    %6504 = vsyncpa [#allocation9], 1
    %6505 = vsyncpa [#allocation4], 1
    %6506 = vsyncpa [#allocation12], 1
    %6507 = vsyncpa [#allocation15], 1

</llo_original>
